<compile_context>
chip_gen: v6e
topology: v6e:2x2x1
jax: 0.10.0
libtpu: 0.0.40
codegen_flags: <defaults>
</compile_context>

<pallas_src>
import functools

import jax
import jax.numpy as jnp
from jax import lax
from jax.experimental import pallas as pl
from jax.experimental.pallas import tpu as pltpu

_EPS = 1e-5
_LANE = 128


def _round_up(x, m):
    return (x + m - 1) // m * m


def _largest_divisor_leq(n, cap):
    cap = max(1, min(cap, n))
    for d in range(cap, 0, -1):
        if n % d == 0:
            return d
    return 1


def _vmem_limit_bytes():
    # Generation-aware scoped-VMEM budget (v5e/v6e: 128 MiB phys, v7x: 64 MiB).
    try:
        cap = pltpu.get_tpu_info().vmem_capacity_bytes
    except Exception:
        cap = 64 * 1024 * 1024
    return int(min(cap * 3 // 4, 96 * 1024 * 1024))


def _compiler_params():
    return pltpu.CompilerParams(
        dimension_semantics=("parallel", "arbitrary"),
        vmem_limit_bytes=_vmem_limit_bytes())


# ---------------------------------------------------------------------------
# Kernel 1: 3x3 conv (pad=1, stride=1) for one (sample, row-band) grid step,
# plus per-band partial BatchNorm statistics.  Optionally fuses the PREVIOUS
# stage's BatchNorm + ReLU into the input path.
# ---------------------------------------------------------------------------
def _conv3x3_kernel(*refs, fuse_prev_bn_relu, TH, W, Wp, Cin_p, Cout_p,
                    out_wpad):
    """
    fuse_prev_bn_relu=False (stage 1):
        refs = (x_hbm, w_ref, y_ref, sum_ref, ssq_ref, xband, col, sem)
        x_hbm : (N, H+2, Wp, Cin_p) bf16 HBM, zero pre-padded in H and W.
    fuse_prev_bn_relu=True (stage 2):
        refs = (x_hbm, w_ref, sc_ref, sh_ref, y_ref, sum_ref, ssq_ref,
                xband, col, sem)
        x_hbm : (N, H, Wp, Cin_p) bf16 HBM raw conv-1 output (zero W-halo
                columns baked in, no H padding); the previous stage's BN+ReLU
                (sc/sh) is applied to the band in VMEM.

    w_ref  : (9*Cin_p, Cout_p) bf16, 3x3 taps flattened into K.
    y_ref  : (1, TH, W+out_wpad, Cout_p) bf16 raw conv output band.
    sum_ref: (1, 1, 1, Cout_p) f32 band channel sum.
    ssq_ref: (1, 1, 1, Cout_p) f32 band centered sum of squares.
    xband  : VMEM (TH+2, Wp, Cin_p) bf16 halo band scratch.
    col    : VMEM (TH*W, 9*Cin_p) bf16 im2col scratch.
    sem    : DMA semaphores, shape (3,).
    """
    if fuse_prev_bn_relu:
        (x_hbm, w_ref, sc_ref, sh_ref, y_ref, sum_ref, ssq_ref,
         xband, col, sem) = refs
    else:
        x_hbm, w_ref, y_ref, sum_ref, ssq_ref, xband, col, sem = refs

    n = pl.program_id(0)
    bk = pl.program_id(1)
    nb = pl.num_programs(1)
    row0 = pl.multiple_of(bk * TH, TH)

    if not fuse_prev_bn_relu:
        # Input is pre-padded in H: rows [row0, row0+TH+2) are always valid.
        cp = pltpu.make_async_copy(x_hbm.at[n, pl.ds(row0, TH + 2)],
                                   xband, sem.at[0])
        cp.start()
        cp.wait()
    else:
        # Interior rows are always valid; 1-row top/bottom halos only when the
        # neighbouring band exists (otherwise that halo row is image padding).
        main = pltpu.make_async_copy(x_hbm.at[n, pl.ds(row0, TH)],
                                     xband.at[pl.ds(1, TH)], sem.at[0])
        main.start()

        @pl.when(bk > 0)
        def _():
            cp = pltpu.make_async_copy(x_hbm.at[n, pl.ds(row0 - 1, 1)],
                                       xband.at[pl.ds(0, 1)], sem.at[1])
            cp.start()
            cp.wait()

        @pl.when(bk < nb - 1)
        def _():
            cp = pltpu.make_async_copy(x_hbm.at[n, pl.ds(row0 + TH, 1)],
                                       xband.at[pl.ds(TH + 1, 1)], sem.at[2])
            cp.start()
            cp.wait()

        main.wait()

        # Fused previous-stage BatchNorm + ReLU, applied to the whole band.
        scale = sc_ref[...].reshape(1, 1, Cin_p)
        shift = sh_ref[...].reshape(1, 1, Cin_p)
        xv = xband[...].astype(jnp.float32)
        xband[...] = jnp.maximum(xv * scale + shift, 0.0).astype(xband.dtype)

        # Re-zero padding pixels (the stored zeros became relu(shift) above):
        # W halo columns always; H halo rows only where they are image padding.
        zcol = jnp.zeros((TH + 2, 1, Cin_p), xband.dtype)
        xband[:, 0:1, :] = zcol
        xband[:, W + 1:W + 2, :] = zcol

        @pl.when(bk == 0)
        def _():
            xband[0:1, :, :] = jnp.zeros((1, Wp, Cin_p), xband.dtype)

        @pl.when(bk == nb - 1)
        def _():
            xband[TH + 1:TH + 2, :, :] = jnp.zeros((1, Wp, Cin_p), xband.dtype)

    # ---- im2col: 9 taps -> one long-K operand, single MXU matmul (f32 acc) --
    for dy in range(3):
        for dx in range(3):
            k0 = (dy * 3 + dx) * Cin_p
            col[:, k0:k0 + Cin_p] = (
                xband[dy:dy + TH, dx:dx + W, :].reshape(TH * W, Cin_p))
    acc = jnp.dot(col[...], w_ref[...], preferred_element_type=jnp.float32)

    # ---- raw conv output band (bf16); bake zero W-halo columns if requested -
    band = acc.astype(y_ref.dtype).reshape(TH, W, Cout_p)
    if out_wpad:
        y_ref[0:1, :, 1:W + 1, :] = band.reshape(1, TH, W, Cout_p)
        y_ref[0:1, :, 0:1, :] = jnp.zeros((1, TH, 1, Cout_p), y_ref.dtype)
        y_ref[0:1, :, W + 1:W + out_wpad, :] = jnp.zeros(
            (1, TH, out_wpad - 1, Cout_p), y_ref.dtype)
    else:
        y_ref[...] = band.reshape(1, TH, W, Cout_p)

    # ---- per-band partial BN statistics (centered; combined in tiny glue) ---
    bsum = jnp.sum(acc, axis=0, keepdims=True)               # (1, Cout_p)
    cent = acc - bsum * (1.0 / float(TH * W))
    bssq = jnp.sum(cent * cent, axis=0, keepdims=True)
    sum_ref[...] = bsum.reshape(1, 1, 1, Cout_p)
    ssq_ref[...] = bssq.reshape(1, 1, 1, Cout_p)


# ---------------------------------------------------------------------------
# Kernel 2: final BatchNorm (precomputed scale/shift) + ReLU, one band / step.
# ---------------------------------------------------------------------------
def _bn_relu_kernel(y_ref, sc_ref, sh_ref, o_ref):
    y = y_ref[...].astype(jnp.float32)
    s = sc_ref[...].reshape(1, 1, 1, -1)
    t = sh_ref[...].reshape(1, 1, 1, -1)
    o_ref[...] = jnp.maximum(y * s + t, 0.0).astype(o_ref.dtype)


# ---------------------------------------------------------------------------
# Wrappers
# ---------------------------------------------------------------------------
def _prep_weight(w, Cin_p, Cout_p):
    kh, kw, cin, cout = w.shape
    w_p = jnp.zeros((kh, kw, Cin_p, Cout_p), jnp.bfloat16)
    w_p = w_p.at[:, :, :cin, :cout].set(w.astype(jnp.bfloat16))
    return w_p.reshape(kh * kw * Cin_p, Cout_p)


def _conv_call(x_src, w_flat, scale_in, shift_in, *, H, W, Wp, TH,
               Cin_p, Cout_p, out_wpad):
    N = x_src.shape[0]
    nb = H // TH
    fuse = scale_in is not None
    kernel = functools.partial(
        _conv3x3_kernel, fuse_prev_bn_relu=fuse, TH=TH, W=W, Wp=Wp,
        Cin_p=Cin_p, Cout_p=Cout_p, out_wpad=out_wpad)

    in_specs = [pl.BlockSpec(memory_space=pl.ANY),           # input stays in HBM
                pl.BlockSpec((9 * Cin_p, Cout_p), lambda n, bk: (0, 0))]
    args = [x_src, w_flat]
    if fuse:
        in_specs += [pl.BlockSpec((1, Cin_p), lambda n, bk: (0, 0)),
                     pl.BlockSpec((1, Cin_p), lambda n, bk: (0, 0))]
        args += [scale_in, shift_in]

    out_w = W + out_wpad
    return pl.pallas_call(
        kernel,
        out_shape=(
            jax.ShapeDtypeStruct((N, H, out_w, Cout_p), jnp.bfloat16),
            jax.ShapeDtypeStruct((N, nb, 1, Cout_p), jnp.float32),
            jax.ShapeDtypeStruct((N, nb, 1, Cout_p), jnp.float32)),
        grid=(N, nb),
        in_specs=in_specs,
        out_specs=(
            pl.BlockSpec((1, TH, out_w, Cout_p), lambda n, bk: (n, bk, 0, 0)),
            pl.BlockSpec((1, 1, 1, Cout_p), lambda n, bk: (n, bk, 0, 0)),
            pl.BlockSpec((1, 1, 1, Cout_p), lambda n, bk: (n, bk, 0, 0))),
        scratch_shapes=[
            pltpu.VMEM((TH + 2, Wp, Cin_p), jnp.bfloat16),    # halo band
            pltpu.VMEM((TH * W, 9 * Cin_p), jnp.bfloat16),    # im2col (bf16)
            pltpu.SemaphoreType.DMA((3,)),
        ],
        compiler_params=_compiler_params(),
    )(*args)


def _finalize_bn(psum, pssq, gamma, beta, *, Cout, Cout_p, total, band_cnt,
                 eps=_EPS):
    # Parallel-variance combine of per-band (sum, centered sum-of-squares).
    band_sum = psum[:, :, 0, :].astype(jnp.float32)           # (N, nb, Cout_p)
    band_ssq = pssq[:, :, 0, :].astype(jnp.float32)
    mean = jnp.sum(band_sum, axis=(0, 1)) / total
    band_mean = band_sum / band_cnt
    var = (jnp.sum(band_ssq, axis=(0, 1))
           + band_cnt * jnp.sum((band_mean - mean) ** 2, axis=(0, 1))) / total
    var = jnp.maximum(var, 0.0)                               # biased (train)
    g = jnp.zeros((Cout_p,), jnp.float32).at[:Cout].set(gamma.astype(jnp.float32))
    b = jnp.zeros((Cout_p,), jnp.float32).at[:Cout].set(beta.astype(jnp.float32))
    scale = g * lax.rsqrt(var + eps)
    shift = b - mean * scale
    return scale.reshape(1, Cout_p), shift.reshape(1, Cout_p)


def double_conv_forward(x_nchw, params, *, row_tile=None):
    """Matches double_conv.forward for a freshly-constructed module
    (train-mode BatchNorm: batch statistics, biased variance).  NCHW in /
    NCHW out like the PyTorch module.  Conv biases are dropped because a bias
    immediately followed by train-mode BN is cancelled exactly."""
    N, Cin, H, W = x_nchw.shape
    Cout = params["w1"].shape[-1]
    Cin_p = _round_up(Cin, _LANE)
    Cout_p = _round_up(Cout, _LANE)
    Wp = _round_up(W + 2, 8)

    if row_tile is None:
        row_tile = max(1, 1024 // W)        # target ~1K output pixels / band
    TH = _largest_divisor_leq(H, row_tile)
    nb = H // TH

    # One-time boundary glue: NCHW f32 -> NHWC bf16, zero pad H (+1/+1),
    # W (+1 left, to Wp on the right) and channels (to a lane multiple).
    x = jnp.transpose(x_nchw, (0, 2, 3, 1)).astype(jnp.bfloat16)
    x = jnp.pad(x, ((0, 0), (1, 1), (1, Wp - W - 1), (0, Cin_p - Cin)))

    w1 = _prep_weight(params["w1"], Cin_p, Cout_p)
    w2 = _prep_weight(params["w2"], Cout_p, Cout_p)
    total = float(N * H * W)
    band_cnt = float(TH * W)

    # Stage 1: conv1 (raw, zero W-halo columns baked in) + BN1 partial stats.
    y1, s1, q1 = _conv_call(x, w1, None, None, H=H, W=W, Wp=Wp, TH=TH,
                            Cin_p=Cin_p, Cout_p=Cout_p, out_wpad=Wp - W)
    scale1, shift1 = _finalize_bn(s1, q1, params["g1"], params["be1"],
                                  Cout=Cout, Cout_p=Cout_p,
                                  total=total, band_cnt=band_cnt)

    # Stage 2: BN1 + ReLU fused into conv-2's input path; conv2 + BN2 stats.
    y2, s2, q2 = _conv_call(y1, w2, scale1, shift1, H=H, W=W, Wp=Wp, TH=TH,
                            Cin_p=Cout_p, Cout_p=Cout_p, out_wpad=0)
    scale2, shift2 = _finalize_bn(s2, q2, params["g2"], params["be2"],
                                  Cout=Cout, Cout_p=Cout_p,
                                  total=total, band_cnt=band_cnt)

    # Final BN2 + ReLU (the only standalone normalize pass).
    out = pl.pallas_call(
        _bn_relu_kernel,
        out_shape=jax.ShapeDtypeStruct((N, H, W, Cout_p), jnp.float32),
        grid=(N, nb),
        in_specs=[
            pl.BlockSpec((1, TH, W, Cout_p), lambda n, bk: (n, bk, 0, 0)),
            pl.BlockSpec((1, Cout_p), lambda n, bk: (0, 0)),
            pl.BlockSpec((1, Cout_p), lambda n, bk: (0, 0))],
        out_specs=pl.BlockSpec((1, TH, W, Cout_p), lambda n, bk: (n, bk, 0, 0)),
        compiler_params=_compiler_params(),
    )(y2, scale2, shift2)

    return jnp.transpose(out[..., :Cout], (0, 3, 1, 2))       # NHWC -> NCHW


def init_params(key, in_ch, out_ch, dtype=jnp.float32):
    ks = jax.random.split(key, 8)
    s1 = 1.0 / (in_ch * 9) ** 0.5
    s2 = 1.0 / (out_ch * 9) ** 0.5
    return {
        "w1": jax.random.uniform(ks[0], (3, 3, in_ch, out_ch), dtype, -s1, s1),
        "b1": jax.random.uniform(ks[1], (out_ch,), dtype, -s1, s1),
        "g1": 1.0 + 0.1 * jax.random.normal(ks[2], (out_ch,), dtype),
        "be1": 0.1 * jax.random.normal(ks[3], (out_ch,), dtype),
        "w2": jax.random.uniform(ks[4], (3, 3, out_ch, out_ch), dtype, -s2, s2),
        "b2": jax.random.uniform(ks[5], (out_ch,), dtype, -s2, s2),
        "g2": 1.0 + 0.1 * jax.random.normal(ks[6], (out_ch,), dtype),
        "be2": 0.1 * jax.random.normal(ks[7], (out_ch,), dtype),
    }


# ---------------------------------------------------------------------------
# Pure-JAX references (for the in-script correctness checks).
# ---------------------------------------------------------------------------
def _ref_forward_policy(x_nchw, p, eps=_EPS):
    """Mirrors the kernel's precision policy: bf16 conv operands / stored
    activations, f32 accumulation and statistics, no conv bias."""
    def stage(a_bf16, w, g, b):
        y = lax.conv_general_dilated(
            a_bf16, w.astype(jnp.bfloat16), (1, 1), ((1, 1), (1, 1)),
            dimension_numbers=("NHWC", "HWIO", "NHWC"),
            preferred_element_type=jnp.float32)
        mean = jnp.mean(y, axis=(0, 1, 2))
        var = jnp.mean((y - mean) ** 2, axis=(0, 1, 2))
        scale = g.astype(jnp.float32) * lax.rsqrt(var + eps)
        shift = b.astype(jnp.float32) - mean * scale
        y_bf16 = y.astype(jnp.bfloat16).astype(jnp.float32)
        return jnp.maximum(y_bf16 * scale + shift, 0.0)

    x = jnp.transpose(x_nchw, (0, 2, 3, 1)).astype(jnp.bfloat16)
    a1 = stage(x, p["w1"], p["g1"], p["be1"]).astype(jnp.bfloat16)
    a2 = stage(a1, p["w2"], p["g2"], p["be2"])
    return jnp.transpose(a2, (0, 3, 1, 2))


def _ref_forward_f32(x_nchw, p, eps=_EPS):
    """Pure-f32 reference with the exact module semantics (incl. conv bias)."""
    def stage(a, w, bias, g, b):
        y = lax.conv_general_dilated(
            a, w, (1, 1), ((1, 1), (1, 1)),
            dimension_numbers=("NHWC", "HWIO", "NHWC"))
        y = y + bias.reshape(1, 1, 1, -1)
        mean = jnp.mean(y, axis=(0, 1, 2))
        var = jnp.mean((y - mean) ** 2, axis=(0, 1, 2))
        y = (y - mean) * lax.rsqrt(var + eps) * g + b
        return jnp.maximum(y, 0.0)

    x = jnp.transpose(x_nchw, (0, 2, 3, 1))
    a = stage(x, p["w1"], p["b1"], p["g1"], p["be1"])
    a = stage(a, p["w2"], p["b2"], p["g2"], p["be2"])
    return jnp.transpose(a, (0, 3, 1, 2))


if __name__ == "__main__":
    key = jax.random.PRNGKey(0)
    k_x, k_p = jax.random.split(key)

    N, in_ch, out_ch, H, W = 2, 4, 8, 16, 16
    x = jax.random.normal(k_x, (N, in_ch, H, W), jnp.float32)  # NCHW (PyTorch)
    params = init_params(k_p, in_ch, out_ch)

    # row_tile=8 forces nb=2 bands so the halo-DMA / edge paths are exercised.
    fwd = jax.jit(functools.partial(double_conv_forward, row_tile=8))
    out = jax.block_until_ready(fwd(x, params))

    assert out.shape == (N, out_ch, H, W), out.shape

    ref_policy = jax.block_until_ready(_ref_forward_policy(x, params))
    ref_f32 = jax.block_until_ready(_ref_forward_f32(x, params))

    err_p = float(jnp.max(jnp.abs(out - ref_policy)))
    err_f = float(jnp.max(jnp.abs(out - ref_f32)))
    # Tight check against the same bf16-operand precision policy.
    assert jnp.allclose(out, ref_policy, atol=5e-3, rtol=5e-3), err_p
    # Looser sanity check against the pure-f32 module semantics.
    assert jnp.allclose(out, ref_f32, atol=1e-1, rtol=1e-1), err_f

    print("KERNEL_OK")
</pallas_src>

<mosaic_0001>
module attributes {stable_mosaic.version = 11 : i64} {
  func.func @_conv3x3_kernel(%arg0: i32, %arg1: i32, %arg2: memref<2x18x24x128xbf16, #tpu.memory_space<any>>, %arg3: memref<1152x128xbf16, #tpu.memory_space<vmem>>, %arg4: memref<1x8x24x128xbf16, #tpu.memory_space<vmem>>, %arg5: memref<1x1x1x128xf32, #tpu.memory_space<vmem>>, %arg6: memref<1x1x1x128xf32, #tpu.memory_space<vmem>>, %arg7: memref<10x24x128xbf16, #tpu.memory_space<vmem>>, %arg8: memref<128x1152xbf16, #tpu.memory_space<vmem>>, %arg9: memref<3x!tpu.dma_semaphore, #tpu.memory_space<semaphore_mem>>) attributes {dimension_semantics = [#tpu.dimension_semantics<parallel>, #tpu.dimension_semantics<arbitrary>], iteration_bounds = array<i64: 2, 2>, scalar_prefetch = 0 : i64, scratch_operands = 3 : i64, tpu.core_type = #tpu.core_type<tc>, window_params = [{}, {pipeline_mode = #tpu.pipeline_mode<synchronous>, transform_indices = @transform_1, window_bounds = array<i64: 1152, 128>}, {transform_indices = @transform_2, window_bounds = array<i64: 1, 8, 24, 128>}, {transform_indices = @transform_3, window_bounds = array<i64: 1, 1, 1, 128>}, {transform_indices = @transform_4, window_bounds = array<i64: 1, 1, 1, 128>}]} {
    %c8_i32 = arith.constant 8 : i32
    %0 = arith.muli %arg1, %c8_i32 : i32
    %1 = tpu.assume_multiple %0, 8 : i32
    %c0_i32 = arith.constant 0 : i32
    %c0_i32_0 = arith.constant 0 : i32
    %c0_i32_1 = arith.constant 0 : i32
    %2 = tpu.memref_slice %arg2[%arg0, %1, %c0_i32_0, %c0_i32_1] : memref<2x18x24x128xbf16, #tpu.memory_space<any>> -> memref<1x10x24x128xbf16, #tpu.memory_space<any>>
    %3 = tpu.memref_squeeze %2 : memref<1x10x24x128xbf16, #tpu.memory_space<any>> -> memref<10x24x128xbf16, #tpu.memory_space<any>>
    %4 = tpu.memref_slice %arg9[%c0_i32] : memref<3x!tpu.dma_semaphore, #tpu.memory_space<semaphore_mem>> -> memref<1x!tpu.dma_semaphore, #tpu.memory_space<semaphore_mem>>
    %5 = tpu.memref_squeeze %4 : memref<1x!tpu.dma_semaphore, #tpu.memory_space<semaphore_mem>> -> memref<!tpu.dma_semaphore, #tpu.memory_space<semaphore_mem>>
    tpu.enqueue_dma source(%3 : memref<10x24x128xbf16, #tpu.memory_space<any>>) target(%arg7 : memref<10x24x128xbf16, #tpu.memory_space<vmem>>) target_semaphore(%5 : memref<!tpu.dma_semaphore, #tpu.memory_space<semaphore_mem>>)
    %c0_i32_2 = arith.constant 0 : i32
    %c0_i32_3 = arith.constant 0 : i32
    %c0_i32_4 = arith.constant 0 : i32
    %6 = tpu.memref_slice %arg2[%arg0, %1, %c0_i32_3, %c0_i32_4] : memref<2x18x24x128xbf16, #tpu.memory_space<any>> -> memref<1x10x24x128xbf16, #tpu.memory_space<any>>
    %7 = tpu.memref_squeeze %6 : memref<1x10x24x128xbf16, #tpu.memory_space<any>> -> memref<10x24x128xbf16, #tpu.memory_space<any>>
    %8 = tpu.memref_slice %arg9[%c0_i32_2] : memref<3x!tpu.dma_semaphore, #tpu.memory_space<semaphore_mem>> -> memref<1x!tpu.dma_semaphore, #tpu.memory_space<semaphore_mem>>
    %9 = tpu.memref_squeeze %8 : memref<1x!tpu.dma_semaphore, #tpu.memory_space<semaphore_mem>> -> memref<!tpu.dma_semaphore, #tpu.memory_space<semaphore_mem>>
    tpu.wait_dma2 semaphore(%9 : memref<!tpu.dma_semaphore, #tpu.memory_space<semaphore_mem>>) src(%7 : memref<10x24x128xbf16, #tpu.memory_space<any>>) dst(%arg7 : memref<10x24x128xbf16, #tpu.memory_space<vmem>>)
    %c0 = arith.constant 0 : index
    %c0_5 = arith.constant 0 : index
    %c0_6 = arith.constant 0 : index
    %10 = vector.load %arg7[%c0, %c0_5, %c0_6] : memref<10x24x128xbf16, #tpu.memory_space<vmem>>, vector<8x16x128xbf16>
    %11 = vector.shape_cast %10 : vector<8x16x128xbf16> to vector<128x128xbf16>
    %c0_7 = arith.constant 0 : index
    %c0_8 = arith.constant 0 : index
    %12 = vector.load %arg8[%c0_7, %c0_8] : memref<128x1152xbf16, #tpu.memory_space<vmem>>, vector<128x128xbf16>
    tpu.vector_store %arg8[%c0_7, %c0_8], %11 {strides = array<i32>} : memref<128x1152xbf16, #tpu.memory_space<vmem>>, vector<128x128xbf16>,
    %c0_9 = arith.constant 0 : index
    %c1 = arith.constant 1 : index
    %c0_10 = arith.constant 0 : index
    %13 = vector.load %arg7[%c0_9, %c1, %c0_10] : memref<10x24x128xbf16, #tpu.memory_space<vmem>>, vector<8x16x128xbf16>
    %14 = vector.shape_cast %13 : vector<8x16x128xbf16> to vector<128x128xbf16>
    %c0_11 = arith.constant 0 : index
    %c128 = arith.constant 128 : index
    %15 = vector.load %arg8[%c0_11, %c128] : memref<128x1152xbf16, #tpu.memory_space<vmem>>, vector<128x128xbf16>
    tpu.vector_store %arg8[%c0_11, %c128], %14 {strides = array<i32>} : memref<128x1152xbf16, #tpu.memory_space<vmem>>, vector<128x128xbf16>,
    %c0_12 = arith.constant 0 : index
    %c2 = arith.constant 2 : index
    %c0_13 = arith.constant 0 : index
    %16 = vector.load %arg7[%c0_12, %c2, %c0_13] : memref<10x24x128xbf16, #tpu.memory_space<vmem>>, vector<8x16x128xbf16>
    %17 = vector.shape_cast %16 : vector<8x16x128xbf16> to vector<128x128xbf16>
    %c0_14 = arith.constant 0 : index
    %c256 = arith.constant 256 : index
    %18 = vector.load %arg8[%c0_14, %c256] : memref<128x1152xbf16, #tpu.memory_space<vmem>>, vector<128x128xbf16>
    tpu.vector_store %arg8[%c0_14, %c256], %17 {strides = array<i32>} : memref<128x1152xbf16, #tpu.memory_space<vmem>>, vector<128x128xbf16>,
    %c1_15 = arith.constant 1 : index
    %c0_16 = arith.constant 0 : index
    %c0_17 = arith.constant 0 : index
    %19 = vector.load %arg7[%c1_15, %c0_16, %c0_17] : memref<10x24x128xbf16, #tpu.memory_space<vmem>>, vector<8x16x128xbf16>
    %20 = vector.shape_cast %19 : vector<8x16x128xbf16> to vector<128x128xbf16>
    %c0_18 = arith.constant 0 : index
    %c384 = arith.constant 384 : index
    %21 = vector.load %arg8[%c0_18, %c384] : memref<128x1152xbf16, #tpu.memory_space<vmem>>, vector<128x128xbf16>
    tpu.vector_store %arg8[%c0_18, %c384], %20 {strides = array<i32>} : memref<128x1152xbf16, #tpu.memory_space<vmem>>, vector<128x128xbf16>,
    %c1_19 = arith.constant 1 : index
    %c1_20 = arith.constant 1 : index
    %c0_21 = arith.constant 0 : index
    %22 = vector.load %arg7[%c1_19, %c1_20, %c0_21] : memref<10x24x128xbf16, #tpu.memory_space<vmem>>, vector<8x16x128xbf16>
    %23 = vector.shape_cast %22 : vector<8x16x128xbf16> to vector<128x128xbf16>
    %c0_22 = arith.constant 0 : index
    %c512 = arith.constant 512 : index
    %24 = vector.load %arg8[%c0_22, %c512] : memref<128x1152xbf16, #tpu.memory_space<vmem>>, vector<128x128xbf16>
    tpu.vector_store %arg8[%c0_22, %c512], %23 {strides = array<i32>} : memref<128x1152xbf16, #tpu.memory_space<vmem>>, vector<128x128xbf16>,
    %c1_23 = arith.constant 1 : index
    %c2_24 = arith.constant 2 : index
    %c0_25 = arith.constant 0 : index
    %25 = vector.load %arg7[%c1_23, %c2_24, %c0_25] : memref<10x24x128xbf16, #tpu.memory_space<vmem>>, vector<8x16x128xbf16>
    %26 = vector.shape_cast %25 : vector<8x16x128xbf16> to vector<128x128xbf16>
    %c0_26 = arith.constant 0 : index
    %c640 = arith.constant 640 : index
    %27 = vector.load %arg8[%c0_26, %c640] : memref<128x1152xbf16, #tpu.memory_space<vmem>>, vector<128x128xbf16>
    tpu.vector_store %arg8[%c0_26, %c640], %26 {strides = array<i32>} : memref<128x1152xbf16, #tpu.memory_space<vmem>>, vector<128x128xbf16>,
    %c2_27 = arith.constant 2 : index
    %c0_28 = arith.constant 0 : index
    %c0_29 = arith.constant 0 : index
    %28 = vector.load %arg7[%c2_27, %c0_28, %c0_29] : memref<10x24x128xbf16, #tpu.memory_space<vmem>>, vector<8x16x128xbf16>
    %29 = vector.shape_cast %28 : vector<8x16x128xbf16> to vector<128x128xbf16>
    %c0_30 = arith.constant 0 : index
    %c768 = arith.constant 768 : index
    %30 = vector.load %arg8[%c0_30, %c768] : memref<128x1152xbf16, #tpu.memory_space<vmem>>, vector<128x128xbf16>
    tpu.vector_store %arg8[%c0_30, %c768], %29 {strides = array<i32>} : memref<128x1152xbf16, #tpu.memory_space<vmem>>, vector<128x128xbf16>,
    %c2_31 = arith.constant 2 : index
    %c1_32 = arith.constant 1 : index
    %c0_33 = arith.constant 0 : index
    %31 = vector.load %arg7[%c2_31, %c1_32, %c0_33] : memref<10x24x128xbf16, #tpu.memory_space<vmem>>, vector<8x16x128xbf16>
    %32 = vector.shape_cast %31 : vector<8x16x128xbf16> to vector<128x128xbf16>
    %c0_34 = arith.constant 0 : index
    %c896 = arith.constant 896 : index
    %33 = vector.load %arg8[%c0_34, %c896] : memref<128x1152xbf16, #tpu.memory_space<vmem>>, vector<128x128xbf16>
    tpu.vector_store %arg8[%c0_34, %c896], %32 {strides = array<i32>} : memref<128x1152xbf16, #tpu.memory_space<vmem>>, vector<128x128xbf16>,
    %c2_35 = arith.constant 2 : index
    %c2_36 = arith.constant 2 : index
    %c0_37 = arith.constant 0 : index
    %34 = vector.load %arg7[%c2_35, %c2_36, %c0_37] : memref<10x24x128xbf16, #tpu.memory_space<vmem>>, vector<8x16x128xbf16>
    %35 = vector.shape_cast %34 : vector<8x16x128xbf16> to vector<128x128xbf16>
    %c0_38 = arith.constant 0 : index
    %c1024 = arith.constant 1024 : index
    %36 = vector.load %arg8[%c0_38, %c1024] : memref<128x1152xbf16, #tpu.memory_space<vmem>>, vector<128x128xbf16>
    tpu.vector_store %arg8[%c0_38, %c1024], %35 {strides = array<i32>} : memref<128x1152xbf16, #tpu.memory_space<vmem>>, vector<128x128xbf16>,
    %c0_39 = arith.constant 0 : index
    %c0_40 = arith.constant 0 : index
    %37 = vector.load %arg8[%c0_39, %c0_40] : memref<128x1152xbf16, #tpu.memory_space<vmem>>, vector<128x1152xbf16>
    %c0_41 = arith.constant 0 : index
    %c0_42 = arith.constant 0 : index
    %38 = vector.load %arg3[%c0_41, %c0_42] : memref<1152x128xbf16, #tpu.memory_space<vmem>>, vector<1152x128xbf16>
    %cst = arith.constant dense<0.000000e+00> : vector<128x128xf32>
    %39 = tpu.matmul %37, %38, %cst {dimension_numbers = #tpu.dot_dimension_numbers<[1], [0], [0], [1], [0, 0, 1, 1], [], []>} : vector<128x1152xbf16>, vector<1152x128xbf16>, vector<128x128xf32> -> vector<128x128xf32>
    %40 = arith.truncf %39 : vector<128x128xf32> to vector<128x128xbf16>
    %41 = vector.shape_cast %40 : vector<128x128xbf16> to vector<8x16x128xbf16>
    %42 = vector.shape_cast %41 : vector<8x16x128xbf16> to vector<1x8x16x128xbf16>
    %c0_43 = arith.constant 0 : index
    %c0_44 = arith.constant 0 : index
    %c1_45 = arith.constant 1 : index
    %c0_46 = arith.constant 0 : index
    %43 = vector.load %arg4[%c0_43, %c0_44, %c1_45, %c0_46] : memref<1x8x24x128xbf16, #tpu.memory_space<vmem>>, vector<1x8x16x128xbf16>
    tpu.vector_store %arg4[%c0_43, %c0_44, %c1_45, %c0_46], %42 {strides = array<i32>} : memref<1x8x24x128xbf16, #tpu.memory_space<vmem>>, vector<1x8x16x128xbf16>,
    %cst_47 = arith.constant 0.000000e+00 : bf16
    %44 = vector.broadcast %cst_47 : bf16 to vector<1x8x1x128xbf16>
    %c0_48 = arith.constant 0 : index
    %c0_49 = arith.constant 0 : index
    %c0_50 = arith.constant 0 : index
    %c0_51 = arith.constant 0 : index
    %45 = vector.load %arg4[%c0_48, %c0_49, %c0_50, %c0_51] : memref<1x8x24x128xbf16, #tpu.memory_space<vmem>>, vector<1x8x1x128xbf16>
    tpu.vector_store %arg4[%c0_48, %c0_49, %c0_50, %c0_51], %44 {strides = array<i32>} : memref<1x8x24x128xbf16, #tpu.memory_space<vmem>>, vector<1x8x1x128xbf16>,
    %cst_52 = arith.constant 0.000000e+00 : bf16
    %46 = vector.broadcast %cst_52 : bf16 to vector<1x8x7x128xbf16>
    %c0_53 = arith.constant 0 : index
    %c0_54 = arith.constant 0 : index
    %c17 = arith.constant 17 : index
    %c0_55 = arith.constant 0 : index
    %47 = vector.load %arg4[%c0_53, %c0_54, %c17, %c0_55] : memref<1x8x24x128xbf16, #tpu.memory_space<vmem>>, vector<1x8x7x128xbf16>
    tpu.vector_store %arg4[%c0_53, %c0_54, %c17, %c0_55], %46 {strides = array<i32>} : memref<1x8x24x128xbf16, #tpu.memory_space<vmem>>, vector<1x8x7x128xbf16>,
    %cst_56 = arith.constant dense<0.000000e+00> : vector<128xf32>
    %48 = vector.multi_reduction <add>, %39, %cst_56 [0] : vector<128x128xf32> to vector<128xf32>
    %49 = vector.shape_cast %48 : vector<128xf32> to vector<1x128xf32>
    %cst_57 = arith.constant 7.812500e-03 : f32
    %50 = vector.broadcast %cst_57 : f32 to vector<1x128xf32>
    %51 = arith.mulf %49, %50 : vector<1x128xf32>
    %52 = vector.broadcast %51 : vector<1x128xf32> to vector<128x128xf32>
    %53 = arith.subf %39, %52 : vector<128x128xf32>
    %54 = arith.mulf %53, %53 : vector<128x128xf32>
    %cst_58 = arith.constant dense<0.000000e+00> : vector<128xf32>
    %55 = vector.multi_reduction <add>, %54, %cst_58 [0] : vector<128x128xf32> to vector<128xf32>
    %56 = vector.shape_cast %55 : vector<128xf32> to vector<1x128xf32>
    %57 = vector.shape_cast %49 : vector<1x128xf32> to vector<1x1x1x128xf32>
    %c0_59 = arith.constant 0 : index
    %c0_60 = arith.constant 0 : index
    %c0_61 = arith.constant 0 : index
    %c0_62 = arith.constant 0 : index
    %58 = vector.load %arg5[%c0_59, %c0_60, %c0_61, %c0_62] : memref<1x1x1x128xf32, #tpu.memory_space<vmem>>, vector<1x1x1x128xf32>
    tpu.vector_store %arg5[%c0_59, %c0_60, %c0_61, %c0_62], %57 {strides = array<i32>} : memref<1x1x1x128xf32, #tpu.memory_space<vmem>>, vector<1x1x1x128xf32>,
    %59 = vector.shape_cast %56 : vector<1x128xf32> to vector<1x1x1x128xf32>
    %c0_63 = arith.constant 0 : index
    %c0_64 = arith.constant 0 : index
    %c0_65 = arith.constant 0 : index
    %c0_66 = arith.constant 0 : index
    %60 = vector.load %arg6[%c0_63, %c0_64, %c0_65, %c0_66] : memref<1x1x1x128xf32, #tpu.memory_space<vmem>>, vector<1x1x1x128xf32>
    tpu.vector_store %arg6[%c0_63, %c0_64, %c0_65, %c0_66], %59 {strides = array<i32>} : memref<1x1x1x128xf32, #tpu.memory_space<vmem>>, vector<1x1x1x128xf32>,
    return
  }
  func.func @transform_1(%arg0: i32, %arg1: i32) -> (i32, i32) {
    %c0_i32 = arith.constant 0 : i32
    %c0_i32_0 = arith.constant 0 : i32
    %c0_i32_1 = arith.constant 0 : i32
    return %c0_i32, %c0_i32_0 : i32, i32
  }
  func.func @transform_2(%arg0: i32, %arg1: i32) -> (i32, i32, i32, i32) {
    %c0_i32 = arith.constant 0 : i32
    %c0_i32_0 = arith.constant 0 : i32
    %c0_i32_1 = arith.constant 0 : i32
    return %arg0, %arg1, %c0_i32, %c0_i32_0 : i32, i32, i32, i32
  }
  func.func @transform_3(%arg0: i32, %arg1: i32) -> (i32, i32, i32, i32) {
    %c0_i32 = arith.constant 0 : i32
    %c0_i32_0 = arith.constant 0 : i32
    %c0_i32_1 = arith.constant 0 : i32
    return %arg0, %arg1, %c0_i32, %c0_i32_0 : i32, i32, i32, i32
  }
  func.func @transform_4(%arg0: i32, %arg1: i32) -> (i32, i32, i32, i32) {
    %c0_i32 = arith.constant 0 : i32
    %c0_i32_0 = arith.constant 0 : i32
    %c0_i32_1 = arith.constant 0 : i32
    return %arg0, %arg1, %c0_i32, %c0_i32_0 : i32, i32, i32, i32
  }
}

module attributes {stable_mosaic.version = 11 : i64} {
  func.func @_bn_relu_kernel(%arg0: i32, %arg1: i32, %arg2: memref<1x8x16x128xbf16, #tpu.memory_space<vmem>>, %arg3: memref<1x128xf32, #tpu.memory_space<vmem>>, %arg4: memref<1x128xf32, #tpu.memory_space<vmem>>, %arg5: memref<1x8x16x128xf32, #tpu.memory_space<vmem>>) attributes {dimension_semantics = [#tpu.dimension_semantics<parallel>, #tpu.dimension_semantics<arbitrary>], iteration_bounds = array<i64: 2, 2>, scalar_prefetch = 0 : i64, scratch_operands = 0 : i64, tpu.core_type = #tpu.core_type<tc>, window_params = [{transform_indices = @transform_0, window_bounds = array<i64: 1, 8, 16, 128>}, {pipeline_mode = #tpu.pipeline_mode<synchronous>, transform_indices = @transform_1, window_bounds = array<i64: 1, 128>}, {pipeline_mode = #tpu.pipeline_mode<synchronous>, transform_indices = @transform_2, window_bounds = array<i64: 1, 128>}, {transform_indices = @transform_3, window_bounds = array<i64: 1, 8, 16, 128>}]} {
    %c0 = arith.constant 0 : index
    %c0_0 = arith.constant 0 : index
    %c0_1 = arith.constant 0 : index
    %c0_2 = arith.constant 0 : index
    %0 = vector.load %arg2[%c0, %c0_0, %c0_1, %c0_2] : memref<1x8x16x128xbf16, #tpu.memory_space<vmem>>, vector<1x8x16x128xbf16>
    %1 = arith.extf %0 : vector<1x8x16x128xbf16> to vector<1x8x16x128xf32>
    %c0_3 = arith.constant 0 : index
    %c0_4 = arith.constant 0 : index
    %2 = vector.load %arg3[%c0_3, %c0_4] : memref<1x128xf32, #tpu.memory_space<vmem>>, vector<1x128xf32>
    %3 = vector.shape_cast %2 : vector<1x128xf32> to vector<1x1x1x128xf32>
    %c0_5 = arith.constant 0 : index
    %c0_6 = arith.constant 0 : index
    %4 = vector.load %arg4[%c0_5, %c0_6] : memref<1x128xf32, #tpu.memory_space<vmem>>, vector<1x128xf32>
    %5 = vector.shape_cast %4 : vector<1x128xf32> to vector<1x1x1x128xf32>
    %6 = vector.broadcast %3 : vector<1x1x1x128xf32> to vector<1x8x16x128xf32>
    %7 = arith.mulf %1, %6 : vector<1x8x16x128xf32>
    %8 = vector.broadcast %5 : vector<1x1x1x128xf32> to vector<1x8x16x128xf32>
    %9 = arith.addf %7, %8 : vector<1x8x16x128xf32>
    %cst = arith.constant 0.000000e+00 : f32
    %10 = vector.broadcast %cst : f32 to vector<1x8x16x128xf32>
    %11 = arith.maximumf %9, %10 : vector<1x8x16x128xf32>
    %c0_7 = arith.constant 0 : index
    %c0_8 = arith.constant 0 : index
    %c0_9 = arith.constant 0 : index
    %c0_10 = arith.constant 0 : index
    %12 = vector.load %arg5[%c0_7, %c0_8, %c0_9, %c0_10] : memref<1x8x16x128xf32, #tpu.memory_space<vmem>>, vector<1x8x16x128xf32>
    tpu.vector_store %arg5[%c0_7, %c0_8, %c0_9, %c0_10], %11 {strides = array<i32>} : memref<1x8x16x128xf32, #tpu.memory_space<vmem>>, vector<1x8x16x128xf32>,
    return
  }
  func.func @transform_0(%arg0: i32, %arg1: i32) -> (i32, i32, i32, i32) {
    %c0_i32 = arith.constant 0 : i32
    %c0_i32_0 = arith.constant 0 : i32
    %c0_i32_1 = arith.constant 0 : i32
    return %arg0, %arg1, %c0_i32, %c0_i32_0 : i32, i32, i32, i32
  }
  func.func @transform_1(%arg0: i32, %arg1: i32) -> (i32, i32) {
    %c0_i32 = arith.constant 0 : i32
    %c0_i32_0 = arith.constant 0 : i32
    %c0_i32_1 = arith.constant 0 : i32
    return %c0_i32, %c0_i32_0 : i32, i32
  }
  func.func @transform_2(%arg0: i32, %arg1: i32) -> (i32, i32) {
    %c0_i32 = arith.constant 0 : i32
    %c0_i32_0 = arith.constant 0 : i32
    %c0_i32_1 = arith.constant 0 : i32
    return %c0_i32, %c0_i32_0 : i32, i32
  }
  func.func @transform_3(%arg0: i32, %arg1: i32) -> (i32, i32, i32, i32) {
    %c0_i32 = arith.constant 0 : i32
    %c0_i32_0 = arith.constant 0 : i32
    %c0_i32_1 = arith.constant 0 : i32
    return %arg0, %arg1, %c0_i32, %c0_i32_0 : i32, i32, i32, i32
  }
}

module attributes {stable_mosaic.version = 11 : i64} {
  func.func @_conv3x3_kernel(%arg0: i32, %arg1: i32, %arg2: memref<2x16x24x128xbf16, #tpu.memory_space<any>>, %arg3: memref<1152x128xbf16, #tpu.memory_space<vmem>>, %arg4: memref<1x128xf32, #tpu.memory_space<vmem>>, %arg5: memref<1x128xf32, #tpu.memory_space<vmem>>, %arg6: memref<1x8x16x128xbf16, #tpu.memory_space<vmem>>, %arg7: memref<1x1x1x128xf32, #tpu.memory_space<vmem>>, %arg8: memref<1x1x1x128xf32, #tpu.memory_space<vmem>>, %arg9: memref<10x24x128xbf16, #tpu.memory_space<vmem>>, %arg10: memref<128x1152xbf16, #tpu.memory_space<vmem>>, %arg11: memref<3x!tpu.dma_semaphore, #tpu.memory_space<semaphore_mem>>) attributes {dimension_semantics = [#tpu.dimension_semantics<parallel>, #tpu.dimension_semantics<arbitrary>], iteration_bounds = array<i64: 2, 2>, scalar_prefetch = 0 : i64, scratch_operands = 3 : i64, tpu.core_type = #tpu.core_type<tc>, window_params = [{}, {pipeline_mode = #tpu.pipeline_mode<synchronous>, transform_indices = @transform_1, window_bounds = array<i64: 1152, 128>}, {pipeline_mode = #tpu.pipeline_mode<synchronous>, transform_indices = @transform_2, window_bounds = array<i64: 1, 128>}, {pipeline_mode = #tpu.pipeline_mode<synchronous>, transform_indices = @transform_3, window_bounds = array<i64: 1, 128>}, {transform_indices = @transform_4, window_bounds = array<i64: 1, 8, 16, 128>}, {transform_indices = @transform_5, window_bounds = array<i64: 1, 1, 1, 128>}, {transform_indices = @transform_6, window_bounds = array<i64: 1, 1, 1, 128>}]} {
    %c8_i32 = arith.constant 8 : i32
    %0 = arith.muli %arg1, %c8_i32 : i32
    %1 = tpu.assume_multiple %0, 8 : i32
    %c0_i32 = arith.constant 0 : i32
    %c0_i32_0 = arith.constant 0 : i32
    %c0_i32_1 = arith.constant 0 : i32
    %2 = tpu.memref_slice %arg2[%arg0, %1, %c0_i32_0, %c0_i32_1] : memref<2x16x24x128xbf16, #tpu.memory_space<any>> -> memref<1x8x24x128xbf16, #tpu.memory_space<any>>
    %3 = tpu.memref_squeeze %2 : memref<1x8x24x128xbf16, #tpu.memory_space<any>> -> memref<8x24x128xbf16, #tpu.memory_space<any>>
    %c1_i32 = arith.constant 1 : i32
    %c0_i32_2 = arith.constant 0 : i32
    %c0_i32_3 = arith.constant 0 : i32
    %4 = tpu.memref_slice %arg9[%c1_i32, %c0_i32_2, %c0_i32_3] : memref<10x24x128xbf16, #tpu.memory_space<vmem>> -> memref<8x24x128xbf16, #tpu.memory_space<vmem>>
    %5 = tpu.memref_slice %arg11[%c0_i32] : memref<3x!tpu.dma_semaphore, #tpu.memory_space<semaphore_mem>> -> memref<1x!tpu.dma_semaphore, #tpu.memory_space<semaphore_mem>>
    %6 = tpu.memref_squeeze %5 : memref<1x!tpu.dma_semaphore, #tpu.memory_space<semaphore_mem>> -> memref<!tpu.dma_semaphore, #tpu.memory_space<semaphore_mem>>
    tpu.enqueue_dma source(%3 : memref<8x24x128xbf16, #tpu.memory_space<any>>) target(%4 : memref<8x24x128xbf16, #tpu.memory_space<vmem>>) target_semaphore(%6 : memref<!tpu.dma_semaphore, #tpu.memory_space<semaphore_mem>>)
    %c0_i32_4 = arith.constant 0 : i32
    %7 = arith.cmpi sgt, %arg1, %c0_i32_4 : i32
    %8 = arith.extui %7 : i1 to i32
    %c0_i32_5 = arith.constant 0 : i32
    %9 = arith.cmpi ne, %8, %c0_i32_5 : i32
    scf.if %9 {
      %c1_i32_88 = arith.constant 1 : i32
      %88 = arith.subi %1, %c1_i32_88 : i32
      %c1_i32_89 = arith.constant 1 : i32
      %c0_i32_90 = arith.constant 0 : i32
      %c0_i32_91 = arith.constant 0 : i32
      %89 = tpu.memref_slice %arg2[%arg0, %88, %c0_i32_90, %c0_i32_91] : memref<2x16x24x128xbf16, #tpu.memory_space<any>> -> memref<1x1x24x128xbf16, #tpu.memory_space<any>>
      %90 = tpu.memref_squeeze %89 : memref<1x1x24x128xbf16, #tpu.memory_space<any>> -> memref<1x24x128xbf16, #tpu.memory_space<any>>
      %c0_i32_92 = arith.constant 0 : i32
      %c0_i32_93 = arith.constant 0 : i32
      %c0_i32_94 = arith.constant 0 : i32
      %91 = tpu.memref_slice %arg9[%c0_i32_92, %c0_i32_93, %c0_i32_94] : memref<10x24x128xbf16, #tpu.memory_space<vmem>> -> memref<1x24x128xbf16, #tpu.memory_space<vmem>>
      %92 = tpu.memref_slice %arg11[%c1_i32_89] : memref<3x!tpu.dma_semaphore, #tpu.memory_space<semaphore_mem>> -> memref<1x!tpu.dma_semaphore, #tpu.memory_space<semaphore_mem>>
      %93 = tpu.memref_squeeze %92 : memref<1x!tpu.dma_semaphore, #tpu.memory_space<semaphore_mem>> -> memref<!tpu.dma_semaphore, #tpu.memory_space<semaphore_mem>>
      tpu.enqueue_dma source(%90 : memref<1x24x128xbf16, #tpu.memory_space<any>>) target(%91 : memref<1x24x128xbf16, #tpu.memory_space<vmem>>) target_semaphore(%93 : memref<!tpu.dma_semaphore, #tpu.memory_space<semaphore_mem>>)
      %c1_i32_95 = arith.constant 1 : i32
      %c0_i32_96 = arith.constant 0 : i32
      %c0_i32_97 = arith.constant 0 : i32
      %94 = tpu.memref_slice %arg2[%arg0, %88, %c0_i32_96, %c0_i32_97] : memref<2x16x24x128xbf16, #tpu.memory_space<any>> -> memref<1x1x24x128xbf16, #tpu.memory_space<any>>
      %95 = tpu.memref_squeeze %94 : memref<1x1x24x128xbf16, #tpu.memory_space<any>> -> memref<1x24x128xbf16, #tpu.memory_space<any>>
      %c0_i32_98 = arith.constant 0 : i32
      %c0_i32_99 = arith.constant 0 : i32
      %c0_i32_100 = arith.constant 0 : i32
      %96 = tpu.memref_slice %arg9[%c0_i32_98, %c0_i32_99, %c0_i32_100] : memref<10x24x128xbf16, #tpu.memory_space<vmem>> -> memref<1x24x128xbf16, #tpu.memory_space<vmem>>
      %97 = tpu.memref_slice %arg11[%c1_i32_95] : memref<3x!tpu.dma_semaphore, #tpu.memory_space<semaphore_mem>> -> memref<1x!tpu.dma_semaphore, #tpu.memory_space<semaphore_mem>>
      %98 = tpu.memref_squeeze %97 : memref<1x!tpu.dma_semaphore, #tpu.memory_space<semaphore_mem>> -> memref<!tpu.dma_semaphore, #tpu.memory_space<semaphore_mem>>
      tpu.wait_dma2 semaphore(%98 : memref<!tpu.dma_semaphore, #tpu.memory_space<semaphore_mem>>) src(%95 : memref<1x24x128xbf16, #tpu.memory_space<any>>) dst(%96 : memref<1x24x128xbf16, #tpu.memory_space<vmem>>)
    } else {
    }
    %c1_i32_6 = arith.constant 1 : i32
    %10 = arith.cmpi slt, %arg1, %c1_i32_6 : i32
    %11 = arith.extui %10 : i1 to i32
    %c0_i32_7 = arith.constant 0 : i32
    %12 = arith.cmpi ne, %11, %c0_i32_7 : i32
    scf.if %12 {
      %c8_i32_88 = arith.constant 8 : i32
      %88 = arith.addi %1, %c8_i32_88 : i32
      %c2_i32 = arith.constant 2 : i32
      %c0_i32_89 = arith.constant 0 : i32
      %c0_i32_90 = arith.constant 0 : i32
      %89 = tpu.memref_slice %arg2[%arg0, %88, %c0_i32_89, %c0_i32_90] : memref<2x16x24x128xbf16, #tpu.memory_space<any>> -> memref<1x1x24x128xbf16, #tpu.memory_space<any>>
      %90 = tpu.memref_squeeze %89 : memref<1x1x24x128xbf16, #tpu.memory_space<any>> -> memref<1x24x128xbf16, #tpu.memory_space<any>>
      %c9_i32 = arith.constant 9 : i32
      %c0_i32_91 = arith.constant 0 : i32
      %c0_i32_92 = arith.constant 0 : i32
      %91 = tpu.memref_slice %arg9[%c9_i32, %c0_i32_91, %c0_i32_92] : memref<10x24x128xbf16, #tpu.memory_space<vmem>> -> memref<1x24x128xbf16, #tpu.memory_space<vmem>>
      %92 = tpu.memref_slice %arg11[%c2_i32] : memref<3x!tpu.dma_semaphore, #tpu.memory_space<semaphore_mem>> -> memref<1x!tpu.dma_semaphore, #tpu.memory_space<semaphore_mem>>
      %93 = tpu.memref_squeeze %92 : memref<1x!tpu.dma_semaphore, #tpu.memory_space<semaphore_mem>> -> memref<!tpu.dma_semaphore, #tpu.memory_space<semaphore_mem>>
      tpu.enqueue_dma source(%90 : memref<1x24x128xbf16, #tpu.memory_space<any>>) target(%91 : memref<1x24x128xbf16, #tpu.memory_space<vmem>>) target_semaphore(%93 : memref<!tpu.dma_semaphore, #tpu.memory_space<semaphore_mem>>)
      %c2_i32_93 = arith.constant 2 : i32
      %c0_i32_94 = arith.constant 0 : i32
      %c0_i32_95 = arith.constant 0 : i32
      %94 = tpu.memref_slice %arg2[%arg0, %88, %c0_i32_94, %c0_i32_95] : memref<2x16x24x128xbf16, #tpu.memory_space<any>> -> memref<1x1x24x128xbf16, #tpu.memory_space<any>>
      %95 = tpu.memref_squeeze %94 : memref<1x1x24x128xbf16, #tpu.memory_space<any>> -> memref<1x24x128xbf16, #tpu.memory_space<any>>
      %c9_i32_96 = arith.constant 9 : i32
      %c0_i32_97 = arith.constant 0 : i32
      %c0_i32_98 = arith.constant 0 : i32
      %96 = tpu.memref_slice %arg9[%c9_i32_96, %c0_i32_97, %c0_i32_98] : memref<10x24x128xbf16, #tpu.memory_space<vmem>> -> memref<1x24x128xbf16, #tpu.memory_space<vmem>>
      %97 = tpu.memref_slice %arg11[%c2_i32_93] : memref<3x!tpu.dma_semaphore, #tpu.memory_space<semaphore_mem>> -> memref<1x!tpu.dma_semaphore, #tpu.memory_space<semaphore_mem>>
      %98 = tpu.memref_squeeze %97 : memref<1x!tpu.dma_semaphore, #tpu.memory_space<semaphore_mem>> -> memref<!tpu.dma_semaphore, #tpu.memory_space<semaphore_mem>>
      tpu.wait_dma2 semaphore(%98 : memref<!tpu.dma_semaphore, #tpu.memory_space<semaphore_mem>>) src(%95 : memref<1x24x128xbf16, #tpu.memory_space<any>>) dst(%96 : memref<1x24x128xbf16, #tpu.memory_space<vmem>>)
    } else {
    }
    %c0_i32_8 = arith.constant 0 : i32
    %c0_i32_9 = arith.constant 0 : i32
    %c0_i32_10 = arith.constant 0 : i32
    %13 = tpu.memref_slice %arg2[%arg0, %1, %c0_i32_9, %c0_i32_10] : memref<2x16x24x128xbf16, #tpu.memory_space<any>> -> memref<1x8x24x128xbf16, #tpu.memory_space<any>>
    %14 = tpu.memref_squeeze %13 : memref<1x8x24x128xbf16, #tpu.memory_space<any>> -> memref<8x24x128xbf16, #tpu.memory_space<any>>
    %c1_i32_11 = arith.constant 1 : i32
    %c0_i32_12 = arith.constant 0 : i32
    %c0_i32_13 = arith.constant 0 : i32
    %15 = tpu.memref_slice %arg9[%c1_i32_11, %c0_i32_12, %c0_i32_13] : memref<10x24x128xbf16, #tpu.memory_space<vmem>> -> memref<8x24x128xbf16, #tpu.memory_space<vmem>>
    %16 = tpu.memref_slice %arg11[%c0_i32_8] : memref<3x!tpu.dma_semaphore, #tpu.memory_space<semaphore_mem>> -> memref<1x!tpu.dma_semaphore, #tpu.memory_space<semaphore_mem>>
    %17 = tpu.memref_squeeze %16 : memref<1x!tpu.dma_semaphore, #tpu.memory_space<semaphore_mem>> -> memref<!tpu.dma_semaphore, #tpu.memory_space<semaphore_mem>>
    tpu.wait_dma2 semaphore(%17 : memref<!tpu.dma_semaphore, #tpu.memory_space<semaphore_mem>>) src(%14 : memref<8x24x128xbf16, #tpu.memory_space<any>>) dst(%15 : memref<8x24x128xbf16, #tpu.memory_space<vmem>>)
    %c0 = arith.constant 0 : index
    %c0_14 = arith.constant 0 : index
    %18 = vector.load %arg4[%c0, %c0_14] : memref<1x128xf32, #tpu.memory_space<vmem>>, vector<1x128xf32>
    %19 = vector.shape_cast %18 : vector<1x128xf32> to vector<1x1x128xf32>
    %c0_15 = arith.constant 0 : index
    %c0_16 = arith.constant 0 : index
    %20 = vector.load %arg5[%c0_15, %c0_16] : memref<1x128xf32, #tpu.memory_space<vmem>>, vector<1x128xf32>
    %21 = vector.shape_cast %20 : vector<1x128xf32> to vector<1x1x128xf32>
    %c0_17 = arith.constant 0 : index
    %c0_18 = arith.constant 0 : index
    %c0_19 = arith.constant 0 : index
    %22 = vector.load %arg9[%c0_17, %c0_18, %c0_19] : memref<10x24x128xbf16, #tpu.memory_space<vmem>>, vector<10x24x128xbf16>
    %23 = arith.extf %22 : vector<10x24x128xbf16> to vector<10x24x128xf32>
    %24 = vector.broadcast %19 : vector<1x1x128xf32> to vector<10x24x128xf32>
    %25 = arith.mulf %23, %24 : vector<10x24x128xf32>
    %26 = vector.broadcast %21 : vector<1x1x128xf32> to vector<10x24x128xf32>
    %27 = arith.addf %25, %26 : vector<10x24x128xf32>
    %cst = arith.constant 0.000000e+00 : f32
    %28 = vector.broadcast %cst : f32 to vector<10x24x128xf32>
    %29 = arith.maximumf %27, %28 : vector<10x24x128xf32>
    %30 = arith.truncf %29 : vector<10x24x128xf32> to vector<10x24x128xbf16>
    %c0_20 = arith.constant 0 : index
    %c0_21 = arith.constant 0 : index
    %c0_22 = arith.constant 0 : index
    %31 = vector.load %arg9[%c0_20, %c0_21, %c0_22] : memref<10x24x128xbf16, #tpu.memory_space<vmem>>, vector<10x24x128xbf16>
    tpu.vector_store %arg9[%c0_20, %c0_21, %c0_22], %30 {strides = array<i32>} : memref<10x24x128xbf16, #tpu.memory_space<vmem>>, vector<10x24x128xbf16>,
    %cst_23 = arith.constant 0.000000e+00 : bf16
    %32 = vector.broadcast %cst_23 : bf16 to vector<10x1x128xbf16>
    %c0_24 = arith.constant 0 : index
    %c0_25 = arith.constant 0 : index
    %c0_26 = arith.constant 0 : index
    %33 = vector.load %arg9[%c0_24, %c0_25, %c0_26] : memref<10x24x128xbf16, #tpu.memory_space<vmem>>, vector<10x1x128xbf16>
    tpu.vector_store %arg9[%c0_24, %c0_25, %c0_26], %32 {strides = array<i32>} : memref<10x24x128xbf16, #tpu.memory_space<vmem>>, vector<10x1x128xbf16>,
    %c0_27 = arith.constant 0 : index
    %c17 = arith.constant 17 : index
    %c0_28 = arith.constant 0 : index
    %34 = vector.load %arg9[%c0_27, %c17, %c0_28] : memref<10x24x128xbf16, #tpu.memory_space<vmem>>, vector<10x1x128xbf16>
    tpu.vector_store %arg9[%c0_27, %c17, %c0_28], %32 {strides = array<i32>} : memref<10x24x128xbf16, #tpu.memory_space<vmem>>, vector<10x1x128xbf16>,
    %c0_i32_29 = arith.constant 0 : i32
    %35 = arith.cmpi eq, %arg1, %c0_i32_29 : i32
    %36 = arith.extui %35 : i1 to i32
    %c0_i32_30 = arith.constant 0 : i32
    %37 = arith.cmpi ne, %36, %c0_i32_30 : i32
    scf.if %37 {
      %cst_88 = arith.constant 0.000000e+00 : bf16
      %88 = vector.broadcast %cst_88 : bf16 to vector<1x24x128xbf16>
      %c0_89 = arith.constant 0 : index
      %c0_90 = arith.constant 0 : index
      %c0_91 = arith.constant 0 : index
      %89 = vector.load %arg9[%c0_89, %c0_90, %c0_91] : memref<10x24x128xbf16, #tpu.memory_space<vmem>>, vector<1x24x128xbf16>
      tpu.vector_store %arg9[%c0_89, %c0_90, %c0_91], %88 {strides = array<i32>} : memref<10x24x128xbf16, #tpu.memory_space<vmem>>, vector<1x24x128xbf16>,
    } else {
    }
    %c1_i32_31 = arith.constant 1 : i32
    %38 = arith.cmpi eq, %arg1, %c1_i32_31 : i32
    %39 = arith.extui %38 : i1 to i32
    %c0_i32_32 = arith.constant 0 : i32
    %40 = arith.cmpi ne, %39, %c0_i32_32 : i32
    scf.if %40 {
      %cst_88 = arith.constant 0.000000e+00 : bf16
      %88 = vector.broadcast %cst_88 : bf16 to vector<1x24x128xbf16>
      %c9 = arith.constant 9 : index
      %c0_89 = arith.constant 0 : index
      %c0_90 = arith.constant 0 : index
      %89 = vector.load %arg9[%c9, %c0_89, %c0_90] : memref<10x24x128xbf16, #tpu.memory_space<vmem>>, vector<1x24x128xbf16>
      tpu.vector_store %arg9[%c9, %c0_89, %c0_90], %88 {strides = array<i32>} : memref<10x24x128xbf16, #tpu.memory_space<vmem>>, vector<1x24x128xbf16>,
    } else {
    }
    %c0_33 = arith.constant 0 : index
    %c0_34 = arith.constant 0 : index
    %c0_35 = arith.constant 0 : index
    %41 = vector.load %arg9[%c0_33, %c0_34, %c0_35] : memref<10x24x128xbf16, #tpu.memory_space<vmem>>, vector<8x16x128xbf16>
    %42 = vector.shape_cast %41 : vector<8x16x128xbf16> to vector<128x128xbf16>
    %c0_36 = arith.constant 0 : index
    %c0_37 = arith.constant 0 : index
    %43 = vector.load %arg10[%c0_36, %c0_37] : memref<128x1152xbf16, #tpu.memory_space<vmem>>, vector<128x128xbf16>
    tpu.vector_store %arg10[%c0_36, %c0_37], %42 {strides = array<i32>} : memref<128x1152xbf16, #tpu.memory_space<vmem>>, vector<128x128xbf16>,
    %c0_38 = arith.constant 0 : index
    %c1 = arith.constant 1 : index
    %c0_39 = arith.constant 0 : index
    %44 = vector.load %arg9[%c0_38, %c1, %c0_39] : memref<10x24x128xbf16, #tpu.memory_space<vmem>>, vector<8x16x128xbf16>
    %45 = vector.shape_cast %44 : vector<8x16x128xbf16> to vector<128x128xbf16>
    %c0_40 = arith.constant 0 : index
    %c128 = arith.constant 128 : index
    %46 = vector.load %arg10[%c0_40, %c128] : memref<128x1152xbf16, #tpu.memory_space<vmem>>, vector<128x128xbf16>
    tpu.vector_store %arg10[%c0_40, %c128], %45 {strides = array<i32>} : memref<128x1152xbf16, #tpu.memory_space<vmem>>, vector<128x128xbf16>,
    %c0_41 = arith.constant 0 : index
    %c2 = arith.constant 2 : index
    %c0_42 = arith.constant 0 : index
    %47 = vector.load %arg9[%c0_41, %c2, %c0_42] : memref<10x24x128xbf16, #tpu.memory_space<vmem>>, vector<8x16x128xbf16>
    %48 = vector.shape_cast %47 : vector<8x16x128xbf16> to vector<128x128xbf16>
    %c0_43 = arith.constant 0 : index
    %c256 = arith.constant 256 : index
    %49 = vector.load %arg10[%c0_43, %c256] : memref<128x1152xbf16, #tpu.memory_space<vmem>>, vector<128x128xbf16>
    tpu.vector_store %arg10[%c0_43, %c256], %48 {strides = array<i32>} : memref<128x1152xbf16, #tpu.memory_space<vmem>>, vector<128x128xbf16>,
    %c1_44 = arith.constant 1 : index
    %c0_45 = arith.constant 0 : index
    %c0_46 = arith.constant 0 : index
    %50 = vector.load %arg9[%c1_44, %c0_45, %c0_46] : memref<10x24x128xbf16, #tpu.memory_space<vmem>>, vector<8x16x128xbf16>
    %51 = vector.shape_cast %50 : vector<8x16x128xbf16> to vector<128x128xbf16>
    %c0_47 = arith.constant 0 : index
    %c384 = arith.constant 384 : index
    %52 = vector.load %arg10[%c0_47, %c384] : memref<128x1152xbf16, #tpu.memory_space<vmem>>, vector<128x128xbf16>
    tpu.vector_store %arg10[%c0_47, %c384], %51 {strides = array<i32>} : memref<128x1152xbf16, #tpu.memory_space<vmem>>, vector<128x128xbf16>,
    %c1_48 = arith.constant 1 : index
    %c1_49 = arith.constant 1 : index
    %c0_50 = arith.constant 0 : index
    %53 = vector.load %arg9[%c1_48, %c1_49, %c0_50] : memref<10x24x128xbf16, #tpu.memory_space<vmem>>, vector<8x16x128xbf16>
    %54 = vector.shape_cast %53 : vector<8x16x128xbf16> to vector<128x128xbf16>
    %c0_51 = arith.constant 0 : index
    %c512 = arith.constant 512 : index
    %55 = vector.load %arg10[%c0_51, %c512] : memref<128x1152xbf16, #tpu.memory_space<vmem>>, vector<128x128xbf16>
    tpu.vector_store %arg10[%c0_51, %c512], %54 {strides = array<i32>} : memref<128x1152xbf16, #tpu.memory_space<vmem>>, vector<128x128xbf16>,
    %c1_52 = arith.constant 1 : index
    %c2_53 = arith.constant 2 : index
    %c0_54 = arith.constant 0 : index
    %56 = vector.load %arg9[%c1_52, %c2_53, %c0_54] : memref<10x24x128xbf16, #tpu.memory_space<vmem>>, vector<8x16x128xbf16>
    %57 = vector.shape_cast %56 : vector<8x16x128xbf16> to vector<128x128xbf16>
    %c0_55 = arith.constant 0 : index
    %c640 = arith.constant 640 : index
    %58 = vector.load %arg10[%c0_55, %c640] : memref<128x1152xbf16, #tpu.memory_space<vmem>>, vector<128x128xbf16>
    tpu.vector_store %arg10[%c0_55, %c640], %57 {strides = array<i32>} : memref<128x1152xbf16, #tpu.memory_space<vmem>>, vector<128x128xbf16>,
    %c2_56 = arith.constant 2 : index
    %c0_57 = arith.constant 0 : index
    %c0_58 = arith.constant 0 : index
    %59 = vector.load %arg9[%c2_56, %c0_57, %c0_58] : memref<10x24x128xbf16, #tpu.memory_space<vmem>>, vector<8x16x128xbf16>
    %60 = vector.shape_cast %59 : vector<8x16x128xbf16> to vector<128x128xbf16>
    %c0_59 = arith.constant 0 : index
    %c768 = arith.constant 768 : index
    %61 = vector.load %arg10[%c0_59, %c768] : memref<128x1152xbf16, #tpu.memory_space<vmem>>, vector<128x128xbf16>
    tpu.vector_store %arg10[%c0_59, %c768], %60 {strides = array<i32>} : memref<128x1152xbf16, #tpu.memory_space<vmem>>, vector<128x128xbf16>,
    %c2_60 = arith.constant 2 : index
    %c1_61 = arith.constant 1 : index
    %c0_62 = arith.constant 0 : index
    %62 = vector.load %arg9[%c2_60, %c1_61, %c0_62] : memref<10x24x128xbf16, #tpu.memory_space<vmem>>, vector<8x16x128xbf16>
    %63 = vector.shape_cast %62 : vector<8x16x128xbf16> to vector<128x128xbf16>
    %c0_63 = arith.constant 0 : index
    %c896 = arith.constant 896 : index
    %64 = vector.load %arg10[%c0_63, %c896] : memref<128x1152xbf16, #tpu.memory_space<vmem>>, vector<128x128xbf16>
    tpu.vector_store %arg10[%c0_63, %c896], %63 {strides = array<i32>} : memref<128x1152xbf16, #tpu.memory_space<vmem>>, vector<128x128xbf16>,
    %c2_64 = arith.constant 2 : index
    %c2_65 = arith.constant 2 : index
    %c0_66 = arith.constant 0 : index
    %65 = vector.load %arg9[%c2_64, %c2_65, %c0_66] : memref<10x24x128xbf16, #tpu.memory_space<vmem>>, vector<8x16x128xbf16>
    %66 = vector.shape_cast %65 : vector<8x16x128xbf16> to vector<128x128xbf16>
    %c0_67 = arith.constant 0 : index
    %c1024 = arith.constant 1024 : index
    %67 = vector.load %arg10[%c0_67, %c1024] : memref<128x1152xbf16, #tpu.memory_space<vmem>>, vector<128x128xbf16>
    tpu.vector_store %arg10[%c0_67, %c1024], %66 {strides = array<i32>} : memref<128x1152xbf16, #tpu.memory_space<vmem>>, vector<128x128xbf16>,
    %c0_68 = arith.constant 0 : index
    %c0_69 = arith.constant 0 : index
    %68 = vector.load %arg10[%c0_68, %c0_69] : memref<128x1152xbf16, #tpu.memory_space<vmem>>, vector<128x1152xbf16>
    %c0_70 = arith.constant 0 : index
    %c0_71 = arith.constant 0 : index
    %69 = vector.load %arg3[%c0_70, %c0_71] : memref<1152x128xbf16, #tpu.memory_space<vmem>>, vector<1152x128xbf16>
    %cst_72 = arith.constant dense<0.000000e+00> : vector<128x128xf32>
    %70 = tpu.matmul %68, %69, %cst_72 {dimension_numbers = #tpu.dot_dimension_numbers<[1], [0], [0], [1], [0, 0, 1, 1], [], []>} : vector<128x1152xbf16>, vector<1152x128xbf16>, vector<128x128xf32> -> vector<128x128xf32>
    %71 = arith.truncf %70 : vector<128x128xf32> to vector<128x128xbf16>
    %72 = vector.shape_cast %71 : vector<128x128xbf16> to vector<8x16x128xbf16>
    %73 = vector.shape_cast %72 : vector<8x16x128xbf16> to vector<1x8x16x128xbf16>
    %c0_73 = arith.constant 0 : index
    %c0_74 = arith.constant 0 : index
    %c0_75 = arith.constant 0 : index
    %c0_76 = arith.constant 0 : index
    %74 = vector.load %arg6[%c0_73, %c0_74, %c0_75, %c0_76] : memref<1x8x16x128xbf16, #tpu.memory_space<vmem>>, vector<1x8x16x128xbf16>
    tpu.vector_store %arg6[%c0_73, %c0_74, %c0_75, %c0_76], %73 {strides = array<i32>} : memref<1x8x16x128xbf16, #tpu.memory_space<vmem>>, vector<1x8x16x128xbf16>,
    %cst_77 = arith.constant dense<0.000000e+00> : vector<128xf32>
    %75 = vector.multi_reduction <add>, %70, %cst_77 [0] : vector<128x128xf32> to vector<128xf32>
    %76 = vector.shape_cast %75 : vector<128xf32> to vector<1x128xf32>
    %cst_78 = arith.constant 7.812500e-03 : f32
    %77 = vector.broadcast %cst_78 : f32 to vector<1x128xf32>
    %78 = arith.mulf %76, %77 : vector<1x128xf32>
    %79 = vector.broadcast %78 : vector<1x128xf32> to vector<128x128xf32>
    %80 = arith.subf %70, %79 : vector<128x128xf32>
    %81 = arith.mulf %80, %80 : vector<128x128xf32>
    %cst_79 = arith.constant dense<0.000000e+00> : vector<128xf32>
    %82 = vector.multi_reduction <add>, %81, %cst_79 [0] : vector<128x128xf32> to vector<128xf32>
    %83 = vector.shape_cast %82 : vector<128xf32> to vector<1x128xf32>
    %84 = vector.shape_cast %76 : vector<1x128xf32> to vector<1x1x1x128xf32>
    %c0_80 = arith.constant 0 : index
    %c0_81 = arith.constant 0 : index
    %c0_82 = arith.constant 0 : index
    %c0_83 = arith.constant 0 : index
    %85 = vector.load %arg7[%c0_80, %c0_81, %c0_82, %c0_83] : memref<1x1x1x128xf32, #tpu.memory_space<vmem>>, vector<1x1x1x128xf32>
    tpu.vector_store %arg7[%c0_80, %c0_81, %c0_82, %c0_83], %84 {strides = array<i32>} : memref<1x1x1x128xf32, #tpu.memory_space<vmem>>, vector<1x1x1x128xf32>,
    %86 = vector.shape_cast %83 : vector<1x128xf32> to vector<1x1x1x128xf32>
    %c0_84 = arith.constant 0 : index
    %c0_85 = arith.constant 0 : index
    %c0_86 = arith.constant 0 : index
    %c0_87 = arith.constant 0 : index
    %87 = vector.load %arg8[%c0_84, %c0_85, %c0_86, %c0_87] : memref<1x1x1x128xf32, #tpu.memory_space<vmem>>, vector<1x1x1x128xf32>
    tpu.vector_store %arg8[%c0_84, %c0_85, %c0_86, %c0_87], %86 {strides = array<i32>} : memref<1x1x1x128xf32, #tpu.memory_space<vmem>>, vector<1x1x1x128xf32>,
    return
  }
  func.func @transform_1(%arg0: i32, %arg1: i32) -> (i32, i32) {
    %c0_i32 = arith.constant 0 : i32
    %c0_i32_0 = arith.constant 0 : i32
    %c0_i32_1 = arith.constant 0 : i32
    return %c0_i32, %c0_i32_0 : i32, i32
  }
  func.func @transform_2(%arg0: i32, %arg1: i32) -> (i32, i32) {
    %c0_i32 = arith.constant 0 : i32
    %c0_i32_0 = arith.constant 0 : i32
    %c0_i32_1 = arith.constant 0 : i32
    return %c0_i32, %c0_i32_0 : i32, i32
  }
  func.func @transform_3(%arg0: i32, %arg1: i32) -> (i32, i32) {
    %c0_i32 = arith.constant 0 : i32
    %c0_i32_0 = arith.constant 0 : i32
    %c0_i32_1 = arith.constant 0 : i32
    return %c0_i32, %c0_i32_0 : i32, i32
  }
  func.func @transform_4(%arg0: i32, %arg1: i32) -> (i32, i32, i32, i32) {
    %c0_i32 = arith.constant 0 : i32
    %c0_i32_0 = arith.constant 0 : i32
    %c0_i32_1 = arith.constant 0 : i32
    return %arg0, %arg1, %c0_i32, %c0_i32_0 : i32, i32, i32, i32
  }
  func.func @transform_5(%arg0: i32, %arg1: i32) -> (i32, i32, i32, i32) {
    %c0_i32 = arith.constant 0 : i32
    %c0_i32_0 = arith.constant 0 : i32
    %c0_i32_1 = arith.constant 0 : i32
    return %arg0, %arg1, %c0_i32, %c0_i32_0 : i32, i32, i32, i32
  }
  func.func @transform_6(%arg0: i32, %arg1: i32) -> (i32, i32, i32, i32) {
    %c0_i32 = arith.constant 0 : i32
    %c0_i32_0 = arith.constant 0 : i32
    %c0_i32_1 = arith.constant 0 : i32
    return %arg0, %arg1, %c0_i32, %c0_i32_0 : i32, i32, i32, i32
  }
}

</mosaic_0001>

<llo_original>
// kernel: double_conv_forward.5
$region0: #{double_conv_forward.5}
  #allocation0 [shape = 'u32[]', space=smem, size = 0x4, offset = 0x4, fixed_abs, tag = 'smem constant byte address 0x4 - core index']
  #allocation1 [shape = 'u32[144,128]{1,0:T(1,128)}', space=vmem, size = 0x12000, scoped, tag = 'internal scratch']
  %s0 = inlined_call_operand.vmem [shape: bf16[2,16,16,128], index: 0, kind: input, shape index: {}]
  %s1 = inlined_call_operand.vmem [shape: f32[1,128], index: 1, kind: input, shape index: {}]
  %s2 = inlined_call_operand.vmem [shape: f32[1,128], index: 2, kind: input, shape index: {}]
  %s3 = inlined_call_operand.vmem [shape: f32[2,16,16,128], index: 3, kind: output, shape index: {}]
  %s4 = sld [smem:[#allocation0]]
  $region45: #{double_conv_forward.5} parent=0
    _
  %s6 = ssub.s32 1, %s4
  %s7 = scalar_select 0, %s6, %s4
  loop: start=0, step=1, limit=6
  $region2: #{double_conv_forward.5} parent=0 // loop_pre_header
    _
  $region3: #{double_conv_forward.5} parent=0 // loop_header
    %s9 = sphi 0, %s13
    %p10 = scmp.ge.s32.totalorder %s9, 6
    %s16 = sphi 0, %s28
    %s17 = sphi 0, %s24
    %s18 = sphi 0, %s16
    %s19 = sphi 0, %s17
    %s20 = sphi 0, %s18
    %s21 = sphi 0, %s19
    %s33 = sphi 0, %s35
    %s36 = sphi 0, %s33
    %s37 = sphi 0, %s36
    %s53 = sphi 0, %s37
    %s57 = sphi 0, %s57
    %s59 = sphi 0, %s57
    %s60 = sphi 0, %s59
    %s74 = sphi 0, %s60
    %s78 = sphi 0, %s78
    %s80 = sphi 0, %s78
    %s81 = sphi 0, %s80
    %s95 = sphi 0, %s81
    %s103 = sphi 0, %s105
    %s106 = sphi 0, %s103
    %s107 = sphi 0, %s106
    %s123 = sphi 0, %s107
  $region4: #{double_conv_forward.5} parent=0 // loop_header_branch
    %12 = sbr.rel (%p10) target = $region8
  $region5: #{double_conv_forward.5} parent=0 // loop_body
    %s14 = ssub.s32 %s9, 1
    %s15 = ssub.s32 %s9, 2
    %s22 = sadd.s32 1, %s17
    %p23 = scmp.ge.s32.totalorder %s22, 2
    %s24 = scalar_select %p23, 0, %s22
    %s25 = sadd.s32 1, %s16
    %s26 = scalar_select %p23, %s25, %s16
    %p27 = scmp.ge.s32.totalorder %s26, 2
    %s28 = scalar_select %p27, 0, %s26
    %s29 = ssub.s32 %s16, %s28
    %s30 = ssub.s32 %s17, %s24
    %s31 = sor.u32 %s29, %s30
    %p32 = scmp.eq.s32.totalorder %s31, 0
    %s34 = sadd.s32 %s33, 1
    %s35 = scalar_select %p32, %s33, %s34
    %p38 = pneg %p32
    %p39 = scmp.eq.s32.totalorder %s9, 3
    %p40 = por %p38, %p39
    %p41 = scmp.ne.s32.totalorder %s33, %s36
    %p42 = scmp.eq.s32.totalorder %s9, 0
    %p43 = por %p41, %p42
    %p44 = scmp.ne.s32.totalorder %s33, %s36
    %p45 = scmp.eq.s32.totalorder %s14, 3
    %p46 = por %p44, %p45
    %p47 = scmp.ne.s32.totalorder %s36, %s37
    %p48 = scmp.eq.s32.totalorder %s14, 0
    %p49 = por %p47, %p48
    %p50 = scmp.ne.s32.totalorder %s36, %s37
    %p51 = scmp.eq.s32.totalorder %s15, 3
    %p52 = por %p50, %p51
    %p54 = scmp.ne.s32.totalorder %s37, %s53
    %p55 = scmp.eq.s32.totalorder %s15, 0
    %p56 = por %p54, %p55
    %s58 = sadd.s32 %s57, 1
    %p61 = scmp.eq.s32.totalorder %s9, 3
    %p62 = scmp.ne.s32.totalorder %s57, %s59
    %p63 = scmp.eq.s32.totalorder %s9, 0
    %p64 = por %p62, %p63
    %p65 = scmp.ne.s32.totalorder %s57, %s59
    %p66 = scmp.eq.s32.totalorder %s14, 3
    %p67 = por %p65, %p66
    %p68 = scmp.ne.s32.totalorder %s59, %s60
    %p69 = scmp.eq.s32.totalorder %s14, 0
    %p70 = por %p68, %p69
    %p71 = scmp.ne.s32.totalorder %s59, %s60
    %p72 = scmp.eq.s32.totalorder %s15, 3
    %p73 = por %p71, %p72
    %p75 = scmp.ne.s32.totalorder %s60, %s74
    %p76 = scmp.eq.s32.totalorder %s15, 0
    %p77 = por %p75, %p76
    %s79 = sadd.s32 %s78, 1
    %p82 = scmp.eq.s32.totalorder %s9, 3
    %p83 = scmp.ne.s32.totalorder %s78, %s80
    %p84 = scmp.eq.s32.totalorder %s9, 0
    %p85 = por %p83, %p84
    %p86 = scmp.ne.s32.totalorder %s78, %s80
    %p87 = scmp.eq.s32.totalorder %s14, 3
    %p88 = por %p86, %p87
    %p89 = scmp.ne.s32.totalorder %s80, %s81
    %p90 = scmp.eq.s32.totalorder %s14, 0
    %p91 = por %p89, %p90
    %p92 = scmp.ne.s32.totalorder %s80, %s81
    %p93 = scmp.eq.s32.totalorder %s15, 3
    %p94 = por %p92, %p93
    %p96 = scmp.ne.s32.totalorder %s81, %s95
    %p97 = scmp.eq.s32.totalorder %s15, 0
    %p98 = por %p96, %p97
    %s99 = ssub.s32 %s16, %s28
    %s100 = ssub.s32 %s17, %s24
    %s101 = sor.u32 %s99, %s100
    %p102 = scmp.eq.s32.totalorder %s101, 0
    %s104 = sadd.s32 %s103, 1
    %s105 = scalar_select %p102, %s103, %s104
    %p108 = pneg %p102
    %p109 = scmp.eq.s32.totalorder %s9, 3
    %p110 = por %p108, %p109
    %p111 = scmp.ne.s32.totalorder %s103, %s106
    %p112 = scmp.eq.s32.totalorder %s9, 0
    %p113 = por %p111, %p112
    %p114 = scmp.ne.s32.totalorder %s103, %s106
    %p115 = scmp.eq.s32.totalorder %s14, 3
    %p116 = por %p114, %p115
    %p117 = scmp.ne.s32.totalorder %s106, %s107
    %p118 = scmp.eq.s32.totalorder %s14, 0
    %p119 = por %p117, %p118
    %p120 = scmp.ne.s32.totalorder %s106, %s107
    %p121 = scmp.eq.s32.totalorder %s15, 3
    %p122 = por %p120, %p121
    %p124 = scmp.ne.s32.totalorder %s107, %s123
    %p125 = scmp.eq.s32.totalorder %s15, 0
    %p126 = por %p124, %p125
    %p127 = scmp.le.s32.totalorder 1, %s9
    %p128 = scmp.lt.s32.totalorder %s9, 5
    %p129 = pnand %p127, %p128
    %p130 = pneg %p129
    // Predicated region
    $region9: #{double_conv_forward.5} parent=5 // pred_check
      _
    $region10: #{double_conv_forward.5} parent=5 // pred_check_branch
      %132 = sbr.rel (%p129) target = $region12
    $region11: #{double_conv_forward.5} parent=5 // pred_region
      %s133 = ssub.s32 %s9, 1
      // Predicated region
      $region13: #{double_conv_forward.5} parent=11 // pred_check
        %p134 = pneg %p70
      $region14: #{double_conv_forward.5} parent=11 // pred_check_branch
        %136 = sbr.rel (%p134) target = $region16
      $region15: #{double_conv_forward.5} parent=11 // pred_region
        _
      $region16: #{double_conv_forward.5} parent=11 // pred_fallthru
        _
      // Predicated region
      $region17: #{double_conv_forward.5} parent=11 // pred_check
        %p137 = pneg %p91
      $region18: #{double_conv_forward.5} parent=11 // pred_check_branch
        %139 = sbr.rel (%p137) target = $region20
      $region19: #{double_conv_forward.5} parent=11 // pred_region
        _
      $region20: #{double_conv_forward.5} parent=11 // pred_fallthru
        _
    $region12: #{double_conv_forward.5} parent=5 // pred_fallthru
      _
    %p140 = scmp.lt.s32.totalorder %s9, 4
    // Predicated region
    $region21: #{double_conv_forward.5} parent=5 // pred_check
      %p141 = pneg %p140
    $region22: #{double_conv_forward.5} parent=5 // pred_check_branch
      %143 = sbr.rel (%p141) target = $region24
    $region23: #{double_conv_forward.5} parent=5 // pred_region
      // Predicated region
      $region25: #{double_conv_forward.5} parent=23 // pred_check
        %p144 = pneg %p43
      $region26: #{double_conv_forward.5} parent=23 // pred_check_branch
        %146 = sbr.rel (%p144) target = $region28
      $region27: #{double_conv_forward.5} parent=23 // pred_region
        %s147 = smul.u32 8, %s17
        %p148 = scmp.lt.s32.totalorder %s16, 1
        %s149 = scalar_select %p148, %s16, 1
        %p150 = scmp.lt.s32.totalorder %s147, 15
        %s151 = scalar_select %p150, %s147, 15
        %s152 = smul.addr %s151, 2
        %s153 = smul.addr %s149, 32
        %s154 = sadd.s32 %s152, %s153
        %s155 = smul.addr %s154, 4
        %s156 = scalar_lea.vmem %s0, %s155
        %s157 = smul.u32 8, %s17
      $region28: #{double_conv_forward.5} parent=23 // pred_fallthru
        _
    $region24: #{double_conv_forward.5} parent=5 // pred_fallthru
      _
    %p158 = scmp.le.s32.totalorder 1, %s9
    %p159 = scmp.lt.s32.totalorder %s9, 5
    %p160 = pnand %p158, %p159
    %p161 = pneg %p160
    // Predicated region
    $region29: #{double_conv_forward.5} parent=5 // pred_check
      _
    $region30: #{double_conv_forward.5} parent=5 // pred_check_branch
      %163 = sbr.rel (%p160) target = $region32
    $region31: #{double_conv_forward.5} parent=5 // pred_region
      %s164 = ssub.s32 %s9, 1
      %s165 = smul.u32 8, %s19
      %p166 = scmp.lt.s32.totalorder %s18, 1
      %s167 = scalar_select %p166, %s18, 1
      %p168 = scmp.lt.s32.totalorder %s165, 15
      %s169 = scalar_select %p168, %s165, 15
      %s170 = smul.addr %s169, 2
      %s171 = smul.addr %s167, 32
      %s172 = sadd.s32 %s170, %s171
      %s173 = smul.addr %s172, 4
      %s174 = scalar_lea.vmem %s0, %s173
      %p175 = pneg %p49
      %p176 = pneg %p46
      %p177 = pneg %p70
      %p178 = pneg %p67
      %p179 = pneg %p91
      %p180 = pneg %p88
      %p181 = pneg %p119
      %p182 = pneg %p116
      %s183 = smul.u32 8, %s19
      %p184 = scmp.lt.s32.totalorder %s18, 1
      %s185 = scalar_select %p184, %s18, 1
      %p186 = scmp.lt.s32.totalorder %s183, 15
      %s187 = scalar_select %p186, %s183, 15
      %s188 = smul.addr %s187, 2
      %s189 = smul.addr %s185, 32
      %s190 = sadd.s32 %s188, %s189
      %s191 = smul.addr %s190, 8
      %s192 = scalar_lea.vmem %s3, %s191
      %s193 = smul.u32 8, %s19
      %p194 = scmp.lt.s32.totalorder %s18, 1
      %s195 = scalar_select %p194, %s18, 1
      %p196 = scmp.lt.s32.totalorder %s193, 15
      %s197 = scalar_select %p196, %s193, 15
      %s198 = smul.addr %s197, 2
      %s199 = smul.addr %s195, 32
      %s200 = sadd.s32 %s198, %s199
      %s201 = smul.addr %s200, 4
      %s202 = scalar_lea.vmem %s0, %s201
      %s203 = smul.u32 8, %s19
      %s204 = smul.u32 8, %s19
      %p205 = scmp.lt.s32.totalorder %s18, 1
      %s206 = scalar_select %p205, %s18, 1
      %p207 = scmp.lt.s32.totalorder %s204, 15
      %s208 = scalar_select %p207, %s204, 15
      %s209 = smul.addr %s208, 2
      %s210 = smul.addr %s206, 32
      %s211 = sadd.s32 %s209, %s210
      %s212 = smul.addr %s211, 8
      %s213 = scalar_lea.vmem %s3, %s212
      %s214 = smul.u32 8, %s19
      %v215 = vld [vmem:[%s202] sm:$0xf]
      %v216 = vld [vmem:[%s202 + $0x4] sm:$0xf]
      %v217 = vld [vmem:[%s202 + $0x8] sm:$0xf]
      %v218 = vld [vmem:[%s202 + $0xc] sm:$0xf]
      %v219 = vld [vmem:[%s202 + $0x10] sm:$0xf]
      %v220 = vld [vmem:[%s202 + $0x14] sm:$0xf]
      %v221 = vld [vmem:[%s202 + $0x18] sm:$0xf]
      %v222 = vld [vmem:[%s202 + $0x1c] sm:$0xf]
      %v223 = vld [vmem:[%s202 + $0x20] sm:$0xf]
      %v224 = vld [vmem:[%s202 + $0x24] sm:$0xf]
      %v225 = vld [vmem:[%s202 + $0x28] sm:$0xf]
      %v226 = vld [vmem:[%s202 + $0x2c] sm:$0xf]
      %v227 = vld [vmem:[%s202 + $0x30] sm:$0xf]
      %v228 = vld [vmem:[%s202 + $0x34] sm:$0xf]
      %v229 = vld [vmem:[%s202 + $0x38] sm:$0xf]
      %v230 = vld [vmem:[%s202 + $0x3c] sm:$0xf]
      %v231 = vunpack.c.l.bf16 %v215
      %v232 = vunpack.c.l.bf16 %v216
      %v233 = vunpack.c.l.bf16 %v217
      %v234 = vunpack.c.l.bf16 %v218
      %v235 = vunpack.c.l.bf16 %v219
      %v236 = vunpack.c.l.bf16 %v220
      %v237 = vunpack.c.l.bf16 %v221
      %v238 = vunpack.c.l.bf16 %v222
      %v239 = vunpack.c.l.bf16 %v223
      %v240 = vunpack.c.l.bf16 %v224
      %v241 = vunpack.c.l.bf16 %v225
      %v242 = vunpack.c.l.bf16 %v226
      %v243 = vunpack.c.l.bf16 %v227
      %v244 = vunpack.c.l.bf16 %v228
      %v245 = vunpack.c.l.bf16 %v229
      %v246 = vunpack.c.l.bf16 %v230
      %v247 = vld [vmem:[%s1] sm:$0x1]
      %v248 = vld [vmem:[%s2] sm:$0x1]
      %v250 = vlaneseq
      %v251 = vshrl.u32 %v250, 7
      %v252 = vsub.s32 0, %v251
      %v253 = vrot.slane %v247, %v252
      %v255 = vmul.f32 %v231, %v253
      %v256 = vmul.f32 %v232, %v253
      %v257 = vmul.f32 %v233, %v253
      %v258 = vmul.f32 %v234, %v253
      %v259 = vmul.f32 %v235, %v253
      %v260 = vmul.f32 %v236, %v253
      %v261 = vmul.f32 %v237, %v253
      %v262 = vmul.f32 %v238, %v253
      %v263 = vmul.f32 %v239, %v253
      %v264 = vmul.f32 %v240, %v253
      %v265 = vmul.f32 %v241, %v253
      %v266 = vmul.f32 %v242, %v253
      %v267 = vmul.f32 %v243, %v253
      %v268 = vmul.f32 %v244, %v253
      %v269 = vmul.f32 %v245, %v253
      %v270 = vmul.f32 %v246, %v253
      %v272 = vlaneseq
      %v273 = vshrl.u32 %v272, 7
      %v274 = vsub.s32 0, %v273
      %v275 = vrot.slane %v248, %v274
      %v277 = vadd.f32 %v255, %v275
      %v278 = vadd.f32 %v256, %v275
      %v279 = vadd.f32 %v257, %v275
      %v280 = vadd.f32 %v258, %v275
      %v281 = vadd.f32 %v259, %v275
      %v282 = vadd.f32 %v260, %v275
      %v283 = vadd.f32 %v261, %v275
      %v284 = vadd.f32 %v262, %v275
      %v285 = vadd.f32 %v263, %v275
      %v286 = vadd.f32 %v264, %v275
      %v287 = vadd.f32 %v265, %v275
      %v288 = vadd.f32 %v266, %v275
      %v289 = vadd.f32 %v267, %v275
      %v290 = vadd.f32 %v268, %v275
      %v291 = vadd.f32 %v269, %v275
      %v292 = vadd.f32 %v270, %v275
      %v293 = vmax.f32 %v277, 0.0
      %v294 = vmax.f32 %v278, 0.0
      %v295 = vmax.f32 %v279, 0.0
      %v296 = vmax.f32 %v280, 0.0
      %v297 = vmax.f32 %v281, 0.0
      %v298 = vmax.f32 %v282, 0.0
      %v299 = vmax.f32 %v283, 0.0
      %v300 = vmax.f32 %v284, 0.0
      %v301 = vmax.f32 %v285, 0.0
      %v302 = vmax.f32 %v286, 0.0
      %v303 = vmax.f32 %v287, 0.0
      %v304 = vmax.f32 %v288, 0.0
      %v305 = vmax.f32 %v289, 0.0
      %v306 = vmax.f32 %v290, 0.0
      %v307 = vmax.f32 %v291, 0.0
      %v308 = vmax.f32 %v292, 0.0
      %309 = vst [vmem:[%s213] sm:$0xff] %v293
      %310 = vst [vmem:[%s213 + $0x8] sm:$0xff] %v294
      %311 = vst [vmem:[%s213 + $0x10] sm:$0xff] %v295
      %312 = vst [vmem:[%s213 + $0x18] sm:$0xff] %v296
      %313 = vst [vmem:[%s213 + $0x20] sm:$0xff] %v297
      %314 = vst [vmem:[%s213 + $0x28] sm:$0xff] %v298
      %315 = vst [vmem:[%s213 + $0x30] sm:$0xff] %v299
      %316 = vst [vmem:[%s213 + $0x38] sm:$0xff] %v300
      %317 = vst [vmem:[%s213 + $0x40] sm:$0xff] %v301
      %318 = vst [vmem:[%s213 + $0x48] sm:$0xff] %v302
      %319 = vst [vmem:[%s213 + $0x50] sm:$0xff] %v303
      %320 = vst [vmem:[%s213 + $0x58] sm:$0xff] %v304
      %321 = vst [vmem:[%s213 + $0x60] sm:$0xff] %v305
      %322 = vst [vmem:[%s213 + $0x68] sm:$0xff] %v306
      %323 = vst [vmem:[%s213 + $0x70] sm:$0xff] %v307
      %324 = vst [vmem:[%s213 + $0x78] sm:$0xff] %v308
      %s325 = smul.u32 8, %s19
      %p326 = scmp.lt.s32.totalorder %s18, 1
      %s327 = scalar_select %p326, %s18, 1
      %p328 = scmp.lt.s32.totalorder %s325, 15
      %s329 = scalar_select %p328, %s325, 15
      %s330 = smul.addr %s329, 2
      %s331 = smul.addr %s327, 32
      %s332 = sadd.s32 %s330, %s331
      %s333 = smul.addr %s332, 8
      %s334 = scalar_lea.vmem %s3, %s333
      // Predicated region
      $region33: #{double_conv_forward.5} parent=31 // pred_check
        %p335 = pneg %p116
      $region34: #{double_conv_forward.5} parent=31 // pred_check_branch
        %337 = sbr.rel (%p335) target = $region36
      $region35: #{double_conv_forward.5} parent=31 // pred_region
        %s338 = smul.u32 8, %s19
      $region36: #{double_conv_forward.5} parent=31 // pred_fallthru
        _
    $region32: #{double_conv_forward.5} parent=5 // pred_fallthru
      _
    %p339 = scmp.le.s32.totalorder 2, %s9
    // Predicated region
    $region37: #{double_conv_forward.5} parent=5 // pred_check
      %p340 = pneg %p339
    $region38: #{double_conv_forward.5} parent=5 // pred_check_branch
      %342 = sbr.rel (%p340) target = $region40
    $region39: #{double_conv_forward.5} parent=5 // pred_region
      %s343 = ssub.s32 %s9, 2
      // Predicated region
      $region41: #{double_conv_forward.5} parent=39 // pred_check
        %p344 = pneg %p122
      $region42: #{double_conv_forward.5} parent=39 // pred_check_branch
        %346 = sbr.rel (%p344) target = $region44
      $region43: #{double_conv_forward.5} parent=39 // pred_region
        %s347 = smul.u32 8, %s21
        %p348 = scmp.lt.s32.totalorder %s20, 1
        %s349 = scalar_select %p348, %s20, 1
        %p350 = scmp.lt.s32.totalorder %s347, 15
        %s351 = scalar_select %p350, %s347, 15
        %s352 = smul.addr %s351, 2
        %s353 = smul.addr %s349, 32
        %s354 = sadd.s32 %s352, %s353
        %s355 = smul.addr %s354, 8
        %s356 = scalar_lea.vmem %s3, %s355
      $region44: #{double_conv_forward.5} parent=39 // pred_fallthru
        _
    $region40: #{double_conv_forward.5} parent=5 // pred_fallthru
      _
  $region6: #{double_conv_forward.5} parent=0 // loop_footer
    %s13 = sadd.s32 1, %s9
  $region7: #{double_conv_forward.5} parent=0 // loop_footer_branch
    %8 = sbr.rel target = $region3
  $region8: #{double_conv_forward.5} parent=0 // loop_exit
    _

// kernel: double_conv_forward.3
$region0: #{double_conv_forward.3}
  #allocation0 [shape = 'u32[]', space=smem, size = 0x4, offset = 0x4, fixed_abs, tag = 'smem constant byte address 0x4 - core index']
  #allocation1 [shape = 'u32[144,128]{1,0:T(1,128)}', space=vmem, size = 0x12000, scoped, tag = 'internal scratch']
  #allocation2 [shape = 'bf16[10,24,128]{2,1,0:T(8,128)(2,1)}', space=vmem, size = 0xf000, scoped, tag = 'scratch operand']
  #allocation3 [shape = 'bf16[128,1152]{1,0:T(8,128)(2,1)}', space=vmem, size = 0x48000, scoped, tag = 'scratch operand']
  #allocation4 [shape = 's32[3]{0}', space=sflag, size = 0xc, scoped, tag = 'scratch operand']
  #allocation5 [shape = 's32[]', space=sflag, size = 0x4, offset = 0, fixed_abs, tag = 'sflag constant byte address 0x0 - dummy sync flag']
  %s0 = inlined_call_operand.vmem [shape: bf16[2,18,24,128], index: 0, kind: input, shape index: {}]
  %s1 = inlined_call_operand.vmem [shape: bf16[1152,128], index: 1, kind: input, shape index: {}]
  %s2 = inlined_call_operand.vmem [shape: bf16[2,16,24,128], index: 2, kind: output, shape index: {0}]
  %s3 = inlined_call_operand.vmem [shape: f32[2,2,1,128], index: 3, kind: output, shape index: {1}]
  %s4 = inlined_call_operand.vmem [shape: f32[2,2,1,128], index: 4, kind: output, shape index: {2}]
  %5 = xla_tuple %s2, %s3, %s4
  %s6 = sld [smem:[#allocation0]]
  $region87: #{double_conv_forward.3} parent=0
    _
  %s8 = ssub.s32 1, %s6
  %s9 = scalar_select 0, %s8, %s6
  loop: start=0, step=1, limit=6
  $region2: #{double_conv_forward.3} parent=0 // loop_pre_header
    _
  $region3: #{double_conv_forward.3} parent=0 // loop_header
    %s11 = sphi 0, %s15
    %p12 = scmp.ge.s32.totalorder %s11, 6
    %s18 = sphi 0, %s30
    %s19 = sphi 0, %s26
    %s20 = sphi 0, %s18
    %s21 = sphi 0, %s19
    %s22 = sphi 0, %s20
    %s23 = sphi 0, %s21
    %s31 = sphi 0, %s31
    %s33 = sphi 0, %s31
    %s34 = sphi 0, %s33
    %s48 = sphi 0, %s34
    %s56 = sphi 0, %s58
    %s59 = sphi 0, %s56
    %s60 = sphi 0, %s59
    %s76 = sphi 0, %s60
    %s84 = sphi 0, %s86
    %s87 = sphi 0, %s84
    %s88 = sphi 0, %s87
    %s104 = sphi 0, %s88
    %s112 = sphi 0, %s114
    %s115 = sphi 0, %s112
    %s116 = sphi 0, %s115
    %s132 = sphi 0, %s116
  $region4: #{double_conv_forward.3} parent=0 // loop_header_branch
    %14 = sbr.rel (%p12) target = $region8
  $region5: #{double_conv_forward.3} parent=0 // loop_body
    %s16 = ssub.s32 %s11, 1
    %s17 = ssub.s32 %s11, 2
    %s24 = sadd.s32 1, %s19
    %p25 = scmp.ge.s32.totalorder %s24, 2
    %s26 = scalar_select %p25, 0, %s24
    %s27 = sadd.s32 1, %s18
    %s28 = scalar_select %p25, %s27, %s18
    %p29 = scmp.ge.s32.totalorder %s28, 2
    %s30 = scalar_select %p29, 0, %s28
    %s32 = sadd.s32 %s31, 1
    %p35 = scmp.eq.s32.totalorder %s11, 3
    %p36 = scmp.ne.s32.totalorder %s31, %s33
    %p37 = scmp.eq.s32.totalorder %s11, 0
    %p38 = por %p36, %p37
    %p39 = scmp.ne.s32.totalorder %s31, %s33
    %p40 = scmp.eq.s32.totalorder %s16, 3
    %p41 = por %p39, %p40
    %p42 = scmp.ne.s32.totalorder %s33, %s34
    %p43 = scmp.eq.s32.totalorder %s16, 0
    %p44 = por %p42, %p43
    %p45 = scmp.ne.s32.totalorder %s33, %s34
    %p46 = scmp.eq.s32.totalorder %s17, 3
    %p47 = por %p45, %p46
    %p49 = scmp.ne.s32.totalorder %s34, %s48
    %p50 = scmp.eq.s32.totalorder %s17, 0
    %p51 = por %p49, %p50
    %s52 = ssub.s32 %s18, %s30
    %s53 = ssub.s32 %s19, %s26
    %s54 = sor.u32 %s52, %s53
    %p55 = scmp.eq.s32.totalorder %s54, 0
    %s57 = sadd.s32 %s56, 1
    %s58 = scalar_select %p55, %s56, %s57
    %p61 = pneg %p55
    %p62 = scmp.eq.s32.totalorder %s11, 3
    %p63 = por %p61, %p62
    %p64 = scmp.ne.s32.totalorder %s56, %s59
    %p65 = scmp.eq.s32.totalorder %s11, 0
    %p66 = por %p64, %p65
    %p67 = scmp.ne.s32.totalorder %s56, %s59
    %p68 = scmp.eq.s32.totalorder %s16, 3
    %p69 = por %p67, %p68
    %p70 = scmp.ne.s32.totalorder %s59, %s60
    %p71 = scmp.eq.s32.totalorder %s16, 0
    %p72 = por %p70, %p71
    %p73 = scmp.ne.s32.totalorder %s59, %s60
    %p74 = scmp.eq.s32.totalorder %s17, 3
    %p75 = por %p73, %p74
    %p77 = scmp.ne.s32.totalorder %s60, %s76
    %p78 = scmp.eq.s32.totalorder %s17, 0
    %p79 = por %p77, %p78
    %s80 = ssub.s32 %s18, %s30
    %s81 = ssub.s32 %s19, %s26
    %s82 = sor.u32 %s80, %s81
    %p83 = scmp.eq.s32.totalorder %s82, 0
    %s85 = sadd.s32 %s84, 1
    %s86 = scalar_select %p83, %s84, %s85
    %p89 = pneg %p83
    %p90 = scmp.eq.s32.totalorder %s11, 3
    %p91 = por %p89, %p90
    %p92 = scmp.ne.s32.totalorder %s84, %s87
    %p93 = scmp.eq.s32.totalorder %s11, 0
    %p94 = por %p92, %p93
    %p95 = scmp.ne.s32.totalorder %s84, %s87
    %p96 = scmp.eq.s32.totalorder %s16, 3
    %p97 = por %p95, %p96
    %p98 = scmp.ne.s32.totalorder %s87, %s88
    %p99 = scmp.eq.s32.totalorder %s16, 0
    %p100 = por %p98, %p99
    %p101 = scmp.ne.s32.totalorder %s87, %s88
    %p102 = scmp.eq.s32.totalorder %s17, 3
    %p103 = por %p101, %p102
    %p105 = scmp.ne.s32.totalorder %s88, %s104
    %p106 = scmp.eq.s32.totalorder %s17, 0
    %p107 = por %p105, %p106
    %s108 = ssub.s32 %s18, %s30
    %s109 = ssub.s32 %s19, %s26
    %s110 = sor.u32 %s108, %s109
    %p111 = scmp.eq.s32.totalorder %s110, 0
    %s113 = sadd.s32 %s112, 1
    %s114 = scalar_select %p111, %s112, %s113
    %p117 = pneg %p111
    %p118 = scmp.eq.s32.totalorder %s11, 3
    %p119 = por %p117, %p118
    %p120 = scmp.ne.s32.totalorder %s112, %s115
    %p121 = scmp.eq.s32.totalorder %s11, 0
    %p122 = por %p120, %p121
    %p123 = scmp.ne.s32.totalorder %s112, %s115
    %p124 = scmp.eq.s32.totalorder %s16, 3
    %p125 = por %p123, %p124
    %p126 = scmp.ne.s32.totalorder %s115, %s116
    %p127 = scmp.eq.s32.totalorder %s16, 0
    %p128 = por %p126, %p127
    %p129 = scmp.ne.s32.totalorder %s115, %s116
    %p130 = scmp.eq.s32.totalorder %s17, 3
    %p131 = por %p129, %p130
    %p133 = scmp.ne.s32.totalorder %s116, %s132
    %p134 = scmp.eq.s32.totalorder %s17, 0
    %p135 = por %p133, %p134
    %p136 = scmp.le.s32.totalorder 1, %s11
    %p137 = scmp.lt.s32.totalorder %s11, 5
    %p138 = pnand %p136, %p137
    %p139 = pneg %p138
    // Predicated region
    $region9: #{double_conv_forward.3} parent=5 // pred_check
      _
    $region10: #{double_conv_forward.3} parent=5 // pred_check_branch
      %141 = sbr.rel (%p138) target = $region12
    $region11: #{double_conv_forward.3} parent=5 // pred_region
      %s142 = ssub.s32 %s11, 1
      // Predicated region
      $region13: #{double_conv_forward.3} parent=11 // pred_check
        %p143 = pneg %p44
      $region14: #{double_conv_forward.3} parent=11 // pred_check_branch
        %145 = sbr.rel (%p143) target = $region16
      $region15: #{double_conv_forward.3} parent=11 // pred_region
        _
      $region16: #{double_conv_forward.3} parent=11 // pred_fallthru
        _
    $region12: #{double_conv_forward.3} parent=5 // pred_fallthru
      _
    %p146 = scmp.lt.s32.totalorder %s11, 4
    // Predicated region
    $region17: #{double_conv_forward.3} parent=5 // pred_check
      %p147 = pneg %p146
    $region18: #{double_conv_forward.3} parent=5 // pred_check_branch
      %149 = sbr.rel (%p147) target = $region20
    $region19: #{double_conv_forward.3} parent=5 // pred_region
      _
    $region20: #{double_conv_forward.3} parent=5 // pred_fallthru
      _
    %p150 = scmp.le.s32.totalorder 1, %s11
    %p151 = scmp.lt.s32.totalorder %s11, 5
    %p152 = pnand %p150, %p151
    %p153 = pneg %p152
    // Predicated region
    $region21: #{double_conv_forward.3} parent=5 // pred_check
      _
    $region22: #{double_conv_forward.3} parent=5 // pred_check_branch
      %155 = sbr.rel (%p152) target = $region24
    $region23: #{double_conv_forward.3} parent=5 // pred_region
      %s156 = ssub.s32 %s11, 1
      %p157 = pneg %p44
      %p158 = pneg %p41
      %p159 = pneg %p72
      %p160 = pneg %p69
      %s161 = smul.u32 8, %s21
      %p162 = scmp.lt.s32.totalorder %s20, 1
      %s163 = scalar_select %p162, %s20, 1
      %p164 = scmp.lt.s32.totalorder %s161, 15
      %s165 = scalar_select %p164, %s161, 15
      %s166 = smul.addr %s165, 3
      %s167 = smul.addr %s163, 48
      %s168 = sadd.s32 %s166, %s167
      %s169 = smul.addr %s168, 4
      %s170 = scalar_lea.vmem %s2, %s169
      %p171 = pneg %p100
      %p172 = pneg %p97
      %p173 = scmp.lt.s32.totalorder %s20, 1
      %s174 = scalar_select %p173, %s20, 1
      %p175 = scmp.lt.s32.totalorder %s21, 1
      %s176 = scalar_select %p175, %s21, 1
      %s177 = smul.addr %s174, 2
      %s178 = sadd.s32 %s176, %s177
      %s179 = scalar_lea.vmem %s3, %s178
      %p180 = pneg %p128
      %p181 = pneg %p125
      %p182 = scmp.lt.s32.totalorder %s20, 1
      %s183 = scalar_select %p182, %s20, 1
      %p184 = scmp.lt.s32.totalorder %s21, 1
      %s185 = scalar_select %p184, %s21, 1
      %s186 = smul.addr %s183, 2
      %s187 = sadd.s32 %s185, %s186
      %s188 = scalar_lea.vmem %s4, %s187
      %s189 = smul.u32 8, %s21
      %p190 = scmp.lt.s32.totalorder %s20, 1
      %s191 = scalar_select %p190, %s20, 1
      %p192 = scmp.lt.s32.totalorder %s189, 15
      %s193 = scalar_select %p192, %s189, 15
      %s194 = smul.addr %s193, 3
      %s195 = smul.addr %s191, 48
      %s196 = sadd.s32 %s194, %s195
      %s197 = smul.addr %s196, 4
      %s198 = scalar_lea.vmem %s2, %s197
      %s199 = smul.u32 8, %s21
      %p200 = scmp.lt.s32.totalorder %s20, 1
      %s201 = scalar_select %p200, %s20, 1
      %p202 = scmp.lt.s32.totalorder %s21, 1
      %s203 = scalar_select %p202, %s21, 1
      %s204 = smul.addr %s201, 2
      %s205 = sadd.s32 %s203, %s204
      %s206 = scalar_lea.vmem %s3, %s205
      %p207 = scmp.lt.s32.totalorder %s20, 1
      %s208 = scalar_select %p207, %s20, 1
      %p209 = scmp.lt.s32.totalorder %s21, 1
      %s210 = scalar_select %p209, %s21, 1
      %s211 = smul.addr %s208, 2
      %s212 = sadd.s32 %s210, %s211
      %s213 = scalar_lea.vmem %s4, %s212
      %s215 = smul.u32 %s21, 8
      %s216 = smul.u32 %s215, 3
      %s217 = smul.u32 %s20, 54
      %s218 = sadd.s32 %s216, %s217
      %s219 = smul.addr %s218, 4
      %s220 = scalar_lea.vmem %s0, %s219
      %p222 = scmp.lt.u32.totalorder 120, 8
      %p223 = pneg %p222
      // Predicated region
      $region25: #{double_conv_forward.3} parent=23 // pred_check
        _
      $region26: #{double_conv_forward.3} parent=23 // pred_check_branch
        %225 = sbr.rel (%p222) target = $region28
      $region27: #{double_conv_forward.3} parent=23 // pred_region
        %s241 = sand.u32 120, 7
        %p242 = scmp.eq.s32.totalorder %s241, 0
        // Predicated region
        $region40: #{double_conv_forward.3} parent=27 // pred_check
          %p243 = pneg %p242
        $region41: #{double_conv_forward.3} parent=27 // pred_check_branch
          %245 = sbr.rel (%p243) target = $region43
        $region42: #{double_conv_forward.3} parent=27 // pred_region
          loop: start=0, step=1, limit=1
          $region44: #{double_conv_forward.3} parent=42 // loop_pre_header
            _
          $region45: #{double_conv_forward.3} parent=42 // loop_header
            %s247 = sphi 0, %s251
            %p248 = scmp.ge.s32.totalorder %s247, 1
            %s252 = sphi %s220, %s220
            %s253 = sphi [#allocation2], [#allocation2]
          $region46: #{double_conv_forward.3} parent=42 // loop_header_branch
            %250 = sbr.rel (%p248) target = $region50
          $region47: #{double_conv_forward.3} parent=42 // loop_body
            %v254 = vld [vmem:[%s252] sm:$0xff]
            %255 = vst [vmem:[%s253] sm:$0xff] %v254
            %v256 = vld [vmem:[%s252 + $0x8] sm:$0xff]
            %257 = vst [vmem:[%s253 + $0x8] sm:$0xff] %v256
            %v258 = vld [vmem:[%s252 + $0x10] sm:$0xff]
            %259 = vst [vmem:[%s253 + $0x10] sm:$0xff] %v258
            %v260 = vld [vmem:[%s252 + $0x18] sm:$0xff]
            %261 = vst [vmem:[%s253 + $0x18] sm:$0xff] %v260
            %v262 = vld [vmem:[%s252 + $0x20] sm:$0xff]
            %263 = vst [vmem:[%s253 + $0x20] sm:$0xff] %v262
            %v264 = vld [vmem:[%s252 + $0x28] sm:$0xff]
            %265 = vst [vmem:[%s253 + $0x28] sm:$0xff] %v264
            %v266 = vld [vmem:[%s252 + $0x30] sm:$0xff]
            %267 = vst [vmem:[%s253 + $0x30] sm:$0xff] %v266
            %v268 = vld [vmem:[%s252 + $0x38] sm:$0xff]
            %269 = vst [vmem:[%s253 + $0x38] sm:$0xff] %v268
            %v270 = vld [vmem:[%s252 + $0x40] sm:$0xff]
            %271 = vst [vmem:[%s253 + $0x40] sm:$0xff] %v270
            %v272 = vld [vmem:[%s252 + $0x48] sm:$0xff]
            %273 = vst [vmem:[%s253 + $0x48] sm:$0xff] %v272
            %v274 = vld [vmem:[%s252 + $0x50] sm:$0xff]
            %275 = vst [vmem:[%s253 + $0x50] sm:$0xff] %v274
            %v276 = vld [vmem:[%s252 + $0x58] sm:$0xff]
            %277 = vst [vmem:[%s253 + $0x58] sm:$0xff] %v276
            %v278 = vld [vmem:[%s252 + $0x60] sm:$0xff]
            %279 = vst [vmem:[%s253 + $0x60] sm:$0xff] %v278
            %v280 = vld [vmem:[%s252 + $0x68] sm:$0xff]
            %281 = vst [vmem:[%s253 + $0x68] sm:$0xff] %v280
            %v282 = vld [vmem:[%s252 + $0x70] sm:$0xff]
            %283 = vst [vmem:[%s253 + $0x70] sm:$0xff] %v282
          $region48: #{double_conv_forward.3} parent=42 // loop_footer
            %s251 = sadd.s32 1, %s247
          $region49: #{double_conv_forward.3} parent=42 // loop_footer_branch
            %246 = sbr.rel target = $region45
          $region50: #{double_conv_forward.3} parent=42 // loop_exit
            _
        $region43: #{double_conv_forward.3} parent=27 // pred_fallthru
          _
        %p284 = pneg %p242
        // Predicated region
        $region51: #{double_conv_forward.3} parent=27 // pred_check
          _
        $region52: #{double_conv_forward.3} parent=27 // pred_check_branch
          %286 = sbr.rel (%p242) target = $region54
        $region53: #{double_conv_forward.3} parent=27 // pred_region
          %s287 = sand.u32 120, 7
        $region54: #{double_conv_forward.3} parent=27 // pred_fallthru
          _
      $region28: #{double_conv_forward.3} parent=23 // pred_fallthru
        _
      // Predicated region
      $region29: #{double_conv_forward.3} parent=23 // pred_check
        %p226 = pneg %p222
      $region30: #{double_conv_forward.3} parent=23 // pred_check_branch
        %228 = sbr.rel (%p226) target = $region32
      $region31: #{double_conv_forward.3} parent=23 // pred_region
        %s229 = sshll.u32 1, 120
        %s230 = ssub.s32 %s229, 1
        loop: start=0, step=1, limit=1
        $region33: #{double_conv_forward.3} parent=31 // loop_pre_header
          _
        $region34: #{double_conv_forward.3} parent=31 // loop_header
          %s232 = sphi 0, %s236
          %p233 = scmp.ge.s32.totalorder %s232, 1
          %s237 = sphi %s220, %s220
          %s238 = sphi [#allocation2], [#allocation2]
        $region35: #{double_conv_forward.3} parent=31 // loop_header_branch
          %235 = sbr.rel (%p233) target = $region39
        $region36: #{double_conv_forward.3} parent=31 // loop_body
          %v239 = vld [vmem:[%s237] sm:%s230]
          %240 = vst [vmem:[%s238] sm:%s230] %v239
        $region37: #{double_conv_forward.3} parent=31 // loop_footer
          %s236 = sadd.s32 1, %s232
        $region38: #{double_conv_forward.3} parent=31 // loop_footer_branch
          %231 = sbr.rel target = $region34
        $region39: #{double_conv_forward.3} parent=31 // loop_exit
          _
      $region32: #{double_conv_forward.3} parent=23 // pred_fallthru
        _
      // Predicated region
      $region55: #{double_conv_forward.3} parent=23 // pred_check
        _
      $region56: #{double_conv_forward.3} parent=23 // pred_check_branch
        %290 = sbr.rel (0) target = $region58
      $region57: #{double_conv_forward.3} parent=23 // pred_region
        %291 = vsyncadd [#allocation4], 1920
      $region58: #{double_conv_forward.3} parent=23 // pred_fallthru
        _
      %s292 = smul.u32 4, 10
      %s293 = smul.u32 %s292, 3
      %s294 = smul.u32 %s293, 1
      %s295 = sshll.u32 %s294, 4
      %296 = dma.done [#allocation4], %s295
      %v297 = vld [vmem:[#allocation2] sm:$0xf]
      %v298 = vld [vmem:[#allocation2 + $0x4] sm:$0xf]
      %v299 = vld [vmem:[#allocation2 + $0xc] sm:$0xf]
      %v300 = vld [vmem:[#allocation2 + $0x10] sm:$0xf]
      %v301 = vld [vmem:[#allocation2 + $0x18] sm:$0xf]
      %v302 = vld [vmem:[#allocation2 + $0x1c] sm:$0xf]
      %v303 = vld [vmem:[#allocation2 + $0x24] sm:$0xf]
      %v304 = vld [vmem:[#allocation2 + $0x28] sm:$0xf]
      %v305 = vld [vmem:[#allocation2 + $0x30] sm:$0xf]
      %v306 = vld [vmem:[#allocation2 + $0x34] sm:$0xf]
      %v307 = vld [vmem:[#allocation2 + $0x3c] sm:$0xf]
      %v308 = vld [vmem:[#allocation2 + $0x40] sm:$0xf]
      %v309 = vld [vmem:[#allocation2 + $0x48] sm:$0xf]
      %v310 = vld [vmem:[#allocation2 + $0x4c] sm:$0xf]
      %v311 = vld [vmem:[#allocation2 + $0x54] sm:$0xf]
      %v312 = vld [vmem:[#allocation2 + $0x58] sm:$0xf]
      %313 = vst [vmem:[#allocation3] sm:$0xf] %v297
      %314 = vst [vmem:[#allocation3 + $0x24] sm:$0xf] %v298
      %315 = vst [vmem:[#allocation3 + $0x48] sm:$0xf] %v299
      %316 = vst [vmem:[#allocation3 + $0x6c] sm:$0xf] %v300
      %317 = vst [vmem:[#allocation3 + $0x90] sm:$0xf] %v301
      %318 = vst [vmem:[#allocation3 + $0xb4] sm:$0xf] %v302
      %319 = vst [vmem:[#allocation3 + $0xd8] sm:$0xf] %v303
      %320 = vst [vmem:[#allocation3 + $0xfc] sm:$0xf] %v304
      %321 = vst [vmem:[#allocation3 + $0x120] sm:$0xf] %v305
      %322 = vst [vmem:[#allocation3 + $0x144] sm:$0xf] %v306
      %323 = vst [vmem:[#allocation3 + $0x168] sm:$0xf] %v307
      %324 = vst [vmem:[#allocation3 + $0x18c] sm:$0xf] %v308
      %325 = vst [vmem:[#allocation3 + $0x1b0] sm:$0xf] %v309
      %326 = vst [vmem:[#allocation3 + $0x1d4] sm:$0xf] %v310
      %327 = vst [vmem:[#allocation3 + $0x1f8] sm:$0xf] %v311
      %328 = vst [vmem:[#allocation3 + $0x21c] sm:$0xf] %v312
      %v329 = vld [vmem:[#allocation2] sm:$0xf]
      %v330 = vld [vmem:[#allocation2 + $0x4] sm:$0xf]
      %v331 = vld [vmem:[#allocation2 + $0x8] sm:$0x1]
      %v332 = vld [vmem:[#allocation2 + $0xc] sm:$0xf]
      %v333 = vld [vmem:[#allocation2 + $0x10] sm:$0xf]
      %v334 = vld [vmem:[#allocation2 + $0x14] sm:$0x1]
      %v335 = vld [vmem:[#allocation2 + $0x18] sm:$0xf]
      %v336 = vld [vmem:[#allocation2 + $0x1c] sm:$0xf]
      %v337 = vld [vmem:[#allocation2 + $0x20] sm:$0x1]
      %v338 = vld [vmem:[#allocation2 + $0x24] sm:$0xf]
      %v339 = vld [vmem:[#allocation2 + $0x28] sm:$0xf]
      %v340 = vld [vmem:[#allocation2 + $0x2c] sm:$0x1]
      %v341 = vld [vmem:[#allocation2 + $0x30] sm:$0xf]
      %v342 = vld [vmem:[#allocation2 + $0x34] sm:$0xf]
      %v343 = vld [vmem:[#allocation2 + $0x38] sm:$0x1]
      %v344 = vld [vmem:[#allocation2 + $0x3c] sm:$0xf]
      %v345 = vld [vmem:[#allocation2 + $0x40] sm:$0xf]
      %v346 = vld [vmem:[#allocation2 + $0x44] sm:$0x1]
      %v347 = vld [vmem:[#allocation2 + $0x48] sm:$0xf]
      %v348 = vld [vmem:[#allocation2 + $0x4c] sm:$0xf]
      %v349 = vld [vmem:[#allocation2 + $0x50] sm:$0x1]
      %v350 = vld [vmem:[#allocation2 + $0x54] sm:$0xf]
      %v351 = vld [vmem:[#allocation2 + $0x58] sm:$0xf]
      %v352 = vld [vmem:[#allocation2 + $0x5c] sm:$0x1]
      %vm353 = vsmask.f32 3328
      %vm354 = vsmask.f32 7440
      %vm355 = vmor %vm353, %vm354
      %v357 = vshrl.u32 %v329, 16
      %v359 = vrot.slane %v357, 4
      %v360 = vshll.u32 %v329, 16
      %v362 = vrot.slane %v360, 5
      %v363 = vor.u32 %v359, %v362
      %v364 = vrot.slane %v363, 4
      %v366 = vshll.u32 %v330, 16
      %v368 = vrot.slane %v366, 5
      %v369 = vsel %vm355, %v364, %v368
      %v370 = vshrl.u32 %v330, 16
      %v372 = vrot.slane %v370, 4
      %v373 = vor.u32 %v372, %v368
      %v374 = vrot.slane %v373, 4
      %v376 = vshll.u32 %v331, 16
      %v378 = vrot.slane %v376, 5
      %v379 = vsel %vm355, %v374, %v378
      %v381 = vshrl.u32 %v332, 16
      %v383 = vrot.slane %v381, 4
      %v384 = vshll.u32 %v332, 16
      %v386 = vrot.slane %v384, 5
      %v387 = vor.u32 %v383, %v386
      %v388 = vrot.slane %v387, 4
      %v390 = vshll.u32 %v333, 16
      %v392 = vrot.slane %v390, 5
      %v393 = vsel %vm355, %v388, %v392
      %v394 = vshrl.u32 %v333, 16
      %v396 = vrot.slane %v394, 4
      %v397 = vor.u32 %v396, %v392
      %v398 = vrot.slane %v397, 4
      %v400 = vshll.u32 %v334, 16
      %v402 = vrot.slane %v400, 5
      %v403 = vsel %vm355, %v398, %v402
      %v405 = vshrl.u32 %v335, 16
      %v407 = vrot.slane %v405, 4
      %v408 = vshll.u32 %v335, 16
      %v410 = vrot.slane %v408, 5
      %v411 = vor.u32 %v407, %v410
      %v412 = vrot.slane %v411, 4
      %v414 = vshll.u32 %v336, 16
      %v416 = vrot.slane %v414, 5
      %v417 = vsel %vm355, %v412, %v416
      %v418 = vshrl.u32 %v336, 16
      %v420 = vrot.slane %v418, 4
      %v421 = vor.u32 %v420, %v416
      %v422 = vrot.slane %v421, 4
      %v424 = vshll.u32 %v337, 16
      %v426 = vrot.slane %v424, 5
      %v427 = vsel %vm355, %v422, %v426
      %v429 = vshrl.u32 %v338, 16
      %v431 = vrot.slane %v429, 4
      %v432 = vshll.u32 %v338, 16
      %v434 = vrot.slane %v432, 5
      %v435 = vor.u32 %v431, %v434
      %v436 = vrot.slane %v435, 4
      %v438 = vshll.u32 %v339, 16
      %v440 = vrot.slane %v438, 5
      %v441 = vsel %vm355, %v436, %v440
      %v442 = vshrl.u32 %v339, 16
      %v444 = vrot.slane %v442, 4
      %v445 = vor.u32 %v444, %v440
      %v446 = vrot.slane %v445, 4
      %v448 = vshll.u32 %v340, 16
      %v450 = vrot.slane %v448, 5
      %v451 = vsel %vm355, %v446, %v450
      %v453 = vshrl.u32 %v341, 16
      %v455 = vrot.slane %v453, 4
      %v456 = vshll.u32 %v341, 16
      %v458 = vrot.slane %v456, 5
      %v459 = vor.u32 %v455, %v458
      %v460 = vrot.slane %v459, 4
      %v462 = vshll.u32 %v342, 16
      %v464 = vrot.slane %v462, 5
      %v465 = vsel %vm355, %v460, %v464
      %v466 = vshrl.u32 %v342, 16
      %v468 = vrot.slane %v466, 4
      %v469 = vor.u32 %v468, %v464
      %v470 = vrot.slane %v469, 4
      %v472 = vshll.u32 %v343, 16
      %v474 = vrot.slane %v472, 5
      %v475 = vsel %vm355, %v470, %v474
      %v477 = vshrl.u32 %v344, 16
      %v479 = vrot.slane %v477, 4
      %v480 = vshll.u32 %v344, 16
      %v482 = vrot.slane %v480, 5
      %v483 = vor.u32 %v479, %v482
      %v484 = vrot.slane %v483, 4
      %v486 = vshll.u32 %v345, 16
      %v488 = vrot.slane %v486, 5
      %v489 = vsel %vm355, %v484, %v488
      %v490 = vshrl.u32 %v345, 16
      %v492 = vrot.slane %v490, 4
      %v493 = vor.u32 %v492, %v488
      %v494 = vrot.slane %v493, 4
      %v496 = vshll.u32 %v346, 16
      %v498 = vrot.slane %v496, 5
      %v499 = vsel %vm355, %v494, %v498
      %v501 = vshrl.u32 %v347, 16
      %v503 = vrot.slane %v501, 4
      %v504 = vshll.u32 %v347, 16
      %v506 = vrot.slane %v504, 5
      %v507 = vor.u32 %v503, %v506
      %v508 = vrot.slane %v507, 4
      %v510 = vshll.u32 %v348, 16
      %v512 = vrot.slane %v510, 5
      %v513 = vsel %vm355, %v508, %v512
      %v514 = vshrl.u32 %v348, 16
      %v516 = vrot.slane %v514, 4
      %v517 = vor.u32 %v516, %v512
      %v518 = vrot.slane %v517, 4
      %v520 = vshll.u32 %v349, 16
      %v522 = vrot.slane %v520, 5
      %v523 = vsel %vm355, %v518, %v522
      %v525 = vshrl.u32 %v350, 16
      %v527 = vrot.slane %v525, 4
      %v528 = vshll.u32 %v350, 16
      %v530 = vrot.slane %v528, 5
      %v531 = vor.u32 %v527, %v530
      %v532 = vrot.slane %v531, 4
      %v534 = vshll.u32 %v351, 16
      %v536 = vrot.slane %v534, 5
      %v537 = vsel %vm355, %v532, %v536
      %v538 = vshrl.u32 %v351, 16
      %v540 = vrot.slane %v538, 4
      %v541 = vor.u32 %v540, %v536
      %v542 = vrot.slane %v541, 4
      %v544 = vshll.u32 %v352, 16
      %v546 = vrot.slane %v544, 5
      %v547 = vsel %vm355, %v542, %v546
      %564 = vst [vmem:[#allocation3 + $0x4] sm:$0xf] %v369
      %565 = vst [vmem:[#allocation3 + $0x28] sm:$0xf] %v379
      %566 = vst [vmem:[#allocation3 + $0x4c] sm:$0xf] %v393
      %567 = vst [vmem:[#allocation3 + $0x70] sm:$0xf] %v403
      %568 = vst [vmem:[#allocation3 + $0x94] sm:$0xf] %v417
      %569 = vst [vmem:[#allocation3 + $0xb8] sm:$0xf] %v427
      %570 = vst [vmem:[#allocation3 + $0xdc] sm:$0xf] %v441
      %571 = vst [vmem:[#allocation3 + $0x100] sm:$0xf] %v451
      %572 = vst [vmem:[#allocation3 + $0x124] sm:$0xf] %v465
      %573 = vst [vmem:[#allocation3 + $0x148] sm:$0xf] %v475
      %574 = vst [vmem:[#allocation3 + $0x16c] sm:$0xf] %v489
      %575 = vst [vmem:[#allocation3 + $0x190] sm:$0xf] %v499
      %576 = vst [vmem:[#allocation3 + $0x1b4] sm:$0xf] %v513
      %577 = vst [vmem:[#allocation3 + $0x1d8] sm:$0xf] %v523
      %578 = vst [vmem:[#allocation3 + $0x1fc] sm:$0xf] %v537
      %579 = vst [vmem:[#allocation3 + $0x220] sm:$0xf] %v547
      %v580 = vld [vmem:[#allocation2] sm:$0xe]
      %v581 = vld [vmem:[#allocation2 + $0x4] sm:$0xf]
      %v582 = vld [vmem:[#allocation2 + $0x8] sm:$0x1]
      %v583 = vld [vmem:[#allocation2 + $0xc] sm:$0xe]
      %v584 = vld [vmem:[#allocation2 + $0x10] sm:$0xf]
      %v585 = vld [vmem:[#allocation2 + $0x14] sm:$0x1]
      %v586 = vld [vmem:[#allocation2 + $0x18] sm:$0xe]
      %v587 = vld [vmem:[#allocation2 + $0x1c] sm:$0xf]
      %v588 = vld [vmem:[#allocation2 + $0x20] sm:$0x1]
      %v589 = vld [vmem:[#allocation2 + $0x24] sm:$0xe]
      %v590 = vld [vmem:[#allocation2 + $0x28] sm:$0xf]
      %v591 = vld [vmem:[#allocation2 + $0x2c] sm:$0x1]
      %v592 = vld [vmem:[#allocation2 + $0x30] sm:$0xe]
      %v593 = vld [vmem:[#allocation2 + $0x34] sm:$0xf]
      %v594 = vld [vmem:[#allocation2 + $0x38] sm:$0x1]
      %v595 = vld [vmem:[#allocation2 + $0x3c] sm:$0xe]
      %v596 = vld [vmem:[#allocation2 + $0x40] sm:$0xf]
      %v597 = vld [vmem:[#allocation2 + $0x44] sm:$0x1]
      %v598 = vld [vmem:[#allocation2 + $0x48] sm:$0xe]
      %v599 = vld [vmem:[#allocation2 + $0x4c] sm:$0xf]
      %v600 = vld [vmem:[#allocation2 + $0x50] sm:$0x1]
      %v601 = vld [vmem:[#allocation2 + $0x54] sm:$0xe]
      %v602 = vld [vmem:[#allocation2 + $0x58] sm:$0xf]
      %v603 = vld [vmem:[#allocation2 + $0x5c] sm:$0x1]
      %vm628 = vcmask 1042432
      %vm629 = vcmask 1046532
      %vm630 = vmor %vm628, %vm629
      %v631 = vrot.slane %v580, 5
      %v632 = vrot.slane %v631, 4
      %v633 = vrot.slane %v581, 5
      %v634 = vsel %vm630, %v632, %v633
      %v635 = vrot.slane %v633, 4
      %v636 = vrot.slane %v582, 5
      %v637 = vsel %vm630, %v635, %v636
      %v638 = vrot.slane %v583, 5
      %v639 = vrot.slane %v638, 4
      %v640 = vrot.slane %v584, 5
      %v641 = vsel %vm630, %v639, %v640
      %v642 = vrot.slane %v640, 4
      %v643 = vrot.slane %v585, 5
      %v644 = vsel %vm630, %v642, %v643
      %v645 = vrot.slane %v586, 5
      %v646 = vrot.slane %v645, 4
      %v647 = vrot.slane %v587, 5
      %v648 = vsel %vm630, %v646, %v647
      %v649 = vrot.slane %v647, 4
      %v650 = vrot.slane %v588, 5
      %v651 = vsel %vm630, %v649, %v650
      %v652 = vrot.slane %v589, 5
      %v653 = vrot.slane %v652, 4
      %v654 = vrot.slane %v590, 5
      %v655 = vsel %vm630, %v653, %v654
      %v656 = vrot.slane %v654, 4
      %v657 = vrot.slane %v591, 5
      %v658 = vsel %vm630, %v656, %v657
      %v659 = vrot.slane %v592, 5
      %v660 = vrot.slane %v659, 4
      %v661 = vrot.slane %v593, 5
      %v662 = vsel %vm630, %v660, %v661
      %v663 = vrot.slane %v661, 4
      %v664 = vrot.slane %v594, 5
      %v665 = vsel %vm630, %v663, %v664
      %v666 = vrot.slane %v595, 5
      %v667 = vrot.slane %v666, 4
      %v668 = vrot.slane %v596, 5
      %v669 = vsel %vm630, %v667, %v668
      %v670 = vrot.slane %v668, 4
      %v671 = vrot.slane %v597, 5
      %v672 = vsel %vm630, %v670, %v671
      %v673 = vrot.slane %v598, 5
      %v674 = vrot.slane %v673, 4
      %v675 = vrot.slane %v599, 5
      %v676 = vsel %vm630, %v674, %v675
      %v677 = vrot.slane %v675, 4
      %v678 = vrot.slane %v600, 5
      %v679 = vsel %vm630, %v677, %v678
      %v680 = vrot.slane %v601, 5
      %v681 = vrot.slane %v680, 4
      %v682 = vrot.slane %v602, 5
      %v683 = vsel %vm630, %v681, %v682
      %v684 = vrot.slane %v682, 4
      %v685 = vrot.slane %v603, 5
      %v686 = vsel %vm630, %v684, %v685
      %703 = vst [vmem:[#allocation3 + $0x8] sm:$0xf] %v634
      %704 = vst [vmem:[#allocation3 + $0x2c] sm:$0xf] %v637
      %705 = vst [vmem:[#allocation3 + $0x50] sm:$0xf] %v641
      %706 = vst [vmem:[#allocation3 + $0x74] sm:$0xf] %v644
      %707 = vst [vmem:[#allocation3 + $0x98] sm:$0xf] %v648
      %708 = vst [vmem:[#allocation3 + $0xbc] sm:$0xf] %v651
      %709 = vst [vmem:[#allocation3 + $0xe0] sm:$0xf] %v655
      %710 = vst [vmem:[#allocation3 + $0x104] sm:$0xf] %v658
      %711 = vst [vmem:[#allocation3 + $0x128] sm:$0xf] %v662
      %712 = vst [vmem:[#allocation3 + $0x14c] sm:$0xf] %v665
      %713 = vst [vmem:[#allocation3 + $0x170] sm:$0xf] %v669
      %714 = vst [vmem:[#allocation3 + $0x194] sm:$0xf] %v672
      %715 = vst [vmem:[#allocation3 + $0x1b8] sm:$0xf] %v676
      %716 = vst [vmem:[#allocation3 + $0x1dc] sm:$0xf] %v679
      %717 = vst [vmem:[#allocation3 + $0x200] sm:$0xf] %v683
      %718 = vst [vmem:[#allocation3 + $0x224] sm:$0xf] %v686
      %s719 = scalar_lea.vmem [#allocation2], 12
      %v720 = vld [vmem:[%s719] sm:$0xf]
      %v721 = vld [vmem:[%s719 + $0x4] sm:$0xf]
      %v722 = vld [vmem:[%s719 + $0xc] sm:$0xf]
      %v723 = vld [vmem:[%s719 + $0x10] sm:$0xf]
      %v724 = vld [vmem:[%s719 + $0x18] sm:$0xf]
      %v725 = vld [vmem:[%s719 + $0x1c] sm:$0xf]
      %v726 = vld [vmem:[%s719 + $0x24] sm:$0xf]
      %v727 = vld [vmem:[%s719 + $0x28] sm:$0xf]
      %v728 = vld [vmem:[%s719 + $0x30] sm:$0xf]
      %v729 = vld [vmem:[%s719 + $0x34] sm:$0xf]
      %v730 = vld [vmem:[%s719 + $0x3c] sm:$0xf]
      %v731 = vld [vmem:[%s719 + $0x40] sm:$0xf]
      %v732 = vld [vmem:[%s719 + $0x48] sm:$0xf]
      %v733 = vld [vmem:[%s719 + $0x4c] sm:$0xf]
      %v734 = vld [vmem:[%s719 + $0x54] sm:$0xf]
      %v735 = vld [vmem:[%s719 + $0x58] sm:$0xf]
      %736 = vst [vmem:[#allocation3 + $0xc] sm:$0xf] %v720
      %737 = vst [vmem:[#allocation3 + $0x30] sm:$0xf] %v721
      %738 = vst [vmem:[#allocation3 + $0x54] sm:$0xf] %v722
      %739 = vst [vmem:[#allocation3 + $0x78] sm:$0xf] %v723
      %740 = vst [vmem:[#allocation3 + $0x9c] sm:$0xf] %v724
      %741 = vst [vmem:[#allocation3 + $0xc0] sm:$0xf] %v725
      %742 = vst [vmem:[#allocation3 + $0xe4] sm:$0xf] %v726
      %743 = vst [vmem:[#allocation3 + $0x108] sm:$0xf] %v727
      %744 = vst [vmem:[#allocation3 + $0x12c] sm:$0xf] %v728
      %745 = vst [vmem:[#allocation3 + $0x150] sm:$0xf] %v729
      %746 = vst [vmem:[#allocation3 + $0x174] sm:$0xf] %v730
      %747 = vst [vmem:[#allocation3 + $0x198] sm:$0xf] %v731
      %748 = vst [vmem:[#allocation3 + $0x1bc] sm:$0xf] %v732
      %749 = vst [vmem:[#allocation3 + $0x1e0] sm:$0xf] %v733
      %750 = vst [vmem:[#allocation3 + $0x204] sm:$0xf] %v734
      %751 = vst [vmem:[#allocation3 + $0x228] sm:$0xf] %v735
      %v752 = vld [vmem:[%s719] sm:$0xf]
      %v753 = vld [vmem:[%s719 + $0x4] sm:$0xf]
      %v754 = vld [vmem:[%s719 + $0x8] sm:$0x1]
      %v755 = vld [vmem:[%s719 + $0xc] sm:$0xf]
      %v756 = vld [vmem:[%s719 + $0x10] sm:$0xf]
      %v757 = vld [vmem:[%s719 + $0x14] sm:$0x1]
      %v758 = vld [vmem:[%s719 + $0x18] sm:$0xf]
      %v759 = vld [vmem:[%s719 + $0x1c] sm:$0xf]
      %v760 = vld [vmem:[%s719 + $0x20] sm:$0x1]
      %v761 = vld [vmem:[%s719 + $0x24] sm:$0xf]
      %v762 = vld [vmem:[%s719 + $0x28] sm:$0xf]
      %v763 = vld [vmem:[%s719 + $0x2c] sm:$0x1]
      %v764 = vld [vmem:[%s719 + $0x30] sm:$0xf]
      %v765 = vld [vmem:[%s719 + $0x34] sm:$0xf]
      %v766 = vld [vmem:[%s719 + $0x38] sm:$0x1]
      %v767 = vld [vmem:[%s719 + $0x3c] sm:$0xf]
      %v768 = vld [vmem:[%s719 + $0x40] sm:$0xf]
      %v769 = vld [vmem:[%s719 + $0x44] sm:$0x1]
      %v770 = vld [vmem:[%s719 + $0x48] sm:$0xf]
      %v771 = vld [vmem:[%s719 + $0x4c] sm:$0xf]
      %v772 = vld [vmem:[%s719 + $0x50] sm:$0x1]
      %v773 = vld [vmem:[%s719 + $0x54] sm:$0xf]
      %v774 = vld [vmem:[%s719 + $0x58] sm:$0xf]
      %v775 = vld [vmem:[%s719 + $0x5c] sm:$0x1]
      %v777 = vshrl.u32 %v752, 16
      %v779 = vrot.slane %v777, 4
      %v780 = vshll.u32 %v752, 16
      %v782 = vrot.slane %v780, 5
      %v783 = vor.u32 %v779, %v782
      %v784 = vrot.slane %v783, 4
      %v786 = vshll.u32 %v753, 16
      %v788 = vrot.slane %v786, 5
      %v789 = vsel %vm355, %v784, %v788
      %v790 = vshrl.u32 %v753, 16
      %v792 = vrot.slane %v790, 4
      %v793 = vor.u32 %v792, %v788
      %v794 = vrot.slane %v793, 4
      %v796 = vshll.u32 %v754, 16
      %v798 = vrot.slane %v796, 5
      %v799 = vsel %vm355, %v794, %v798
      %v801 = vshrl.u32 %v755, 16
      %v803 = vrot.slane %v801, 4
      %v804 = vshll.u32 %v755, 16
      %v806 = vrot.slane %v804, 5
      %v807 = vor.u32 %v803, %v806
      %v808 = vrot.slane %v807, 4
      %v810 = vshll.u32 %v756, 16
      %v812 = vrot.slane %v810, 5
      %v813 = vsel %vm355, %v808, %v812
      %v814 = vshrl.u32 %v756, 16
      %v816 = vrot.slane %v814, 4
      %v817 = vor.u32 %v816, %v812
      %v818 = vrot.slane %v817, 4
      %v820 = vshll.u32 %v757, 16
      %v822 = vrot.slane %v820, 5
      %v823 = vsel %vm355, %v818, %v822
      %v825 = vshrl.u32 %v758, 16
      %v827 = vrot.slane %v825, 4
      %v828 = vshll.u32 %v758, 16
      %v830 = vrot.slane %v828, 5
      %v831 = vor.u32 %v827, %v830
      %v832 = vrot.slane %v831, 4
      %v834 = vshll.u32 %v759, 16
      %v836 = vrot.slane %v834, 5
      %v837 = vsel %vm355, %v832, %v836
      %v838 = vshrl.u32 %v759, 16
      %v840 = vrot.slane %v838, 4
      %v841 = vor.u32 %v840, %v836
      %v842 = vrot.slane %v841, 4
      %v844 = vshll.u32 %v760, 16
      %v846 = vrot.slane %v844, 5
      %v847 = vsel %vm355, %v842, %v846
      %v849 = vshrl.u32 %v761, 16
      %v851 = vrot.slane %v849, 4
      %v852 = vshll.u32 %v761, 16
      %v854 = vrot.slane %v852, 5
      %v855 = vor.u32 %v851, %v854
      %v856 = vrot.slane %v855, 4
      %v858 = vshll.u32 %v762, 16
      %v860 = vrot.slane %v858, 5
      %v861 = vsel %vm355, %v856, %v860
      %v862 = vshrl.u32 %v762, 16
      %v864 = vrot.slane %v862, 4
      %v865 = vor.u32 %v864, %v860
      %v866 = vrot.slane %v865, 4
      %v868 = vshll.u32 %v763, 16
      %v870 = vrot.slane %v868, 5
      %v871 = vsel %vm355, %v866, %v870
      %v873 = vshrl.u32 %v764, 16
      %v875 = vrot.slane %v873, 4
      %v876 = vshll.u32 %v764, 16
      %v878 = vrot.slane %v876, 5
      %v879 = vor.u32 %v875, %v878
      %v880 = vrot.slane %v879, 4
      %v882 = vshll.u32 %v765, 16
      %v884 = vrot.slane %v882, 5
      %v885 = vsel %vm355, %v880, %v884
      %v886 = vshrl.u32 %v765, 16
      %v888 = vrot.slane %v886, 4
      %v889 = vor.u32 %v888, %v884
      %v890 = vrot.slane %v889, 4
      %v892 = vshll.u32 %v766, 16
      %v894 = vrot.slane %v892, 5
      %v895 = vsel %vm355, %v890, %v894
      %v897 = vshrl.u32 %v767, 16
      %v899 = vrot.slane %v897, 4
      %v900 = vshll.u32 %v767, 16
      %v902 = vrot.slane %v900, 5
      %v903 = vor.u32 %v899, %v902
      %v904 = vrot.slane %v903, 4
      %v906 = vshll.u32 %v768, 16
      %v908 = vrot.slane %v906, 5
      %v909 = vsel %vm355, %v904, %v908
      %v910 = vshrl.u32 %v768, 16
      %v912 = vrot.slane %v910, 4
      %v913 = vor.u32 %v912, %v908
      %v914 = vrot.slane %v913, 4
      %v916 = vshll.u32 %v769, 16
      %v918 = vrot.slane %v916, 5
      %v919 = vsel %vm355, %v914, %v918
      %v921 = vshrl.u32 %v770, 16
      %v923 = vrot.slane %v921, 4
      %v924 = vshll.u32 %v770, 16
      %v926 = vrot.slane %v924, 5
      %v927 = vor.u32 %v923, %v926
      %v928 = vrot.slane %v927, 4
      %v930 = vshll.u32 %v771, 16
      %v932 = vrot.slane %v930, 5
      %v933 = vsel %vm355, %v928, %v932
      %v934 = vshrl.u32 %v771, 16
      %v936 = vrot.slane %v934, 4
      %v937 = vor.u32 %v936, %v932
      %v938 = vrot.slane %v937, 4
      %v940 = vshll.u32 %v772, 16
      %v942 = vrot.slane %v940, 5
      %v943 = vsel %vm355, %v938, %v942
      %v945 = vshrl.u32 %v773, 16
      %v947 = vrot.slane %v945, 4
      %v948 = vshll.u32 %v773, 16
      %v950 = vrot.slane %v948, 5
      %v951 = vor.u32 %v947, %v950
      %v952 = vrot.slane %v951, 4
      %v954 = vshll.u32 %v774, 16
      %v956 = vrot.slane %v954, 5
      %v957 = vsel %vm355, %v952, %v956
      %v958 = vshrl.u32 %v774, 16
      %v960 = vrot.slane %v958, 4
      %v961 = vor.u32 %v960, %v956
      %v962 = vrot.slane %v961, 4
      %v964 = vshll.u32 %v775, 16
      %v966 = vrot.slane %v964, 5
      %v967 = vsel %vm355, %v962, %v966
      %984 = vst [vmem:[#allocation3 + $0x10] sm:$0xf] %v789
      %985 = vst [vmem:[#allocation3 + $0x34] sm:$0xf] %v799
      %986 = vst [vmem:[#allocation3 + $0x58] sm:$0xf] %v813
      %987 = vst [vmem:[#allocation3 + $0x7c] sm:$0xf] %v823
      %988 = vst [vmem:[#allocation3 + $0xa0] sm:$0xf] %v837
      %989 = vst [vmem:[#allocation3 + $0xc4] sm:$0xf] %v847
      %990 = vst [vmem:[#allocation3 + $0xe8] sm:$0xf] %v861
      %991 = vst [vmem:[#allocation3 + $0x10c] sm:$0xf] %v871
      %992 = vst [vmem:[#allocation3 + $0x130] sm:$0xf] %v885
      %993 = vst [vmem:[#allocation3 + $0x154] sm:$0xf] %v895
      %994 = vst [vmem:[#allocation3 + $0x178] sm:$0xf] %v909
      %995 = vst [vmem:[#allocation3 + $0x19c] sm:$0xf] %v919
      %996 = vst [vmem:[#allocation3 + $0x1c0] sm:$0xf] %v933
      %997 = vst [vmem:[#allocation3 + $0x1e4] sm:$0xf] %v943
      %998 = vst [vmem:[#allocation3 + $0x208] sm:$0xf] %v957
      %999 = vst [vmem:[#allocation3 + $0x22c] sm:$0xf] %v967
      %v1000 = vld [vmem:[%s719] sm:$0xe]
      %v1001 = vld [vmem:[%s719 + $0x4] sm:$0xf]
      %v1002 = vld [vmem:[%s719 + $0x8] sm:$0x1]
      %v1003 = vld [vmem:[%s719 + $0xc] sm:$0xe]
      %v1004 = vld [vmem:[%s719 + $0x10] sm:$0xf]
      %v1005 = vld [vmem:[%s719 + $0x14] sm:$0x1]
      %v1006 = vld [vmem:[%s719 + $0x18] sm:$0xe]
      %v1007 = vld [vmem:[%s719 + $0x1c] sm:$0xf]
      %v1008 = vld [vmem:[%s719 + $0x20] sm:$0x1]
      %v1009 = vld [vmem:[%s719 + $0x24] sm:$0xe]
      %v1010 = vld [vmem:[%s719 + $0x28] sm:$0xf]
      %v1011 = vld [vmem:[%s719 + $0x2c] sm:$0x1]
      %v1012 = vld [vmem:[%s719 + $0x30] sm:$0xe]
      %v1013 = vld [vmem:[%s719 + $0x34] sm:$0xf]
      %v1014 = vld [vmem:[%s719 + $0x38] sm:$0x1]
      %v1015 = vld [vmem:[%s719 + $0x3c] sm:$0xe]
      %v1016 = vld [vmem:[%s719 + $0x40] sm:$0xf]
      %v1017 = vld [vmem:[%s719 + $0x44] sm:$0x1]
      %v1018 = vld [vmem:[%s719 + $0x48] sm:$0xe]
      %v1019 = vld [vmem:[%s719 + $0x4c] sm:$0xf]
      %v1020 = vld [vmem:[%s719 + $0x50] sm:$0x1]
      %v1021 = vld [vmem:[%s719 + $0x54] sm:$0xe]
      %v1022 = vld [vmem:[%s719 + $0x58] sm:$0xf]
      %v1023 = vld [vmem:[%s719 + $0x5c] sm:$0x1]
      %v1048 = vrot.slane %v1000, 5
      %v1049 = vrot.slane %v1048, 4
      %v1050 = vrot.slane %v1001, 5
      %v1051 = vsel %vm630, %v1049, %v1050
      %v1052 = vrot.slane %v1050, 4
      %v1053 = vrot.slane %v1002, 5
      %v1054 = vsel %vm630, %v1052, %v1053
      %v1055 = vrot.slane %v1003, 5
      %v1056 = vrot.slane %v1055, 4
      %v1057 = vrot.slane %v1004, 5
      %v1058 = vsel %vm630, %v1056, %v1057
      %v1059 = vrot.slane %v1057, 4
      %v1060 = vrot.slane %v1005, 5
      %v1061 = vsel %vm630, %v1059, %v1060
      %v1062 = vrot.slane %v1006, 5
      %v1063 = vrot.slane %v1062, 4
      %v1064 = vrot.slane %v1007, 5
      %v1065 = vsel %vm630, %v1063, %v1064
      %v1066 = vrot.slane %v1064, 4
      %v1067 = vrot.slane %v1008, 5
      %v1068 = vsel %vm630, %v1066, %v1067
      %v1069 = vrot.slane %v1009, 5
      %v1070 = vrot.slane %v1069, 4
      %v1071 = vrot.slane %v1010, 5
      %v1072 = vsel %vm630, %v1070, %v1071
      %v1073 = vrot.slane %v1071, 4
      %v1074 = vrot.slane %v1011, 5
      %v1075 = vsel %vm630, %v1073, %v1074
      %v1076 = vrot.slane %v1012, 5
      %v1077 = vrot.slane %v1076, 4
      %v1078 = vrot.slane %v1013, 5
      %v1079 = vsel %vm630, %v1077, %v1078
      %v1080 = vrot.slane %v1078, 4
      %v1081 = vrot.slane %v1014, 5
      %v1082 = vsel %vm630, %v1080, %v1081
      %v1083 = vrot.slane %v1015, 5
      %v1084 = vrot.slane %v1083, 4
      %v1085 = vrot.slane %v1016, 5
      %v1086 = vsel %vm630, %v1084, %v1085
      %v1087 = vrot.slane %v1085, 4
      %v1088 = vrot.slane %v1017, 5
      %v1089 = vsel %vm630, %v1087, %v1088
      %v1090 = vrot.slane %v1018, 5
      %v1091 = vrot.slane %v1090, 4
      %v1092 = vrot.slane %v1019, 5
      %v1093 = vsel %vm630, %v1091, %v1092
      %v1094 = vrot.slane %v1092, 4
      %v1095 = vrot.slane %v1020, 5
      %v1096 = vsel %vm630, %v1094, %v1095
      %v1097 = vrot.slane %v1021, 5
      %v1098 = vrot.slane %v1097, 4
      %v1099 = vrot.slane %v1022, 5
      %v1100 = vsel %vm630, %v1098, %v1099
      %v1101 = vrot.slane %v1099, 4
      %v1102 = vrot.slane %v1023, 5
      %v1103 = vsel %vm630, %v1101, %v1102
      %1120 = vst [vmem:[#allocation3 + $0x14] sm:$0xf] %v1051
      %1121 = vst [vmem:[#allocation3 + $0x38] sm:$0xf] %v1054
      %1122 = vst [vmem:[#allocation3 + $0x5c] sm:$0xf] %v1058
      %1123 = vst [vmem:[#allocation3 + $0x80] sm:$0xf] %v1061
      %1124 = vst [vmem:[#allocation3 + $0xa4] sm:$0xf] %v1065
      %1125 = vst [vmem:[#allocation3 + $0xc8] sm:$0xf] %v1068
      %1126 = vst [vmem:[#allocation3 + $0xec] sm:$0xf] %v1072
      %1127 = vst [vmem:[#allocation3 + $0x110] sm:$0xf] %v1075
      %1128 = vst [vmem:[#allocation3 + $0x134] sm:$0xf] %v1079
      %1129 = vst [vmem:[#allocation3 + $0x158] sm:$0xf] %v1082
      %1130 = vst [vmem:[#allocation3 + $0x17c] sm:$0xf] %v1086
      %1131 = vst [vmem:[#allocation3 + $0x1a0] sm:$0xf] %v1089
      %1132 = vst [vmem:[#allocation3 + $0x1c4] sm:$0xf] %v1093
      %1133 = vst [vmem:[#allocation3 + $0x1e8] sm:$0xf] %v1096
      %1134 = vst [vmem:[#allocation3 + $0x20c] sm:$0xf] %v1100
      %1135 = vst [vmem:[#allocation3 + $0x230] sm:$0xf] %v1103
      %s1136 = scalar_lea.vmem [#allocation2], 24
      %v1137 = vld [vmem:[%s1136] sm:$0xf]
      %v1138 = vld [vmem:[%s1136 + $0x4] sm:$0xf]
      %v1139 = vld [vmem:[%s1136 + $0xc] sm:$0xf]
      %v1140 = vld [vmem:[%s1136 + $0x10] sm:$0xf]
      %v1141 = vld [vmem:[%s1136 + $0x18] sm:$0xf]
      %v1142 = vld [vmem:[%s1136 + $0x1c] sm:$0xf]
      %v1143 = vld [vmem:[%s1136 + $0x24] sm:$0xf]
      %v1144 = vld [vmem:[%s1136 + $0x28] sm:$0xf]
      %v1145 = vld [vmem:[%s1136 + $0x30] sm:$0xf]
      %v1146 = vld [vmem:[%s1136 + $0x34] sm:$0xf]
      %v1147 = vld [vmem:[%s1136 + $0x3c] sm:$0xf]
      %v1148 = vld [vmem:[%s1136 + $0x40] sm:$0xf]
      %v1149 = vld [vmem:[%s1136 + $0x48] sm:$0xf]
      %v1150 = vld [vmem:[%s1136 + $0x4c] sm:$0xf]
      %v1151 = vld [vmem:[%s1136 + $0x54] sm:$0xf]
      %v1152 = vld [vmem:[%s1136 + $0x58] sm:$0xf]
      %1153 = vst [vmem:[#allocation3 + $0x18] sm:$0xf] %v1137
      %1154 = vst [vmem:[#allocation3 + $0x3c] sm:$0xf] %v1138
      %1155 = vst [vmem:[#allocation3 + $0x60] sm:$0xf] %v1139
      %1156 = vst [vmem:[#allocation3 + $0x84] sm:$0xf] %v1140
      %1157 = vst [vmem:[#allocation3 + $0xa8] sm:$0xf] %v1141
      %1158 = vst [vmem:[#allocation3 + $0xcc] sm:$0xf] %v1142
      %1159 = vst [vmem:[#allocation3 + $0xf0] sm:$0xf] %v1143
      %1160 = vst [vmem:[#allocation3 + $0x114] sm:$0xf] %v1144
      %1161 = vst [vmem:[#allocation3 + $0x138] sm:$0xf] %v1145
      %1162 = vst [vmem:[#allocation3 + $0x15c] sm:$0xf] %v1146
      %1163 = vst [vmem:[#allocation3 + $0x180] sm:$0xf] %v1147
      %1164 = vst [vmem:[#allocation3 + $0x1a4] sm:$0xf] %v1148
      %1165 = vst [vmem:[#allocation3 + $0x1c8] sm:$0xf] %v1149
      %1166 = vst [vmem:[#allocation3 + $0x1ec] sm:$0xf] %v1150
      %1167 = vst [vmem:[#allocation3 + $0x210] sm:$0xf] %v1151
      %1168 = vst [vmem:[#allocation3 + $0x234] sm:$0xf] %v1152
      %v1169 = vld [vmem:[%s1136] sm:$0xf]
      %v1170 = vld [vmem:[%s1136 + $0x4] sm:$0xf]
      %v1171 = vld [vmem:[%s1136 + $0x8] sm:$0x1]
      %v1172 = vld [vmem:[%s1136 + $0xc] sm:$0xf]
      %v1173 = vld [vmem:[%s1136 + $0x10] sm:$0xf]
      %v1174 = vld [vmem:[%s1136 + $0x14] sm:$0x1]
      %v1175 = vld [vmem:[%s1136 + $0x18] sm:$0xf]
      %v1176 = vld [vmem:[%s1136 + $0x1c] sm:$0xf]
      %v1177 = vld [vmem:[%s1136 + $0x20] sm:$0x1]
      %v1178 = vld [vmem:[%s1136 + $0x24] sm:$0xf]
      %v1179 = vld [vmem:[%s1136 + $0x28] sm:$0xf]
      %v1180 = vld [vmem:[%s1136 + $0x2c] sm:$0x1]
      %v1181 = vld [vmem:[%s1136 + $0x30] sm:$0xf]
      %v1182 = vld [vmem:[%s1136 + $0x34] sm:$0xf]
      %v1183 = vld [vmem:[%s1136 + $0x38] sm:$0x1]
      %v1184 = vld [vmem:[%s1136 + $0x3c] sm:$0xf]
      %v1185 = vld [vmem:[%s1136 + $0x40] sm:$0xf]
      %v1186 = vld [vmem:[%s1136 + $0x44] sm:$0x1]
      %v1187 = vld [vmem:[%s1136 + $0x48] sm:$0xf]
      %v1188 = vld [vmem:[%s1136 + $0x4c] sm:$0xf]
      %v1189 = vld [vmem:[%s1136 + $0x50] sm:$0x1]
      %v1190 = vld [vmem:[%s1136 + $0x54] sm:$0xf]
      %v1191 = vld [vmem:[%s1136 + $0x58] sm:$0xf]
      %v1192 = vld [vmem:[%s1136 + $0x5c] sm:$0x1]
      %v1194 = vshrl.u32 %v1169, 16
      %v1196 = vrot.slane %v1194, 4
      %v1197 = vshll.u32 %v1169, 16
      %v1199 = vrot.slane %v1197, 5
      %v1200 = vor.u32 %v1196, %v1199
      %v1201 = vrot.slane %v1200, 4
      %v1203 = vshll.u32 %v1170, 16
      %v1205 = vrot.slane %v1203, 5
      %v1206 = vsel %vm355, %v1201, %v1205
      %v1207 = vshrl.u32 %v1170, 16
      %v1209 = vrot.slane %v1207, 4
      %v1210 = vor.u32 %v1209, %v1205
      %v1211 = vrot.slane %v1210, 4
      %v1213 = vshll.u32 %v1171, 16
      %v1215 = vrot.slane %v1213, 5
      %v1216 = vsel %vm355, %v1211, %v1215
      %v1218 = vshrl.u32 %v1172, 16
      %v1220 = vrot.slane %v1218, 4
      %v1221 = vshll.u32 %v1172, 16
      %v1223 = vrot.slane %v1221, 5
      %v1224 = vor.u32 %v1220, %v1223
      %v1225 = vrot.slane %v1224, 4
      %v1227 = vshll.u32 %v1173, 16
      %v1229 = vrot.slane %v1227, 5
      %v1230 = vsel %vm355, %v1225, %v1229
      %v1231 = vshrl.u32 %v1173, 16
      %v1233 = vrot.slane %v1231, 4
      %v1234 = vor.u32 %v1233, %v1229
      %v1235 = vrot.slane %v1234, 4
      %v1237 = vshll.u32 %v1174, 16
      %v1239 = vrot.slane %v1237, 5
      %v1240 = vsel %vm355, %v1235, %v1239
      %v1242 = vshrl.u32 %v1175, 16
      %v1244 = vrot.slane %v1242, 4
      %v1245 = vshll.u32 %v1175, 16
      %v1247 = vrot.slane %v1245, 5
      %v1248 = vor.u32 %v1244, %v1247
      %v1249 = vrot.slane %v1248, 4
      %v1251 = vshll.u32 %v1176, 16
      %v1253 = vrot.slane %v1251, 5
      %v1254 = vsel %vm355, %v1249, %v1253
      %v1255 = vshrl.u32 %v1176, 16
      %v1257 = vrot.slane %v1255, 4
      %v1258 = vor.u32 %v1257, %v1253
      %v1259 = vrot.slane %v1258, 4
      %v1261 = vshll.u32 %v1177, 16
      %v1263 = vrot.slane %v1261, 5
      %v1264 = vsel %vm355, %v1259, %v1263
      %v1266 = vshrl.u32 %v1178, 16
      %v1268 = vrot.slane %v1266, 4
      %v1269 = vshll.u32 %v1178, 16
      %v1271 = vrot.slane %v1269, 5
      %v1272 = vor.u32 %v1268, %v1271
      %v1273 = vrot.slane %v1272, 4
      %v1275 = vshll.u32 %v1179, 16
      %v1277 = vrot.slane %v1275, 5
      %v1278 = vsel %vm355, %v1273, %v1277
      %v1279 = vshrl.u32 %v1179, 16
      %v1281 = vrot.slane %v1279, 4
      %v1282 = vor.u32 %v1281, %v1277
      %v1283 = vrot.slane %v1282, 4
      %v1285 = vshll.u32 %v1180, 16
      %v1287 = vrot.slane %v1285, 5
      %v1288 = vsel %vm355, %v1283, %v1287
      %v1290 = vshrl.u32 %v1181, 16
      %v1292 = vrot.slane %v1290, 4
      %v1293 = vshll.u32 %v1181, 16
      %v1295 = vrot.slane %v1293, 5
      %v1296 = vor.u32 %v1292, %v1295
      %v1297 = vrot.slane %v1296, 4
      %v1299 = vshll.u32 %v1182, 16
      %v1301 = vrot.slane %v1299, 5
      %v1302 = vsel %vm355, %v1297, %v1301
      %v1303 = vshrl.u32 %v1182, 16
      %v1305 = vrot.slane %v1303, 4
      %v1306 = vor.u32 %v1305, %v1301
      %v1307 = vrot.slane %v1306, 4
      %v1309 = vshll.u32 %v1183, 16
      %v1311 = vrot.slane %v1309, 5
      %v1312 = vsel %vm355, %v1307, %v1311
      %v1314 = vshrl.u32 %v1184, 16
      %v1316 = vrot.slane %v1314, 4
      %v1317 = vshll.u32 %v1184, 16
      %v1319 = vrot.slane %v1317, 5
      %v1320 = vor.u32 %v1316, %v1319
      %v1321 = vrot.slane %v1320, 4
      %v1323 = vshll.u32 %v1185, 16
      %v1325 = vrot.slane %v1323, 5
      %v1326 = vsel %vm355, %v1321, %v1325
      %v1327 = vshrl.u32 %v1185, 16
      %v1329 = vrot.slane %v1327, 4
      %v1330 = vor.u32 %v1329, %v1325
      %v1331 = vrot.slane %v1330, 4
      %v1333 = vshll.u32 %v1186, 16
      %v1335 = vrot.slane %v1333, 5
      %v1336 = vsel %vm355, %v1331, %v1335
      %v1338 = vshrl.u32 %v1187, 16
      %v1340 = vrot.slane %v1338, 4
      %v1341 = vshll.u32 %v1187, 16
      %v1343 = vrot.slane %v1341, 5
      %v1344 = vor.u32 %v1340, %v1343
      %v1345 = vrot.slane %v1344, 4
      %v1347 = vshll.u32 %v1188, 16
      %v1349 = vrot.slane %v1347, 5
      %v1350 = vsel %vm355, %v1345, %v1349
      %v1351 = vshrl.u32 %v1188, 16
      %v1353 = vrot.slane %v1351, 4
      %v1354 = vor.u32 %v1353, %v1349
      %v1355 = vrot.slane %v1354, 4
      %v1357 = vshll.u32 %v1189, 16
      %v1359 = vrot.slane %v1357, 5
      %v1360 = vsel %vm355, %v1355, %v1359
      %v1362 = vshrl.u32 %v1190, 16
      %v1364 = vrot.slane %v1362, 4
      %v1365 = vshll.u32 %v1190, 16
      %v1367 = vrot.slane %v1365, 5
      %v1368 = vor.u32 %v1364, %v1367
      %v1369 = vrot.slane %v1368, 4
      %v1371 = vshll.u32 %v1191, 16
      %v1373 = vrot.slane %v1371, 5
      %v1374 = vsel %vm355, %v1369, %v1373
      %v1375 = vshrl.u32 %v1191, 16
      %v1377 = vrot.slane %v1375, 4
      %v1378 = vor.u32 %v1377, %v1373
      %v1379 = vrot.slane %v1378, 4
      %v1381 = vshll.u32 %v1192, 16
      %v1383 = vrot.slane %v1381, 5
      %v1384 = vsel %vm355, %v1379, %v1383
      %1401 = vst [vmem:[#allocation3 + $0x1c] sm:$0xf] %v1206
      %1402 = vst [vmem:[#allocation3 + $0x40] sm:$0xf] %v1216
      %1403 = vst [vmem:[#allocation3 + $0x64] sm:$0xf] %v1230
      %1404 = vst [vmem:[#allocation3 + $0x88] sm:$0xf] %v1240
      %1405 = vst [vmem:[#allocation3 + $0xac] sm:$0xf] %v1254
      %1406 = vst [vmem:[#allocation3 + $0xd0] sm:$0xf] %v1264
      %1407 = vst [vmem:[#allocation3 + $0xf4] sm:$0xf] %v1278
      %1408 = vst [vmem:[#allocation3 + $0x118] sm:$0xf] %v1288
      %1409 = vst [vmem:[#allocation3 + $0x13c] sm:$0xf] %v1302
      %1410 = vst [vmem:[#allocation3 + $0x160] sm:$0xf] %v1312
      %1411 = vst [vmem:[#allocation3 + $0x184] sm:$0xf] %v1326
      %1412 = vst [vmem:[#allocation3 + $0x1a8] sm:$0xf] %v1336
      %1413 = vst [vmem:[#allocation3 + $0x1cc] sm:$0xf] %v1350
      %1414 = vst [vmem:[#allocation3 + $0x1f0] sm:$0xf] %v1360
      %1415 = vst [vmem:[#allocation3 + $0x214] sm:$0xf] %v1374
      %1416 = vst [vmem:[#allocation3 + $0x238] sm:$0xf] %v1384
      %v1417 = vld [vmem:[%s1136] sm:$0xe]
      %v1418 = vld [vmem:[%s1136 + $0x4] sm:$0xf]
      %v1419 = vld [vmem:[%s1136 + $0x8] sm:$0x1]
      %v1420 = vld [vmem:[%s1136 + $0xc] sm:$0xe]
      %v1421 = vld [vmem:[%s1136 + $0x10] sm:$0xf]
      %v1422 = vld [vmem:[%s1136 + $0x14] sm:$0x1]
      %v1423 = vld [vmem:[%s1136 + $0x18] sm:$0xe]
      %v1424 = vld [vmem:[%s1136 + $0x1c] sm:$0xf]
      %v1425 = vld [vmem:[%s1136 + $0x20] sm:$0x1]
      %v1426 = vld [vmem:[%s1136 + $0x24] sm:$0xe]
      %v1427 = vld [vmem:[%s1136 + $0x28] sm:$0xf]
      %v1428 = vld [vmem:[%s1136 + $0x2c] sm:$0x1]
      %v1429 = vld [vmem:[%s1136 + $0x30] sm:$0xe]
      %v1430 = vld [vmem:[%s1136 + $0x34] sm:$0xf]
      %v1431 = vld [vmem:[%s1136 + $0x38] sm:$0x1]
      %v1432 = vld [vmem:[%s1136 + $0x3c] sm:$0xe]
      %v1433 = vld [vmem:[%s1136 + $0x40] sm:$0xf]
      %v1434 = vld [vmem:[%s1136 + $0x44] sm:$0x1]
      %v1435 = vld [vmem:[%s1136 + $0x48] sm:$0xe]
      %v1436 = vld [vmem:[%s1136 + $0x4c] sm:$0xf]
      %v1437 = vld [vmem:[%s1136 + $0x50] sm:$0x1]
      %v1438 = vld [vmem:[%s1136 + $0x54] sm:$0xe]
      %v1439 = vld [vmem:[%s1136 + $0x58] sm:$0xf]
      %v1440 = vld [vmem:[%s1136 + $0x5c] sm:$0x1]
      %v1465 = vrot.slane %v1417, 5
      %v1466 = vrot.slane %v1465, 4
      %v1467 = vrot.slane %v1418, 5
      %v1468 = vsel %vm630, %v1466, %v1467
      %v1469 = vrot.slane %v1467, 4
      %v1470 = vrot.slane %v1419, 5
      %v1471 = vsel %vm630, %v1469, %v1470
      %v1472 = vrot.slane %v1420, 5
      %v1473 = vrot.slane %v1472, 4
      %v1474 = vrot.slane %v1421, 5
      %v1475 = vsel %vm630, %v1473, %v1474
      %v1476 = vrot.slane %v1474, 4
      %v1477 = vrot.slane %v1422, 5
      %v1478 = vsel %vm630, %v1476, %v1477
      %v1479 = vrot.slane %v1423, 5
      %v1480 = vrot.slane %v1479, 4
      %v1481 = vrot.slane %v1424, 5
      %v1482 = vsel %vm630, %v1480, %v1481
      %v1483 = vrot.slane %v1481, 4
      %v1484 = vrot.slane %v1425, 5
      %v1485 = vsel %vm630, %v1483, %v1484
      %v1486 = vrot.slane %v1426, 5
      %v1487 = vrot.slane %v1486, 4
      %v1488 = vrot.slane %v1427, 5
      %v1489 = vsel %vm630, %v1487, %v1488
      %v1490 = vrot.slane %v1488, 4
      %v1491 = vrot.slane %v1428, 5
      %v1492 = vsel %vm630, %v1490, %v1491
      %v1493 = vrot.slane %v1429, 5
      %v1494 = vrot.slane %v1493, 4
      %v1495 = vrot.slane %v1430, 5
      %v1496 = vsel %vm630, %v1494, %v1495
      %v1497 = vrot.slane %v1495, 4
      %v1498 = vrot.slane %v1431, 5
      %v1499 = vsel %vm630, %v1497, %v1498
      %v1500 = vrot.slane %v1432, 5
      %v1501 = vrot.slane %v1500, 4
      %v1502 = vrot.slane %v1433, 5
      %v1503 = vsel %vm630, %v1501, %v1502
      %v1504 = vrot.slane %v1502, 4
      %v1505 = vrot.slane %v1434, 5
      %v1506 = vsel %vm630, %v1504, %v1505
      %v1507 = vrot.slane %v1435, 5
      %v1508 = vrot.slane %v1507, 4
      %v1509 = vrot.slane %v1436, 5
      %v1510 = vsel %vm630, %v1508, %v1509
      %v1511 = vrot.slane %v1509, 4
      %v1512 = vrot.slane %v1437, 5
      %v1513 = vsel %vm630, %v1511, %v1512
      %v1514 = vrot.slane %v1438, 5
      %v1515 = vrot.slane %v1514, 4
      %v1516 = vrot.slane %v1439, 5
      %v1517 = vsel %vm630, %v1515, %v1516
      %v1518 = vrot.slane %v1516, 4
      %v1519 = vrot.slane %v1440, 5
      %v1520 = vsel %vm630, %v1518, %v1519
      %1537 = vst [vmem:[#allocation3 + $0x20] sm:$0xf] %v1468
      %1538 = vst [vmem:[#allocation3 + $0x44] sm:$0xf] %v1471
      %1539 = vst [vmem:[#allocation3 + $0x68] sm:$0xf] %v1475
      %1540 = vst [vmem:[#allocation3 + $0x8c] sm:$0xf] %v1478
      %1541 = vst [vmem:[#allocation3 + $0xb0] sm:$0xf] %v1482
      %1542 = vst [vmem:[#allocation3 + $0xd4] sm:$0xf] %v1485
      %1543 = vst [vmem:[#allocation3 + $0xf8] sm:$0xf] %v1489
      %1544 = vst [vmem:[#allocation3 + $0x11c] sm:$0xf] %v1492
      %1545 = vst [vmem:[#allocation3 + $0x140] sm:$0xf] %v1496
      %1546 = vst [vmem:[#allocation3 + $0x164] sm:$0xf] %v1499
      %1547 = vst [vmem:[#allocation3 + $0x188] sm:$0xf] %v1503
      %1548 = vst [vmem:[#allocation3 + $0x1ac] sm:$0xf] %v1506
      %1549 = vst [vmem:[#allocation3 + $0x1d0] sm:$0xf] %v1510
      %1550 = vst [vmem:[#allocation3 + $0x1f4] sm:$0xf] %v1513
      %1551 = vst [vmem:[#allocation3 + $0x218] sm:$0xf] %v1517
      %1552 = vst [vmem:[#allocation3 + $0x23c] sm:$0xf] %v1520
      %v1553 = vld [vmem:[#allocation3] sm:$0xff]
      %v1554 = vld [vmem:[#allocation3 + $0x8] sm:$0xff]
      %v1555 = vld [vmem:[#allocation3 + $0x10] sm:$0xff]
      %v1556 = vld [vmem:[#allocation3 + $0x18] sm:$0xff]
      %v1557 = vld [vmem:[#allocation3 + $0x20] sm:$0xf]
      %v1558 = vld [vmem:[#allocation3 + $0x24] sm:$0xff]
      %v1559 = vld [vmem:[#allocation3 + $0x2c] sm:$0xff]
      %v1560 = vld [vmem:[#allocation3 + $0x34] sm:$0xff]
      %v1561 = vld [vmem:[#allocation3 + $0x3c] sm:$0xff]
      %v1562 = vld [vmem:[#allocation3 + $0x44] sm:$0xf]
      %v1563 = vld [vmem:[#allocation3 + $0x48] sm:$0xff]
      %v1564 = vld [vmem:[#allocation3 + $0x50] sm:$0xff]
      %v1565 = vld [vmem:[#allocation3 + $0x58] sm:$0xff]
      %v1566 = vld [vmem:[#allocation3 + $0x60] sm:$0xff]
      %v1567 = vld [vmem:[#allocation3 + $0x68] sm:$0xf]
      %v1568 = vld [vmem:[#allocation3 + $0x6c] sm:$0xff]
      %v1569 = vld [vmem:[#allocation3 + $0x74] sm:$0xff]
      %v1570 = vld [vmem:[#allocation3 + $0x7c] sm:$0xff]
      %v1571 = vld [vmem:[#allocation3 + $0x84] sm:$0xff]
      %v1572 = vld [vmem:[#allocation3 + $0x8c] sm:$0xf]
      %v1573 = vld [vmem:[#allocation3 + $0x90] sm:$0xff]
      %v1574 = vld [vmem:[#allocation3 + $0x98] sm:$0xff]
      %v1575 = vld [vmem:[#allocation3 + $0xa0] sm:$0xff]
      %v1576 = vld [vmem:[#allocation3 + $0xa8] sm:$0xff]
      %v1577 = vld [vmem:[#allocation3 + $0xb0] sm:$0xf]
      %v1578 = vld [vmem:[#allocation3 + $0xb4] sm:$0xff]
      %v1579 = vld [vmem:[#allocation3 + $0xbc] sm:$0xff]
      %v1580 = vld [vmem:[#allocation3 + $0xc4] sm:$0xff]
      %v1581 = vld [vmem:[#allocation3 + $0xcc] sm:$0xff]
      %v1582 = vld [vmem:[#allocation3 + $0xd4] sm:$0xf]
      %v1583 = vld [vmem:[#allocation3 + $0xd8] sm:$0xff]
      %v1584 = vld [vmem:[#allocation3 + $0xe0] sm:$0xff]
      %v1585 = vld [vmem:[#allocation3 + $0xe8] sm:$0xff]
      %v1586 = vld [vmem:[#allocation3 + $0xf0] sm:$0xff]
      %v1587 = vld [vmem:[#allocation3 + $0xf8] sm:$0xf]
      %v1588 = vld [vmem:[#allocation3 + $0xfc] sm:$0xff]
      %v1589 = vld [vmem:[#allocation3 + $0x104] sm:$0xff]
      %v1590 = vld [vmem:[#allocation3 + $0x10c] sm:$0xff]
      %v1591 = vld [vmem:[#allocation3 + $0x114] sm:$0xff]
      %v1592 = vld [vmem:[#allocation3 + $0x11c] sm:$0xf]
      %v1593 = vld [vmem:[#allocation3 + $0x120] sm:$0xff]
      %v1594 = vld [vmem:[#allocation3 + $0x128] sm:$0xff]
      %v1595 = vld [vmem:[#allocation3 + $0x130] sm:$0xff]
      %v1596 = vld [vmem:[#allocation3 + $0x138] sm:$0xff]
      %v1597 = vld [vmem:[#allocation3 + $0x140] sm:$0xf]
      %v1598 = vld [vmem:[#allocation3 + $0x144] sm:$0xff]
      %v1599 = vld [vmem:[#allocation3 + $0x14c] sm:$0xff]
      %v1600 = vld [vmem:[#allocation3 + $0x154] sm:$0xff]
      %v1601 = vld [vmem:[#allocation3 + $0x15c] sm:$0xff]
      %v1602 = vld [vmem:[#allocation3 + $0x164] sm:$0xf]
      %v1603 = vld [vmem:[#allocation3 + $0x168] sm:$0xff]
      %v1604 = vld [vmem:[#allocation3 + $0x170] sm:$0xff]
      %v1605 = vld [vmem:[#allocation3 + $0x178] sm:$0xff]
      %v1606 = vld [vmem:[#allocation3 + $0x180] sm:$0xff]
      %v1607 = vld [vmem:[#allocation3 + $0x188] sm:$0xf]
      %v1608 = vld [vmem:[#allocation3 + $0x18c] sm:$0xff]
      %v1609 = vld [vmem:[#allocation3 + $0x194] sm:$0xff]
      %v1610 = vld [vmem:[#allocation3 + $0x19c] sm:$0xff]
      %v1611 = vld [vmem:[#allocation3 + $0x1a4] sm:$0xff]
      %v1612 = vld [vmem:[#allocation3 + $0x1ac] sm:$0xf]
      %v1613 = vld [vmem:[#allocation3 + $0x1b0] sm:$0xff]
      %v1614 = vld [vmem:[#allocation3 + $0x1b8] sm:$0xff]
      %v1615 = vld [vmem:[#allocation3 + $0x1c0] sm:$0xff]
      %v1616 = vld [vmem:[#allocation3 + $0x1c8] sm:$0xff]
      %v1617 = vld [vmem:[#allocation3 + $0x1d0] sm:$0xf]
      %v1618 = vld [vmem:[#allocation3 + $0x1d4] sm:$0xff]
      %v1619 = vld [vmem:[#allocation3 + $0x1dc] sm:$0xff]
      %v1620 = vld [vmem:[#allocation3 + $0x1e4] sm:$0xff]
      %v1621 = vld [vmem:[#allocation3 + $0x1ec] sm:$0xff]
      %v1622 = vld [vmem:[#allocation3 + $0x1f4] sm:$0xf]
      %v1623 = vld [vmem:[#allocation3 + $0x1f8] sm:$0xff]
      %v1624 = vld [vmem:[#allocation3 + $0x200] sm:$0xff]
      %v1625 = vld [vmem:[#allocation3 + $0x208] sm:$0xff]
      %v1626 = vld [vmem:[#allocation3 + $0x210] sm:$0xff]
      %v1627 = vld [vmem:[#allocation3 + $0x218] sm:$0xf]
      %v1628 = vld [vmem:[#allocation3 + $0x21c] sm:$0xff]
      %v1629 = vld [vmem:[#allocation3 + $0x224] sm:$0xff]
      %v1630 = vld [vmem:[#allocation3 + $0x22c] sm:$0xff]
      %v1631 = vld [vmem:[#allocation3 + $0x234] sm:$0xff]
      %v1632 = vld [vmem:[#allocation3 + $0x23c] sm:$0xf]
      %v1633 = vld [vmem:[%s1] sm:$0xf]
      %v1634 = vld [vmem:[%s1 + $0x4] sm:$0xf]
      %v1635 = vld [vmem:[%s1 + $0x8] sm:$0xf]
      %v1636 = vld [vmem:[%s1 + $0xc] sm:$0xf]
      %v1637 = vld [vmem:[%s1 + $0x10] sm:$0xf]
      %v1638 = vld [vmem:[%s1 + $0x14] sm:$0xf]
      %v1639 = vld [vmem:[%s1 + $0x18] sm:$0xf]
      %v1640 = vld [vmem:[%s1 + $0x1c] sm:$0xf]
      %v1641 = vld [vmem:[%s1 + $0x20] sm:$0xf]
      %v1642 = vld [vmem:[%s1 + $0x24] sm:$0xf]
      %v1643 = vld [vmem:[%s1 + $0x28] sm:$0xf]
      %v1644 = vld [vmem:[%s1 + $0x2c] sm:$0xf]
      %v1645 = vld [vmem:[%s1 + $0x30] sm:$0xf]
      %v1646 = vld [vmem:[%s1 + $0x34] sm:$0xf]
      %v1647 = vld [vmem:[%s1 + $0x38] sm:$0xf]
      %v1648 = vld [vmem:[%s1 + $0x3c] sm:$0xf]
      %v1649 = vld [vmem:[%s1 + $0x40] sm:$0xf]
      %v1650 = vld [vmem:[%s1 + $0x44] sm:$0xf]
      %v1651 = vld [vmem:[%s1 + $0x48] sm:$0xf]
      %v1652 = vld [vmem:[%s1 + $0x4c] sm:$0xf]
      %v1653 = vld [vmem:[%s1 + $0x50] sm:$0xf]
      %v1654 = vld [vmem:[%s1 + $0x54] sm:$0xf]
      %v1655 = vld [vmem:[%s1 + $0x58] sm:$0xf]
      %v1656 = vld [vmem:[%s1 + $0x5c] sm:$0xf]
      %v1657 = vld [vmem:[%s1 + $0x60] sm:$0xf]
      %v1658 = vld [vmem:[%s1 + $0x64] sm:$0xf]
      %v1659 = vld [vmem:[%s1 + $0x68] sm:$0xf]
      %v1660 = vld [vmem:[%s1 + $0x6c] sm:$0xf]
      %v1661 = vld [vmem:[%s1 + $0x70] sm:$0xf]
      %v1662 = vld [vmem:[%s1 + $0x74] sm:$0xf]
      %v1663 = vld [vmem:[%s1 + $0x78] sm:$0xf]
      %v1664 = vld [vmem:[%s1 + $0x7c] sm:$0xf]
      %v1665 = vld [vmem:[%s1 + $0x80] sm:$0xf]
      %v1666 = vld [vmem:[%s1 + $0x84] sm:$0xf]
      %v1667 = vld [vmem:[%s1 + $0x88] sm:$0xf]
      %v1668 = vld [vmem:[%s1 + $0x8c] sm:$0xf]
      %v1669 = vld [vmem:[%s1 + $0x90] sm:$0xf]
      %v1670 = vld [vmem:[%s1 + $0x94] sm:$0xf]
      %v1671 = vld [vmem:[%s1 + $0x98] sm:$0xf]
      %v1672 = vld [vmem:[%s1 + $0x9c] sm:$0xf]
      %v1673 = vld [vmem:[%s1 + $0xa0] sm:$0xf]
      %v1674 = vld [vmem:[%s1 + $0xa4] sm:$0xf]
      %v1675 = vld [vmem:[%s1 + $0xa8] sm:$0xf]
      %v1676 = vld [vmem:[%s1 + $0xac] sm:$0xf]
      %v1677 = vld [vmem:[%s1 + $0xb0] sm:$0xf]
      %v1678 = vld [vmem:[%s1 + $0xb4] sm:$0xf]
      %v1679 = vld [vmem:[%s1 + $0xb8] sm:$0xf]
      %v1680 = vld [vmem:[%s1 + $0xbc] sm:$0xf]
      %v1681 = vld [vmem:[%s1 + $0xc0] sm:$0xf]
      %v1682 = vld [vmem:[%s1 + $0xc4] sm:$0xf]
      %v1683 = vld [vmem:[%s1 + $0xc8] sm:$0xf]
      %v1684 = vld [vmem:[%s1 + $0xcc] sm:$0xf]
      %v1685 = vld [vmem:[%s1 + $0xd0] sm:$0xf]
      %v1686 = vld [vmem:[%s1 + $0xd4] sm:$0xf]
      %v1687 = vld [vmem:[%s1 + $0xd8] sm:$0xf]
      %v1688 = vld [vmem:[%s1 + $0xdc] sm:$0xf]
      %v1689 = vld [vmem:[%s1 + $0xe0] sm:$0xf]
      %v1690 = vld [vmem:[%s1 + $0xe4] sm:$0xf]
      %v1691 = vld [vmem:[%s1 + $0xe8] sm:$0xf]
      %v1692 = vld [vmem:[%s1 + $0xec] sm:$0xf]
      %v1693 = vld [vmem:[%s1 + $0xf0] sm:$0xf]
      %v1694 = vld [vmem:[%s1 + $0xf4] sm:$0xf]
      %v1695 = vld [vmem:[%s1 + $0xf8] sm:$0xf]
      %v1696 = vld [vmem:[%s1 + $0xfc] sm:$0xf]
      %v1697 = vld [vmem:[%s1 + $0x100] sm:$0xf]
      %v1698 = vld [vmem:[%s1 + $0x104] sm:$0xf]
      %v1699 = vld [vmem:[%s1 + $0x108] sm:$0xf]
      %v1700 = vld [vmem:[%s1 + $0x10c] sm:$0xf]
      %v1701 = vld [vmem:[%s1 + $0x110] sm:$0xf]
      %v1702 = vld [vmem:[%s1 + $0x114] sm:$0xf]
      %v1703 = vld [vmem:[%s1 + $0x118] sm:$0xf]
      %v1704 = vld [vmem:[%s1 + $0x11c] sm:$0xf]
      %v1705 = vld [vmem:[%s1 + $0x120] sm:$0xf]
      %v1706 = vld [vmem:[%s1 + $0x124] sm:$0xf]
      %v1707 = vld [vmem:[%s1 + $0x128] sm:$0xf]
      %v1708 = vld [vmem:[%s1 + $0x12c] sm:$0xf]
      %v1709 = vld [vmem:[%s1 + $0x130] sm:$0xf]
      %v1710 = vld [vmem:[%s1 + $0x134] sm:$0xf]
      %v1711 = vld [vmem:[%s1 + $0x138] sm:$0xf]
      %v1712 = vld [vmem:[%s1 + $0x13c] sm:$0xf]
      %v1713 = vld [vmem:[%s1 + $0x140] sm:$0xf]
      %v1714 = vld [vmem:[%s1 + $0x144] sm:$0xf]
      %v1715 = vld [vmem:[%s1 + $0x148] sm:$0xf]
      %v1716 = vld [vmem:[%s1 + $0x14c] sm:$0xf]
      %v1717 = vld [vmem:[%s1 + $0x150] sm:$0xf]
      %v1718 = vld [vmem:[%s1 + $0x154] sm:$0xf]
      %v1719 = vld [vmem:[%s1 + $0x158] sm:$0xf]
      %v1720 = vld [vmem:[%s1 + $0x15c] sm:$0xf]
      %v1721 = vld [vmem:[%s1 + $0x160] sm:$0xf]
      %v1722 = vld [vmem:[%s1 + $0x164] sm:$0xf]
      %v1723 = vld [vmem:[%s1 + $0x168] sm:$0xf]
      %v1724 = vld [vmem:[%s1 + $0x16c] sm:$0xf]
      %v1725 = vld [vmem:[%s1 + $0x170] sm:$0xf]
      %v1726 = vld [vmem:[%s1 + $0x174] sm:$0xf]
      %v1727 = vld [vmem:[%s1 + $0x178] sm:$0xf]
      %v1728 = vld [vmem:[%s1 + $0x17c] sm:$0xf]
      %v1729 = vld [vmem:[%s1 + $0x180] sm:$0xf]
      %v1730 = vld [vmem:[%s1 + $0x184] sm:$0xf]
      %v1731 = vld [vmem:[%s1 + $0x188] sm:$0xf]
      %v1732 = vld [vmem:[%s1 + $0x18c] sm:$0xf]
      %v1733 = vld [vmem:[%s1 + $0x190] sm:$0xf]
      %v1734 = vld [vmem:[%s1 + $0x194] sm:$0xf]
      %v1735 = vld [vmem:[%s1 + $0x198] sm:$0xf]
      %v1736 = vld [vmem:[%s1 + $0x19c] sm:$0xf]
      %v1737 = vld [vmem:[%s1 + $0x1a0] sm:$0xf]
      %v1738 = vld [vmem:[%s1 + $0x1a4] sm:$0xf]
      %v1739 = vld [vmem:[%s1 + $0x1a8] sm:$0xf]
      %v1740 = vld [vmem:[%s1 + $0x1ac] sm:$0xf]
      %v1741 = vld [vmem:[%s1 + $0x1b0] sm:$0xf]
      %v1742 = vld [vmem:[%s1 + $0x1b4] sm:$0xf]
      %v1743 = vld [vmem:[%s1 + $0x1b8] sm:$0xf]
      %v1744 = vld [vmem:[%s1 + $0x1bc] sm:$0xf]
      %v1745 = vld [vmem:[%s1 + $0x1c0] sm:$0xf]
      %v1746 = vld [vmem:[%s1 + $0x1c4] sm:$0xf]
      %v1747 = vld [vmem:[%s1 + $0x1c8] sm:$0xf]
      %v1748 = vld [vmem:[%s1 + $0x1cc] sm:$0xf]
      %v1749 = vld [vmem:[%s1 + $0x1d0] sm:$0xf]
      %v1750 = vld [vmem:[%s1 + $0x1d4] sm:$0xf]
      %v1751 = vld [vmem:[%s1 + $0x1d8] sm:$0xf]
      %v1752 = vld [vmem:[%s1 + $0x1dc] sm:$0xf]
      %v1753 = vld [vmem:[%s1 + $0x1e0] sm:$0xf]
      %v1754 = vld [vmem:[%s1 + $0x1e4] sm:$0xf]
      %v1755 = vld [vmem:[%s1 + $0x1e8] sm:$0xf]
      %v1756 = vld [vmem:[%s1 + $0x1ec] sm:$0xf]
      %v1757 = vld [vmem:[%s1 + $0x1f0] sm:$0xf]
      %v1758 = vld [vmem:[%s1 + $0x1f4] sm:$0xf]
      %v1759 = vld [vmem:[%s1 + $0x1f8] sm:$0xf]
      %v1760 = vld [vmem:[%s1 + $0x1fc] sm:$0xf]
      %v1761 = vld [vmem:[%s1 + $0x200] sm:$0xf]
      %v1762 = vld [vmem:[%s1 + $0x204] sm:$0xf]
      %v1763 = vld [vmem:[%s1 + $0x208] sm:$0xf]
      %v1764 = vld [vmem:[%s1 + $0x20c] sm:$0xf]
      %v1765 = vld [vmem:[%s1 + $0x210] sm:$0xf]
      %v1766 = vld [vmem:[%s1 + $0x214] sm:$0xf]
      %v1767 = vld [vmem:[%s1 + $0x218] sm:$0xf]
      %v1768 = vld [vmem:[%s1 + $0x21c] sm:$0xf]
      %v1769 = vld [vmem:[%s1 + $0x220] sm:$0xf]
      %v1770 = vld [vmem:[%s1 + $0x224] sm:$0xf]
      %v1771 = vld [vmem:[%s1 + $0x228] sm:$0xf]
      %v1772 = vld [vmem:[%s1 + $0x22c] sm:$0xf]
      %v1773 = vld [vmem:[%s1 + $0x230] sm:$0xf]
      %v1774 = vld [vmem:[%s1 + $0x234] sm:$0xf]
      %v1775 = vld [vmem:[%s1 + $0x238] sm:$0xf]
      %v1776 = vld [vmem:[%s1 + $0x23c] sm:$0xf]
      %v1857 = vunpack.c.l.b16 %v1553
      %v1858 = vunpack.c.h.b16 %v1553
      %v1859 = vunpack.c.l.b16 %v1554
      %v1860 = vunpack.c.h.b16 %v1554
      %v1861 = vunpack.c.l.b16 %v1555
      %v1862 = vunpack.c.h.b16 %v1555
      %v1863 = vunpack.c.l.b16 %v1556
      %v1864 = vunpack.c.h.b16 %v1556
      %v1865 = vunpack.c.l.b16 %v1557
      %v1866 = vunpack.c.l.b16 %v1558
      %v1867 = vunpack.c.h.b16 %v1558
      %v1868 = vunpack.c.l.b16 %v1559
      %v1869 = vunpack.c.h.b16 %v1559
      %v1870 = vunpack.c.l.b16 %v1560
      %v1871 = vunpack.c.h.b16 %v1560
      %v1872 = vunpack.c.l.b16 %v1561
      %v1873 = vunpack.c.h.b16 %v1561
      %v1874 = vunpack.c.l.b16 %v1562
      %v1875 = vunpack.c.l.b16 %v1563
      %v1876 = vunpack.c.h.b16 %v1563
      %v1877 = vunpack.c.l.b16 %v1564
      %v1878 = vunpack.c.h.b16 %v1564
      %v1879 = vunpack.c.l.b16 %v1565
      %v1880 = vunpack.c.h.b16 %v1565
      %v1881 = vunpack.c.l.b16 %v1566
      %v1882 = vunpack.c.h.b16 %v1566
      %v1883 = vunpack.c.l.b16 %v1567
      %v1884 = vunpack.c.l.b16 %v1568
      %v1885 = vunpack.c.h.b16 %v1568
      %v1886 = vunpack.c.l.b16 %v1569
      %v1887 = vunpack.c.h.b16 %v1569
      %v1888 = vunpack.c.l.b16 %v1570
      %v1889 = vunpack.c.h.b16 %v1570
      %v1890 = vunpack.c.l.b16 %v1571
      %v1891 = vunpack.c.h.b16 %v1571
      %v1892 = vunpack.c.l.b16 %v1572
      %v1893 = vunpack.c.l.b16 %v1573
      %v1894 = vunpack.c.h.b16 %v1573
      %v1895 = vunpack.c.l.b16 %v1574
      %v1896 = vunpack.c.h.b16 %v1574
      %v1897 = vunpack.c.l.b16 %v1575
      %v1898 = vunpack.c.h.b16 %v1575
      %v1899 = vunpack.c.l.b16 %v1576
      %v1900 = vunpack.c.h.b16 %v1576
      %v1901 = vunpack.c.l.b16 %v1577
      %v1902 = vunpack.c.l.b16 %v1578
      %v1903 = vunpack.c.h.b16 %v1578
      %v1904 = vunpack.c.l.b16 %v1579
      %v1905 = vunpack.c.h.b16 %v1579
      %v1906 = vunpack.c.l.b16 %v1580
      %v1907 = vunpack.c.h.b16 %v1580
      %v1908 = vunpack.c.l.b16 %v1581
      %v1909 = vunpack.c.h.b16 %v1581
      %v1910 = vunpack.c.l.b16 %v1582
      %v1911 = vunpack.c.l.b16 %v1583
      %v1912 = vunpack.c.h.b16 %v1583
      %v1913 = vunpack.c.l.b16 %v1584
      %v1914 = vunpack.c.h.b16 %v1584
      %v1915 = vunpack.c.l.b16 %v1585
      %v1916 = vunpack.c.h.b16 %v1585
      %v1917 = vunpack.c.l.b16 %v1586
      %v1918 = vunpack.c.h.b16 %v1586
      %v1919 = vunpack.c.l.b16 %v1587
      %v1920 = vunpack.c.l.b16 %v1588
      %v1921 = vunpack.c.h.b16 %v1588
      %v1922 = vunpack.c.l.b16 %v1589
      %v1923 = vunpack.c.h.b16 %v1589
      %v1924 = vunpack.c.l.b16 %v1590
      %v1925 = vunpack.c.h.b16 %v1590
      %v1926 = vunpack.c.l.b16 %v1591
      %v1927 = vunpack.c.h.b16 %v1591
      %v1928 = vunpack.c.l.b16 %v1592
      %v1929 = vunpack.c.l.b16 %v1593
      %v1930 = vunpack.c.h.b16 %v1593
      %v1931 = vunpack.c.l.b16 %v1594
      %v1932 = vunpack.c.h.b16 %v1594
      %v1933 = vunpack.c.l.b16 %v1595
      %v1934 = vunpack.c.h.b16 %v1595
      %v1935 = vunpack.c.l.b16 %v1596
      %v1936 = vunpack.c.h.b16 %v1596
      %v1937 = vunpack.c.l.b16 %v1597
      %v1938 = vunpack.c.l.b16 %v1598
      %v1939 = vunpack.c.h.b16 %v1598
      %v1940 = vunpack.c.l.b16 %v1599
      %v1941 = vunpack.c.h.b16 %v1599
      %v1942 = vunpack.c.l.b16 %v1600
      %v1943 = vunpack.c.h.b16 %v1600
      %v1944 = vunpack.c.l.b16 %v1601
      %v1945 = vunpack.c.h.b16 %v1601
      %v1946 = vunpack.c.l.b16 %v1602
      %v1947 = vunpack.c.l.b16 %v1603
      %v1948 = vunpack.c.h.b16 %v1603
      %v1949 = vunpack.c.l.b16 %v1604
      %v1950 = vunpack.c.h.b16 %v1604
      %v1951 = vunpack.c.l.b16 %v1605
      %v1952 = vunpack.c.h.b16 %v1605
      %v1953 = vunpack.c.l.b16 %v1606
      %v1954 = vunpack.c.h.b16 %v1606
      %v1955 = vunpack.c.l.b16 %v1607
      %v1956 = vunpack.c.l.b16 %v1608
      %v1957 = vunpack.c.h.b16 %v1608
      %v1958 = vunpack.c.l.b16 %v1609
      %v1959 = vunpack.c.h.b16 %v1609
      %v1960 = vunpack.c.l.b16 %v1610
      %v1961 = vunpack.c.h.b16 %v1610
      %v1962 = vunpack.c.l.b16 %v1611
      %v1963 = vunpack.c.h.b16 %v1611
      %v1964 = vunpack.c.l.b16 %v1612
      %v1965 = vunpack.c.l.b16 %v1613
      %v1966 = vunpack.c.h.b16 %v1613
      %v1967 = vunpack.c.l.b16 %v1614
      %v1968 = vunpack.c.h.b16 %v1614
      %v1969 = vunpack.c.l.b16 %v1615
      %v1970 = vunpack.c.h.b16 %v1615
      %v1971 = vunpack.c.l.b16 %v1616
      %v1972 = vunpack.c.h.b16 %v1616
      %v1973 = vunpack.c.l.b16 %v1617
      %v1974 = vunpack.c.l.b16 %v1618
      %v1975 = vunpack.c.h.b16 %v1618
      %v1976 = vunpack.c.l.b16 %v1619
      %v1977 = vunpack.c.h.b16 %v1619
      %v1978 = vunpack.c.l.b16 %v1620
      %v1979 = vunpack.c.h.b16 %v1620
      %v1980 = vunpack.c.l.b16 %v1621
      %v1981 = vunpack.c.h.b16 %v1621
      %v1982 = vunpack.c.l.b16 %v1622
      %v1983 = vunpack.c.l.b16 %v1623
      %v1984 = vunpack.c.h.b16 %v1623
      %v1985 = vunpack.c.l.b16 %v1624
      %v1986 = vunpack.c.h.b16 %v1624
      %v1987 = vunpack.c.l.b16 %v1625
      %v1988 = vunpack.c.h.b16 %v1625
      %v1989 = vunpack.c.l.b16 %v1626
      %v1990 = vunpack.c.h.b16 %v1626
      %v1991 = vunpack.c.l.b16 %v1627
      %v1992 = vunpack.c.l.b16 %v1628
      %v1993 = vunpack.c.h.b16 %v1628
      %v1994 = vunpack.c.l.b16 %v1629
      %v1995 = vunpack.c.h.b16 %v1629
      %v1996 = vunpack.c.l.b16 %v1630
      %v1997 = vunpack.c.h.b16 %v1630
      %v1998 = vunpack.c.l.b16 %v1631
      %v1999 = vunpack.c.h.b16 %v1631
      %v2000 = vunpack.c.l.b16 %v1632
      %v2001 = vpack.c.b16 %v1866, %v1857
      %v2002 = vpack.c.b16 %v1867, %v1858
      %v2003 = vpack.c.b16 %v1868, %v1859
      %v2004 = vpack.c.b16 %v1869, %v1860
      %v2005 = vpack.c.b16 %v1870, %v1861
      %v2006 = vpack.c.b16 %v1871, %v1862
      %v2007 = vpack.c.b16 %v1872, %v1863
      %v2008 = vpack.c.b16 %v1873, %v1864
      %v2009 = vpack.c.b16 %v1874, %v1865
      %v2010 = vpack.c.b16 %v1884, %v1875
      %v2011 = vpack.c.b16 %v1885, %v1876
      %v2012 = vpack.c.b16 %v1886, %v1877
      %v2013 = vpack.c.b16 %v1887, %v1878
      %v2014 = vpack.c.b16 %v1888, %v1879
      %v2015 = vpack.c.b16 %v1889, %v1880
      %v2016 = vpack.c.b16 %v1890, %v1881
      %v2017 = vpack.c.b16 %v1891, %v1882
      %v2018 = vpack.c.b16 %v1892, %v1883
      %v2019 = vpack.c.b16 %v1902, %v1893
      %v2020 = vpack.c.b16 %v1903, %v1894
      %v2021 = vpack.c.b16 %v1904, %v1895
      %v2022 = vpack.c.b16 %v1905, %v1896
      %v2023 = vpack.c.b16 %v1906, %v1897
      %v2024 = vpack.c.b16 %v1907, %v1898
      %v2025 = vpack.c.b16 %v1908, %v1899
      %v2026 = vpack.c.b16 %v1909, %v1900
      %v2027 = vpack.c.b16 %v1910, %v1901
      %v2028 = vpack.c.b16 %v1920, %v1911
      %v2029 = vpack.c.b16 %v1921, %v1912
      %v2030 = vpack.c.b16 %v1922, %v1913
      %v2031 = vpack.c.b16 %v1923, %v1914
      %v2032 = vpack.c.b16 %v1924, %v1915
      %v2033 = vpack.c.b16 %v1925, %v1916
      %v2034 = vpack.c.b16 %v1926, %v1917
      %v2035 = vpack.c.b16 %v1927, %v1918
      %v2036 = vpack.c.b16 %v1928, %v1919
      %v2037 = vpack.c.b16 %v1938, %v1929
      %v2038 = vpack.c.b16 %v1939, %v1930
      %v2039 = vpack.c.b16 %v1940, %v1931
      %v2040 = vpack.c.b16 %v1941, %v1932
      %v2041 = vpack.c.b16 %v1942, %v1933
      %v2042 = vpack.c.b16 %v1943, %v1934
      %v2043 = vpack.c.b16 %v1944, %v1935
      %v2044 = vpack.c.b16 %v1945, %v1936
      %v2045 = vpack.c.b16 %v1946, %v1937
      %v2046 = vpack.c.b16 %v1956, %v1947
      %v2047 = vpack.c.b16 %v1957, %v1948
      %v2048 = vpack.c.b16 %v1958, %v1949
      %v2049 = vpack.c.b16 %v1959, %v1950
      %v2050 = vpack.c.b16 %v1960, %v1951
      %v2051 = vpack.c.b16 %v1961, %v1952
      %v2052 = vpack.c.b16 %v1962, %v1953
      %v2053 = vpack.c.b16 %v1963, %v1954
      %v2054 = vpack.c.b16 %v1964, %v1955
      %v2055 = vpack.c.b16 %v1974, %v1965
      %v2056 = vpack.c.b16 %v1975, %v1966
      %v2057 = vpack.c.b16 %v1976, %v1967
      %v2058 = vpack.c.b16 %v1977, %v1968
      %v2059 = vpack.c.b16 %v1978, %v1969
      %v2060 = vpack.c.b16 %v1979, %v1970
      %v2061 = vpack.c.b16 %v1980, %v1971
      %v2062 = vpack.c.b16 %v1981, %v1972
      %v2063 = vpack.c.b16 %v1982, %v1973
      %v2064 = vpack.c.b16 %v1992, %v1983
      %v2065 = vpack.c.b16 %v1993, %v1984
      %v2066 = vpack.c.b16 %v1994, %v1985
      %v2067 = vpack.c.b16 %v1995, %v1986
      %v2068 = vpack.c.b16 %v1996, %v1987
      %v2069 = vpack.c.b16 %v1997, %v1988
      %v2070 = vpack.c.b16 %v1998, %v1989
      %v2071 = vpack.c.b16 %v1999, %v1990
      %v2072 = vpack.c.b16 %v2000, %v1991
      %v2289 = vunpack.c.l.b16 %v1633
      %v2290 = vunpack.c.l.b16 %v1634
      %v2291 = vunpack.c.l.b16 %v1635
      %v2292 = vunpack.c.l.b16 %v1636
      %v2293 = vunpack.c.l.b16 %v1637
      %v2294 = vunpack.c.l.b16 %v1638
      %v2295 = vunpack.c.l.b16 %v1639
      %v2296 = vunpack.c.l.b16 %v1640
      %v2297 = vunpack.c.l.b16 %v1641
      %v2298 = vunpack.c.l.b16 %v1642
      %v2299 = vunpack.c.l.b16 %v1643
      %v2300 = vunpack.c.l.b16 %v1644
      %v2301 = vunpack.c.l.b16 %v1645
      %v2302 = vunpack.c.l.b16 %v1646
      %v2303 = vunpack.c.l.b16 %v1647
      %v2304 = vunpack.c.l.b16 %v1648
      %v2305 = vunpack.c.l.b16 %v1649
      %v2306 = vunpack.c.l.b16 %v1650
      %v2307 = vunpack.c.l.b16 %v1651
      %v2308 = vunpack.c.l.b16 %v1652
      %v2309 = vunpack.c.l.b16 %v1653
      %v2310 = vunpack.c.l.b16 %v1654
      %v2311 = vunpack.c.l.b16 %v1655
      %v2312 = vunpack.c.l.b16 %v1656
      %v2313 = vunpack.c.l.b16 %v1657
      %v2314 = vunpack.c.l.b16 %v1658
      %v2315 = vunpack.c.l.b16 %v1659
      %v2316 = vunpack.c.l.b16 %v1660
      %v2317 = vunpack.c.l.b16 %v1661
      %v2318 = vunpack.c.l.b16 %v1662
      %v2319 = vunpack.c.l.b16 %v1663
      %v2320 = vunpack.c.l.b16 %v1664
      %v2321 = vunpack.c.l.b16 %v1665
      %v2322 = vunpack.c.l.b16 %v1666
      %v2323 = vunpack.c.l.b16 %v1667
      %v2324 = vunpack.c.l.b16 %v1668
      %v2325 = vunpack.c.l.b16 %v1669
      %v2326 = vunpack.c.l.b16 %v1670
      %v2327 = vunpack.c.l.b16 %v1671
      %v2328 = vunpack.c.l.b16 %v1672
      %v2329 = vunpack.c.l.b16 %v1673
      %v2330 = vunpack.c.l.b16 %v1674
      %v2331 = vunpack.c.l.b16 %v1675
      %v2332 = vunpack.c.l.b16 %v1676
      %v2333 = vunpack.c.l.b16 %v1677
      %v2334 = vunpack.c.l.b16 %v1678
      %v2335 = vunpack.c.l.b16 %v1679
      %v2336 = vunpack.c.l.b16 %v1680
      %v2337 = vunpack.c.l.b16 %v1681
      %v2338 = vunpack.c.l.b16 %v1682
      %v2339 = vunpack.c.l.b16 %v1683
      %v2340 = vunpack.c.l.b16 %v1684
      %v2341 = vunpack.c.l.b16 %v1685
      %v2342 = vunpack.c.l.b16 %v1686
      %v2343 = vunpack.c.l.b16 %v1687
      %v2344 = vunpack.c.l.b16 %v1688
      %v2345 = vunpack.c.l.b16 %v1689
      %v2346 = vunpack.c.l.b16 %v1690
      %v2347 = vunpack.c.l.b16 %v1691
      %v2348 = vunpack.c.l.b16 %v1692
      %v2349 = vunpack.c.l.b16 %v1693
      %v2350 = vunpack.c.l.b16 %v1694
      %v2351 = vunpack.c.l.b16 %v1695
      %v2352 = vunpack.c.l.b16 %v1696
      %v2353 = vunpack.c.l.b16 %v1697
      %v2354 = vunpack.c.l.b16 %v1698
      %v2355 = vunpack.c.l.b16 %v1699
      %v2356 = vunpack.c.l.b16 %v1700
      %v2357 = vunpack.c.l.b16 %v1701
      %v2358 = vunpack.c.l.b16 %v1702
      %v2359 = vunpack.c.l.b16 %v1703
      %v2360 = vunpack.c.l.b16 %v1704
      %v2361 = vunpack.c.l.b16 %v1705
      %v2362 = vunpack.c.l.b16 %v1706
      %v2363 = vunpack.c.l.b16 %v1707
      %v2364 = vunpack.c.l.b16 %v1708
      %v2365 = vunpack.c.l.b16 %v1709
      %v2366 = vunpack.c.l.b16 %v1710
      %v2367 = vunpack.c.l.b16 %v1711
      %v2368 = vunpack.c.l.b16 %v1712
      %v2369 = vunpack.c.l.b16 %v1713
      %v2370 = vunpack.c.l.b16 %v1714
      %v2371 = vunpack.c.l.b16 %v1715
      %v2372 = vunpack.c.l.b16 %v1716
      %v2373 = vunpack.c.l.b16 %v1717
      %v2374 = vunpack.c.l.b16 %v1718
      %v2375 = vunpack.c.l.b16 %v1719
      %v2376 = vunpack.c.l.b16 %v1720
      %v2377 = vunpack.c.l.b16 %v1721
      %v2378 = vunpack.c.l.b16 %v1722
      %v2379 = vunpack.c.l.b16 %v1723
      %v2380 = vunpack.c.l.b16 %v1724
      %v2381 = vunpack.c.l.b16 %v1725
      %v2382 = vunpack.c.l.b16 %v1726
      %v2383 = vunpack.c.l.b16 %v1727
      %v2384 = vunpack.c.l.b16 %v1728
      %v2385 = vunpack.c.l.b16 %v1729
      %v2386 = vunpack.c.l.b16 %v1730
      %v2387 = vunpack.c.l.b16 %v1731
      %v2388 = vunpack.c.l.b16 %v1732
      %v2389 = vunpack.c.l.b16 %v1733
      %v2390 = vunpack.c.l.b16 %v1734
      %v2391 = vunpack.c.l.b16 %v1735
      %v2392 = vunpack.c.l.b16 %v1736
      %v2393 = vunpack.c.l.b16 %v1737
      %v2394 = vunpack.c.l.b16 %v1738
      %v2395 = vunpack.c.l.b16 %v1739
      %v2396 = vunpack.c.l.b16 %v1740
      %v2397 = vunpack.c.l.b16 %v1741
      %v2398 = vunpack.c.l.b16 %v1742
      %v2399 = vunpack.c.l.b16 %v1743
      %v2400 = vunpack.c.l.b16 %v1744
      %v2401 = vunpack.c.l.b16 %v1745
      %v2402 = vunpack.c.l.b16 %v1746
      %v2403 = vunpack.c.l.b16 %v1747
      %v2404 = vunpack.c.l.b16 %v1748
      %v2405 = vunpack.c.l.b16 %v1749
      %v2406 = vunpack.c.l.b16 %v1750
      %v2407 = vunpack.c.l.b16 %v1751
      %v2408 = vunpack.c.l.b16 %v1752
      %v2409 = vunpack.c.l.b16 %v1753
      %v2410 = vunpack.c.l.b16 %v1754
      %v2411 = vunpack.c.l.b16 %v1755
      %v2412 = vunpack.c.l.b16 %v1756
      %v2413 = vunpack.c.l.b16 %v1757
      %v2414 = vunpack.c.l.b16 %v1758
      %v2415 = vunpack.c.l.b16 %v1759
      %v2416 = vunpack.c.l.b16 %v1760
      %v2417 = vunpack.c.l.b16 %v1761
      %v2418 = vunpack.c.l.b16 %v1762
      %v2419 = vunpack.c.l.b16 %v1763
      %v2420 = vunpack.c.l.b16 %v1764
      %v2421 = vunpack.c.l.b16 %v1765
      %v2422 = vunpack.c.l.b16 %v1766
      %v2423 = vunpack.c.l.b16 %v1767
      %v2424 = vunpack.c.l.b16 %v1768
      %v2425 = vunpack.c.l.b16 %v1769
      %v2426 = vunpack.c.l.b16 %v1770
      %v2427 = vunpack.c.l.b16 %v1771
      %v2428 = vunpack.c.l.b16 %v1772
      %v2429 = vunpack.c.l.b16 %v1773
      %v2430 = vunpack.c.l.b16 %v1774
      %v2431 = vunpack.c.l.b16 %v1775
      %v2432 = vunpack.c.l.b16 %v1776
      %v2433 = vpack.c.b16 %v2290, %v2289
      %v2434 = vpack.c.b16 %v2292, %v2291
      %v2435 = vpack.c.b16 %v2294, %v2293
      %v2436 = vpack.c.b16 %v2296, %v2295
      %v2437 = vpack.c.b16 %v2298, %v2297
      %v2438 = vpack.c.b16 %v2300, %v2299
      %v2439 = vpack.c.b16 %v2302, %v2301
      %v2440 = vpack.c.b16 %v2304, %v2303
      %v2441 = vpack.c.b16 %v2306, %v2305
      %v2442 = vpack.c.b16 %v2308, %v2307
      %v2443 = vpack.c.b16 %v2310, %v2309
      %v2444 = vpack.c.b16 %v2312, %v2311
      %v2445 = vpack.c.b16 %v2314, %v2313
      %v2446 = vpack.c.b16 %v2316, %v2315
      %v2447 = vpack.c.b16 %v2318, %v2317
      %v2448 = vpack.c.b16 %v2320, %v2319
      %v2449 = vpack.c.b16 %v2322, %v2321
      %v2450 = vpack.c.b16 %v2324, %v2323
      %v2451 = vpack.c.b16 %v2326, %v2325
      %v2452 = vpack.c.b16 %v2328, %v2327
      %v2453 = vpack.c.b16 %v2330, %v2329
      %v2454 = vpack.c.b16 %v2332, %v2331
      %v2455 = vpack.c.b16 %v2334, %v2333
      %v2456 = vpack.c.b16 %v2336, %v2335
      %v2457 = vpack.c.b16 %v2338, %v2337
      %v2458 = vpack.c.b16 %v2340, %v2339
      %v2459 = vpack.c.b16 %v2342, %v2341
      %v2460 = vpack.c.b16 %v2344, %v2343
      %v2461 = vpack.c.b16 %v2346, %v2345
      %v2462 = vpack.c.b16 %v2348, %v2347
      %v2463 = vpack.c.b16 %v2350, %v2349
      %v2464 = vpack.c.b16 %v2352, %v2351
      %v2465 = vpack.c.b16 %v2354, %v2353
      %v2466 = vpack.c.b16 %v2356, %v2355
      %v2467 = vpack.c.b16 %v2358, %v2357
      %v2468 = vpack.c.b16 %v2360, %v2359
      %v2469 = vpack.c.b16 %v2362, %v2361
      %v2470 = vpack.c.b16 %v2364, %v2363
      %v2471 = vpack.c.b16 %v2366, %v2365
      %v2472 = vpack.c.b16 %v2368, %v2367
      %v2473 = vpack.c.b16 %v2370, %v2369
      %v2474 = vpack.c.b16 %v2372, %v2371
      %v2475 = vpack.c.b16 %v2374, %v2373
      %v2476 = vpack.c.b16 %v2376, %v2375
      %v2477 = vpack.c.b16 %v2378, %v2377
      %v2478 = vpack.c.b16 %v2380, %v2379
      %v2479 = vpack.c.b16 %v2382, %v2381
      %v2480 = vpack.c.b16 %v2384, %v2383
      %v2481 = vpack.c.b16 %v2386, %v2385
      %v2482 = vpack.c.b16 %v2388, %v2387
      %v2483 = vpack.c.b16 %v2390, %v2389
      %v2484 = vpack.c.b16 %v2392, %v2391
      %v2485 = vpack.c.b16 %v2394, %v2393
      %v2486 = vpack.c.b16 %v2396, %v2395
      %v2487 = vpack.c.b16 %v2398, %v2397
      %v2488 = vpack.c.b16 %v2400, %v2399
      %v2489 = vpack.c.b16 %v2402, %v2401
      %v2490 = vpack.c.b16 %v2404, %v2403
      %v2491 = vpack.c.b16 %v2406, %v2405
      %v2492 = vpack.c.b16 %v2408, %v2407
      %v2493 = vpack.c.b16 %v2410, %v2409
      %v2494 = vpack.c.b16 %v2412, %v2411
      %v2495 = vpack.c.b16 %v2414, %v2413
      %v2496 = vpack.c.b16 %v2416, %v2415
      %v2497 = vpack.c.b16 %v2418, %v2417
      %v2498 = vpack.c.b16 %v2420, %v2419
      %v2499 = vpack.c.b16 %v2422, %v2421
      %v2500 = vpack.c.b16 %v2424, %v2423
      %v2501 = vpack.c.b16 %v2426, %v2425
      %v2502 = vpack.c.b16 %v2428, %v2427
      %v2503 = vpack.c.b16 %v2430, %v2429
      %v2504 = vpack.c.b16 %v2432, %v2431
      %2577 = vmatprep.subr.bf16.mxu0 0
      %2578 = vmatpush1.bf16.msra.mxu0 %v2440
      %2579 = vmatprep.subr.bf16.mxu0 0
      %2580 = vmatpush1.bf16.msra.mxu0 %v2439
      %2581 = vmatprep.subr.bf16.mxu0 0
      %2582 = vmatpush1.bf16.msra.mxu0 %v2438
      %2583 = vmatprep.subr.bf16.mxu0 0
      %2584 = vmatpush1.bf16.msra.mxu0 %v2437
      %2585 = vmatprep.subr.bf16.mxu0 0
      %2586 = vmatpush1.bf16.msra.mxu0 %v2436
      %2587 = vmatprep.subr.bf16.mxu0 0
      %2588 = vmatpush1.bf16.msra.mxu0 %v2435
      %2589 = vmatprep.subr.bf16.mxu0 0
      %2590 = vmatpush1.bf16.msra.mxu0 %v2434
      %2591 = vmatprep.subr.bf16.mxu0 0
      %2592 = vmatpush1.bf16.msra.mxu0 %v2433
      %2593 = vmatprep.subr.bf16.mxu0 0
      %2594 = vmatpush2.bf16.msra.mxu0 %v2448
      %2595 = vmatprep.subr.bf16.mxu0 0
      %2596 = vmatpush2.bf16.msra.mxu0 %v2447
      %2597 = vmatprep.subr.bf16.mxu0 0
      %2598 = vmatpush2.bf16.msra.mxu0 %v2446
      %2599 = vmatprep.subr.bf16.mxu0 0
      %2600 = vmatpush2.bf16.msra.mxu0 %v2445
      %2601 = vmatprep.subr.bf16.mxu0 0
      %2602 = vmatpush2.bf16.msra.mxu0 %v2444
      %2603 = vmatprep.subr.bf16.mxu0 0
      %2604 = vmatpush2.bf16.msra.mxu0 %v2443
      %2605 = vmatprep.subr.bf16.mxu0 0
      %2606 = vmatpush2.bf16.msra.mxu0 %v2442
      %2607 = vmatprep.subr.bf16.mxu0 0
      %2608 = vmatpush2.bf16.msra.mxu0 %v2441
      %2609 = vmatprep.mubr.bf16.mxu0 %v2002
      %2610 = vmatmul.mubr.bf16.gmra.mxu0 %v2001
      %v2611 = vpop.f32.mrf.mxu0
      %v2612 = vadd.f32 0.0, %v2611
      %v2613 = vpop.f32.mrf.mxu0
      %v2614 = vpop.f32.mrf.mxu0
      %v2615 = vadd.f32 0.0, %v2614
      %v2616 = vpop.f32.mrf.mxu0
      %2617 = vmatprep.mubr.bf16.mxu0 %v2011
      %2618 = vmatmul.mubr.bf16.gmra.mxu0 %v2010
      %v2619 = vpop.f32.mrf.mxu0
      %v2620 = vadd.f32 0.0, %v2619
      %v2621 = vpop.f32.mrf.mxu0
      %v2622 = vpop.f32.mrf.mxu0
      %v2623 = vadd.f32 0.0, %v2622
      %v2624 = vpop.f32.mrf.mxu0
      %2625 = vmatprep.mubr.bf16.mxu0 %v2020
      %2626 = vmatmul.mubr.bf16.gmra.mxu0 %v2019
      %v2627 = vpop.f32.mrf.mxu0
      %v2628 = vadd.f32 0.0, %v2627
      %v2629 = vpop.f32.mrf.mxu0
      %v2630 = vpop.f32.mrf.mxu0
      %v2631 = vadd.f32 0.0, %v2630
      %v2632 = vpop.f32.mrf.mxu0
      %2633 = vmatprep.mubr.bf16.mxu0 %v2029
      %2634 = vmatmul.mubr.bf16.gmra.mxu0 %v2028
      %v2635 = vpop.f32.mrf.mxu0
      %v2636 = vadd.f32 0.0, %v2635
      %v2637 = vpop.f32.mrf.mxu0
      %v2638 = vpop.f32.mrf.mxu0
      %v2639 = vadd.f32 0.0, %v2638
      %v2640 = vpop.f32.mrf.mxu0
      %2641 = vmatprep.mubr.bf16.mxu0 %v2038
      %2642 = vmatmul.mubr.bf16.gmra.mxu0 %v2037
      %v2643 = vpop.f32.mrf.mxu0
      %v2644 = vadd.f32 0.0, %v2643
      %v2645 = vpop.f32.mrf.mxu0
      %v2646 = vpop.f32.mrf.mxu0
      %v2647 = vadd.f32 0.0, %v2646
      %v2648 = vpop.f32.mrf.mxu0
      %2649 = vmatprep.mubr.bf16.mxu0 %v2047
      %2650 = vmatmul.mubr.bf16.gmra.mxu0 %v2046
      %v2651 = vpop.f32.mrf.mxu0
      %v2652 = vadd.f32 0.0, %v2651
      %v2653 = vpop.f32.mrf.mxu0
      %v2654 = vpop.f32.mrf.mxu0
      %v2655 = vadd.f32 0.0, %v2654
      %v2656 = vpop.f32.mrf.mxu0
      %2657 = vmatprep.mubr.bf16.mxu0 %v2056
      %2658 = vmatmul.mubr.bf16.gmra.mxu0 %v2055
      %v2659 = vpop.f32.mrf.mxu0
      %v2660 = vadd.f32 0.0, %v2659
      %v2661 = vpop.f32.mrf.mxu0
      %v2662 = vpop.f32.mrf.mxu0
      %v2663 = vadd.f32 0.0, %v2662
      %v2664 = vpop.f32.mrf.mxu0
      %2665 = vmatprep.mubr.bf16.mxu0 %v2065
      %2666 = vmatmul.mubr.bf16.gmra.mxu0 %v2064
      %v2667 = vpop.f32.mrf.mxu0
      %v2668 = vadd.f32 0.0, %v2667
      %v2669 = vpop.f32.mrf.mxu0
      %v2670 = vpop.f32.mrf.mxu0
      %v2671 = vadd.f32 0.0, %v2670
      %v2672 = vpop.f32.mrf.mxu0
      %2673 = vdwg.mxu0
      %2674 = vmatprep.subr.bf16.mxu0 0
      %2675 = vmatpush1.bf16.msra.mxu0 %v2456
      %2676 = vmatprep.subr.bf16.mxu0 0
      %2677 = vmatpush1.bf16.msra.mxu0 %v2455
      %2678 = vmatprep.subr.bf16.mxu0 0
      %2679 = vmatpush1.bf16.msra.mxu0 %v2454
      %2680 = vmatprep.subr.bf16.mxu0 0
      %2681 = vmatpush1.bf16.msra.mxu0 %v2453
      %2682 = vmatprep.subr.bf16.mxu0 0
      %2683 = vmatpush1.bf16.msra.mxu0 %v2452
      %2684 = vmatprep.subr.bf16.mxu0 0
      %2685 = vmatpush1.bf16.msra.mxu0 %v2451
      %2686 = vmatprep.subr.bf16.mxu0 0
      %2687 = vmatpush1.bf16.msra.mxu0 %v2450
      %2688 = vmatprep.subr.bf16.mxu0 0
      %2689 = vmatpush1.bf16.msra.mxu0 %v2449
      %2690 = vmatprep.subr.bf16.mxu0 0
      %2691 = vmatpush2.bf16.msra.mxu0 %v2464
      %2692 = vmatprep.subr.bf16.mxu0 0
      %2693 = vmatpush2.bf16.msra.mxu0 %v2463
      %2694 = vmatprep.subr.bf16.mxu0 0
      %2695 = vmatpush2.bf16.msra.mxu0 %v2462
      %2696 = vmatprep.subr.bf16.mxu0 0
      %2697 = vmatpush2.bf16.msra.mxu0 %v2461
      %2698 = vmatprep.subr.bf16.mxu0 0
      %2699 = vmatpush2.bf16.msra.mxu0 %v2460
      %2700 = vmatprep.subr.bf16.mxu0 0
      %2701 = vmatpush2.bf16.msra.mxu0 %v2459
      %2702 = vmatprep.subr.bf16.mxu0 0
      %2703 = vmatpush2.bf16.msra.mxu0 %v2458
      %2704 = vmatprep.subr.bf16.mxu0 0
      %2705 = vmatpush2.bf16.msra.mxu0 %v2457
      %2706 = vmatprep.mubr.bf16.mxu0 %v2004
      %2707 = vmatmul.mubr.bf16.gmra.mxu0 %v2003
      %v2708 = vpop.f32.mrf.mxu0
      %v2709 = vadd.f32 %v2612, %v2708
      %v2710 = vpop.f32.mrf.mxu0
      %v2711 = vpop.f32.mrf.mxu0
      %v2712 = vadd.f32 %v2615, %v2711
      %v2713 = vpop.f32.mrf.mxu0
      %2714 = vmatprep.mubr.bf16.mxu0 %v2013
      %2715 = vmatmul.mubr.bf16.gmra.mxu0 %v2012
      %v2716 = vpop.f32.mrf.mxu0
      %v2717 = vadd.f32 %v2620, %v2716
      %v2718 = vpop.f32.mrf.mxu0
      %v2719 = vpop.f32.mrf.mxu0
      %v2720 = vadd.f32 %v2623, %v2719
      %v2721 = vpop.f32.mrf.mxu0
      %2722 = vmatprep.mubr.bf16.mxu0 %v2022
      %2723 = vmatmul.mubr.bf16.gmra.mxu0 %v2021
      %v2724 = vpop.f32.mrf.mxu0
      %v2725 = vadd.f32 %v2628, %v2724
      %v2726 = vpop.f32.mrf.mxu0
      %v2727 = vpop.f32.mrf.mxu0
      %v2728 = vadd.f32 %v2631, %v2727
      %v2729 = vpop.f32.mrf.mxu0
      %2730 = vmatprep.mubr.bf16.mxu0 %v2031
      %2731 = vmatmul.mubr.bf16.gmra.mxu0 %v2030
      %v2732 = vpop.f32.mrf.mxu0
      %v2733 = vadd.f32 %v2636, %v2732
      %v2734 = vpop.f32.mrf.mxu0
      %v2735 = vpop.f32.mrf.mxu0
      %v2736 = vadd.f32 %v2639, %v2735
      %v2737 = vpop.f32.mrf.mxu0
      %2738 = vmatprep.mubr.bf16.mxu0 %v2040
      %2739 = vmatmul.mubr.bf16.gmra.mxu0 %v2039
      %v2740 = vpop.f32.mrf.mxu0
      %v2741 = vadd.f32 %v2644, %v2740
      %v2742 = vpop.f32.mrf.mxu0
      %v2743 = vpop.f32.mrf.mxu0
      %v2744 = vadd.f32 %v2647, %v2743
      %v2745 = vpop.f32.mrf.mxu0
      %2746 = vmatprep.mubr.bf16.mxu0 %v2049
      %2747 = vmatmul.mubr.bf16.gmra.mxu0 %v2048
      %v2748 = vpop.f32.mrf.mxu0
      %v2749 = vadd.f32 %v2652, %v2748
      %v2750 = vpop.f32.mrf.mxu0
      %v2751 = vpop.f32.mrf.mxu0
      %v2752 = vadd.f32 %v2655, %v2751
      %v2753 = vpop.f32.mrf.mxu0
      %2754 = vmatprep.mubr.bf16.mxu0 %v2058
      %2755 = vmatmul.mubr.bf16.gmra.mxu0 %v2057
      %v2756 = vpop.f32.mrf.mxu0
      %v2757 = vadd.f32 %v2660, %v2756
      %v2758 = vpop.f32.mrf.mxu0
      %v2759 = vpop.f32.mrf.mxu0
      %v2760 = vadd.f32 %v2663, %v2759
      %v2761 = vpop.f32.mrf.mxu0
      %2762 = vmatprep.mubr.bf16.mxu0 %v2067
      %2763 = vmatmul.mubr.bf16.gmra.mxu0 %v2066
      %v2764 = vpop.f32.mrf.mxu0
      %v2765 = vadd.f32 %v2668, %v2764
      %v2766 = vpop.f32.mrf.mxu0
      %v2767 = vpop.f32.mrf.mxu0
      %v2768 = vadd.f32 %v2671, %v2767
      %v2769 = vpop.f32.mrf.mxu0
      %2770 = vdwg.mxu0
      %2771 = vmatprep.subr.bf16.mxu0 0
      %2772 = vmatpush1.bf16.msra.mxu0 %v2472
      %2773 = vmatprep.subr.bf16.mxu0 0
      %2774 = vmatpush1.bf16.msra.mxu0 %v2471
      %2775 = vmatprep.subr.bf16.mxu0 0
      %2776 = vmatpush1.bf16.msra.mxu0 %v2470
      %2777 = vmatprep.subr.bf16.mxu0 0
      %2778 = vmatpush1.bf16.msra.mxu0 %v2469
      %2779 = vmatprep.subr.bf16.mxu0 0
      %2780 = vmatpush1.bf16.msra.mxu0 %v2468
      %2781 = vmatprep.subr.bf16.mxu0 0
      %2782 = vmatpush1.bf16.msra.mxu0 %v2467
      %2783 = vmatprep.subr.bf16.mxu0 0
      %2784 = vmatpush1.bf16.msra.mxu0 %v2466
      %2785 = vmatprep.subr.bf16.mxu0 0
      %2786 = vmatpush1.bf16.msra.mxu0 %v2465
      %2787 = vmatprep.subr.bf16.mxu0 0
      %2788 = vmatpush2.bf16.msra.mxu0 %v2480
      %2789 = vmatprep.subr.bf16.mxu0 0
      %2790 = vmatpush2.bf16.msra.mxu0 %v2479
      %2791 = vmatprep.subr.bf16.mxu0 0
      %2792 = vmatpush2.bf16.msra.mxu0 %v2478
      %2793 = vmatprep.subr.bf16.mxu0 0
      %2794 = vmatpush2.bf16.msra.mxu0 %v2477
      %2795 = vmatprep.subr.bf16.mxu0 0
      %2796 = vmatpush2.bf16.msra.mxu0 %v2476
      %2797 = vmatprep.subr.bf16.mxu0 0
      %2798 = vmatpush2.bf16.msra.mxu0 %v2475
      %2799 = vmatprep.subr.bf16.mxu0 0
      %2800 = vmatpush2.bf16.msra.mxu0 %v2474
      %2801 = vmatprep.subr.bf16.mxu0 0
      %2802 = vmatpush2.bf16.msra.mxu0 %v2473
      %2803 = vmatprep.mubr.bf16.mxu0 %v2006
      %2804 = vmatmul.mubr.bf16.gmra.mxu0 %v2005
      %v2805 = vpop.f32.mrf.mxu0
      %v2806 = vadd.f32 %v2709, %v2805
      %v2807 = vpop.f32.mrf.mxu0
      %v2808 = vpop.f32.mrf.mxu0
      %v2809 = vadd.f32 %v2712, %v2808
      %v2810 = vpop.f32.mrf.mxu0
      %2811 = vmatprep.mubr.bf16.mxu0 %v2015
      %2812 = vmatmul.mubr.bf16.gmra.mxu0 %v2014
      %v2813 = vpop.f32.mrf.mxu0
      %v2814 = vadd.f32 %v2717, %v2813
      %v2815 = vpop.f32.mrf.mxu0
      %v2816 = vpop.f32.mrf.mxu0
      %v2817 = vadd.f32 %v2720, %v2816
      %v2818 = vpop.f32.mrf.mxu0
      %2819 = vmatprep.mubr.bf16.mxu0 %v2024
      %2820 = vmatmul.mubr.bf16.gmra.mxu0 %v2023
      %v2821 = vpop.f32.mrf.mxu0
      %v2822 = vadd.f32 %v2725, %v2821
      %v2823 = vpop.f32.mrf.mxu0
      %v2824 = vpop.f32.mrf.mxu0
      %v2825 = vadd.f32 %v2728, %v2824
      %v2826 = vpop.f32.mrf.mxu0
      %2827 = vmatprep.mubr.bf16.mxu0 %v2033
      %2828 = vmatmul.mubr.bf16.gmra.mxu0 %v2032
      %v2829 = vpop.f32.mrf.mxu0
      %v2830 = vadd.f32 %v2733, %v2829
      %v2831 = vpop.f32.mrf.mxu0
      %v2832 = vpop.f32.mrf.mxu0
      %v2833 = vadd.f32 %v2736, %v2832
      %v2834 = vpop.f32.mrf.mxu0
      %2835 = vmatprep.mubr.bf16.mxu0 %v2042
      %2836 = vmatmul.mubr.bf16.gmra.mxu0 %v2041
      %v2837 = vpop.f32.mrf.mxu0
      %v2838 = vadd.f32 %v2741, %v2837
      %v2839 = vpop.f32.mrf.mxu0
      %v2840 = vpop.f32.mrf.mxu0
      %v2841 = vadd.f32 %v2744, %v2840
      %v2842 = vpop.f32.mrf.mxu0
      %2843 = vmatprep.mubr.bf16.mxu0 %v2051
      %2844 = vmatmul.mubr.bf16.gmra.mxu0 %v2050
      %v2845 = vpop.f32.mrf.mxu0
      %v2846 = vadd.f32 %v2749, %v2845
      %v2847 = vpop.f32.mrf.mxu0
      %v2848 = vpop.f32.mrf.mxu0
      %v2849 = vadd.f32 %v2752, %v2848
      %v2850 = vpop.f32.mrf.mxu0
      %2851 = vmatprep.mubr.bf16.mxu0 %v2060
      %2852 = vmatmul.mubr.bf16.gmra.mxu0 %v2059
      %v2853 = vpop.f32.mrf.mxu0
      %v2854 = vadd.f32 %v2757, %v2853
      %v2855 = vpop.f32.mrf.mxu0
      %v2856 = vpop.f32.mrf.mxu0
      %v2857 = vadd.f32 %v2760, %v2856
      %v2858 = vpop.f32.mrf.mxu0
      %2859 = vmatprep.mubr.bf16.mxu0 %v2069
      %2860 = vmatmul.mubr.bf16.gmra.mxu0 %v2068
      %v2861 = vpop.f32.mrf.mxu0
      %v2862 = vadd.f32 %v2765, %v2861
      %v2863 = vpop.f32.mrf.mxu0
      %v2864 = vpop.f32.mrf.mxu0
      %v2865 = vadd.f32 %v2768, %v2864
      %v2866 = vpop.f32.mrf.mxu0
      %2867 = vdwg.mxu0
      %2868 = vmatprep.subr.bf16.mxu0 0
      %2869 = vmatpush1.bf16.msra.mxu0 %v2488
      %2870 = vmatprep.subr.bf16.mxu0 0
      %2871 = vmatpush1.bf16.msra.mxu0 %v2487
      %2872 = vmatprep.subr.bf16.mxu0 0
      %2873 = vmatpush1.bf16.msra.mxu0 %v2486
      %2874 = vmatprep.subr.bf16.mxu0 0
      %2875 = vmatpush1.bf16.msra.mxu0 %v2485
      %2876 = vmatprep.subr.bf16.mxu0 0
      %2877 = vmatpush1.bf16.msra.mxu0 %v2484
      %2878 = vmatprep.subr.bf16.mxu0 0
      %2879 = vmatpush1.bf16.msra.mxu0 %v2483
      %2880 = vmatprep.subr.bf16.mxu0 0
      %2881 = vmatpush1.bf16.msra.mxu0 %v2482
      %2882 = vmatprep.subr.bf16.mxu0 0
      %2883 = vmatpush1.bf16.msra.mxu0 %v2481
      %2884 = vmatprep.subr.bf16.mxu0 0
      %2885 = vmatpush2.bf16.msra.mxu0 %v2496
      %2886 = vmatprep.subr.bf16.mxu0 0
      %2887 = vmatpush2.bf16.msra.mxu0 %v2495
      %2888 = vmatprep.subr.bf16.mxu0 0
      %2889 = vmatpush2.bf16.msra.mxu0 %v2494
      %2890 = vmatprep.subr.bf16.mxu0 0
      %2891 = vmatpush2.bf16.msra.mxu0 %v2493
      %2892 = vmatprep.subr.bf16.mxu0 0
      %2893 = vmatpush2.bf16.msra.mxu0 %v2492
      %2894 = vmatprep.subr.bf16.mxu0 0
      %2895 = vmatpush2.bf16.msra.mxu0 %v2491
      %2896 = vmatprep.subr.bf16.mxu0 0
      %2897 = vmatpush2.bf16.msra.mxu0 %v2490
      %2898 = vmatprep.subr.bf16.mxu0 0
      %2899 = vmatpush2.bf16.msra.mxu0 %v2489
      %2900 = vmatprep.mubr.bf16.mxu0 %v2008
      %2901 = vmatmul.mubr.bf16.gmra.mxu0 %v2007
      %v2902 = vpop.f32.mrf.mxu0
      %v2903 = vadd.f32 %v2806, %v2902
      %v2904 = vpop.f32.mrf.mxu0
      %v2905 = vpop.f32.mrf.mxu0
      %v2906 = vadd.f32 %v2809, %v2905
      %v2907 = vpop.f32.mrf.mxu0
      %2908 = vmatprep.mubr.bf16.mxu0 %v2017
      %2909 = vmatmul.mubr.bf16.gmra.mxu0 %v2016
      %v2910 = vpop.f32.mrf.mxu0
      %v2911 = vadd.f32 %v2814, %v2910
      %v2912 = vpop.f32.mrf.mxu0
      %v2913 = vpop.f32.mrf.mxu0
      %v2914 = vadd.f32 %v2817, %v2913
      %v2915 = vpop.f32.mrf.mxu0
      %2916 = vmatprep.mubr.bf16.mxu0 %v2026
      %2917 = vmatmul.mubr.bf16.gmra.mxu0 %v2025
      %v2918 = vpop.f32.mrf.mxu0
      %v2919 = vadd.f32 %v2822, %v2918
      %v2920 = vpop.f32.mrf.mxu0
      %v2921 = vpop.f32.mrf.mxu0
      %v2922 = vadd.f32 %v2825, %v2921
      %v2923 = vpop.f32.mrf.mxu0
      %2924 = vmatprep.mubr.bf16.mxu0 %v2035
      %2925 = vmatmul.mubr.bf16.gmra.mxu0 %v2034
      %v2926 = vpop.f32.mrf.mxu0
      %v2927 = vadd.f32 %v2830, %v2926
      %v2928 = vpop.f32.mrf.mxu0
      %v2929 = vpop.f32.mrf.mxu0
      %v2930 = vadd.f32 %v2833, %v2929
      %v2931 = vpop.f32.mrf.mxu0
      %2932 = vmatprep.mubr.bf16.mxu0 %v2044
      %2933 = vmatmul.mubr.bf16.gmra.mxu0 %v2043
      %v2934 = vpop.f32.mrf.mxu0
      %v2935 = vadd.f32 %v2838, %v2934
      %v2936 = vpop.f32.mrf.mxu0
      %v2937 = vpop.f32.mrf.mxu0
      %v2938 = vadd.f32 %v2841, %v2937
      %v2939 = vpop.f32.mrf.mxu0
      %2940 = vmatprep.mubr.bf16.mxu0 %v2053
      %2941 = vmatmul.mubr.bf16.gmra.mxu0 %v2052
      %v2942 = vpop.f32.mrf.mxu0
      %v2943 = vadd.f32 %v2846, %v2942
      %v2944 = vpop.f32.mrf.mxu0
      %v2945 = vpop.f32.mrf.mxu0
      %v2946 = vadd.f32 %v2849, %v2945
      %v2947 = vpop.f32.mrf.mxu0
      %2948 = vmatprep.mubr.bf16.mxu0 %v2062
      %2949 = vmatmul.mubr.bf16.gmra.mxu0 %v2061
      %v2950 = vpop.f32.mrf.mxu0
      %v2951 = vadd.f32 %v2854, %v2950
      %v2952 = vpop.f32.mrf.mxu0
      %v2953 = vpop.f32.mrf.mxu0
      %v2954 = vadd.f32 %v2857, %v2953
      %v2955 = vpop.f32.mrf.mxu0
      %2956 = vmatprep.mubr.bf16.mxu0 %v2071
      %2957 = vmatmul.mubr.bf16.gmra.mxu0 %v2070
      %v2958 = vpop.f32.mrf.mxu0
      %v2959 = vadd.f32 %v2862, %v2958
      %v2960 = vpop.f32.mrf.mxu0
      %v2961 = vpop.f32.mrf.mxu0
      %v2962 = vadd.f32 %v2865, %v2961
      %v2963 = vpop.f32.mrf.mxu0
      %2964 = vdwg.mxu0
      %2965 = vmatprep.subr.bf16.mxu0 0
      %2966 = vmatpush1.bf16.msra.mxu0 %v2504
      %2967 = vmatprep.subr.bf16.mxu0 0
      %2968 = vmatpush1.bf16.msra.mxu0 %v2503
      %2969 = vmatprep.subr.bf16.mxu0 0
      %2970 = vmatpush1.bf16.msra.mxu0 %v2502
      %2971 = vmatprep.subr.bf16.mxu0 0
      %2972 = vmatpush1.bf16.msra.mxu0 %v2501
      %2973 = vmatprep.subr.bf16.mxu0 0
      %2974 = vmatpush1.bf16.msra.mxu0 %v2500
      %2975 = vmatprep.subr.bf16.mxu0 0
      %2976 = vmatpush1.bf16.msra.mxu0 %v2499
      %2977 = vmatprep.subr.bf16.mxu0 0
      %2978 = vmatpush1.bf16.msra.mxu0 %v2498
      %2979 = vmatprep.subr.bf16.mxu0 0
      %2980 = vmatpush1.bf16.msra.mxu0 %v2497
      %2981 = vmatprep.subr.bf16.mxu0 0
      %2982 = vmatpush2.bf16.msra.mxu0 0
      %2983 = vmatprep.subr.bf16.mxu0 0
      %2984 = vmatpush2.bf16.msra.mxu0 0
      %2985 = vmatprep.subr.bf16.mxu0 0
      %2986 = vmatpush2.bf16.msra.mxu0 0
      %2987 = vmatprep.subr.bf16.mxu0 0
      %2988 = vmatpush2.bf16.msra.mxu0 0
      %2989 = vmatprep.subr.bf16.mxu0 0
      %2990 = vmatpush2.bf16.msra.mxu0 0
      %2991 = vmatprep.subr.bf16.mxu0 0
      %2992 = vmatpush2.bf16.msra.mxu0 0
      %2993 = vmatprep.subr.bf16.mxu0 0
      %2994 = vmatpush2.bf16.msra.mxu0 0
      %2995 = vmatprep.subr.bf16.mxu0 0
      %2996 = vmatpush2.bf16.msra.mxu0 0
      %2997 = vmatprep.mubr.bf16.mxu0 0
      %2998 = vmatmul.mubr.bf16.gmra.mxu0 %v2009
      %v2999 = vpop.f32.mrf.mxu0
      %v3000 = vadd.f32 %v2903, %v2999
      %v3001 = vpop.f32.mrf.mxu0
      %v3002 = vpop.f32.mrf.mxu0
      %v3003 = vadd.f32 %v2906, %v3002
      %v3004 = vpop.f32.mrf.mxu0
      %3005 = vmatprep.mubr.bf16.mxu0 0
      %3006 = vmatmul.mubr.bf16.gmra.mxu0 %v2018
      %v3007 = vpop.f32.mrf.mxu0
      %v3008 = vadd.f32 %v2911, %v3007
      %v3009 = vpop.f32.mrf.mxu0
      %v3010 = vpop.f32.mrf.mxu0
      %v3011 = vadd.f32 %v2914, %v3010
      %v3012 = vpop.f32.mrf.mxu0
      %3013 = vmatprep.mubr.bf16.mxu0 0
      %3014 = vmatmul.mubr.bf16.gmra.mxu0 %v2027
      %v3015 = vpop.f32.mrf.mxu0
      %v3016 = vadd.f32 %v2919, %v3015
      %v3017 = vpop.f32.mrf.mxu0
      %v3018 = vpop.f32.mrf.mxu0
      %v3019 = vadd.f32 %v2922, %v3018
      %v3020 = vpop.f32.mrf.mxu0
      %3021 = vmatprep.mubr.bf16.mxu0 0
      %3022 = vmatmul.mubr.bf16.gmra.mxu0 %v2036
      %v3023 = vpop.f32.mrf.mxu0
      %v3024 = vadd.f32 %v2927, %v3023
      %v3025 = vpop.f32.mrf.mxu0
      %v3026 = vpop.f32.mrf.mxu0
      %v3027 = vadd.f32 %v2930, %v3026
      %v3028 = vpop.f32.mrf.mxu0
      %3029 = vmatprep.mubr.bf16.mxu0 0
      %3030 = vmatmul.mubr.bf16.gmra.mxu0 %v2045
      %v3031 = vpop.f32.mrf.mxu0
      %v3032 = vadd.f32 %v2935, %v3031
      %v3033 = vpop.f32.mrf.mxu0
      %v3034 = vpop.f32.mrf.mxu0
      %v3035 = vadd.f32 %v2938, %v3034
      %v3036 = vpop.f32.mrf.mxu0
      %3037 = vmatprep.mubr.bf16.mxu0 0
      %3038 = vmatmul.mubr.bf16.gmra.mxu0 %v2054
      %v3039 = vpop.f32.mrf.mxu0
      %v3040 = vadd.f32 %v2943, %v3039
      %v3041 = vpop.f32.mrf.mxu0
      %v3042 = vpop.f32.mrf.mxu0
      %v3043 = vadd.f32 %v2946, %v3042
      %v3044 = vpop.f32.mrf.mxu0
      %3045 = vmatprep.mubr.bf16.mxu0 0
      %3046 = vmatmul.mubr.bf16.gmra.mxu0 %v2063
      %v3047 = vpop.f32.mrf.mxu0
      %v3048 = vadd.f32 %v2951, %v3047
      %v3049 = vpop.f32.mrf.mxu0
      %v3050 = vpop.f32.mrf.mxu0
      %v3051 = vadd.f32 %v2954, %v3050
      %v3052 = vpop.f32.mrf.mxu0
      %3053 = vmatprep.mubr.bf16.mxu0 0
      %3054 = vmatmul.mubr.bf16.gmra.mxu0 %v2072
      %v3055 = vpop.f32.mrf.mxu0
      %v3056 = vadd.f32 %v2959, %v3055
      %v3057 = vpop.f32.mrf.mxu0
      %v3058 = vpop.f32.mrf.mxu0
      %v3059 = vadd.f32 %v2962, %v3058
      %v3060 = vpop.f32.mrf.mxu0
      %3061 = vdwg.mxu0
      %v3062 = vpack.c.bf16 %v3003, %v3000
      %v3063 = vpack.c.bf16 %v3011, %v3008
      %v3064 = vpack.c.bf16 %v3019, %v3016
      %v3065 = vpack.c.bf16 %v3027, %v3024
      %v3066 = vpack.c.bf16 %v3035, %v3032
      %v3067 = vpack.c.bf16 %v3043, %v3040
      %v3068 = vpack.c.bf16 %v3051, %v3048
      %v3069 = vpack.c.bf16 %v3059, %v3056
      %v3078 = vunpack.c.l.b16 %v3062
      %v3079 = vunpack.c.h.b16 %v3062
      %v3080 = vunpack.c.l.b16 %v3063
      %v3081 = vunpack.c.h.b16 %v3063
      %v3082 = vunpack.c.l.b16 %v3064
      %v3083 = vunpack.c.h.b16 %v3064
      %v3084 = vunpack.c.l.b16 %v3065
      %v3085 = vunpack.c.h.b16 %v3065
      %v3086 = vunpack.c.l.b16 %v3066
      %v3087 = vunpack.c.h.b16 %v3066
      %v3088 = vunpack.c.l.b16 %v3067
      %v3089 = vunpack.c.h.b16 %v3067
      %v3090 = vunpack.c.l.b16 %v3068
      %v3091 = vunpack.c.h.b16 %v3068
      %v3092 = vunpack.c.l.b16 %v3069
      %v3093 = vunpack.c.h.b16 %v3069
      %v3094 = vpack.c.b16 %v3078, %v3078
      %v3095 = vpack.c.b16 %v3079, %v3079
      %v3096 = vpack.c.b16 %v3080, %v3080
      %v3097 = vpack.c.b16 %v3081, %v3081
      %v3098 = vpack.c.b16 %v3082, %v3082
      %v3099 = vpack.c.b16 %v3083, %v3083
      %v3100 = vpack.c.b16 %v3084, %v3084
      %v3101 = vpack.c.b16 %v3085, %v3085
      %v3102 = vpack.c.b16 %v3086, %v3086
      %v3103 = vpack.c.b16 %v3087, %v3087
      %v3104 = vpack.c.b16 %v3088, %v3088
      %v3105 = vpack.c.b16 %v3089, %v3089
      %v3106 = vpack.c.b16 %v3090, %v3090
      %v3107 = vpack.c.b16 %v3091, %v3091
      %v3108 = vpack.c.b16 %v3092, %v3092
      %v3109 = vpack.c.b16 %v3093, %v3093
      %vm3110 = vsmask.f32 256
      %vm3111 = vsmask.f32 4368
      %vm3112 = vmor %vm3110, %vm3111
      %v3114 = vshrl.u32 %v3094, 16
      %v3116 = vrot.slane %v3114, 7
      %v3117 = vshll.u32 %v3094, 16
      %v3119 = vor.u32 %v3116, %v3117
      %v3120 = vrot.slane %v3116, 4
      %v3122 = vshrl.u32 %v3095, 16
      %v3124 = vrot.slane %v3122, 7
      %v3125 = vshll.u32 %v3095, 16
      %v3127 = vor.u32 %v3124, %v3125
      %v3128 = vsel %vm3112, %v3120, %v3127
      %v3129 = vrot.slane %v3124, 4
      %v3131 = vshrl.u32 %v3096, 16
      %v3133 = vrot.slane %v3131, 7
      %v3134 = vshll.u32 %v3096, 16
      %v3136 = vor.u32 %v3133, %v3134
      %v3137 = vrot.slane %v3133, 4
      %v3139 = vshrl.u32 %v3097, 16
      %v3141 = vrot.slane %v3139, 7
      %v3142 = vshll.u32 %v3097, 16
      %v3144 = vor.u32 %v3141, %v3142
      %v3145 = vsel %vm3112, %v3137, %v3144
      %v3146 = vrot.slane %v3141, 4
      %v3148 = vshrl.u32 %v3098, 16
      %v3150 = vrot.slane %v3148, 7
      %v3151 = vshll.u32 %v3098, 16
      %v3153 = vor.u32 %v3150, %v3151
      %v3154 = vrot.slane %v3150, 4
      %v3156 = vshrl.u32 %v3099, 16
      %v3158 = vrot.slane %v3156, 7
      %v3159 = vshll.u32 %v3099, 16
      %v3161 = vor.u32 %v3158, %v3159
      %v3162 = vsel %vm3112, %v3154, %v3161
      %v3163 = vrot.slane %v3158, 4
      %v3165 = vshrl.u32 %v3100, 16
      %v3167 = vrot.slane %v3165, 7
      %v3168 = vshll.u32 %v3100, 16
      %v3170 = vor.u32 %v3167, %v3168
      %v3171 = vrot.slane %v3167, 4
      %v3173 = vshrl.u32 %v3101, 16
      %v3175 = vrot.slane %v3173, 7
      %v3176 = vshll.u32 %v3101, 16
      %v3178 = vor.u32 %v3175, %v3176
      %v3179 = vsel %vm3112, %v3171, %v3178
      %v3180 = vrot.slane %v3175, 4
      %v3182 = vshrl.u32 %v3102, 16
      %v3184 = vrot.slane %v3182, 7
      %v3185 = vshll.u32 %v3102, 16
      %v3187 = vor.u32 %v3184, %v3185
      %v3188 = vrot.slane %v3184, 4
      %v3190 = vshrl.u32 %v3103, 16
      %v3192 = vrot.slane %v3190, 7
      %v3193 = vshll.u32 %v3103, 16
      %v3195 = vor.u32 %v3192, %v3193
      %v3196 = vsel %vm3112, %v3188, %v3195
      %v3197 = vrot.slane %v3192, 4
      %v3199 = vshrl.u32 %v3104, 16
      %v3201 = vrot.slane %v3199, 7
      %v3202 = vshll.u32 %v3104, 16
      %v3204 = vor.u32 %v3201, %v3202
      %v3205 = vrot.slane %v3201, 4
      %v3207 = vshrl.u32 %v3105, 16
      %v3209 = vrot.slane %v3207, 7
      %v3210 = vshll.u32 %v3105, 16
      %v3212 = vor.u32 %v3209, %v3210
      %v3213 = vsel %vm3112, %v3205, %v3212
      %v3214 = vrot.slane %v3209, 4
      %v3216 = vshrl.u32 %v3106, 16
      %v3218 = vrot.slane %v3216, 7
      %v3219 = vshll.u32 %v3106, 16
      %v3221 = vor.u32 %v3218, %v3219
      %v3222 = vrot.slane %v3218, 4
      %v3224 = vshrl.u32 %v3107, 16
      %v3226 = vrot.slane %v3224, 7
      %v3227 = vshll.u32 %v3107, 16
      %v3229 = vor.u32 %v3226, %v3227
      %v3230 = vsel %vm3112, %v3222, %v3229
      %v3231 = vrot.slane %v3226, 4
      %v3233 = vshrl.u32 %v3108, 16
      %v3235 = vrot.slane %v3233, 7
      %v3236 = vshll.u32 %v3108, 16
      %v3238 = vor.u32 %v3235, %v3236
      %v3239 = vrot.slane %v3235, 4
      %v3241 = vshrl.u32 %v3109, 16
      %v3243 = vrot.slane %v3241, 7
      %v3244 = vshll.u32 %v3109, 16
      %v3246 = vor.u32 %v3243, %v3244
      %v3247 = vsel %vm3112, %v3239, %v3246
      %v3248 = vrot.slane %v3243, 4
      %vm3273 = vcmask 1043456
      %vm3274 = vsmask.f32 7938
      %vm3275 = vmand %vm3273, %vm3274
      %v3276 = vld [vmem:[%s198] sm:$0xf]
      %v3277 = vsel %vm3275, %v3119, %v3276
      %3278 = vst [vmem:[%s198] sm:$0xf] %v3277
      %3279 = vst [vmem:[%s198 + $0x4] sm:$0xf] %v3128
      %vm3280 = vcmask 1040384
      %vm3281 = vmand %vm3280, %vm3110
      %v3282 = vld [vmem:[%s198 + $0x8] sm:$0x1]
      %v3283 = vsel %vm3281, %v3129, %v3282
      %3284 = vst [vmem:[%s198 + $0x8] sm:$0x1] %v3283
      %v3285 = vld [vmem:[%s198 + $0xc] sm:$0xf]
      %v3286 = vsel %vm3275, %v3136, %v3285
      %3287 = vst [vmem:[%s198 + $0xc] sm:$0xf] %v3286
      %3288 = vst [vmem:[%s198 + $0x10] sm:$0xf] %v3145
      %v3289 = vld [vmem:[%s198 + $0x14] sm:$0x1]
      %v3290 = vsel %vm3281, %v3146, %v3289
      %3291 = vst [vmem:[%s198 + $0x14] sm:$0x1] %v3290
      %v3292 = vld [vmem:[%s198 + $0x18] sm:$0xf]
      %v3293 = vsel %vm3275, %v3153, %v3292
      %3294 = vst [vmem:[%s198 + $0x18] sm:$0xf] %v3293
      %3295 = vst [vmem:[%s198 + $0x1c] sm:$0xf] %v3162
      %v3296 = vld [vmem:[%s198 + $0x20] sm:$0x1]
      %v3297 = vsel %vm3281, %v3163, %v3296
      %3298 = vst [vmem:[%s198 + $0x20] sm:$0x1] %v3297
      %v3299 = vld [vmem:[%s198 + $0x24] sm:$0xf]
      %v3300 = vsel %vm3275, %v3170, %v3299
      %3301 = vst [vmem:[%s198 + $0x24] sm:$0xf] %v3300
      %3302 = vst [vmem:[%s198 + $0x28] sm:$0xf] %v3179
      %v3303 = vld [vmem:[%s198 + $0x2c] sm:$0x1]
      %v3304 = vsel %vm3281, %v3180, %v3303
      %3305 = vst [vmem:[%s198 + $0x2c] sm:$0x1] %v3304
      %v3306 = vld [vmem:[%s198 + $0x30] sm:$0xf]
      %v3307 = vsel %vm3275, %v3187, %v3306
      %3308 = vst [vmem:[%s198 + $0x30] sm:$0xf] %v3307
      %3309 = vst [vmem:[%s198 + $0x34] sm:$0xf] %v3196
      %v3310 = vld [vmem:[%s198 + $0x38] sm:$0x1]
      %v3311 = vsel %vm3281, %v3197, %v3310
      %3312 = vst [vmem:[%s198 + $0x38] sm:$0x1] %v3311
      %v3313 = vld [vmem:[%s198 + $0x3c] sm:$0xf]
      %v3314 = vsel %vm3275, %v3204, %v3313
      %3315 = vst [vmem:[%s198 + $0x3c] sm:$0xf] %v3314
      %3316 = vst [vmem:[%s198 + $0x40] sm:$0xf] %v3213
      %v3317 = vld [vmem:[%s198 + $0x44] sm:$0x1]
      %v3318 = vsel %vm3281, %v3214, %v3317
      %3319 = vst [vmem:[%s198 + $0x44] sm:$0x1] %v3318
      %v3320 = vld [vmem:[%s198 + $0x48] sm:$0xf]
      %v3321 = vsel %vm3275, %v3221, %v3320
      %3322 = vst [vmem:[%s198 + $0x48] sm:$0xf] %v3321
      %3323 = vst [vmem:[%s198 + $0x4c] sm:$0xf] %v3230
      %v3324 = vld [vmem:[%s198 + $0x50] sm:$0x1]
      %v3325 = vsel %vm3281, %v3231, %v3324
      %3326 = vst [vmem:[%s198 + $0x50] sm:$0x1] %v3325
      %v3327 = vld [vmem:[%s198 + $0x54] sm:$0xf]
      %v3328 = vsel %vm3275, %v3238, %v3327
      %3329 = vst [vmem:[%s198 + $0x54] sm:$0xf] %v3328
      %3330 = vst [vmem:[%s198 + $0x58] sm:$0xf] %v3247
      %v3331 = vld [vmem:[%s198 + $0x5c] sm:$0x1]
      %v3332 = vsel %vm3281, %v3248, %v3331
      %3333 = vst [vmem:[%s198 + $0x5c] sm:$0x1] %v3332
      %v3334 = vld [vmem:[%s198] sm:$0x1]
      %v3335 = vsel %vm3281, 0, %v3334
      %3336 = vst [vmem:[%s198] sm:$0x1] %v3335
      %v3337 = vld [vmem:[%s198 + $0xc] sm:$0x1]
      %v3338 = vsel %vm3281, 0, %v3337
      %3339 = vst [vmem:[%s198 + $0xc] sm:$0x1] %v3338
      %v3340 = vld [vmem:[%s198 + $0x18] sm:$0x1]
      %v3341 = vsel %vm3281, 0, %v3340
      %3342 = vst [vmem:[%s198 + $0x18] sm:$0x1] %v3341
      %v3343 = vld [vmem:[%s198 + $0x24] sm:$0x1]
      %v3344 = vsel %vm3281, 0, %v3343
      %3345 = vst [vmem:[%s198 + $0x24] sm:$0x1] %v3344
      %v3346 = vld [vmem:[%s198 + $0x30] sm:$0x1]
      %v3347 = vsel %vm3281, 0, %v3346
      %3348 = vst [vmem:[%s198 + $0x30] sm:$0x1] %v3347
      %v3349 = vld [vmem:[%s198 + $0x3c] sm:$0x1]
      %v3350 = vsel %vm3281, 0, %v3349
      %3351 = vst [vmem:[%s198 + $0x3c] sm:$0x1] %v3350
      %v3352 = vld [vmem:[%s198 + $0x48] sm:$0x1]
      %v3353 = vsel %vm3281, 0, %v3352
      %3354 = vst [vmem:[%s198 + $0x48] sm:$0x1] %v3353
      %v3355 = vld [vmem:[%s198 + $0x54] sm:$0x1]
      %v3356 = vsel %vm3281, 0, %v3355
      %3357 = vst [vmem:[%s198 + $0x54] sm:$0x1] %v3356
      %v3358 = vld [vmem:[%s198 + $0x8] sm:$0xf]
      %v3359 = vsel %vm3275, 0, %v3358
      %3360 = vst [vmem:[%s198 + $0x8] sm:$0xf] %v3359
      %v3361 = vld [vmem:[%s198 + $0x14] sm:$0xf]
      %v3362 = vsel %vm3275, 0, %v3361
      %3363 = vst [vmem:[%s198 + $0x14] sm:$0xf] %v3362
      %v3364 = vld [vmem:[%s198 + $0x20] sm:$0xf]
      %v3365 = vsel %vm3275, 0, %v3364
      %3366 = vst [vmem:[%s198 + $0x20] sm:$0xf] %v3365
      %v3367 = vld [vmem:[%s198 + $0x2c] sm:$0xf]
      %v3368 = vsel %vm3275, 0, %v3367
      %3369 = vst [vmem:[%s198 + $0x2c] sm:$0xf] %v3368
      %v3370 = vld [vmem:[%s198 + $0x38] sm:$0xf]
      %v3371 = vsel %vm3275, 0, %v3370
      %3372 = vst [vmem:[%s198 + $0x38] sm:$0xf] %v3371
      %v3373 = vld [vmem:[%s198 + $0x44] sm:$0xf]
      %v3374 = vsel %vm3275, 0, %v3373
      %3375 = vst [vmem:[%s198 + $0x44] sm:$0xf] %v3374
      %v3376 = vld [vmem:[%s198 + $0x50] sm:$0xf]
      %v3377 = vsel %vm3275, 0, %v3376
      %3378 = vst [vmem:[%s198 + $0x50] sm:$0xf] %v3377
      %v3379 = vld [vmem:[%s198 + $0x5c] sm:$0xf]
      %v3380 = vsel %vm3275, 0, %v3379
      %3381 = vst [vmem:[%s198 + $0x5c] sm:$0xf] %v3380
      %v3382 = vadd.f32 %v3000, %v3003
      %v3383 = vadd.f32 %v3382, %v3008
      %v3384 = vadd.f32 %v3383, %v3011
      %v3385 = vadd.f32 %v3384, %v3016
      %v3386 = vadd.f32 %v3385, %v3019
      %v3387 = vadd.f32 %v3386, %v3024
      %v3388 = vadd.f32 %v3387, %v3027
      %v3389 = vadd.f32 %v3388, %v3032
      %v3390 = vadd.f32 %v3389, %v3035
      %v3391 = vadd.f32 %v3390, %v3040
      %v3392 = vadd.f32 %v3391, %v3043
      %v3393 = vadd.f32 %v3392, %v3048
      %v3394 = vadd.f32 %v3393, %v3051
      %v3395 = vadd.f32 %v3394, %v3056
      %v3396 = vadd.f32 %v3395, %v3059
      %v3397 = vrot.slane %v3396, 4
      %v3398 = vadd.f32 %v3396, %v3397
      %v3399 = vrot.slane %v3398, 2
      %v3400 = vadd.f32 %v3398, %v3399
      %v3401 = vrot.slane %v3400, 1
      %v3402 = vadd.f32 %v3400, %v3401
      %v3403 = vmul.f32 %v3402, 0.0078125
      %v3404 = vsub.f32 %v3000, %v3403
      %v3405 = vsub.f32 %v3003, %v3403
      %v3406 = vsub.f32 %v3008, %v3403
      %v3407 = vsub.f32 %v3011, %v3403
      %v3408 = vsub.f32 %v3016, %v3403
      %v3409 = vsub.f32 %v3019, %v3403
      %v3410 = vsub.f32 %v3024, %v3403
      %v3411 = vsub.f32 %v3027, %v3403
      %v3412 = vsub.f32 %v3032, %v3403
      %v3413 = vsub.f32 %v3035, %v3403
      %v3414 = vsub.f32 %v3040, %v3403
      %v3415 = vsub.f32 %v3043, %v3403
      %v3416 = vsub.f32 %v3048, %v3403
      %v3417 = vsub.f32 %v3051, %v3403
      %v3418 = vsub.f32 %v3056, %v3403
      %v3419 = vsub.f32 %v3059, %v3403
      %v3420 = vmul.f32 %v3404, %v3404
      %v3421 = vmul.f32 %v3405, %v3405
      %v3422 = vmul.f32 %v3406, %v3406
      %v3423 = vmul.f32 %v3407, %v3407
      %v3424 = vmul.f32 %v3408, %v3408
      %v3425 = vmul.f32 %v3409, %v3409
      %v3426 = vmul.f32 %v3410, %v3410
      %v3427 = vmul.f32 %v3411, %v3411
      %v3428 = vmul.f32 %v3412, %v3412
      %v3429 = vmul.f32 %v3413, %v3413
      %v3430 = vmul.f32 %v3414, %v3414
      %v3431 = vmul.f32 %v3415, %v3415
      %v3432 = vmul.f32 %v3416, %v3416
      %v3433 = vmul.f32 %v3417, %v3417
      %v3434 = vmul.f32 %v3418, %v3418
      %v3435 = vmul.f32 %v3419, %v3419
      %v3436 = vadd.f32 %v3420, %v3421
      %v3437 = vadd.f32 %v3436, %v3422
      %v3438 = vadd.f32 %v3437, %v3423
      %v3439 = vadd.f32 %v3438, %v3424
      %v3440 = vadd.f32 %v3439, %v3425
      %v3441 = vadd.f32 %v3440, %v3426
      %v3442 = vadd.f32 %v3441, %v3427
      %v3443 = vadd.f32 %v3442, %v3428
      %v3444 = vadd.f32 %v3443, %v3429
      %v3445 = vadd.f32 %v3444, %v3430
      %v3446 = vadd.f32 %v3445, %v3431
      %v3447 = vadd.f32 %v3446, %v3432
      %v3448 = vadd.f32 %v3447, %v3433
      %v3449 = vadd.f32 %v3448, %v3434
      %v3450 = vadd.f32 %v3449, %v3435
      %v3451 = vrot.slane %v3450, 4
      %v3452 = vadd.f32 %v3450, %v3451
      %v3453 = vrot.slane %v3452, 2
      %v3454 = vadd.f32 %v3452, %v3453
      %v3455 = vrot.slane %v3454, 1
      %v3456 = vadd.f32 %v3454, %v3455
      %3457 = vst [vmem:[%s206] sm:$0x1] %v3402
      %3458 = vst [vmem:[%s213] sm:$0x1] %v3456
      %s3459 = smul.u32 8, %s21
      %p3460 = scmp.lt.s32.totalorder %s20, 1
      %s3461 = scalar_select %p3460, %s20, 1
      %p3462 = scmp.lt.s32.totalorder %s3459, 15
      %s3463 = scalar_select %p3462, %s3459, 15
      %s3464 = smul.addr %s3463, 3
      %s3465 = smul.addr %s3461, 48
      %s3466 = sadd.s32 %s3464, %s3465
      %s3467 = smul.addr %s3466, 4
      %s3468 = scalar_lea.vmem %s2, %s3467
      %p3469 = scmp.lt.s32.totalorder %s20, 1
      %s3470 = scalar_select %p3469, %s20, 1
      %p3471 = scmp.lt.s32.totalorder %s21, 1
      %s3472 = scalar_select %p3471, %s21, 1
      %s3473 = smul.addr %s3470, 2
      %s3474 = sadd.s32 %s3472, %s3473
      %s3475 = scalar_lea.vmem %s3, %s3474
      %p3476 = scmp.lt.s32.totalorder %s20, 1
      %s3477 = scalar_select %p3476, %s20, 1
      %p3478 = scmp.lt.s32.totalorder %s21, 1
      %s3479 = scalar_select %p3478, %s21, 1
      %s3480 = smul.addr %s3477, 2
      %s3481 = sadd.s32 %s3479, %s3480
      %s3482 = scalar_lea.vmem %s4, %s3481
      // Predicated region
      $region59: #{double_conv_forward.3} parent=23 // pred_check
        %p3483 = pneg %p69
      $region60: #{double_conv_forward.3} parent=23 // pred_check_branch
        %3485 = sbr.rel (%p3483) target = $region62
      $region61: #{double_conv_forward.3} parent=23 // pred_region
        %s3486 = smul.u32 8, %s21
      $region62: #{double_conv_forward.3} parent=23 // pred_fallthru
        _
      // Predicated region
      $region63: #{double_conv_forward.3} parent=23 // pred_check
        %p3487 = pneg %p97
      $region64: #{double_conv_forward.3} parent=23 // pred_check_branch
        %3489 = sbr.rel (%p3487) target = $region66
      $region65: #{double_conv_forward.3} parent=23 // pred_region
        _
      $region66: #{double_conv_forward.3} parent=23 // pred_fallthru
        _
      // Predicated region
      $region67: #{double_conv_forward.3} parent=23 // pred_check
        %p3490 = pneg %p125
      $region68: #{double_conv_forward.3} parent=23 // pred_check_branch
        %3492 = sbr.rel (%p3490) target = $region70
      $region69: #{double_conv_forward.3} parent=23 // pred_region
        _
      $region70: #{double_conv_forward.3} parent=23 // pred_fallthru
        _
    $region24: #{double_conv_forward.3} parent=5 // pred_fallthru
      _
    %p3493 = scmp.le.s32.totalorder 2, %s11
    // Predicated region
    $region71: #{double_conv_forward.3} parent=5 // pred_check
      %p3494 = pneg %p3493
    $region72: #{double_conv_forward.3} parent=5 // pred_check_branch
      %3496 = sbr.rel (%p3494) target = $region74
    $region73: #{double_conv_forward.3} parent=5 // pred_region
      %s3497 = ssub.s32 %s11, 2
      // Predicated region
      $region75: #{double_conv_forward.3} parent=73 // pred_check
        %p3498 = pneg %p75
      $region76: #{double_conv_forward.3} parent=73 // pred_check_branch
        %3500 = sbr.rel (%p3498) target = $region78
      $region77: #{double_conv_forward.3} parent=73 // pred_region
        %s3501 = smul.u32 8, %s23
        %p3502 = scmp.lt.s32.totalorder %s22, 1
        %s3503 = scalar_select %p3502, %s22, 1
        %p3504 = scmp.lt.s32.totalorder %s3501, 15
        %s3505 = scalar_select %p3504, %s3501, 15
        %s3506 = smul.addr %s3505, 3
        %s3507 = smul.addr %s3503, 48
        %s3508 = sadd.s32 %s3506, %s3507
        %s3509 = smul.addr %s3508, 4
        %s3510 = scalar_lea.vmem %s2, %s3509
      $region78: #{double_conv_forward.3} parent=73 // pred_fallthru
        _
      // Predicated region
      $region79: #{double_conv_forward.3} parent=73 // pred_check
        %p3511 = pneg %p103
      $region80: #{double_conv_forward.3} parent=73 // pred_check_branch
        %3513 = sbr.rel (%p3511) target = $region82
      $region81: #{double_conv_forward.3} parent=73 // pred_region
        %p3514 = scmp.lt.s32.totalorder %s22, 1
        %s3515 = scalar_select %p3514, %s22, 1
        %p3516 = scmp.lt.s32.totalorder %s23, 1
        %s3517 = scalar_select %p3516, %s23, 1
        %s3518 = smul.addr %s3515, 2
        %s3519 = sadd.s32 %s3517, %s3518
        %s3520 = scalar_lea.vmem %s3, %s3519
      $region82: #{double_conv_forward.3} parent=73 // pred_fallthru
        _
      // Predicated region
      $region83: #{double_conv_forward.3} parent=73 // pred_check
        %p3521 = pneg %p131
      $region84: #{double_conv_forward.3} parent=73 // pred_check_branch
        %3523 = sbr.rel (%p3521) target = $region86
      $region85: #{double_conv_forward.3} parent=73 // pred_region
        %p3524 = scmp.lt.s32.totalorder %s22, 1
        %s3525 = scalar_select %p3524, %s22, 1
        %p3526 = scmp.lt.s32.totalorder %s23, 1
        %s3527 = scalar_select %p3526, %s23, 1
        %s3528 = smul.addr %s3525, 2
        %s3529 = sadd.s32 %s3527, %s3528
        %s3530 = scalar_lea.vmem %s4, %s3529
      $region86: #{double_conv_forward.3} parent=73 // pred_fallthru
        _
    $region74: #{double_conv_forward.3} parent=5 // pred_fallthru
      _
  $region6: #{double_conv_forward.3} parent=0 // loop_footer
    %s15 = sadd.s32 1, %s11
  $region7: #{double_conv_forward.3} parent=0 // loop_footer_branch
    %10 = sbr.rel target = $region3
  $region8: #{double_conv_forward.3} parent=0 // loop_exit
    _
  %3531 = vsyncmov [#allocation4]
  %s3532 = vpop.sfrf %3531
  %p3533 = scmp.eq.s32.totalorder %s3532, 0
  %p3534 = pneg %p3533
  %3536 = shalt.err (%p3534)
  %s3537 = scalar_lea.sflag [#allocation4], 1
  %3538 = vsyncmov %s3537
  %s3539 = vpop.sfrf %3538
  %p3540 = scmp.eq.s32.totalorder %s3539, 0
  %p3541 = pneg %p3540
  %3543 = shalt.err (%p3541)
  %s3544 = scalar_lea.sflag [#allocation4], 2
  %3545 = vsyncmov %s3544
  %s3546 = vpop.sfrf %3545
  %p3547 = scmp.eq.s32.totalorder %s3546, 0
  %p3548 = pneg %p3547
  %3550 = shalt.err (%p3548)

// kernel: double_conv_forward.4
$region0: #{double_conv_forward.4}
  #allocation0 [shape = 'u32[]', space=smem, size = 0x4, offset = 0x4, fixed_abs, tag = 'smem constant byte address 0x4 - core index']
  #allocation1 [shape = 'u32[144,128]{1,0:T(1,128)}', space=vmem, size = 0x12000, scoped, tag = 'internal scratch']
  #allocation2 [shape = 'bf16[10,24,128]{2,1,0:T(8,128)(2,1)}', space=vmem, size = 0xf000, scoped, tag = 'scratch operand']
  #allocation3 [shape = 'bf16[128,1152]{1,0:T(8,128)(2,1)}', space=vmem, size = 0x48000, scoped, tag = 'scratch operand']
  #allocation4 [shape = 's32[3]{0}', space=sflag, size = 0xc, scoped, tag = 'scratch operand']
  #allocation5 [shape = 's32[]', space=sflag, size = 0x4, offset = 0, fixed_abs, tag = 'sflag constant byte address 0x0 - dummy sync flag']
  #allocation6 [shape = 's32[]', space=sflag, size = 0x4, offset = 0, fixed_abs, tag = 'sflag constant byte address 0x0 - dummy sync flag']
  #allocation7 [shape = 's32[]', space=sflag, size = 0x4, offset = 0, fixed_abs, tag = 'sflag constant byte address 0x0 - dummy sync flag']
  %s0 = inlined_call_operand.vmem [shape: bf16[2,16,24,128], index: 0, kind: input, shape index: {}]
  %s1 = inlined_call_operand.vmem [shape: bf16[1152,128], index: 1, kind: input, shape index: {}]
  %s2 = inlined_call_operand.vmem [shape: f32[1,128], index: 2, kind: input, shape index: {}]
  %s3 = inlined_call_operand.vmem [shape: f32[1,128], index: 3, kind: input, shape index: {}]
  %s4 = inlined_call_operand.vmem [shape: bf16[2,16,16,128], index: 4, kind: output, shape index: {0}]
  %s5 = inlined_call_operand.vmem [shape: f32[2,2,1,128], index: 5, kind: output, shape index: {1}]
  %s6 = inlined_call_operand.vmem [shape: f32[2,2,1,128], index: 6, kind: output, shape index: {2}]
  %7 = xla_tuple %s4, %s5, %s6
  %s8 = sld [smem:[#allocation0]]
  $region185: #{double_conv_forward.4} parent=0
    _
  %s10 = ssub.s32 1, %s8
  %s11 = scalar_select 0, %s10, %s8
  loop: start=0, step=1, limit=6
  $region2: #{double_conv_forward.4} parent=0 // loop_pre_header
    _
  $region3: #{double_conv_forward.4} parent=0 // loop_header
    %s13 = sphi 0, %s17
    %p14 = scmp.ge.s32.totalorder %s13, 6
    %s20 = sphi 0, %s32
    %s21 = sphi 0, %s28
    %s22 = sphi 0, %s20
    %s23 = sphi 0, %s21
    %s24 = sphi 0, %s22
    %s25 = sphi 0, %s23
    %s33 = sphi 0, %s33
    %s35 = sphi 0, %s33
    %s36 = sphi 0, %s35
    %s50 = sphi 0, %s36
    %s54 = sphi 0, %s54
    %s56 = sphi 0, %s54
    %s57 = sphi 0, %s56
    %s71 = sphi 0, %s57
    %s75 = sphi 0, %s75
    %s77 = sphi 0, %s75
    %s78 = sphi 0, %s77
    %s92 = sphi 0, %s78
    %s100 = sphi 0, %s102
    %s103 = sphi 0, %s100
    %s104 = sphi 0, %s103
    %s120 = sphi 0, %s104
    %s128 = sphi 0, %s130
    %s131 = sphi 0, %s128
    %s132 = sphi 0, %s131
    %s148 = sphi 0, %s132
    %s156 = sphi 0, %s158
    %s159 = sphi 0, %s156
    %s160 = sphi 0, %s159
    %s176 = sphi 0, %s160
  $region4: #{double_conv_forward.4} parent=0 // loop_header_branch
    %16 = sbr.rel (%p14) target = $region8
  $region5: #{double_conv_forward.4} parent=0 // loop_body
    %s18 = ssub.s32 %s13, 1
    %s19 = ssub.s32 %s13, 2
    %s26 = sadd.s32 1, %s21
    %p27 = scmp.ge.s32.totalorder %s26, 2
    %s28 = scalar_select %p27, 0, %s26
    %s29 = sadd.s32 1, %s20
    %s30 = scalar_select %p27, %s29, %s20
    %p31 = scmp.ge.s32.totalorder %s30, 2
    %s32 = scalar_select %p31, 0, %s30
    %s34 = sadd.s32 %s33, 1
    %p37 = scmp.eq.s32.totalorder %s13, 3
    %p38 = scmp.ne.s32.totalorder %s33, %s35
    %p39 = scmp.eq.s32.totalorder %s13, 0
    %p40 = por %p38, %p39
    %p41 = scmp.ne.s32.totalorder %s33, %s35
    %p42 = scmp.eq.s32.totalorder %s18, 3
    %p43 = por %p41, %p42
    %p44 = scmp.ne.s32.totalorder %s35, %s36
    %p45 = scmp.eq.s32.totalorder %s18, 0
    %p46 = por %p44, %p45
    %p47 = scmp.ne.s32.totalorder %s35, %s36
    %p48 = scmp.eq.s32.totalorder %s19, 3
    %p49 = por %p47, %p48
    %p51 = scmp.ne.s32.totalorder %s36, %s50
    %p52 = scmp.eq.s32.totalorder %s19, 0
    %p53 = por %p51, %p52
    %s55 = sadd.s32 %s54, 1
    %p58 = scmp.eq.s32.totalorder %s13, 3
    %p59 = scmp.ne.s32.totalorder %s54, %s56
    %p60 = scmp.eq.s32.totalorder %s13, 0
    %p61 = por %p59, %p60
    %p62 = scmp.ne.s32.totalorder %s54, %s56
    %p63 = scmp.eq.s32.totalorder %s18, 3
    %p64 = por %p62, %p63
    %p65 = scmp.ne.s32.totalorder %s56, %s57
    %p66 = scmp.eq.s32.totalorder %s18, 0
    %p67 = por %p65, %p66
    %p68 = scmp.ne.s32.totalorder %s56, %s57
    %p69 = scmp.eq.s32.totalorder %s19, 3
    %p70 = por %p68, %p69
    %p72 = scmp.ne.s32.totalorder %s57, %s71
    %p73 = scmp.eq.s32.totalorder %s19, 0
    %p74 = por %p72, %p73
    %s76 = sadd.s32 %s75, 1
    %p79 = scmp.eq.s32.totalorder %s13, 3
    %p80 = scmp.ne.s32.totalorder %s75, %s77
    %p81 = scmp.eq.s32.totalorder %s13, 0
    %p82 = por %p80, %p81
    %p83 = scmp.ne.s32.totalorder %s75, %s77
    %p84 = scmp.eq.s32.totalorder %s18, 3
    %p85 = por %p83, %p84
    %p86 = scmp.ne.s32.totalorder %s77, %s78
    %p87 = scmp.eq.s32.totalorder %s18, 0
    %p88 = por %p86, %p87
    %p89 = scmp.ne.s32.totalorder %s77, %s78
    %p90 = scmp.eq.s32.totalorder %s19, 3
    %p91 = por %p89, %p90
    %p93 = scmp.ne.s32.totalorder %s78, %s92
    %p94 = scmp.eq.s32.totalorder %s19, 0
    %p95 = por %p93, %p94
    %s96 = ssub.s32 %s20, %s32
    %s97 = ssub.s32 %s21, %s28
    %s98 = sor.u32 %s96, %s97
    %p99 = scmp.eq.s32.totalorder %s98, 0
    %s101 = sadd.s32 %s100, 1
    %s102 = scalar_select %p99, %s100, %s101
    %p105 = pneg %p99
    %p106 = scmp.eq.s32.totalorder %s13, 3
    %p107 = por %p105, %p106
    %p108 = scmp.ne.s32.totalorder %s100, %s103
    %p109 = scmp.eq.s32.totalorder %s13, 0
    %p110 = por %p108, %p109
    %p111 = scmp.ne.s32.totalorder %s100, %s103
    %p112 = scmp.eq.s32.totalorder %s18, 3
    %p113 = por %p111, %p112
    %p114 = scmp.ne.s32.totalorder %s103, %s104
    %p115 = scmp.eq.s32.totalorder %s18, 0
    %p116 = por %p114, %p115
    %p117 = scmp.ne.s32.totalorder %s103, %s104
    %p118 = scmp.eq.s32.totalorder %s19, 3
    %p119 = por %p117, %p118
    %p121 = scmp.ne.s32.totalorder %s104, %s120
    %p122 = scmp.eq.s32.totalorder %s19, 0
    %p123 = por %p121, %p122
    %s124 = ssub.s32 %s20, %s32
    %s125 = ssub.s32 %s21, %s28
    %s126 = sor.u32 %s124, %s125
    %p127 = scmp.eq.s32.totalorder %s126, 0
    %s129 = sadd.s32 %s128, 1
    %s130 = scalar_select %p127, %s128, %s129
    %p133 = pneg %p127
    %p134 = scmp.eq.s32.totalorder %s13, 3
    %p135 = por %p133, %p134
    %p136 = scmp.ne.s32.totalorder %s128, %s131
    %p137 = scmp.eq.s32.totalorder %s13, 0
    %p138 = por %p136, %p137
    %p139 = scmp.ne.s32.totalorder %s128, %s131
    %p140 = scmp.eq.s32.totalorder %s18, 3
    %p141 = por %p139, %p140
    %p142 = scmp.ne.s32.totalorder %s131, %s132
    %p143 = scmp.eq.s32.totalorder %s18, 0
    %p144 = por %p142, %p143
    %p145 = scmp.ne.s32.totalorder %s131, %s132
    %p146 = scmp.eq.s32.totalorder %s19, 3
    %p147 = por %p145, %p146
    %p149 = scmp.ne.s32.totalorder %s132, %s148
    %p150 = scmp.eq.s32.totalorder %s19, 0
    %p151 = por %p149, %p150
    %s152 = ssub.s32 %s20, %s32
    %s153 = ssub.s32 %s21, %s28
    %s154 = sor.u32 %s152, %s153
    %p155 = scmp.eq.s32.totalorder %s154, 0
    %s157 = sadd.s32 %s156, 1
    %s158 = scalar_select %p155, %s156, %s157
    %p161 = pneg %p155
    %p162 = scmp.eq.s32.totalorder %s13, 3
    %p163 = por %p161, %p162
    %p164 = scmp.ne.s32.totalorder %s156, %s159
    %p165 = scmp.eq.s32.totalorder %s13, 0
    %p166 = por %p164, %p165
    %p167 = scmp.ne.s32.totalorder %s156, %s159
    %p168 = scmp.eq.s32.totalorder %s18, 3
    %p169 = por %p167, %p168
    %p170 = scmp.ne.s32.totalorder %s159, %s160
    %p171 = scmp.eq.s32.totalorder %s18, 0
    %p172 = por %p170, %p171
    %p173 = scmp.ne.s32.totalorder %s159, %s160
    %p174 = scmp.eq.s32.totalorder %s19, 3
    %p175 = por %p173, %p174
    %p177 = scmp.ne.s32.totalorder %s160, %s176
    %p178 = scmp.eq.s32.totalorder %s19, 0
    %p179 = por %p177, %p178
    %p180 = scmp.le.s32.totalorder 1, %s13
    %p181 = scmp.lt.s32.totalorder %s13, 5
    %p182 = pnand %p180, %p181
    %p183 = pneg %p182
    // Predicated region
    $region9: #{double_conv_forward.4} parent=5 // pred_check
      _
    $region10: #{double_conv_forward.4} parent=5 // pred_check_branch
      %185 = sbr.rel (%p182) target = $region12
    $region11: #{double_conv_forward.4} parent=5 // pred_region
      %s186 = ssub.s32 %s13, 1
      // Predicated region
      $region13: #{double_conv_forward.4} parent=11 // pred_check
        %p187 = pneg %p46
      $region14: #{double_conv_forward.4} parent=11 // pred_check_branch
        %189 = sbr.rel (%p187) target = $region16
      $region15: #{double_conv_forward.4} parent=11 // pred_region
        _
      $region16: #{double_conv_forward.4} parent=11 // pred_fallthru
        _
      // Predicated region
      $region17: #{double_conv_forward.4} parent=11 // pred_check
        %p190 = pneg %p67
      $region18: #{double_conv_forward.4} parent=11 // pred_check_branch
        %192 = sbr.rel (%p190) target = $region20
      $region19: #{double_conv_forward.4} parent=11 // pred_region
        _
      $region20: #{double_conv_forward.4} parent=11 // pred_fallthru
        _
      // Predicated region
      $region21: #{double_conv_forward.4} parent=11 // pred_check
        %p193 = pneg %p88
      $region22: #{double_conv_forward.4} parent=11 // pred_check_branch
        %195 = sbr.rel (%p193) target = $region24
      $region23: #{double_conv_forward.4} parent=11 // pred_region
        _
      $region24: #{double_conv_forward.4} parent=11 // pred_fallthru
        _
    $region12: #{double_conv_forward.4} parent=5 // pred_fallthru
      _
    %p196 = scmp.lt.s32.totalorder %s13, 4
    // Predicated region
    $region25: #{double_conv_forward.4} parent=5 // pred_check
      %p197 = pneg %p196
    $region26: #{double_conv_forward.4} parent=5 // pred_check_branch
      %199 = sbr.rel (%p197) target = $region28
    $region27: #{double_conv_forward.4} parent=5 // pred_region
      _
    $region28: #{double_conv_forward.4} parent=5 // pred_fallthru
      _
    %p200 = scmp.le.s32.totalorder 1, %s13
    %p201 = scmp.lt.s32.totalorder %s13, 5
    %p202 = pnand %p200, %p201
    %p203 = pneg %p202
    // Predicated region
    $region29: #{double_conv_forward.4} parent=5 // pred_check
      _
    $region30: #{double_conv_forward.4} parent=5 // pred_check_branch
      %205 = sbr.rel (%p202) target = $region32
    $region31: #{double_conv_forward.4} parent=5 // pred_region
      %s206 = ssub.s32 %s13, 1
      %p207 = pneg %p46
      %p208 = pneg %p43
      %p209 = pneg %p67
      %p210 = pneg %p64
      %p211 = pneg %p88
      %p212 = pneg %p85
      %p213 = pneg %p116
      %p214 = pneg %p113
      %s215 = smul.u32 8, %s23
      %p216 = scmp.lt.s32.totalorder %s22, 1
      %s217 = scalar_select %p216, %s22, 1
      %p218 = scmp.lt.s32.totalorder %s215, 15
      %s219 = scalar_select %p218, %s215, 15
      %s220 = smul.addr %s219, 2
      %s221 = smul.addr %s217, 32
      %s222 = sadd.s32 %s220, %s221
      %s223 = smul.addr %s222, 4
      %s224 = scalar_lea.vmem %s4, %s223
      %p225 = pneg %p144
      %p226 = pneg %p141
      %p227 = scmp.lt.s32.totalorder %s22, 1
      %s228 = scalar_select %p227, %s22, 1
      %p229 = scmp.lt.s32.totalorder %s23, 1
      %s230 = scalar_select %p229, %s23, 1
      %s231 = smul.addr %s228, 2
      %s232 = sadd.s32 %s230, %s231
      %s233 = scalar_lea.vmem %s5, %s232
      %p234 = pneg %p172
      %p235 = pneg %p169
      %p236 = scmp.lt.s32.totalorder %s22, 1
      %s237 = scalar_select %p236, %s22, 1
      %p238 = scmp.lt.s32.totalorder %s23, 1
      %s239 = scalar_select %p238, %s23, 1
      %s240 = smul.addr %s237, 2
      %s241 = sadd.s32 %s239, %s240
      %s242 = scalar_lea.vmem %s6, %s241
      %s243 = smul.u32 8, %s23
      %p244 = scmp.lt.s32.totalorder %s22, 1
      %s245 = scalar_select %p244, %s22, 1
      %p246 = scmp.lt.s32.totalorder %s243, 15
      %s247 = scalar_select %p246, %s243, 15
      %s248 = smul.addr %s247, 2
      %s249 = smul.addr %s245, 32
      %s250 = sadd.s32 %s248, %s249
      %s251 = smul.addr %s250, 4
      %s252 = scalar_lea.vmem %s4, %s251
      %s253 = smul.u32 8, %s23
      %p254 = scmp.lt.s32.totalorder %s22, 1
      %s255 = scalar_select %p254, %s22, 1
      %p256 = scmp.lt.s32.totalorder %s23, 1
      %s257 = scalar_select %p256, %s23, 1
      %s258 = smul.addr %s255, 2
      %s259 = sadd.s32 %s257, %s258
      %s260 = scalar_lea.vmem %s5, %s259
      %p261 = scmp.lt.s32.totalorder %s22, 1
      %s262 = scalar_select %p261, %s22, 1
      %p263 = scmp.lt.s32.totalorder %s23, 1
      %s264 = scalar_select %p263, %s23, 1
      %s265 = smul.addr %s262, 2
      %s266 = sadd.s32 %s264, %s265
      %s267 = scalar_lea.vmem %s6, %s266
      %s269 = smul.u32 %s23, 8
      %s270 = smul.u32 %s269, 3
      %s271 = smul.u32 %s22, 48
      %s272 = sadd.s32 %s270, %s271
      %s273 = smul.addr %s272, 4
      %s274 = scalar_lea.vmem %s0, %s273
      %s275 = scalar_lea.vmem [#allocation2], 12
      %p277 = scmp.lt.u32.totalorder 96, 8
      %p278 = pneg %p277
      // Predicated region
      $region33: #{double_conv_forward.4} parent=31 // pred_check
        _
      $region34: #{double_conv_forward.4} parent=31 // pred_check_branch
        %280 = sbr.rel (%p277) target = $region36
      $region35: #{double_conv_forward.4} parent=31 // pred_region
        %s296 = sand.u32 96, 7
        %p297 = scmp.eq.s32.totalorder %s296, 0
        // Predicated region
        $region48: #{double_conv_forward.4} parent=35 // pred_check
          %p298 = pneg %p297
        $region49: #{double_conv_forward.4} parent=35 // pred_check_branch
          %300 = sbr.rel (%p298) target = $region51
        $region50: #{double_conv_forward.4} parent=35 // pred_region
          loop: start=0, step=1, limit=1
          $region52: #{double_conv_forward.4} parent=50 // loop_pre_header
            _
          $region53: #{double_conv_forward.4} parent=50 // loop_header
            %s302 = sphi 0, %s306
            %p303 = scmp.ge.s32.totalorder %s302, 1
            %s307 = sphi %s274, %s274
            %s308 = sphi %s275, %s275
          $region54: #{double_conv_forward.4} parent=50 // loop_header_branch
            %305 = sbr.rel (%p303) target = $region58
          $region55: #{double_conv_forward.4} parent=50 // loop_body
            %v309 = vld [vmem:[%s307] sm:$0xff]
            %310 = vst [vmem:[%s308] sm:$0xff] %v309
            %v311 = vld [vmem:[%s307 + $0x8] sm:$0xff]
            %312 = vst [vmem:[%s308 + $0x8] sm:$0xff] %v311
            %v313 = vld [vmem:[%s307 + $0x10] sm:$0xff]
            %314 = vst [vmem:[%s308 + $0x10] sm:$0xff] %v313
            %v315 = vld [vmem:[%s307 + $0x18] sm:$0xff]
            %316 = vst [vmem:[%s308 + $0x18] sm:$0xff] %v315
            %v317 = vld [vmem:[%s307 + $0x20] sm:$0xff]
            %318 = vst [vmem:[%s308 + $0x20] sm:$0xff] %v317
            %v319 = vld [vmem:[%s307 + $0x28] sm:$0xff]
            %320 = vst [vmem:[%s308 + $0x28] sm:$0xff] %v319
            %v321 = vld [vmem:[%s307 + $0x30] sm:$0xff]
            %322 = vst [vmem:[%s308 + $0x30] sm:$0xff] %v321
            %v323 = vld [vmem:[%s307 + $0x38] sm:$0xff]
            %324 = vst [vmem:[%s308 + $0x38] sm:$0xff] %v323
            %v325 = vld [vmem:[%s307 + $0x40] sm:$0xff]
            %326 = vst [vmem:[%s308 + $0x40] sm:$0xff] %v325
            %v327 = vld [vmem:[%s307 + $0x48] sm:$0xff]
            %328 = vst [vmem:[%s308 + $0x48] sm:$0xff] %v327
            %v329 = vld [vmem:[%s307 + $0x50] sm:$0xff]
            %330 = vst [vmem:[%s308 + $0x50] sm:$0xff] %v329
            %v331 = vld [vmem:[%s307 + $0x58] sm:$0xff]
            %332 = vst [vmem:[%s308 + $0x58] sm:$0xff] %v331
          $region56: #{double_conv_forward.4} parent=50 // loop_footer
            %s306 = sadd.s32 1, %s302
          $region57: #{double_conv_forward.4} parent=50 // loop_footer_branch
            %301 = sbr.rel target = $region53
          $region58: #{double_conv_forward.4} parent=50 // loop_exit
            _
        $region51: #{double_conv_forward.4} parent=35 // pred_fallthru
          _
        %p333 = pneg %p297
        // Predicated region
        $region59: #{double_conv_forward.4} parent=35 // pred_check
          _
        $region60: #{double_conv_forward.4} parent=35 // pred_check_branch
          %335 = sbr.rel (%p297) target = $region62
        $region61: #{double_conv_forward.4} parent=35 // pred_region
          %s336 = sand.u32 96, 7
        $region62: #{double_conv_forward.4} parent=35 // pred_fallthru
          _
      $region36: #{double_conv_forward.4} parent=31 // pred_fallthru
        _
      // Predicated region
      $region37: #{double_conv_forward.4} parent=31 // pred_check
        %p281 = pneg %p277
      $region38: #{double_conv_forward.4} parent=31 // pred_check_branch
        %283 = sbr.rel (%p281) target = $region40
      $region39: #{double_conv_forward.4} parent=31 // pred_region
        %s284 = sshll.u32 1, 96
        %s285 = ssub.s32 %s284, 1
        loop: start=0, step=1, limit=1
        $region41: #{double_conv_forward.4} parent=39 // loop_pre_header
          _
        $region42: #{double_conv_forward.4} parent=39 // loop_header
          %s287 = sphi 0, %s291
          %p288 = scmp.ge.s32.totalorder %s287, 1
          %s292 = sphi %s274, %s274
          %s293 = sphi %s275, %s275
        $region43: #{double_conv_forward.4} parent=39 // loop_header_branch
          %290 = sbr.rel (%p288) target = $region47
        $region44: #{double_conv_forward.4} parent=39 // loop_body
          %v294 = vld [vmem:[%s292] sm:%s285]
          %295 = vst [vmem:[%s293] sm:%s285] %v294
        $region45: #{double_conv_forward.4} parent=39 // loop_footer
          %s291 = sadd.s32 1, %s287
        $region46: #{double_conv_forward.4} parent=39 // loop_footer_branch
          %286 = sbr.rel target = $region42
        $region47: #{double_conv_forward.4} parent=39 // loop_exit
          _
      $region40: #{double_conv_forward.4} parent=31 // pred_fallthru
        _
      // Predicated region
      $region63: #{double_conv_forward.4} parent=31 // pred_check
        _
      $region64: #{double_conv_forward.4} parent=31 // pred_check_branch
        %339 = sbr.rel (0) target = $region66
      $region65: #{double_conv_forward.4} parent=31 // pred_region
        %340 = vsyncadd [#allocation4], 1536
      $region66: #{double_conv_forward.4} parent=31 // pred_fallthru
        _
      %p341 = scmp.gt.s32.totalorder %s23, 0
      // Predicated region
      $region67: #{double_conv_forward.4} parent=31 // pred_check
        %p342 = pneg %p341
      $region68: #{double_conv_forward.4} parent=31 // pred_check_branch
        %344 = sbr.rel (%p342) target = $region70
      $region69: #{double_conv_forward.4} parent=31 // pred_region
        %s345 = ssub.s32 %s269, 1
        %s346 = smul.u32 %s345, 3
        %s347 = sadd.s32 %s346, %s271
        %s348 = smul.addr %s347, 4
        %s349 = scalar_lea.vmem %s0, %s348
        %s350 = scalar_lea.sflag [#allocation4], 1
        %p352 = scmp.lt.u32.totalorder 12, 8
        %p353 = pneg %p352
        // Predicated region
        $region71: #{double_conv_forward.4} parent=69 // pred_check
          _
        $region72: #{double_conv_forward.4} parent=69 // pred_check_branch
          %355 = sbr.rel (%p352) target = $region74
        $region73: #{double_conv_forward.4} parent=69 // pred_region
          %s371 = sand.u32 12, 7
          %p372 = scmp.eq.s32.totalorder %s371, 0
          %p373 = pneg %p372
          // Predicated region
          $region86: #{double_conv_forward.4} parent=73 // pred_check
            _
          $region87: #{double_conv_forward.4} parent=73 // pred_check_branch
            %375 = sbr.rel (%p372) target = $region89
          $region88: #{double_conv_forward.4} parent=73 // pred_region
            %s376 = sand.u32 12, 7
            %s377 = ssub.s32 12, %s376
            %s378 = scalar_lea.vmem %s349, %s377
            %s379 = ssub.s32 12, %s376
            %s380 = scalar_lea.vmem [#allocation2], %s379
            loop: start=0, step=1, limit=1
            $region90: #{double_conv_forward.4} parent=88 // loop_pre_header
              _
            $region91: #{double_conv_forward.4} parent=88 // loop_header
              %s382 = sphi 0, %s386
              %p383 = scmp.ge.s32.totalorder %s382, 1
              %s387 = sphi %s349, %s349
              %s388 = sphi [#allocation2], [#allocation2]
            $region92: #{double_conv_forward.4} parent=88 // loop_header_branch
              %385 = sbr.rel (%p383) target = $region96
            $region93: #{double_conv_forward.4} parent=88 // loop_body
              %v389 = vld [vmem:[%s387] sm:$0xff]
              %390 = vst [vmem:[%s388] sm:$0xff] %v389
            $region94: #{double_conv_forward.4} parent=88 // loop_footer
              %s386 = sadd.s32 1, %s382
            $region95: #{double_conv_forward.4} parent=88 // loop_footer_branch
              %381 = sbr.rel target = $region91
            $region96: #{double_conv_forward.4} parent=88 // loop_exit
              _
            %s391 = sshll.u32 1, %s376
            %s392 = ssub.s32 %s391, 1
            loop: start=0, step=1, limit=1
            $region97: #{double_conv_forward.4} parent=88 // loop_pre_header
              _
            $region98: #{double_conv_forward.4} parent=88 // loop_header
              %s394 = sphi 0, %s398
              %p395 = scmp.ge.s32.totalorder %s394, 1
              %s399 = sphi %s378, %s378
              %s400 = sphi %s380, %s380
            $region99: #{double_conv_forward.4} parent=88 // loop_header_branch
              %397 = sbr.rel (%p395) target = $region103
            $region100: #{double_conv_forward.4} parent=88 // loop_body
              %v401 = vld [vmem:[%s399] sm:%s392]
              %402 = vst [vmem:[%s400] sm:%s392] %v401
            $region101: #{double_conv_forward.4} parent=88 // loop_footer
              %s398 = sadd.s32 1, %s394
            $region102: #{double_conv_forward.4} parent=88 // loop_footer_branch
              %393 = sbr.rel target = $region98
            $region103: #{double_conv_forward.4} parent=88 // loop_exit
              _
          $region89: #{double_conv_forward.4} parent=73 // pred_fallthru
            _
        $region74: #{double_conv_forward.4} parent=69 // pred_fallthru
          _
        // Predicated region
        $region75: #{double_conv_forward.4} parent=69 // pred_check
          %p356 = pneg %p352
        $region76: #{double_conv_forward.4} parent=69 // pred_check_branch
          %358 = sbr.rel (%p356) target = $region78
        $region77: #{double_conv_forward.4} parent=69 // pred_region
          %s359 = sshll.u32 1, 12
          %s360 = ssub.s32 %s359, 1
          loop: start=0, step=1, limit=1
          $region79: #{double_conv_forward.4} parent=77 // loop_pre_header
            _
          $region80: #{double_conv_forward.4} parent=77 // loop_header
            %s362 = sphi 0, %s366
            %p363 = scmp.ge.s32.totalorder %s362, 1
            %s367 = sphi %s349, %s349
            %s368 = sphi [#allocation2], [#allocation2]
          $region81: #{double_conv_forward.4} parent=77 // loop_header_branch
            %365 = sbr.rel (%p363) target = $region85
          $region82: #{double_conv_forward.4} parent=77 // loop_body
            %v369 = vld [vmem:[%s367] sm:%s360]
            %370 = vst [vmem:[%s368] sm:%s360] %v369
          $region83: #{double_conv_forward.4} parent=77 // loop_footer
            %s366 = sadd.s32 1, %s362
          $region84: #{double_conv_forward.4} parent=77 // loop_footer_branch
            %361 = sbr.rel target = $region80
          $region85: #{double_conv_forward.4} parent=77 // loop_exit
            _
        $region78: #{double_conv_forward.4} parent=69 // pred_fallthru
          _
        // Predicated region
        $region104: #{double_conv_forward.4} parent=69 // pred_check
          _
        $region105: #{double_conv_forward.4} parent=69 // pred_check_branch
          %405 = sbr.rel (0) target = $region107
        $region106: #{double_conv_forward.4} parent=69 // pred_region
          %406 = vsyncadd %s350, 192
        $region107: #{double_conv_forward.4} parent=69 // pred_fallthru
          _
        %s407 = smul.u32 4, 1
        %s408 = smul.u32 %s407, 3
        %s409 = smul.u32 %s408, 1
        %s410 = sshll.u32 %s409, 4
        %411 = dma.done %s350, %s410
      $region70: #{double_conv_forward.4} parent=31 // pred_fallthru
        _
      %p412 = scmp.lt.s32.totalorder %s23, 1
      // Predicated region
      $region108: #{double_conv_forward.4} parent=31 // pred_check
        %p413 = pneg %p412
      $region109: #{double_conv_forward.4} parent=31 // pred_check_branch
        %415 = sbr.rel (%p413) target = $region111
      $region110: #{double_conv_forward.4} parent=31 // pred_region
        %s416 = sadd.s32 %s269, 8
        %s417 = smul.u32 %s416, 3
        %s418 = sadd.s32 %s417, %s271
        %s419 = smul.addr %s418, 4
        %s420 = scalar_lea.vmem %s0, %s419
        %s421 = scalar_lea.vmem [#allocation2], 108
        %s422 = scalar_lea.sflag [#allocation4], 2
        %p424 = scmp.lt.u32.totalorder 12, 8
        %p425 = pneg %p424
        // Predicated region
        $region112: #{double_conv_forward.4} parent=110 // pred_check
          _
        $region113: #{double_conv_forward.4} parent=110 // pred_check_branch
          %427 = sbr.rel (%p424) target = $region115
        $region114: #{double_conv_forward.4} parent=110 // pred_region
          %s443 = sand.u32 12, 7
          %p444 = scmp.eq.s32.totalorder %s443, 0
          %p445 = pneg %p444
          // Predicated region
          $region127: #{double_conv_forward.4} parent=114 // pred_check
            _
          $region128: #{double_conv_forward.4} parent=114 // pred_check_branch
            %447 = sbr.rel (%p444) target = $region130
          $region129: #{double_conv_forward.4} parent=114 // pred_region
            %s448 = sand.u32 12, 7
            %s449 = ssub.s32 12, %s448
            %s450 = scalar_lea.vmem %s420, %s449
            %s451 = ssub.s32 12, %s448
            %s452 = scalar_lea.vmem %s421, %s451 [#allocation2]
            loop: start=0, step=1, limit=1
            $region131: #{double_conv_forward.4} parent=129 // loop_pre_header
              _
            $region132: #{double_conv_forward.4} parent=129 // loop_header
              %s454 = sphi 0, %s458
              %p455 = scmp.ge.s32.totalorder %s454, 1
              %s459 = sphi %s420, %s420
              %s460 = sphi %s421, %s421
            $region133: #{double_conv_forward.4} parent=129 // loop_header_branch
              %457 = sbr.rel (%p455) target = $region137
            $region134: #{double_conv_forward.4} parent=129 // loop_body
              %v461 = vld [vmem:[%s459] sm:$0xff]
              %462 = vst [vmem:[%s460] sm:$0xff] %v461
            $region135: #{double_conv_forward.4} parent=129 // loop_footer
              %s458 = sadd.s32 1, %s454
            $region136: #{double_conv_forward.4} parent=129 // loop_footer_branch
              %453 = sbr.rel target = $region132
            $region137: #{double_conv_forward.4} parent=129 // loop_exit
              _
            %s463 = sshll.u32 1, %s448
            %s464 = ssub.s32 %s463, 1
            loop: start=0, step=1, limit=1
            $region138: #{double_conv_forward.4} parent=129 // loop_pre_header
              _
            $region139: #{double_conv_forward.4} parent=129 // loop_header
              %s466 = sphi 0, %s470
              %p467 = scmp.ge.s32.totalorder %s466, 1
              %s471 = sphi %s450, %s450
              %s472 = sphi %s452, %s452
            $region140: #{double_conv_forward.4} parent=129 // loop_header_branch
              %469 = sbr.rel (%p467) target = $region144
            $region141: #{double_conv_forward.4} parent=129 // loop_body
              %v473 = vld [vmem:[%s471] sm:%s464]
              %474 = vst [vmem:[%s472] sm:%s464] %v473
            $region142: #{double_conv_forward.4} parent=129 // loop_footer
              %s470 = sadd.s32 1, %s466
            $region143: #{double_conv_forward.4} parent=129 // loop_footer_branch
              %465 = sbr.rel target = $region139
            $region144: #{double_conv_forward.4} parent=129 // loop_exit
              _
          $region130: #{double_conv_forward.4} parent=114 // pred_fallthru
            _
        $region115: #{double_conv_forward.4} parent=110 // pred_fallthru
          _
        // Predicated region
        $region116: #{double_conv_forward.4} parent=110 // pred_check
          %p428 = pneg %p424
        $region117: #{double_conv_forward.4} parent=110 // pred_check_branch
          %430 = sbr.rel (%p428) target = $region119
        $region118: #{double_conv_forward.4} parent=110 // pred_region
          %s431 = sshll.u32 1, 12
          %s432 = ssub.s32 %s431, 1
          loop: start=0, step=1, limit=1
          $region120: #{double_conv_forward.4} parent=118 // loop_pre_header
            _
          $region121: #{double_conv_forward.4} parent=118 // loop_header
            %s434 = sphi 0, %s438
            %p435 = scmp.ge.s32.totalorder %s434, 1
            %s439 = sphi %s420, %s420
            %s440 = sphi %s421, %s421
          $region122: #{double_conv_forward.4} parent=118 // loop_header_branch
            %437 = sbr.rel (%p435) target = $region126
          $region123: #{double_conv_forward.4} parent=118 // loop_body
            %v441 = vld [vmem:[%s439] sm:%s432]
            %442 = vst [vmem:[%s440] sm:%s432] %v441
          $region124: #{double_conv_forward.4} parent=118 // loop_footer
            %s438 = sadd.s32 1, %s434
          $region125: #{double_conv_forward.4} parent=118 // loop_footer_branch
            %433 = sbr.rel target = $region121
          $region126: #{double_conv_forward.4} parent=118 // loop_exit
            _
        $region119: #{double_conv_forward.4} parent=110 // pred_fallthru
          _
        // Predicated region
        $region145: #{double_conv_forward.4} parent=110 // pred_check
          _
        $region146: #{double_conv_forward.4} parent=110 // pred_check_branch
          %477 = sbr.rel (0) target = $region148
        $region147: #{double_conv_forward.4} parent=110 // pred_region
          %478 = vsyncadd %s422, 192
        $region148: #{double_conv_forward.4} parent=110 // pred_fallthru
          _
        %s479 = smul.u32 4, 1
        %s480 = smul.u32 %s479, 3
        %s481 = smul.u32 %s480, 1
        %s482 = sshll.u32 %s481, 4
        %483 = dma.done %s422, %s482
      $region111: #{double_conv_forward.4} parent=31 // pred_fallthru
        _
      %s484 = smul.u32 4, 8
      %s485 = smul.u32 %s484, 3
      %s486 = smul.u32 %s485, 1
      %s487 = sshll.u32 %s486, 4
      %488 = dma.done [#allocation4], %s487
      %v489 = vld [vmem:[%s2] sm:$0x1]
      %v490 = vld [vmem:[%s3] sm:$0x1]
      %v491 = vld [vmem:[#allocation2] sm:$0xf]
      %v492 = vld [vmem:[#allocation2 + $0x4] sm:$0xf]
      %v493 = vld [vmem:[#allocation2 + $0x8] sm:$0xf]
      %v494 = vld [vmem:[#allocation2 + $0xc] sm:$0xf]
      %v495 = vld [vmem:[#allocation2 + $0x10] sm:$0xf]
      %v496 = vld [vmem:[#allocation2 + $0x14] sm:$0xf]
      %v497 = vld [vmem:[#allocation2 + $0x18] sm:$0xf]
      %v498 = vld [vmem:[#allocation2 + $0x1c] sm:$0xf]
      %v499 = vld [vmem:[#allocation2 + $0x20] sm:$0xf]
      %v500 = vld [vmem:[#allocation2 + $0x24] sm:$0xf]
      %v501 = vld [vmem:[#allocation2 + $0x28] sm:$0xf]
      %v502 = vld [vmem:[#allocation2 + $0x2c] sm:$0xf]
      %v503 = vld [vmem:[#allocation2 + $0x30] sm:$0xf]
      %v504 = vld [vmem:[#allocation2 + $0x34] sm:$0xf]
      %v505 = vld [vmem:[#allocation2 + $0x38] sm:$0xf]
      %v506 = vld [vmem:[#allocation2 + $0x3c] sm:$0xf]
      %v507 = vld [vmem:[#allocation2 + $0x40] sm:$0xf]
      %v508 = vld [vmem:[#allocation2 + $0x44] sm:$0xf]
      %v509 = vld [vmem:[#allocation2 + $0x48] sm:$0xf]
      %v510 = vld [vmem:[#allocation2 + $0x4c] sm:$0xf]
      %v511 = vld [vmem:[#allocation2 + $0x50] sm:$0xf]
      %v512 = vld [vmem:[#allocation2 + $0x54] sm:$0xf]
      %v513 = vld [vmem:[#allocation2 + $0x58] sm:$0xf]
      %v514 = vld [vmem:[#allocation2 + $0x5c] sm:$0xf]
      %v515 = vld [vmem:[#allocation2 + $0x60] sm:$0xf]
      %v516 = vld [vmem:[#allocation2 + $0x64] sm:$0xf]
      %v517 = vld [vmem:[#allocation2 + $0x68] sm:$0xf]
      %v518 = vld [vmem:[#allocation2 + $0x6c] sm:$0xf]
      %v519 = vld [vmem:[#allocation2 + $0x70] sm:$0xf]
      %v520 = vld [vmem:[#allocation2 + $0x74] sm:$0xf]
      %v521 = vunpack.c.l.bf16 %v491
      %v522 = vunpack.c.l.bf16 %v492
      %v523 = vunpack.c.l.bf16 %v493
      %v524 = vunpack.c.l.bf16 %v494
      %v525 = vunpack.c.l.bf16 %v495
      %v526 = vunpack.c.l.bf16 %v496
      %v527 = vunpack.c.l.bf16 %v497
      %v528 = vunpack.c.l.bf16 %v498
      %v529 = vunpack.c.l.bf16 %v499
      %v530 = vunpack.c.l.bf16 %v500
      %v531 = vunpack.c.l.bf16 %v501
      %v532 = vunpack.c.l.bf16 %v502
      %v533 = vunpack.c.l.bf16 %v503
      %v534 = vunpack.c.l.bf16 %v504
      %v535 = vunpack.c.l.bf16 %v505
      %v536 = vunpack.c.l.bf16 %v506
      %v537 = vunpack.c.l.bf16 %v507
      %v538 = vunpack.c.l.bf16 %v508
      %v539 = vunpack.c.l.bf16 %v509
      %v540 = vunpack.c.l.bf16 %v510
      %v541 = vunpack.c.l.bf16 %v511
      %v542 = vunpack.c.l.bf16 %v512
      %v543 = vunpack.c.l.bf16 %v513
      %v544 = vunpack.c.l.bf16 %v514
      %v545 = vunpack.c.l.bf16 %v515
      %v546 = vunpack.c.l.bf16 %v516
      %v547 = vunpack.c.l.bf16 %v517
      %v548 = vunpack.c.l.bf16 %v518
      %v549 = vunpack.c.l.bf16 %v519
      %v550 = vunpack.c.l.bf16 %v520
      %v552 = vlaneseq
      %v553 = vshrl.u32 %v552, 7
      %v554 = vsub.s32 0, %v553
      %v555 = vrot.slane %v489, %v554
      %v557 = vmul.f32 %v521, %v555
      %v558 = vmul.f32 %v522, %v555
      %v559 = vmul.f32 %v523, %v555
      %v560 = vmul.f32 %v524, %v555
      %v561 = vmul.f32 %v525, %v555
      %v562 = vmul.f32 %v526, %v555
      %v563 = vmul.f32 %v527, %v555
      %v564 = vmul.f32 %v528, %v555
      %v565 = vmul.f32 %v529, %v555
      %v566 = vmul.f32 %v530, %v555
      %v567 = vmul.f32 %v531, %v555
      %v568 = vmul.f32 %v532, %v555
      %v569 = vmul.f32 %v533, %v555
      %v570 = vmul.f32 %v534, %v555
      %v571 = vmul.f32 %v535, %v555
      %v572 = vmul.f32 %v536, %v555
      %v573 = vmul.f32 %v537, %v555
      %v574 = vmul.f32 %v538, %v555
      %v575 = vmul.f32 %v539, %v555
      %v576 = vmul.f32 %v540, %v555
      %v577 = vmul.f32 %v541, %v555
      %v578 = vmul.f32 %v542, %v555
      %v579 = vmul.f32 %v543, %v555
      %v580 = vmul.f32 %v544, %v555
      %v581 = vmul.f32 %v545, %v555
      %v582 = vmul.f32 %v546, %v555
      %v583 = vmul.f32 %v547, %v555
      %v584 = vmul.f32 %v548, %v555
      %v585 = vmul.f32 %v549, %v555
      %v586 = vmul.f32 %v550, %v555
      %v588 = vlaneseq
      %v589 = vshrl.u32 %v588, 7
      %v590 = vsub.s32 0, %v589
      %v591 = vrot.slane %v490, %v590
      %v593 = vadd.f32 %v557, %v591
      %v594 = vadd.f32 %v558, %v591
      %v595 = vadd.f32 %v559, %v591
      %v596 = vadd.f32 %v560, %v591
      %v597 = vadd.f32 %v561, %v591
      %v598 = vadd.f32 %v562, %v591
      %v599 = vadd.f32 %v563, %v591
      %v600 = vadd.f32 %v564, %v591
      %v601 = vadd.f32 %v565, %v591
      %v602 = vadd.f32 %v566, %v591
      %v603 = vadd.f32 %v567, %v591
      %v604 = vadd.f32 %v568, %v591
      %v605 = vadd.f32 %v569, %v591
      %v606 = vadd.f32 %v570, %v591
      %v607 = vadd.f32 %v571, %v591
      %v608 = vadd.f32 %v572, %v591
      %v609 = vadd.f32 %v573, %v591
      %v610 = vadd.f32 %v574, %v591
      %v611 = vadd.f32 %v575, %v591
      %v612 = vadd.f32 %v576, %v591
      %v613 = vadd.f32 %v577, %v591
      %v614 = vadd.f32 %v578, %v591
      %v615 = vadd.f32 %v579, %v591
      %v616 = vadd.f32 %v580, %v591
      %v617 = vadd.f32 %v581, %v591
      %v618 = vadd.f32 %v582, %v591
      %v619 = vadd.f32 %v583, %v591
      %v620 = vadd.f32 %v584, %v591
      %v621 = vadd.f32 %v585, %v591
      %v622 = vadd.f32 %v586, %v591
      %v623 = vmax.f32 %v593, 0.0
      %v624 = vmax.f32 %v594, 0.0
      %v625 = vmax.f32 %v595, 0.0
      %v626 = vmax.f32 %v596, 0.0
      %v627 = vmax.f32 %v597, 0.0
      %v628 = vmax.f32 %v598, 0.0
      %v629 = vmax.f32 %v599, 0.0
      %v630 = vmax.f32 %v600, 0.0
      %v631 = vmax.f32 %v601, 0.0
      %v632 = vmax.f32 %v602, 0.0
      %v633 = vmax.f32 %v603, 0.0
      %v634 = vmax.f32 %v604, 0.0
      %v635 = vmax.f32 %v605, 0.0
      %v636 = vmax.f32 %v606, 0.0
      %v637 = vmax.f32 %v607, 0.0
      %v638 = vmax.f32 %v608, 0.0
      %v639 = vmax.f32 %v609, 0.0
      %v640 = vmax.f32 %v610, 0.0
      %v641 = vmax.f32 %v611, 0.0
      %v642 = vmax.f32 %v612, 0.0
      %v643 = vmax.f32 %v613, 0.0
      %v644 = vmax.f32 %v614, 0.0
      %v645 = vmax.f32 %v615, 0.0
      %v646 = vmax.f32 %v616, 0.0
      %v647 = vmax.f32 %v617, 0.0
      %v648 = vmax.f32 %v618, 0.0
      %v649 = vmax.f32 %v619, 0.0
      %v650 = vmax.f32 %v620, 0.0
      %v651 = vmax.f32 %v621, 0.0
      %v652 = vmax.f32 %v622, 0.0
      %v653 = vpack.c.bf16 %v624, %v623
      %v654 = vpack.c.bf16 %v625, %v625
      %v655 = vpack.c.bf16 %v627, %v626
      %v656 = vpack.c.bf16 %v628, %v628
      %v657 = vpack.c.bf16 %v630, %v629
      %v658 = vpack.c.bf16 %v631, %v631
      %v659 = vpack.c.bf16 %v633, %v632
      %v660 = vpack.c.bf16 %v634, %v634
      %v661 = vpack.c.bf16 %v636, %v635
      %v662 = vpack.c.bf16 %v637, %v637
      %v663 = vpack.c.bf16 %v639, %v638
      %v664 = vpack.c.bf16 %v640, %v640
      %v665 = vpack.c.bf16 %v642, %v641
      %v666 = vpack.c.bf16 %v643, %v643
      %v667 = vpack.c.bf16 %v645, %v644
      %v668 = vpack.c.bf16 %v646, %v646
      %v669 = vpack.c.bf16 %v648, %v647
      %v670 = vpack.c.bf16 %v649, %v649
      %v671 = vpack.c.bf16 %v651, %v650
      %v672 = vpack.c.bf16 %v652, %v652
      %v693 = vunpack.c.l.b16 %v653
      %v694 = vunpack.c.h.b16 %v653
      %v695 = vunpack.c.l.b16 %v654
      %v696 = vunpack.c.l.b16 %v655
      %v697 = vunpack.c.h.b16 %v655
      %v698 = vunpack.c.l.b16 %v656
      %v699 = vunpack.c.l.b16 %v657
      %v700 = vunpack.c.h.b16 %v657
      %v701 = vunpack.c.l.b16 %v658
      %v702 = vunpack.c.l.b16 %v659
      %v703 = vunpack.c.h.b16 %v659
      %v704 = vunpack.c.l.b16 %v660
      %v705 = vunpack.c.l.b16 %v661
      %v706 = vunpack.c.h.b16 %v661
      %v707 = vunpack.c.l.b16 %v662
      %v708 = vunpack.c.l.b16 %v663
      %v709 = vunpack.c.h.b16 %v663
      %v710 = vunpack.c.l.b16 %v664
      %v711 = vunpack.c.l.b16 %v665
      %v712 = vunpack.c.h.b16 %v665
      %v713 = vunpack.c.l.b16 %v666
      %v714 = vunpack.c.l.b16 %v667
      %v715 = vunpack.c.h.b16 %v667
      %v716 = vunpack.c.l.b16 %v668
      %v717 = vunpack.c.l.b16 %v669
      %v718 = vunpack.c.h.b16 %v669
      %v719 = vunpack.c.l.b16 %v670
      %v720 = vunpack.c.l.b16 %v671
      %v721 = vunpack.c.h.b16 %v671
      %v722 = vunpack.c.l.b16 %v672
      %v723 = vpack.c.b16 %v693, %v693
      %v724 = vpack.c.b16 %v694, %v694
      %v725 = vpack.c.b16 %v695, %v695
      %v726 = vpack.c.b16 %v696, %v696
      %v727 = vpack.c.b16 %v697, %v697
      %v728 = vpack.c.b16 %v698, %v698
      %v729 = vpack.c.b16 %v699, %v699
      %v730 = vpack.c.b16 %v700, %v700
      %v731 = vpack.c.b16 %v701, %v701
      %v732 = vpack.c.b16 %v702, %v702
      %v733 = vpack.c.b16 %v703, %v703
      %v734 = vpack.c.b16 %v704, %v704
      %v735 = vpack.c.b16 %v705, %v705
      %v736 = vpack.c.b16 %v706, %v706
      %v737 = vpack.c.b16 %v707, %v707
      %v738 = vpack.c.b16 %v708, %v708
      %v739 = vpack.c.b16 %v709, %v709
      %v740 = vpack.c.b16 %v710, %v710
      %v741 = vpack.c.b16 %v711, %v711
      %v742 = vpack.c.b16 %v712, %v712
      %v743 = vpack.c.b16 %v713, %v713
      %v744 = vpack.c.b16 %v714, %v714
      %v745 = vpack.c.b16 %v715, %v715
      %v746 = vpack.c.b16 %v716, %v716
      %v747 = vpack.c.b16 %v717, %v717
      %v748 = vpack.c.b16 %v718, %v718
      %v749 = vpack.c.b16 %v719, %v719
      %v750 = vpack.c.b16 %v720, %v720
      %v751 = vpack.c.b16 %v721, %v721
      %v752 = vpack.c.b16 %v722, %v722
      %783 = vst [vmem:[#allocation2] sm:$0xf] %v723
      %784 = vst [vmem:[#allocation2 + $0x4] sm:$0xf] %v724
      %785 = vst [vmem:[#allocation2 + $0x8] sm:$0xf] %v725
      %786 = vst [vmem:[#allocation2 + $0xc] sm:$0xf] %v726
      %787 = vst [vmem:[#allocation2 + $0x10] sm:$0xf] %v727
      %788 = vst [vmem:[#allocation2 + $0x14] sm:$0xf] %v728
      %789 = vst [vmem:[#allocation2 + $0x18] sm:$0xf] %v729
      %790 = vst [vmem:[#allocation2 + $0x1c] sm:$0xf] %v730
      %791 = vst [vmem:[#allocation2 + $0x20] sm:$0xf] %v731
      %792 = vst [vmem:[#allocation2 + $0x24] sm:$0xf] %v732
      %793 = vst [vmem:[#allocation2 + $0x28] sm:$0xf] %v733
      %794 = vst [vmem:[#allocation2 + $0x2c] sm:$0xf] %v734
      %795 = vst [vmem:[#allocation2 + $0x30] sm:$0xf] %v735
      %796 = vst [vmem:[#allocation2 + $0x34] sm:$0xf] %v736
      %797 = vst [vmem:[#allocation2 + $0x38] sm:$0xf] %v737
      %798 = vst [vmem:[#allocation2 + $0x3c] sm:$0xf] %v738
      %799 = vst [vmem:[#allocation2 + $0x40] sm:$0xf] %v739
      %800 = vst [vmem:[#allocation2 + $0x44] sm:$0xf] %v740
      %801 = vst [vmem:[#allocation2 + $0x48] sm:$0xf] %v741
      %802 = vst [vmem:[#allocation2 + $0x4c] sm:$0xf] %v742
      %803 = vst [vmem:[#allocation2 + $0x50] sm:$0xf] %v743
      %804 = vst [vmem:[#allocation2 + $0x54] sm:$0xf] %v744
      %805 = vst [vmem:[#allocation2 + $0x58] sm:$0xf] %v745
      %806 = vst [vmem:[#allocation2 + $0x5c] sm:$0xf] %v746
      %807 = vst [vmem:[#allocation2 + $0x60] sm:$0xf] %v747
      %808 = vst [vmem:[#allocation2 + $0x64] sm:$0xf] %v748
      %809 = vst [vmem:[#allocation2 + $0x68] sm:$0xf] %v749
      %810 = vst [vmem:[#allocation2 + $0x6c] sm:$0xf] %v750
      %811 = vst [vmem:[#allocation2 + $0x70] sm:$0xf] %v751
      %812 = vst [vmem:[#allocation2 + $0x74] sm:$0xf] %v752
      %vm813 = vcmask 1040384
      %vm814 = vsmask.f32 256
      %vm815 = vmand %vm813, %vm814
      %v816 = vld [vmem:[#allocation2] sm:$0x1]
      %v817 = vsel %vm815, 0, %v816
      %818 = vst [vmem:[#allocation2] sm:$0x1] %v817
      %v819 = vld [vmem:[#allocation2 + $0xc] sm:$0x1]
      %v820 = vsel %vm815, 0, %v819
      %821 = vst [vmem:[#allocation2 + $0xc] sm:$0x1] %v820
      %v822 = vld [vmem:[#allocation2 + $0x18] sm:$0x1]
      %v823 = vsel %vm815, 0, %v822
      %824 = vst [vmem:[#allocation2 + $0x18] sm:$0x1] %v823
      %v825 = vld [vmem:[#allocation2 + $0x24] sm:$0x1]
      %v826 = vsel %vm815, 0, %v825
      %827 = vst [vmem:[#allocation2 + $0x24] sm:$0x1] %v826
      %v828 = vld [vmem:[#allocation2 + $0x30] sm:$0x1]
      %v829 = vsel %vm815, 0, %v828
      %830 = vst [vmem:[#allocation2 + $0x30] sm:$0x1] %v829
      %v831 = vld [vmem:[#allocation2 + $0x3c] sm:$0x1]
      %v832 = vsel %vm815, 0, %v831
      %833 = vst [vmem:[#allocation2 + $0x3c] sm:$0x1] %v832
      %v834 = vld [vmem:[#allocation2 + $0x48] sm:$0x1]
      %v835 = vsel %vm815, 0, %v834
      %836 = vst [vmem:[#allocation2 + $0x48] sm:$0x1] %v835
      %v837 = vld [vmem:[#allocation2 + $0x54] sm:$0x1]
      %v838 = vsel %vm815, 0, %v837
      %839 = vst [vmem:[#allocation2 + $0x54] sm:$0x1] %v838
      %v840 = vld [vmem:[#allocation2 + $0x60] sm:$0x1]
      %v841 = vsel %vm815, 0, %v840
      %842 = vst [vmem:[#allocation2 + $0x60] sm:$0x1] %v841
      %v843 = vld [vmem:[#allocation2 + $0x6c] sm:$0x1]
      %v844 = vsel %vm815, 0, %v843
      %845 = vst [vmem:[#allocation2 + $0x6c] sm:$0x1] %v844
      %vm846 = vsmask.f32 7938
      %vm847 = vmand %vm813, %vm846
      %v848 = vld [vmem:[#allocation2 + $0x8] sm:$0x1]
      %v849 = vsel %vm847, 0, %v848
      %850 = vst [vmem:[#allocation2 + $0x8] sm:$0x1] %v849
      %v851 = vld [vmem:[#allocation2 + $0x14] sm:$0x1]
      %v852 = vsel %vm847, 0, %v851
      %853 = vst [vmem:[#allocation2 + $0x14] sm:$0x1] %v852
      %v854 = vld [vmem:[#allocation2 + $0x20] sm:$0x1]
      %v855 = vsel %vm847, 0, %v854
      %856 = vst [vmem:[#allocation2 + $0x20] sm:$0x1] %v855
      %v857 = vld [vmem:[#allocation2 + $0x2c] sm:$0x1]
      %v858 = vsel %vm847, 0, %v857
      %859 = vst [vmem:[#allocation2 + $0x2c] sm:$0x1] %v858
      %v860 = vld [vmem:[#allocation2 + $0x38] sm:$0x1]
      %v861 = vsel %vm847, 0, %v860
      %862 = vst [vmem:[#allocation2 + $0x38] sm:$0x1] %v861
      %v863 = vld [vmem:[#allocation2 + $0x44] sm:$0x1]
      %v864 = vsel %vm847, 0, %v863
      %865 = vst [vmem:[#allocation2 + $0x44] sm:$0x1] %v864
      %v866 = vld [vmem:[#allocation2 + $0x50] sm:$0x1]
      %v867 = vsel %vm847, 0, %v866
      %868 = vst [vmem:[#allocation2 + $0x50] sm:$0x1] %v867
      %v869 = vld [vmem:[#allocation2 + $0x5c] sm:$0x1]
      %v870 = vsel %vm847, 0, %v869
      %871 = vst [vmem:[#allocation2 + $0x5c] sm:$0x1] %v870
      %v872 = vld [vmem:[#allocation2 + $0x68] sm:$0x1]
      %v873 = vsel %vm847, 0, %v872
      %874 = vst [vmem:[#allocation2 + $0x68] sm:$0x1] %v873
      %v875 = vld [vmem:[#allocation2 + $0x74] sm:$0x1]
      %v876 = vsel %vm847, 0, %v875
      %877 = vst [vmem:[#allocation2 + $0x74] sm:$0x1] %v876
      %p878 = scmp.eq.s32.totalorder %s23, 0
      // Predicated region
      $region149: #{double_conv_forward.4} parent=31 // pred_check
        %p879 = pneg %p878
      $region150: #{double_conv_forward.4} parent=31 // pred_check_branch
        %881 = sbr.rel (%p879) target = $region152
      $region151: #{double_conv_forward.4} parent=31 // pred_region
        %882 = vst [vmem:[#allocation2] sm:$0xf] 0
        %883 = vst [vmem:[#allocation2 + $0x4] sm:$0xf] 0
        %884 = vst [vmem:[#allocation2 + $0x8] sm:$0xf] 0
      $region152: #{double_conv_forward.4} parent=31 // pred_fallthru
        _
      %p885 = scmp.eq.s32.totalorder %s23, 1
      // Predicated region
      $region153: #{double_conv_forward.4} parent=31 // pred_check
        %p886 = pneg %p885
      $region154: #{double_conv_forward.4} parent=31 // pred_check_branch
        %888 = sbr.rel (%p886) target = $region156
      $region155: #{double_conv_forward.4} parent=31 // pred_region
        %s889 = scalar_lea.vmem [#allocation2], 108
        %890 = vst [vmem:[%s889] sm:$0xf] 0
        %891 = vst [vmem:[%s889 + $0x4] sm:$0xf] 0
        %892 = vst [vmem:[%s889 + $0x8] sm:$0xf] 0
      $region156: #{double_conv_forward.4} parent=31 // pred_fallthru
        _
      %v893 = vld [vmem:[#allocation2] sm:$0xf]
      %v894 = vld [vmem:[#allocation2 + $0x4] sm:$0xf]
      %v895 = vld [vmem:[#allocation2 + $0xc] sm:$0xf]
      %v896 = vld [vmem:[#allocation2 + $0x10] sm:$0xf]
      %v897 = vld [vmem:[#allocation2 + $0x18] sm:$0xf]
      %v898 = vld [vmem:[#allocation2 + $0x1c] sm:$0xf]
      %v899 = vld [vmem:[#allocation2 + $0x24] sm:$0xf]
      %v900 = vld [vmem:[#allocation2 + $0x28] sm:$0xf]
      %v901 = vld [vmem:[#allocation2 + $0x30] sm:$0xf]
      %v902 = vld [vmem:[#allocation2 + $0x34] sm:$0xf]
      %v903 = vld [vmem:[#allocation2 + $0x3c] sm:$0xf]
      %v904 = vld [vmem:[#allocation2 + $0x40] sm:$0xf]
      %v905 = vld [vmem:[#allocation2 + $0x48] sm:$0xf]
      %v906 = vld [vmem:[#allocation2 + $0x4c] sm:$0xf]
      %v907 = vld [vmem:[#allocation2 + $0x54] sm:$0xf]
      %v908 = vld [vmem:[#allocation2 + $0x58] sm:$0xf]
      %909 = vst [vmem:[#allocation3] sm:$0xf] %v893
      %910 = vst [vmem:[#allocation3 + $0x24] sm:$0xf] %v894
      %911 = vst [vmem:[#allocation3 + $0x48] sm:$0xf] %v895
      %912 = vst [vmem:[#allocation3 + $0x6c] sm:$0xf] %v896
      %913 = vst [vmem:[#allocation3 + $0x90] sm:$0xf] %v897
      %914 = vst [vmem:[#allocation3 + $0xb4] sm:$0xf] %v898
      %915 = vst [vmem:[#allocation3 + $0xd8] sm:$0xf] %v899
      %916 = vst [vmem:[#allocation3 + $0xfc] sm:$0xf] %v900
      %917 = vst [vmem:[#allocation3 + $0x120] sm:$0xf] %v901
      %918 = vst [vmem:[#allocation3 + $0x144] sm:$0xf] %v902
      %919 = vst [vmem:[#allocation3 + $0x168] sm:$0xf] %v903
      %920 = vst [vmem:[#allocation3 + $0x18c] sm:$0xf] %v904
      %921 = vst [vmem:[#allocation3 + $0x1b0] sm:$0xf] %v905
      %922 = vst [vmem:[#allocation3 + $0x1d4] sm:$0xf] %v906
      %923 = vst [vmem:[#allocation3 + $0x1f8] sm:$0xf] %v907
      %924 = vst [vmem:[#allocation3 + $0x21c] sm:$0xf] %v908
      %v925 = vld [vmem:[#allocation2] sm:$0xf]
      %v926 = vld [vmem:[#allocation2 + $0x4] sm:$0xf]
      %v927 = vld [vmem:[#allocation2 + $0x8] sm:$0x1]
      %v928 = vld [vmem:[#allocation2 + $0xc] sm:$0xf]
      %v929 = vld [vmem:[#allocation2 + $0x10] sm:$0xf]
      %v930 = vld [vmem:[#allocation2 + $0x14] sm:$0x1]
      %v931 = vld [vmem:[#allocation2 + $0x18] sm:$0xf]
      %v932 = vld [vmem:[#allocation2 + $0x1c] sm:$0xf]
      %v933 = vld [vmem:[#allocation2 + $0x20] sm:$0x1]
      %v934 = vld [vmem:[#allocation2 + $0x24] sm:$0xf]
      %v935 = vld [vmem:[#allocation2 + $0x28] sm:$0xf]
      %v936 = vld [vmem:[#allocation2 + $0x2c] sm:$0x1]
      %v937 = vld [vmem:[#allocation2 + $0x30] sm:$0xf]
      %v938 = vld [vmem:[#allocation2 + $0x34] sm:$0xf]
      %v939 = vld [vmem:[#allocation2 + $0x38] sm:$0x1]
      %v940 = vld [vmem:[#allocation2 + $0x3c] sm:$0xf]
      %v941 = vld [vmem:[#allocation2 + $0x40] sm:$0xf]
      %v942 = vld [vmem:[#allocation2 + $0x44] sm:$0x1]
      %v943 = vld [vmem:[#allocation2 + $0x48] sm:$0xf]
      %v944 = vld [vmem:[#allocation2 + $0x4c] sm:$0xf]
      %v945 = vld [vmem:[#allocation2 + $0x50] sm:$0x1]
      %v946 = vld [vmem:[#allocation2 + $0x54] sm:$0xf]
      %v947 = vld [vmem:[#allocation2 + $0x58] sm:$0xf]
      %v948 = vld [vmem:[#allocation2 + $0x5c] sm:$0x1]
      %vm949 = vsmask.f32 3328
      %vm950 = vsmask.f32 7440
      %vm951 = vmor %vm949, %vm950
      %v953 = vshrl.u32 %v925, 16
      %v955 = vrot.slane %v953, 4
      %v956 = vshll.u32 %v925, 16
      %v958 = vrot.slane %v956, 5
      %v959 = vor.u32 %v955, %v958
      %v960 = vrot.slane %v959, 4
      %v962 = vshll.u32 %v926, 16
      %v964 = vrot.slane %v962, 5
      %v965 = vsel %vm951, %v960, %v964
      %v966 = vshrl.u32 %v926, 16
      %v968 = vrot.slane %v966, 4
      %v969 = vor.u32 %v968, %v964
      %v970 = vrot.slane %v969, 4
      %v972 = vshll.u32 %v927, 16
      %v974 = vrot.slane %v972, 5
      %v975 = vsel %vm951, %v970, %v974
      %v977 = vshrl.u32 %v928, 16
      %v979 = vrot.slane %v977, 4
      %v980 = vshll.u32 %v928, 16
      %v982 = vrot.slane %v980, 5
      %v983 = vor.u32 %v979, %v982
      %v984 = vrot.slane %v983, 4
      %v986 = vshll.u32 %v929, 16
      %v988 = vrot.slane %v986, 5
      %v989 = vsel %vm951, %v984, %v988
      %v990 = vshrl.u32 %v929, 16
      %v992 = vrot.slane %v990, 4
      %v993 = vor.u32 %v992, %v988
      %v994 = vrot.slane %v993, 4
      %v996 = vshll.u32 %v930, 16
      %v998 = vrot.slane %v996, 5
      %v999 = vsel %vm951, %v994, %v998
      %v1001 = vshrl.u32 %v931, 16
      %v1003 = vrot.slane %v1001, 4
      %v1004 = vshll.u32 %v931, 16
      %v1006 = vrot.slane %v1004, 5
      %v1007 = vor.u32 %v1003, %v1006
      %v1008 = vrot.slane %v1007, 4
      %v1010 = vshll.u32 %v932, 16
      %v1012 = vrot.slane %v1010, 5
      %v1013 = vsel %vm951, %v1008, %v1012
      %v1014 = vshrl.u32 %v932, 16
      %v1016 = vrot.slane %v1014, 4
      %v1017 = vor.u32 %v1016, %v1012
      %v1018 = vrot.slane %v1017, 4
      %v1020 = vshll.u32 %v933, 16
      %v1022 = vrot.slane %v1020, 5
      %v1023 = vsel %vm951, %v1018, %v1022
      %v1025 = vshrl.u32 %v934, 16
      %v1027 = vrot.slane %v1025, 4
      %v1028 = vshll.u32 %v934, 16
      %v1030 = vrot.slane %v1028, 5
      %v1031 = vor.u32 %v1027, %v1030
      %v1032 = vrot.slane %v1031, 4
      %v1034 = vshll.u32 %v935, 16
      %v1036 = vrot.slane %v1034, 5
      %v1037 = vsel %vm951, %v1032, %v1036
      %v1038 = vshrl.u32 %v935, 16
      %v1040 = vrot.slane %v1038, 4
      %v1041 = vor.u32 %v1040, %v1036
      %v1042 = vrot.slane %v1041, 4
      %v1044 = vshll.u32 %v936, 16
      %v1046 = vrot.slane %v1044, 5
      %v1047 = vsel %vm951, %v1042, %v1046
      %v1049 = vshrl.u32 %v937, 16
      %v1051 = vrot.slane %v1049, 4
      %v1052 = vshll.u32 %v937, 16
      %v1054 = vrot.slane %v1052, 5
      %v1055 = vor.u32 %v1051, %v1054
      %v1056 = vrot.slane %v1055, 4
      %v1058 = vshll.u32 %v938, 16
      %v1060 = vrot.slane %v1058, 5
      %v1061 = vsel %vm951, %v1056, %v1060
      %v1062 = vshrl.u32 %v938, 16
      %v1064 = vrot.slane %v1062, 4
      %v1065 = vor.u32 %v1064, %v1060
      %v1066 = vrot.slane %v1065, 4
      %v1068 = vshll.u32 %v939, 16
      %v1070 = vrot.slane %v1068, 5
      %v1071 = vsel %vm951, %v1066, %v1070
      %v1073 = vshrl.u32 %v940, 16
      %v1075 = vrot.slane %v1073, 4
      %v1076 = vshll.u32 %v940, 16
      %v1078 = vrot.slane %v1076, 5
      %v1079 = vor.u32 %v1075, %v1078
      %v1080 = vrot.slane %v1079, 4
      %v1082 = vshll.u32 %v941, 16
      %v1084 = vrot.slane %v1082, 5
      %v1085 = vsel %vm951, %v1080, %v1084
      %v1086 = vshrl.u32 %v941, 16
      %v1088 = vrot.slane %v1086, 4
      %v1089 = vor.u32 %v1088, %v1084
      %v1090 = vrot.slane %v1089, 4
      %v1092 = vshll.u32 %v942, 16
      %v1094 = vrot.slane %v1092, 5
      %v1095 = vsel %vm951, %v1090, %v1094
      %v1097 = vshrl.u32 %v943, 16
      %v1099 = vrot.slane %v1097, 4
      %v1100 = vshll.u32 %v943, 16
      %v1102 = vrot.slane %v1100, 5
      %v1103 = vor.u32 %v1099, %v1102
      %v1104 = vrot.slane %v1103, 4
      %v1106 = vshll.u32 %v944, 16
      %v1108 = vrot.slane %v1106, 5
      %v1109 = vsel %vm951, %v1104, %v1108
      %v1110 = vshrl.u32 %v944, 16
      %v1112 = vrot.slane %v1110, 4
      %v1113 = vor.u32 %v1112, %v1108
      %v1114 = vrot.slane %v1113, 4
      %v1116 = vshll.u32 %v945, 16
      %v1118 = vrot.slane %v1116, 5
      %v1119 = vsel %vm951, %v1114, %v1118
      %v1121 = vshrl.u32 %v946, 16
      %v1123 = vrot.slane %v1121, 4
      %v1124 = vshll.u32 %v946, 16
      %v1126 = vrot.slane %v1124, 5
      %v1127 = vor.u32 %v1123, %v1126
      %v1128 = vrot.slane %v1127, 4
      %v1130 = vshll.u32 %v947, 16
      %v1132 = vrot.slane %v1130, 5
      %v1133 = vsel %vm951, %v1128, %v1132
      %v1134 = vshrl.u32 %v947, 16
      %v1136 = vrot.slane %v1134, 4
      %v1137 = vor.u32 %v1136, %v1132
      %v1138 = vrot.slane %v1137, 4
      %v1140 = vshll.u32 %v948, 16
      %v1142 = vrot.slane %v1140, 5
      %v1143 = vsel %vm951, %v1138, %v1142
      %1160 = vst [vmem:[#allocation3 + $0x4] sm:$0xf] %v965
      %1161 = vst [vmem:[#allocation3 + $0x28] sm:$0xf] %v975
      %1162 = vst [vmem:[#allocation3 + $0x4c] sm:$0xf] %v989
      %1163 = vst [vmem:[#allocation3 + $0x70] sm:$0xf] %v999
      %1164 = vst [vmem:[#allocation3 + $0x94] sm:$0xf] %v1013
      %1165 = vst [vmem:[#allocation3 + $0xb8] sm:$0xf] %v1023
      %1166 = vst [vmem:[#allocation3 + $0xdc] sm:$0xf] %v1037
      %1167 = vst [vmem:[#allocation3 + $0x100] sm:$0xf] %v1047
      %1168 = vst [vmem:[#allocation3 + $0x124] sm:$0xf] %v1061
      %1169 = vst [vmem:[#allocation3 + $0x148] sm:$0xf] %v1071
      %1170 = vst [vmem:[#allocation3 + $0x16c] sm:$0xf] %v1085
      %1171 = vst [vmem:[#allocation3 + $0x190] sm:$0xf] %v1095
      %1172 = vst [vmem:[#allocation3 + $0x1b4] sm:$0xf] %v1109
      %1173 = vst [vmem:[#allocation3 + $0x1d8] sm:$0xf] %v1119
      %1174 = vst [vmem:[#allocation3 + $0x1fc] sm:$0xf] %v1133
      %1175 = vst [vmem:[#allocation3 + $0x220] sm:$0xf] %v1143
      %v1176 = vld [vmem:[#allocation2] sm:$0xe]
      %v1177 = vld [vmem:[#allocation2 + $0x4] sm:$0xf]
      %v1178 = vld [vmem:[#allocation2 + $0x8] sm:$0x1]
      %v1179 = vld [vmem:[#allocation2 + $0xc] sm:$0xe]
      %v1180 = vld [vmem:[#allocation2 + $0x10] sm:$0xf]
      %v1181 = vld [vmem:[#allocation2 + $0x14] sm:$0x1]
      %v1182 = vld [vmem:[#allocation2 + $0x18] sm:$0xe]
      %v1183 = vld [vmem:[#allocation2 + $0x1c] sm:$0xf]
      %v1184 = vld [vmem:[#allocation2 + $0x20] sm:$0x1]
      %v1185 = vld [vmem:[#allocation2 + $0x24] sm:$0xe]
      %v1186 = vld [vmem:[#allocation2 + $0x28] sm:$0xf]
      %v1187 = vld [vmem:[#allocation2 + $0x2c] sm:$0x1]
      %v1188 = vld [vmem:[#allocation2 + $0x30] sm:$0xe]
      %v1189 = vld [vmem:[#allocation2 + $0x34] sm:$0xf]
      %v1190 = vld [vmem:[#allocation2 + $0x38] sm:$0x1]
      %v1191 = vld [vmem:[#allocation2 + $0x3c] sm:$0xe]
      %v1192 = vld [vmem:[#allocation2 + $0x40] sm:$0xf]
      %v1193 = vld [vmem:[#allocation2 + $0x44] sm:$0x1]
      %v1194 = vld [vmem:[#allocation2 + $0x48] sm:$0xe]
      %v1195 = vld [vmem:[#allocation2 + $0x4c] sm:$0xf]
      %v1196 = vld [vmem:[#allocation2 + $0x50] sm:$0x1]
      %v1197 = vld [vmem:[#allocation2 + $0x54] sm:$0xe]
      %v1198 = vld [vmem:[#allocation2 + $0x58] sm:$0xf]
      %v1199 = vld [vmem:[#allocation2 + $0x5c] sm:$0x1]
      %vm1224 = vcmask 1042432
      %vm1225 = vcmask 1046532
      %vm1226 = vmor %vm1224, %vm1225
      %v1227 = vrot.slane %v1176, 5
      %v1228 = vrot.slane %v1227, 4
      %v1229 = vrot.slane %v1177, 5
      %v1230 = vsel %vm1226, %v1228, %v1229
      %v1231 = vrot.slane %v1229, 4
      %v1232 = vrot.slane %v1178, 5
      %v1233 = vsel %vm1226, %v1231, %v1232
      %v1234 = vrot.slane %v1179, 5
      %v1235 = vrot.slane %v1234, 4
      %v1236 = vrot.slane %v1180, 5
      %v1237 = vsel %vm1226, %v1235, %v1236
      %v1238 = vrot.slane %v1236, 4
      %v1239 = vrot.slane %v1181, 5
      %v1240 = vsel %vm1226, %v1238, %v1239
      %v1241 = vrot.slane %v1182, 5
      %v1242 = vrot.slane %v1241, 4
      %v1243 = vrot.slane %v1183, 5
      %v1244 = vsel %vm1226, %v1242, %v1243
      %v1245 = vrot.slane %v1243, 4
      %v1246 = vrot.slane %v1184, 5
      %v1247 = vsel %vm1226, %v1245, %v1246
      %v1248 = vrot.slane %v1185, 5
      %v1249 = vrot.slane %v1248, 4
      %v1250 = vrot.slane %v1186, 5
      %v1251 = vsel %vm1226, %v1249, %v1250
      %v1252 = vrot.slane %v1250, 4
      %v1253 = vrot.slane %v1187, 5
      %v1254 = vsel %vm1226, %v1252, %v1253
      %v1255 = vrot.slane %v1188, 5
      %v1256 = vrot.slane %v1255, 4
      %v1257 = vrot.slane %v1189, 5
      %v1258 = vsel %vm1226, %v1256, %v1257
      %v1259 = vrot.slane %v1257, 4
      %v1260 = vrot.slane %v1190, 5
      %v1261 = vsel %vm1226, %v1259, %v1260
      %v1262 = vrot.slane %v1191, 5
      %v1263 = vrot.slane %v1262, 4
      %v1264 = vrot.slane %v1192, 5
      %v1265 = vsel %vm1226, %v1263, %v1264
      %v1266 = vrot.slane %v1264, 4
      %v1267 = vrot.slane %v1193, 5
      %v1268 = vsel %vm1226, %v1266, %v1267
      %v1269 = vrot.slane %v1194, 5
      %v1270 = vrot.slane %v1269, 4
      %v1271 = vrot.slane %v1195, 5
      %v1272 = vsel %vm1226, %v1270, %v1271
      %v1273 = vrot.slane %v1271, 4
      %v1274 = vrot.slane %v1196, 5
      %v1275 = vsel %vm1226, %v1273, %v1274
      %v1276 = vrot.slane %v1197, 5
      %v1277 = vrot.slane %v1276, 4
      %v1278 = vrot.slane %v1198, 5
      %v1279 = vsel %vm1226, %v1277, %v1278
      %v1280 = vrot.slane %v1278, 4
      %v1281 = vrot.slane %v1199, 5
      %v1282 = vsel %vm1226, %v1280, %v1281
      %1299 = vst [vmem:[#allocation3 + $0x8] sm:$0xf] %v1230
      %1300 = vst [vmem:[#allocation3 + $0x2c] sm:$0xf] %v1233
      %1301 = vst [vmem:[#allocation3 + $0x50] sm:$0xf] %v1237
      %1302 = vst [vmem:[#allocation3 + $0x74] sm:$0xf] %v1240
      %1303 = vst [vmem:[#allocation3 + $0x98] sm:$0xf] %v1244
      %1304 = vst [vmem:[#allocation3 + $0xbc] sm:$0xf] %v1247
      %1305 = vst [vmem:[#allocation3 + $0xe0] sm:$0xf] %v1251
      %1306 = vst [vmem:[#allocation3 + $0x104] sm:$0xf] %v1254
      %1307 = vst [vmem:[#allocation3 + $0x128] sm:$0xf] %v1258
      %1308 = vst [vmem:[#allocation3 + $0x14c] sm:$0xf] %v1261
      %1309 = vst [vmem:[#allocation3 + $0x170] sm:$0xf] %v1265
      %1310 = vst [vmem:[#allocation3 + $0x194] sm:$0xf] %v1268
      %1311 = vst [vmem:[#allocation3 + $0x1b8] sm:$0xf] %v1272
      %1312 = vst [vmem:[#allocation3 + $0x1dc] sm:$0xf] %v1275
      %1313 = vst [vmem:[#allocation3 + $0x200] sm:$0xf] %v1279
      %1314 = vst [vmem:[#allocation3 + $0x224] sm:$0xf] %v1282
      %v1315 = vld [vmem:[%s275] sm:$0xf]
      %v1316 = vld [vmem:[%s275 + $0x4] sm:$0xf]
      %v1317 = vld [vmem:[%s275 + $0xc] sm:$0xf]
      %v1318 = vld [vmem:[%s275 + $0x10] sm:$0xf]
      %v1319 = vld [vmem:[%s275 + $0x18] sm:$0xf]
      %v1320 = vld [vmem:[%s275 + $0x1c] sm:$0xf]
      %v1321 = vld [vmem:[%s275 + $0x24] sm:$0xf]
      %v1322 = vld [vmem:[%s275 + $0x28] sm:$0xf]
      %v1323 = vld [vmem:[%s275 + $0x30] sm:$0xf]
      %v1324 = vld [vmem:[%s275 + $0x34] sm:$0xf]
      %v1325 = vld [vmem:[%s275 + $0x3c] sm:$0xf]
      %v1326 = vld [vmem:[%s275 + $0x40] sm:$0xf]
      %v1327 = vld [vmem:[%s275 + $0x48] sm:$0xf]
      %v1328 = vld [vmem:[%s275 + $0x4c] sm:$0xf]
      %v1329 = vld [vmem:[%s275 + $0x54] sm:$0xf]
      %v1330 = vld [vmem:[%s275 + $0x58] sm:$0xf]
      %1331 = vst [vmem:[#allocation3 + $0xc] sm:$0xf] %v1315
      %1332 = vst [vmem:[#allocation3 + $0x30] sm:$0xf] %v1316
      %1333 = vst [vmem:[#allocation3 + $0x54] sm:$0xf] %v1317
      %1334 = vst [vmem:[#allocation3 + $0x78] sm:$0xf] %v1318
      %1335 = vst [vmem:[#allocation3 + $0x9c] sm:$0xf] %v1319
      %1336 = vst [vmem:[#allocation3 + $0xc0] sm:$0xf] %v1320
      %1337 = vst [vmem:[#allocation3 + $0xe4] sm:$0xf] %v1321
      %1338 = vst [vmem:[#allocation3 + $0x108] sm:$0xf] %v1322
      %1339 = vst [vmem:[#allocation3 + $0x12c] sm:$0xf] %v1323
      %1340 = vst [vmem:[#allocation3 + $0x150] sm:$0xf] %v1324
      %1341 = vst [vmem:[#allocation3 + $0x174] sm:$0xf] %v1325
      %1342 = vst [vmem:[#allocation3 + $0x198] sm:$0xf] %v1326
      %1343 = vst [vmem:[#allocation3 + $0x1bc] sm:$0xf] %v1327
      %1344 = vst [vmem:[#allocation3 + $0x1e0] sm:$0xf] %v1328
      %1345 = vst [vmem:[#allocation3 + $0x204] sm:$0xf] %v1329
      %1346 = vst [vmem:[#allocation3 + $0x228] sm:$0xf] %v1330
      %v1347 = vld [vmem:[%s275] sm:$0xf]
      %v1348 = vld [vmem:[%s275 + $0x4] sm:$0xf]
      %v1349 = vld [vmem:[%s275 + $0x8] sm:$0x1]
      %v1350 = vld [vmem:[%s275 + $0xc] sm:$0xf]
      %v1351 = vld [vmem:[%s275 + $0x10] sm:$0xf]
      %v1352 = vld [vmem:[%s275 + $0x14] sm:$0x1]
      %v1353 = vld [vmem:[%s275 + $0x18] sm:$0xf]
      %v1354 = vld [vmem:[%s275 + $0x1c] sm:$0xf]
      %v1355 = vld [vmem:[%s275 + $0x20] sm:$0x1]
      %v1356 = vld [vmem:[%s275 + $0x24] sm:$0xf]
      %v1357 = vld [vmem:[%s275 + $0x28] sm:$0xf]
      %v1358 = vld [vmem:[%s275 + $0x2c] sm:$0x1]
      %v1359 = vld [vmem:[%s275 + $0x30] sm:$0xf]
      %v1360 = vld [vmem:[%s275 + $0x34] sm:$0xf]
      %v1361 = vld [vmem:[%s275 + $0x38] sm:$0x1]
      %v1362 = vld [vmem:[%s275 + $0x3c] sm:$0xf]
      %v1363 = vld [vmem:[%s275 + $0x40] sm:$0xf]
      %v1364 = vld [vmem:[%s275 + $0x44] sm:$0x1]
      %v1365 = vld [vmem:[%s275 + $0x48] sm:$0xf]
      %v1366 = vld [vmem:[%s275 + $0x4c] sm:$0xf]
      %v1367 = vld [vmem:[%s275 + $0x50] sm:$0x1]
      %v1368 = vld [vmem:[%s275 + $0x54] sm:$0xf]
      %v1369 = vld [vmem:[%s275 + $0x58] sm:$0xf]
      %v1370 = vld [vmem:[%s275 + $0x5c] sm:$0x1]
      %v1372 = vshrl.u32 %v1347, 16
      %v1374 = vrot.slane %v1372, 4
      %v1375 = vshll.u32 %v1347, 16
      %v1377 = vrot.slane %v1375, 5
      %v1378 = vor.u32 %v1374, %v1377
      %v1379 = vrot.slane %v1378, 4
      %v1381 = vshll.u32 %v1348, 16
      %v1383 = vrot.slane %v1381, 5
      %v1384 = vsel %vm951, %v1379, %v1383
      %v1385 = vshrl.u32 %v1348, 16
      %v1387 = vrot.slane %v1385, 4
      %v1388 = vor.u32 %v1387, %v1383
      %v1389 = vrot.slane %v1388, 4
      %v1391 = vshll.u32 %v1349, 16
      %v1393 = vrot.slane %v1391, 5
      %v1394 = vsel %vm951, %v1389, %v1393
      %v1396 = vshrl.u32 %v1350, 16
      %v1398 = vrot.slane %v1396, 4
      %v1399 = vshll.u32 %v1350, 16
      %v1401 = vrot.slane %v1399, 5
      %v1402 = vor.u32 %v1398, %v1401
      %v1403 = vrot.slane %v1402, 4
      %v1405 = vshll.u32 %v1351, 16
      %v1407 = vrot.slane %v1405, 5
      %v1408 = vsel %vm951, %v1403, %v1407
      %v1409 = vshrl.u32 %v1351, 16
      %v1411 = vrot.slane %v1409, 4
      %v1412 = vor.u32 %v1411, %v1407
      %v1413 = vrot.slane %v1412, 4
      %v1415 = vshll.u32 %v1352, 16
      %v1417 = vrot.slane %v1415, 5
      %v1418 = vsel %vm951, %v1413, %v1417
      %v1420 = vshrl.u32 %v1353, 16
      %v1422 = vrot.slane %v1420, 4
      %v1423 = vshll.u32 %v1353, 16
      %v1425 = vrot.slane %v1423, 5
      %v1426 = vor.u32 %v1422, %v1425
      %v1427 = vrot.slane %v1426, 4
      %v1429 = vshll.u32 %v1354, 16
      %v1431 = vrot.slane %v1429, 5
      %v1432 = vsel %vm951, %v1427, %v1431
      %v1433 = vshrl.u32 %v1354, 16
      %v1435 = vrot.slane %v1433, 4
      %v1436 = vor.u32 %v1435, %v1431
      %v1437 = vrot.slane %v1436, 4
      %v1439 = vshll.u32 %v1355, 16
      %v1441 = vrot.slane %v1439, 5
      %v1442 = vsel %vm951, %v1437, %v1441
      %v1444 = vshrl.u32 %v1356, 16
      %v1446 = vrot.slane %v1444, 4
      %v1447 = vshll.u32 %v1356, 16
      %v1449 = vrot.slane %v1447, 5
      %v1450 = vor.u32 %v1446, %v1449
      %v1451 = vrot.slane %v1450, 4
      %v1453 = vshll.u32 %v1357, 16
      %v1455 = vrot.slane %v1453, 5
      %v1456 = vsel %vm951, %v1451, %v1455
      %v1457 = vshrl.u32 %v1357, 16
      %v1459 = vrot.slane %v1457, 4
      %v1460 = vor.u32 %v1459, %v1455
      %v1461 = vrot.slane %v1460, 4
      %v1463 = vshll.u32 %v1358, 16
      %v1465 = vrot.slane %v1463, 5
      %v1466 = vsel %vm951, %v1461, %v1465
      %v1468 = vshrl.u32 %v1359, 16
      %v1470 = vrot.slane %v1468, 4
      %v1471 = vshll.u32 %v1359, 16
      %v1473 = vrot.slane %v1471, 5
      %v1474 = vor.u32 %v1470, %v1473
      %v1475 = vrot.slane %v1474, 4
      %v1477 = vshll.u32 %v1360, 16
      %v1479 = vrot.slane %v1477, 5
      %v1480 = vsel %vm951, %v1475, %v1479
      %v1481 = vshrl.u32 %v1360, 16
      %v1483 = vrot.slane %v1481, 4
      %v1484 = vor.u32 %v1483, %v1479
      %v1485 = vrot.slane %v1484, 4
      %v1487 = vshll.u32 %v1361, 16
      %v1489 = vrot.slane %v1487, 5
      %v1490 = vsel %vm951, %v1485, %v1489
      %v1492 = vshrl.u32 %v1362, 16
      %v1494 = vrot.slane %v1492, 4
      %v1495 = vshll.u32 %v1362, 16
      %v1497 = vrot.slane %v1495, 5
      %v1498 = vor.u32 %v1494, %v1497
      %v1499 = vrot.slane %v1498, 4
      %v1501 = vshll.u32 %v1363, 16
      %v1503 = vrot.slane %v1501, 5
      %v1504 = vsel %vm951, %v1499, %v1503
      %v1505 = vshrl.u32 %v1363, 16
      %v1507 = vrot.slane %v1505, 4
      %v1508 = vor.u32 %v1507, %v1503
      %v1509 = vrot.slane %v1508, 4
      %v1511 = vshll.u32 %v1364, 16
      %v1513 = vrot.slane %v1511, 5
      %v1514 = vsel %vm951, %v1509, %v1513
      %v1516 = vshrl.u32 %v1365, 16
      %v1518 = vrot.slane %v1516, 4
      %v1519 = vshll.u32 %v1365, 16
      %v1521 = vrot.slane %v1519, 5
      %v1522 = vor.u32 %v1518, %v1521
      %v1523 = vrot.slane %v1522, 4
      %v1525 = vshll.u32 %v1366, 16
      %v1527 = vrot.slane %v1525, 5
      %v1528 = vsel %vm951, %v1523, %v1527
      %v1529 = vshrl.u32 %v1366, 16
      %v1531 = vrot.slane %v1529, 4
      %v1532 = vor.u32 %v1531, %v1527
      %v1533 = vrot.slane %v1532, 4
      %v1535 = vshll.u32 %v1367, 16
      %v1537 = vrot.slane %v1535, 5
      %v1538 = vsel %vm951, %v1533, %v1537
      %v1540 = vshrl.u32 %v1368, 16
      %v1542 = vrot.slane %v1540, 4
      %v1543 = vshll.u32 %v1368, 16
      %v1545 = vrot.slane %v1543, 5
      %v1546 = vor.u32 %v1542, %v1545
      %v1547 = vrot.slane %v1546, 4
      %v1549 = vshll.u32 %v1369, 16
      %v1551 = vrot.slane %v1549, 5
      %v1552 = vsel %vm951, %v1547, %v1551
      %v1553 = vshrl.u32 %v1369, 16
      %v1555 = vrot.slane %v1553, 4
      %v1556 = vor.u32 %v1555, %v1551
      %v1557 = vrot.slane %v1556, 4
      %v1559 = vshll.u32 %v1370, 16
      %v1561 = vrot.slane %v1559, 5
      %v1562 = vsel %vm951, %v1557, %v1561
      %1579 = vst [vmem:[#allocation3 + $0x10] sm:$0xf] %v1384
      %1580 = vst [vmem:[#allocation3 + $0x34] sm:$0xf] %v1394
      %1581 = vst [vmem:[#allocation3 + $0x58] sm:$0xf] %v1408
      %1582 = vst [vmem:[#allocation3 + $0x7c] sm:$0xf] %v1418
      %1583 = vst [vmem:[#allocation3 + $0xa0] sm:$0xf] %v1432
      %1584 = vst [vmem:[#allocation3 + $0xc4] sm:$0xf] %v1442
      %1585 = vst [vmem:[#allocation3 + $0xe8] sm:$0xf] %v1456
      %1586 = vst [vmem:[#allocation3 + $0x10c] sm:$0xf] %v1466
      %1587 = vst [vmem:[#allocation3 + $0x130] sm:$0xf] %v1480
      %1588 = vst [vmem:[#allocation3 + $0x154] sm:$0xf] %v1490
      %1589 = vst [vmem:[#allocation3 + $0x178] sm:$0xf] %v1504
      %1590 = vst [vmem:[#allocation3 + $0x19c] sm:$0xf] %v1514
      %1591 = vst [vmem:[#allocation3 + $0x1c0] sm:$0xf] %v1528
      %1592 = vst [vmem:[#allocation3 + $0x1e4] sm:$0xf] %v1538
      %1593 = vst [vmem:[#allocation3 + $0x208] sm:$0xf] %v1552
      %1594 = vst [vmem:[#allocation3 + $0x22c] sm:$0xf] %v1562
      %v1595 = vld [vmem:[%s275] sm:$0xe]
      %v1596 = vld [vmem:[%s275 + $0x4] sm:$0xf]
      %v1597 = vld [vmem:[%s275 + $0x8] sm:$0x1]
      %v1598 = vld [vmem:[%s275 + $0xc] sm:$0xe]
      %v1599 = vld [vmem:[%s275 + $0x10] sm:$0xf]
      %v1600 = vld [vmem:[%s275 + $0x14] sm:$0x1]
      %v1601 = vld [vmem:[%s275 + $0x18] sm:$0xe]
      %v1602 = vld [vmem:[%s275 + $0x1c] sm:$0xf]
      %v1603 = vld [vmem:[%s275 + $0x20] sm:$0x1]
      %v1604 = vld [vmem:[%s275 + $0x24] sm:$0xe]
      %v1605 = vld [vmem:[%s275 + $0x28] sm:$0xf]
      %v1606 = vld [vmem:[%s275 + $0x2c] sm:$0x1]
      %v1607 = vld [vmem:[%s275 + $0x30] sm:$0xe]
      %v1608 = vld [vmem:[%s275 + $0x34] sm:$0xf]
      %v1609 = vld [vmem:[%s275 + $0x38] sm:$0x1]
      %v1610 = vld [vmem:[%s275 + $0x3c] sm:$0xe]
      %v1611 = vld [vmem:[%s275 + $0x40] sm:$0xf]
      %v1612 = vld [vmem:[%s275 + $0x44] sm:$0x1]
      %v1613 = vld [vmem:[%s275 + $0x48] sm:$0xe]
      %v1614 = vld [vmem:[%s275 + $0x4c] sm:$0xf]
      %v1615 = vld [vmem:[%s275 + $0x50] sm:$0x1]
      %v1616 = vld [vmem:[%s275 + $0x54] sm:$0xe]
      %v1617 = vld [vmem:[%s275 + $0x58] sm:$0xf]
      %v1618 = vld [vmem:[%s275 + $0x5c] sm:$0x1]
      %v1643 = vrot.slane %v1595, 5
      %v1644 = vrot.slane %v1643, 4
      %v1645 = vrot.slane %v1596, 5
      %v1646 = vsel %vm1226, %v1644, %v1645
      %v1647 = vrot.slane %v1645, 4
      %v1648 = vrot.slane %v1597, 5
      %v1649 = vsel %vm1226, %v1647, %v1648
      %v1650 = vrot.slane %v1598, 5
      %v1651 = vrot.slane %v1650, 4
      %v1652 = vrot.slane %v1599, 5
      %v1653 = vsel %vm1226, %v1651, %v1652
      %v1654 = vrot.slane %v1652, 4
      %v1655 = vrot.slane %v1600, 5
      %v1656 = vsel %vm1226, %v1654, %v1655
      %v1657 = vrot.slane %v1601, 5
      %v1658 = vrot.slane %v1657, 4
      %v1659 = vrot.slane %v1602, 5
      %v1660 = vsel %vm1226, %v1658, %v1659
      %v1661 = vrot.slane %v1659, 4
      %v1662 = vrot.slane %v1603, 5
      %v1663 = vsel %vm1226, %v1661, %v1662
      %v1664 = vrot.slane %v1604, 5
      %v1665 = vrot.slane %v1664, 4
      %v1666 = vrot.slane %v1605, 5
      %v1667 = vsel %vm1226, %v1665, %v1666
      %v1668 = vrot.slane %v1666, 4
      %v1669 = vrot.slane %v1606, 5
      %v1670 = vsel %vm1226, %v1668, %v1669
      %v1671 = vrot.slane %v1607, 5
      %v1672 = vrot.slane %v1671, 4
      %v1673 = vrot.slane %v1608, 5
      %v1674 = vsel %vm1226, %v1672, %v1673
      %v1675 = vrot.slane %v1673, 4
      %v1676 = vrot.slane %v1609, 5
      %v1677 = vsel %vm1226, %v1675, %v1676
      %v1678 = vrot.slane %v1610, 5
      %v1679 = vrot.slane %v1678, 4
      %v1680 = vrot.slane %v1611, 5
      %v1681 = vsel %vm1226, %v1679, %v1680
      %v1682 = vrot.slane %v1680, 4
      %v1683 = vrot.slane %v1612, 5
      %v1684 = vsel %vm1226, %v1682, %v1683
      %v1685 = vrot.slane %v1613, 5
      %v1686 = vrot.slane %v1685, 4
      %v1687 = vrot.slane %v1614, 5
      %v1688 = vsel %vm1226, %v1686, %v1687
      %v1689 = vrot.slane %v1687, 4
      %v1690 = vrot.slane %v1615, 5
      %v1691 = vsel %vm1226, %v1689, %v1690
      %v1692 = vrot.slane %v1616, 5
      %v1693 = vrot.slane %v1692, 4
      %v1694 = vrot.slane %v1617, 5
      %v1695 = vsel %vm1226, %v1693, %v1694
      %v1696 = vrot.slane %v1694, 4
      %v1697 = vrot.slane %v1618, 5
      %v1698 = vsel %vm1226, %v1696, %v1697
      %1715 = vst [vmem:[#allocation3 + $0x14] sm:$0xf] %v1646
      %1716 = vst [vmem:[#allocation3 + $0x38] sm:$0xf] %v1649
      %1717 = vst [vmem:[#allocation3 + $0x5c] sm:$0xf] %v1653
      %1718 = vst [vmem:[#allocation3 + $0x80] sm:$0xf] %v1656
      %1719 = vst [vmem:[#allocation3 + $0xa4] sm:$0xf] %v1660
      %1720 = vst [vmem:[#allocation3 + $0xc8] sm:$0xf] %v1663
      %1721 = vst [vmem:[#allocation3 + $0xec] sm:$0xf] %v1667
      %1722 = vst [vmem:[#allocation3 + $0x110] sm:$0xf] %v1670
      %1723 = vst [vmem:[#allocation3 + $0x134] sm:$0xf] %v1674
      %1724 = vst [vmem:[#allocation3 + $0x158] sm:$0xf] %v1677
      %1725 = vst [vmem:[#allocation3 + $0x17c] sm:$0xf] %v1681
      %1726 = vst [vmem:[#allocation3 + $0x1a0] sm:$0xf] %v1684
      %1727 = vst [vmem:[#allocation3 + $0x1c4] sm:$0xf] %v1688
      %1728 = vst [vmem:[#allocation3 + $0x1e8] sm:$0xf] %v1691
      %1729 = vst [vmem:[#allocation3 + $0x20c] sm:$0xf] %v1695
      %1730 = vst [vmem:[#allocation3 + $0x230] sm:$0xf] %v1698
      %s1731 = scalar_lea.vmem [#allocation2], 24
      %v1732 = vld [vmem:[%s1731] sm:$0xf]
      %v1733 = vld [vmem:[%s1731 + $0x4] sm:$0xf]
      %v1734 = vld [vmem:[%s1731 + $0xc] sm:$0xf]
      %v1735 = vld [vmem:[%s1731 + $0x10] sm:$0xf]
      %v1736 = vld [vmem:[%s1731 + $0x18] sm:$0xf]
      %v1737 = vld [vmem:[%s1731 + $0x1c] sm:$0xf]
      %v1738 = vld [vmem:[%s1731 + $0x24] sm:$0xf]
      %v1739 = vld [vmem:[%s1731 + $0x28] sm:$0xf]
      %v1740 = vld [vmem:[%s1731 + $0x30] sm:$0xf]
      %v1741 = vld [vmem:[%s1731 + $0x34] sm:$0xf]
      %v1742 = vld [vmem:[%s1731 + $0x3c] sm:$0xf]
      %v1743 = vld [vmem:[%s1731 + $0x40] sm:$0xf]
      %v1744 = vld [vmem:[%s1731 + $0x48] sm:$0xf]
      %v1745 = vld [vmem:[%s1731 + $0x4c] sm:$0xf]
      %v1746 = vld [vmem:[%s1731 + $0x54] sm:$0xf]
      %v1747 = vld [vmem:[%s1731 + $0x58] sm:$0xf]
      %1748 = vst [vmem:[#allocation3 + $0x18] sm:$0xf] %v1732
      %1749 = vst [vmem:[#allocation3 + $0x3c] sm:$0xf] %v1733
      %1750 = vst [vmem:[#allocation3 + $0x60] sm:$0xf] %v1734
      %1751 = vst [vmem:[#allocation3 + $0x84] sm:$0xf] %v1735
      %1752 = vst [vmem:[#allocation3 + $0xa8] sm:$0xf] %v1736
      %1753 = vst [vmem:[#allocation3 + $0xcc] sm:$0xf] %v1737
      %1754 = vst [vmem:[#allocation3 + $0xf0] sm:$0xf] %v1738
      %1755 = vst [vmem:[#allocation3 + $0x114] sm:$0xf] %v1739
      %1756 = vst [vmem:[#allocation3 + $0x138] sm:$0xf] %v1740
      %1757 = vst [vmem:[#allocation3 + $0x15c] sm:$0xf] %v1741
      %1758 = vst [vmem:[#allocation3 + $0x180] sm:$0xf] %v1742
      %1759 = vst [vmem:[#allocation3 + $0x1a4] sm:$0xf] %v1743
      %1760 = vst [vmem:[#allocation3 + $0x1c8] sm:$0xf] %v1744
      %1761 = vst [vmem:[#allocation3 + $0x1ec] sm:$0xf] %v1745
      %1762 = vst [vmem:[#allocation3 + $0x210] sm:$0xf] %v1746
      %1763 = vst [vmem:[#allocation3 + $0x234] sm:$0xf] %v1747
      %v1764 = vld [vmem:[%s1731] sm:$0xf]
      %v1765 = vld [vmem:[%s1731 + $0x4] sm:$0xf]
      %v1766 = vld [vmem:[%s1731 + $0x8] sm:$0x1]
      %v1767 = vld [vmem:[%s1731 + $0xc] sm:$0xf]
      %v1768 = vld [vmem:[%s1731 + $0x10] sm:$0xf]
      %v1769 = vld [vmem:[%s1731 + $0x14] sm:$0x1]
      %v1770 = vld [vmem:[%s1731 + $0x18] sm:$0xf]
      %v1771 = vld [vmem:[%s1731 + $0x1c] sm:$0xf]
      %v1772 = vld [vmem:[%s1731 + $0x20] sm:$0x1]
      %v1773 = vld [vmem:[%s1731 + $0x24] sm:$0xf]
      %v1774 = vld [vmem:[%s1731 + $0x28] sm:$0xf]
      %v1775 = vld [vmem:[%s1731 + $0x2c] sm:$0x1]
      %v1776 = vld [vmem:[%s1731 + $0x30] sm:$0xf]
      %v1777 = vld [vmem:[%s1731 + $0x34] sm:$0xf]
      %v1778 = vld [vmem:[%s1731 + $0x38] sm:$0x1]
      %v1779 = vld [vmem:[%s1731 + $0x3c] sm:$0xf]
      %v1780 = vld [vmem:[%s1731 + $0x40] sm:$0xf]
      %v1781 = vld [vmem:[%s1731 + $0x44] sm:$0x1]
      %v1782 = vld [vmem:[%s1731 + $0x48] sm:$0xf]
      %v1783 = vld [vmem:[%s1731 + $0x4c] sm:$0xf]
      %v1784 = vld [vmem:[%s1731 + $0x50] sm:$0x1]
      %v1785 = vld [vmem:[%s1731 + $0x54] sm:$0xf]
      %v1786 = vld [vmem:[%s1731 + $0x58] sm:$0xf]
      %v1787 = vld [vmem:[%s1731 + $0x5c] sm:$0x1]
      %v1789 = vshrl.u32 %v1764, 16
      %v1791 = vrot.slane %v1789, 4
      %v1792 = vshll.u32 %v1764, 16
      %v1794 = vrot.slane %v1792, 5
      %v1795 = vor.u32 %v1791, %v1794
      %v1796 = vrot.slane %v1795, 4
      %v1798 = vshll.u32 %v1765, 16
      %v1800 = vrot.slane %v1798, 5
      %v1801 = vsel %vm951, %v1796, %v1800
      %v1802 = vshrl.u32 %v1765, 16
      %v1804 = vrot.slane %v1802, 4
      %v1805 = vor.u32 %v1804, %v1800
      %v1806 = vrot.slane %v1805, 4
      %v1808 = vshll.u32 %v1766, 16
      %v1810 = vrot.slane %v1808, 5
      %v1811 = vsel %vm951, %v1806, %v1810
      %v1813 = vshrl.u32 %v1767, 16
      %v1815 = vrot.slane %v1813, 4
      %v1816 = vshll.u32 %v1767, 16
      %v1818 = vrot.slane %v1816, 5
      %v1819 = vor.u32 %v1815, %v1818
      %v1820 = vrot.slane %v1819, 4
      %v1822 = vshll.u32 %v1768, 16
      %v1824 = vrot.slane %v1822, 5
      %v1825 = vsel %vm951, %v1820, %v1824
      %v1826 = vshrl.u32 %v1768, 16
      %v1828 = vrot.slane %v1826, 4
      %v1829 = vor.u32 %v1828, %v1824
      %v1830 = vrot.slane %v1829, 4
      %v1832 = vshll.u32 %v1769, 16
      %v1834 = vrot.slane %v1832, 5
      %v1835 = vsel %vm951, %v1830, %v1834
      %v1837 = vshrl.u32 %v1770, 16
      %v1839 = vrot.slane %v1837, 4
      %v1840 = vshll.u32 %v1770, 16
      %v1842 = vrot.slane %v1840, 5
      %v1843 = vor.u32 %v1839, %v1842
      %v1844 = vrot.slane %v1843, 4
      %v1846 = vshll.u32 %v1771, 16
      %v1848 = vrot.slane %v1846, 5
      %v1849 = vsel %vm951, %v1844, %v1848
      %v1850 = vshrl.u32 %v1771, 16
      %v1852 = vrot.slane %v1850, 4
      %v1853 = vor.u32 %v1852, %v1848
      %v1854 = vrot.slane %v1853, 4
      %v1856 = vshll.u32 %v1772, 16
      %v1858 = vrot.slane %v1856, 5
      %v1859 = vsel %vm951, %v1854, %v1858
      %v1861 = vshrl.u32 %v1773, 16
      %v1863 = vrot.slane %v1861, 4
      %v1864 = vshll.u32 %v1773, 16
      %v1866 = vrot.slane %v1864, 5
      %v1867 = vor.u32 %v1863, %v1866
      %v1868 = vrot.slane %v1867, 4
      %v1870 = vshll.u32 %v1774, 16
      %v1872 = vrot.slane %v1870, 5
      %v1873 = vsel %vm951, %v1868, %v1872
      %v1874 = vshrl.u32 %v1774, 16
      %v1876 = vrot.slane %v1874, 4
      %v1877 = vor.u32 %v1876, %v1872
      %v1878 = vrot.slane %v1877, 4
      %v1880 = vshll.u32 %v1775, 16
      %v1882 = vrot.slane %v1880, 5
      %v1883 = vsel %vm951, %v1878, %v1882
      %v1885 = vshrl.u32 %v1776, 16
      %v1887 = vrot.slane %v1885, 4
      %v1888 = vshll.u32 %v1776, 16
      %v1890 = vrot.slane %v1888, 5
      %v1891 = vor.u32 %v1887, %v1890
      %v1892 = vrot.slane %v1891, 4
      %v1894 = vshll.u32 %v1777, 16
      %v1896 = vrot.slane %v1894, 5
      %v1897 = vsel %vm951, %v1892, %v1896
      %v1898 = vshrl.u32 %v1777, 16
      %v1900 = vrot.slane %v1898, 4
      %v1901 = vor.u32 %v1900, %v1896
      %v1902 = vrot.slane %v1901, 4
      %v1904 = vshll.u32 %v1778, 16
      %v1906 = vrot.slane %v1904, 5
      %v1907 = vsel %vm951, %v1902, %v1906
      %v1909 = vshrl.u32 %v1779, 16
      %v1911 = vrot.slane %v1909, 4
      %v1912 = vshll.u32 %v1779, 16
      %v1914 = vrot.slane %v1912, 5
      %v1915 = vor.u32 %v1911, %v1914
      %v1916 = vrot.slane %v1915, 4
      %v1918 = vshll.u32 %v1780, 16
      %v1920 = vrot.slane %v1918, 5
      %v1921 = vsel %vm951, %v1916, %v1920
      %v1922 = vshrl.u32 %v1780, 16
      %v1924 = vrot.slane %v1922, 4
      %v1925 = vor.u32 %v1924, %v1920
      %v1926 = vrot.slane %v1925, 4
      %v1928 = vshll.u32 %v1781, 16
      %v1930 = vrot.slane %v1928, 5
      %v1931 = vsel %vm951, %v1926, %v1930
      %v1933 = vshrl.u32 %v1782, 16
      %v1935 = vrot.slane %v1933, 4
      %v1936 = vshll.u32 %v1782, 16
      %v1938 = vrot.slane %v1936, 5
      %v1939 = vor.u32 %v1935, %v1938
      %v1940 = vrot.slane %v1939, 4
      %v1942 = vshll.u32 %v1783, 16
      %v1944 = vrot.slane %v1942, 5
      %v1945 = vsel %vm951, %v1940, %v1944
      %v1946 = vshrl.u32 %v1783, 16
      %v1948 = vrot.slane %v1946, 4
      %v1949 = vor.u32 %v1948, %v1944
      %v1950 = vrot.slane %v1949, 4
      %v1952 = vshll.u32 %v1784, 16
      %v1954 = vrot.slane %v1952, 5
      %v1955 = vsel %vm951, %v1950, %v1954
      %v1957 = vshrl.u32 %v1785, 16
      %v1959 = vrot.slane %v1957, 4
      %v1960 = vshll.u32 %v1785, 16
      %v1962 = vrot.slane %v1960, 5
      %v1963 = vor.u32 %v1959, %v1962
      %v1964 = vrot.slane %v1963, 4
      %v1966 = vshll.u32 %v1786, 16
      %v1968 = vrot.slane %v1966, 5
      %v1969 = vsel %vm951, %v1964, %v1968
      %v1970 = vshrl.u32 %v1786, 16
      %v1972 = vrot.slane %v1970, 4
      %v1973 = vor.u32 %v1972, %v1968
      %v1974 = vrot.slane %v1973, 4
      %v1976 = vshll.u32 %v1787, 16
      %v1978 = vrot.slane %v1976, 5
      %v1979 = vsel %vm951, %v1974, %v1978
      %1996 = vst [vmem:[#allocation3 + $0x1c] sm:$0xf] %v1801
      %1997 = vst [vmem:[#allocation3 + $0x40] sm:$0xf] %v1811
      %1998 = vst [vmem:[#allocation3 + $0x64] sm:$0xf] %v1825
      %1999 = vst [vmem:[#allocation3 + $0x88] sm:$0xf] %v1835
      %2000 = vst [vmem:[#allocation3 + $0xac] sm:$0xf] %v1849
      %2001 = vst [vmem:[#allocation3 + $0xd0] sm:$0xf] %v1859
      %2002 = vst [vmem:[#allocation3 + $0xf4] sm:$0xf] %v1873
      %2003 = vst [vmem:[#allocation3 + $0x118] sm:$0xf] %v1883
      %2004 = vst [vmem:[#allocation3 + $0x13c] sm:$0xf] %v1897
      %2005 = vst [vmem:[#allocation3 + $0x160] sm:$0xf] %v1907
      %2006 = vst [vmem:[#allocation3 + $0x184] sm:$0xf] %v1921
      %2007 = vst [vmem:[#allocation3 + $0x1a8] sm:$0xf] %v1931
      %2008 = vst [vmem:[#allocation3 + $0x1cc] sm:$0xf] %v1945
      %2009 = vst [vmem:[#allocation3 + $0x1f0] sm:$0xf] %v1955
      %2010 = vst [vmem:[#allocation3 + $0x214] sm:$0xf] %v1969
      %2011 = vst [vmem:[#allocation3 + $0x238] sm:$0xf] %v1979
      %v2012 = vld [vmem:[%s1731] sm:$0xe]
      %v2013 = vld [vmem:[%s1731 + $0x4] sm:$0xf]
      %v2014 = vld [vmem:[%s1731 + $0x8] sm:$0x1]
      %v2015 = vld [vmem:[%s1731 + $0xc] sm:$0xe]
      %v2016 = vld [vmem:[%s1731 + $0x10] sm:$0xf]
      %v2017 = vld [vmem:[%s1731 + $0x14] sm:$0x1]
      %v2018 = vld [vmem:[%s1731 + $0x18] sm:$0xe]
      %v2019 = vld [vmem:[%s1731 + $0x1c] sm:$0xf]
      %v2020 = vld [vmem:[%s1731 + $0x20] sm:$0x1]
      %v2021 = vld [vmem:[%s1731 + $0x24] sm:$0xe]
      %v2022 = vld [vmem:[%s1731 + $0x28] sm:$0xf]
      %v2023 = vld [vmem:[%s1731 + $0x2c] sm:$0x1]
      %v2024 = vld [vmem:[%s1731 + $0x30] sm:$0xe]
      %v2025 = vld [vmem:[%s1731 + $0x34] sm:$0xf]
      %v2026 = vld [vmem:[%s1731 + $0x38] sm:$0x1]
      %v2027 = vld [vmem:[%s1731 + $0x3c] sm:$0xe]
      %v2028 = vld [vmem:[%s1731 + $0x40] sm:$0xf]
      %v2029 = vld [vmem:[%s1731 + $0x44] sm:$0x1]
      %v2030 = vld [vmem:[%s1731 + $0x48] sm:$0xe]
      %v2031 = vld [vmem:[%s1731 + $0x4c] sm:$0xf]
      %v2032 = vld [vmem:[%s1731 + $0x50] sm:$0x1]
      %v2033 = vld [vmem:[%s1731 + $0x54] sm:$0xe]
      %v2034 = vld [vmem:[%s1731 + $0x58] sm:$0xf]
      %v2035 = vld [vmem:[%s1731 + $0x5c] sm:$0x1]
      %v2060 = vrot.slane %v2012, 5
      %v2061 = vrot.slane %v2060, 4
      %v2062 = vrot.slane %v2013, 5
      %v2063 = vsel %vm1226, %v2061, %v2062
      %v2064 = vrot.slane %v2062, 4
      %v2065 = vrot.slane %v2014, 5
      %v2066 = vsel %vm1226, %v2064, %v2065
      %v2067 = vrot.slane %v2015, 5
      %v2068 = vrot.slane %v2067, 4
      %v2069 = vrot.slane %v2016, 5
      %v2070 = vsel %vm1226, %v2068, %v2069
      %v2071 = vrot.slane %v2069, 4
      %v2072 = vrot.slane %v2017, 5
      %v2073 = vsel %vm1226, %v2071, %v2072
      %v2074 = vrot.slane %v2018, 5
      %v2075 = vrot.slane %v2074, 4
      %v2076 = vrot.slane %v2019, 5
      %v2077 = vsel %vm1226, %v2075, %v2076
      %v2078 = vrot.slane %v2076, 4
      %v2079 = vrot.slane %v2020, 5
      %v2080 = vsel %vm1226, %v2078, %v2079
      %v2081 = vrot.slane %v2021, 5
      %v2082 = vrot.slane %v2081, 4
      %v2083 = vrot.slane %v2022, 5
      %v2084 = vsel %vm1226, %v2082, %v2083
      %v2085 = vrot.slane %v2083, 4
      %v2086 = vrot.slane %v2023, 5
      %v2087 = vsel %vm1226, %v2085, %v2086
      %v2088 = vrot.slane %v2024, 5
      %v2089 = vrot.slane %v2088, 4
      %v2090 = vrot.slane %v2025, 5
      %v2091 = vsel %vm1226, %v2089, %v2090
      %v2092 = vrot.slane %v2090, 4
      %v2093 = vrot.slane %v2026, 5
      %v2094 = vsel %vm1226, %v2092, %v2093
      %v2095 = vrot.slane %v2027, 5
      %v2096 = vrot.slane %v2095, 4
      %v2097 = vrot.slane %v2028, 5
      %v2098 = vsel %vm1226, %v2096, %v2097
      %v2099 = vrot.slane %v2097, 4
      %v2100 = vrot.slane %v2029, 5
      %v2101 = vsel %vm1226, %v2099, %v2100
      %v2102 = vrot.slane %v2030, 5
      %v2103 = vrot.slane %v2102, 4
      %v2104 = vrot.slane %v2031, 5
      %v2105 = vsel %vm1226, %v2103, %v2104
      %v2106 = vrot.slane %v2104, 4
      %v2107 = vrot.slane %v2032, 5
      %v2108 = vsel %vm1226, %v2106, %v2107
      %v2109 = vrot.slane %v2033, 5
      %v2110 = vrot.slane %v2109, 4
      %v2111 = vrot.slane %v2034, 5
      %v2112 = vsel %vm1226, %v2110, %v2111
      %v2113 = vrot.slane %v2111, 4
      %v2114 = vrot.slane %v2035, 5
      %v2115 = vsel %vm1226, %v2113, %v2114
      %2132 = vst [vmem:[#allocation3 + $0x20] sm:$0xf] %v2063
      %2133 = vst [vmem:[#allocation3 + $0x44] sm:$0xf] %v2066
      %2134 = vst [vmem:[#allocation3 + $0x68] sm:$0xf] %v2070
      %2135 = vst [vmem:[#allocation3 + $0x8c] sm:$0xf] %v2073
      %2136 = vst [vmem:[#allocation3 + $0xb0] sm:$0xf] %v2077
      %2137 = vst [vmem:[#allocation3 + $0xd4] sm:$0xf] %v2080
      %2138 = vst [vmem:[#allocation3 + $0xf8] sm:$0xf] %v2084
      %2139 = vst [vmem:[#allocation3 + $0x11c] sm:$0xf] %v2087
      %2140 = vst [vmem:[#allocation3 + $0x140] sm:$0xf] %v2091
      %2141 = vst [vmem:[#allocation3 + $0x164] sm:$0xf] %v2094
      %2142 = vst [vmem:[#allocation3 + $0x188] sm:$0xf] %v2098
      %2143 = vst [vmem:[#allocation3 + $0x1ac] sm:$0xf] %v2101
      %2144 = vst [vmem:[#allocation3 + $0x1d0] sm:$0xf] %v2105
      %2145 = vst [vmem:[#allocation3 + $0x1f4] sm:$0xf] %v2108
      %2146 = vst [vmem:[#allocation3 + $0x218] sm:$0xf] %v2112
      %2147 = vst [vmem:[#allocation3 + $0x23c] sm:$0xf] %v2115
      %v2148 = vld [vmem:[#allocation3] sm:$0xff]
      %v2149 = vld [vmem:[#allocation3 + $0x8] sm:$0xff]
      %v2150 = vld [vmem:[#allocation3 + $0x10] sm:$0xff]
      %v2151 = vld [vmem:[#allocation3 + $0x18] sm:$0xff]
      %v2152 = vld [vmem:[#allocation3 + $0x20] sm:$0xf]
      %v2153 = vld [vmem:[#allocation3 + $0x24] sm:$0xff]
      %v2154 = vld [vmem:[#allocation3 + $0x2c] sm:$0xff]
      %v2155 = vld [vmem:[#allocation3 + $0x34] sm:$0xff]
      %v2156 = vld [vmem:[#allocation3 + $0x3c] sm:$0xff]
      %v2157 = vld [vmem:[#allocation3 + $0x44] sm:$0xf]
      %v2158 = vld [vmem:[#allocation3 + $0x48] sm:$0xff]
      %v2159 = vld [vmem:[#allocation3 + $0x50] sm:$0xff]
      %v2160 = vld [vmem:[#allocation3 + $0x58] sm:$0xff]
      %v2161 = vld [vmem:[#allocation3 + $0x60] sm:$0xff]
      %v2162 = vld [vmem:[#allocation3 + $0x68] sm:$0xf]
      %v2163 = vld [vmem:[#allocation3 + $0x6c] sm:$0xff]
      %v2164 = vld [vmem:[#allocation3 + $0x74] sm:$0xff]
      %v2165 = vld [vmem:[#allocation3 + $0x7c] sm:$0xff]
      %v2166 = vld [vmem:[#allocation3 + $0x84] sm:$0xff]
      %v2167 = vld [vmem:[#allocation3 + $0x8c] sm:$0xf]
      %v2168 = vld [vmem:[#allocation3 + $0x90] sm:$0xff]
      %v2169 = vld [vmem:[#allocation3 + $0x98] sm:$0xff]
      %v2170 = vld [vmem:[#allocation3 + $0xa0] sm:$0xff]
      %v2171 = vld [vmem:[#allocation3 + $0xa8] sm:$0xff]
      %v2172 = vld [vmem:[#allocation3 + $0xb0] sm:$0xf]
      %v2173 = vld [vmem:[#allocation3 + $0xb4] sm:$0xff]
      %v2174 = vld [vmem:[#allocation3 + $0xbc] sm:$0xff]
      %v2175 = vld [vmem:[#allocation3 + $0xc4] sm:$0xff]
      %v2176 = vld [vmem:[#allocation3 + $0xcc] sm:$0xff]
      %v2177 = vld [vmem:[#allocation3 + $0xd4] sm:$0xf]
      %v2178 = vld [vmem:[#allocation3 + $0xd8] sm:$0xff]
      %v2179 = vld [vmem:[#allocation3 + $0xe0] sm:$0xff]
      %v2180 = vld [vmem:[#allocation3 + $0xe8] sm:$0xff]
      %v2181 = vld [vmem:[#allocation3 + $0xf0] sm:$0xff]
      %v2182 = vld [vmem:[#allocation3 + $0xf8] sm:$0xf]
      %v2183 = vld [vmem:[#allocation3 + $0xfc] sm:$0xff]
      %v2184 = vld [vmem:[#allocation3 + $0x104] sm:$0xff]
      %v2185 = vld [vmem:[#allocation3 + $0x10c] sm:$0xff]
      %v2186 = vld [vmem:[#allocation3 + $0x114] sm:$0xff]
      %v2187 = vld [vmem:[#allocation3 + $0x11c] sm:$0xf]
      %v2188 = vld [vmem:[#allocation3 + $0x120] sm:$0xff]
      %v2189 = vld [vmem:[#allocation3 + $0x128] sm:$0xff]
      %v2190 = vld [vmem:[#allocation3 + $0x130] sm:$0xff]
      %v2191 = vld [vmem:[#allocation3 + $0x138] sm:$0xff]
      %v2192 = vld [vmem:[#allocation3 + $0x140] sm:$0xf]
      %v2193 = vld [vmem:[#allocation3 + $0x144] sm:$0xff]
      %v2194 = vld [vmem:[#allocation3 + $0x14c] sm:$0xff]
      %v2195 = vld [vmem:[#allocation3 + $0x154] sm:$0xff]
      %v2196 = vld [vmem:[#allocation3 + $0x15c] sm:$0xff]
      %v2197 = vld [vmem:[#allocation3 + $0x164] sm:$0xf]
      %v2198 = vld [vmem:[#allocation3 + $0x168] sm:$0xff]
      %v2199 = vld [vmem:[#allocation3 + $0x170] sm:$0xff]
      %v2200 = vld [vmem:[#allocation3 + $0x178] sm:$0xff]
      %v2201 = vld [vmem:[#allocation3 + $0x180] sm:$0xff]
      %v2202 = vld [vmem:[#allocation3 + $0x188] sm:$0xf]
      %v2203 = vld [vmem:[#allocation3 + $0x18c] sm:$0xff]
      %v2204 = vld [vmem:[#allocation3 + $0x194] sm:$0xff]
      %v2205 = vld [vmem:[#allocation3 + $0x19c] sm:$0xff]
      %v2206 = vld [vmem:[#allocation3 + $0x1a4] sm:$0xff]
      %v2207 = vld [vmem:[#allocation3 + $0x1ac] sm:$0xf]
      %v2208 = vld [vmem:[#allocation3 + $0x1b0] sm:$0xff]
      %v2209 = vld [vmem:[#allocation3 + $0x1b8] sm:$0xff]
      %v2210 = vld [vmem:[#allocation3 + $0x1c0] sm:$0xff]
      %v2211 = vld [vmem:[#allocation3 + $0x1c8] sm:$0xff]
      %v2212 = vld [vmem:[#allocation3 + $0x1d0] sm:$0xf]
      %v2213 = vld [vmem:[#allocation3 + $0x1d4] sm:$0xff]
      %v2214 = vld [vmem:[#allocation3 + $0x1dc] sm:$0xff]
      %v2215 = vld [vmem:[#allocation3 + $0x1e4] sm:$0xff]
      %v2216 = vld [vmem:[#allocation3 + $0x1ec] sm:$0xff]
      %v2217 = vld [vmem:[#allocation3 + $0x1f4] sm:$0xf]
      %v2218 = vld [vmem:[#allocation3 + $0x1f8] sm:$0xff]
      %v2219 = vld [vmem:[#allocation3 + $0x200] sm:$0xff]
      %v2220 = vld [vmem:[#allocation3 + $0x208] sm:$0xff]
      %v2221 = vld [vmem:[#allocation3 + $0x210] sm:$0xff]
      %v2222 = vld [vmem:[#allocation3 + $0x218] sm:$0xf]
      %v2223 = vld [vmem:[#allocation3 + $0x21c] sm:$0xff]
      %v2224 = vld [vmem:[#allocation3 + $0x224] sm:$0xff]
      %v2225 = vld [vmem:[#allocation3 + $0x22c] sm:$0xff]
      %v2226 = vld [vmem:[#allocation3 + $0x234] sm:$0xff]
      %v2227 = vld [vmem:[#allocation3 + $0x23c] sm:$0xf]
      %v2228 = vld [vmem:[%s1] sm:$0xf]
      %v2229 = vld [vmem:[%s1 + $0x4] sm:$0xf]
      %v2230 = vld [vmem:[%s1 + $0x8] sm:$0xf]
      %v2231 = vld [vmem:[%s1 + $0xc] sm:$0xf]
      %v2232 = vld [vmem:[%s1 + $0x10] sm:$0xf]
      %v2233 = vld [vmem:[%s1 + $0x14] sm:$0xf]
      %v2234 = vld [vmem:[%s1 + $0x18] sm:$0xf]
      %v2235 = vld [vmem:[%s1 + $0x1c] sm:$0xf]
      %v2236 = vld [vmem:[%s1 + $0x20] sm:$0xf]
      %v2237 = vld [vmem:[%s1 + $0x24] sm:$0xf]
      %v2238 = vld [vmem:[%s1 + $0x28] sm:$0xf]
      %v2239 = vld [vmem:[%s1 + $0x2c] sm:$0xf]
      %v2240 = vld [vmem:[%s1 + $0x30] sm:$0xf]
      %v2241 = vld [vmem:[%s1 + $0x34] sm:$0xf]
      %v2242 = vld [vmem:[%s1 + $0x38] sm:$0xf]
      %v2243 = vld [vmem:[%s1 + $0x3c] sm:$0xf]
      %v2244 = vld [vmem:[%s1 + $0x40] sm:$0xf]
      %v2245 = vld [vmem:[%s1 + $0x44] sm:$0xf]
      %v2246 = vld [vmem:[%s1 + $0x48] sm:$0xf]
      %v2247 = vld [vmem:[%s1 + $0x4c] sm:$0xf]
      %v2248 = vld [vmem:[%s1 + $0x50] sm:$0xf]
      %v2249 = vld [vmem:[%s1 + $0x54] sm:$0xf]
      %v2250 = vld [vmem:[%s1 + $0x58] sm:$0xf]
      %v2251 = vld [vmem:[%s1 + $0x5c] sm:$0xf]
      %v2252 = vld [vmem:[%s1 + $0x60] sm:$0xf]
      %v2253 = vld [vmem:[%s1 + $0x64] sm:$0xf]
      %v2254 = vld [vmem:[%s1 + $0x68] sm:$0xf]
      %v2255 = vld [vmem:[%s1 + $0x6c] sm:$0xf]
      %v2256 = vld [vmem:[%s1 + $0x70] sm:$0xf]
      %v2257 = vld [vmem:[%s1 + $0x74] sm:$0xf]
      %v2258 = vld [vmem:[%s1 + $0x78] sm:$0xf]
      %v2259 = vld [vmem:[%s1 + $0x7c] sm:$0xf]
      %v2260 = vld [vmem:[%s1 + $0x80] sm:$0xf]
      %v2261 = vld [vmem:[%s1 + $0x84] sm:$0xf]
      %v2262 = vld [vmem:[%s1 + $0x88] sm:$0xf]
      %v2263 = vld [vmem:[%s1 + $0x8c] sm:$0xf]
      %v2264 = vld [vmem:[%s1 + $0x90] sm:$0xf]
      %v2265 = vld [vmem:[%s1 + $0x94] sm:$0xf]
      %v2266 = vld [vmem:[%s1 + $0x98] sm:$0xf]
      %v2267 = vld [vmem:[%s1 + $0x9c] sm:$0xf]
      %v2268 = vld [vmem:[%s1 + $0xa0] sm:$0xf]
      %v2269 = vld [vmem:[%s1 + $0xa4] sm:$0xf]
      %v2270 = vld [vmem:[%s1 + $0xa8] sm:$0xf]
      %v2271 = vld [vmem:[%s1 + $0xac] sm:$0xf]
      %v2272 = vld [vmem:[%s1 + $0xb0] sm:$0xf]
      %v2273 = vld [vmem:[%s1 + $0xb4] sm:$0xf]
      %v2274 = vld [vmem:[%s1 + $0xb8] sm:$0xf]
      %v2275 = vld [vmem:[%s1 + $0xbc] sm:$0xf]
      %v2276 = vld [vmem:[%s1 + $0xc0] sm:$0xf]
      %v2277 = vld [vmem:[%s1 + $0xc4] sm:$0xf]
      %v2278 = vld [vmem:[%s1 + $0xc8] sm:$0xf]
      %v2279 = vld [vmem:[%s1 + $0xcc] sm:$0xf]
      %v2280 = vld [vmem:[%s1 + $0xd0] sm:$0xf]
      %v2281 = vld [vmem:[%s1 + $0xd4] sm:$0xf]
      %v2282 = vld [vmem:[%s1 + $0xd8] sm:$0xf]
      %v2283 = vld [vmem:[%s1 + $0xdc] sm:$0xf]
      %v2284 = vld [vmem:[%s1 + $0xe0] sm:$0xf]
      %v2285 = vld [vmem:[%s1 + $0xe4] sm:$0xf]
      %v2286 = vld [vmem:[%s1 + $0xe8] sm:$0xf]
      %v2287 = vld [vmem:[%s1 + $0xec] sm:$0xf]
      %v2288 = vld [vmem:[%s1 + $0xf0] sm:$0xf]
      %v2289 = vld [vmem:[%s1 + $0xf4] sm:$0xf]
      %v2290 = vld [vmem:[%s1 + $0xf8] sm:$0xf]
      %v2291 = vld [vmem:[%s1 + $0xfc] sm:$0xf]
      %v2292 = vld [vmem:[%s1 + $0x100] sm:$0xf]
      %v2293 = vld [vmem:[%s1 + $0x104] sm:$0xf]
      %v2294 = vld [vmem:[%s1 + $0x108] sm:$0xf]
      %v2295 = vld [vmem:[%s1 + $0x10c] sm:$0xf]
      %v2296 = vld [vmem:[%s1 + $0x110] sm:$0xf]
      %v2297 = vld [vmem:[%s1 + $0x114] sm:$0xf]
      %v2298 = vld [vmem:[%s1 + $0x118] sm:$0xf]
      %v2299 = vld [vmem:[%s1 + $0x11c] sm:$0xf]
      %v2300 = vld [vmem:[%s1 + $0x120] sm:$0xf]
      %v2301 = vld [vmem:[%s1 + $0x124] sm:$0xf]
      %v2302 = vld [vmem:[%s1 + $0x128] sm:$0xf]
      %v2303 = vld [vmem:[%s1 + $0x12c] sm:$0xf]
      %v2304 = vld [vmem:[%s1 + $0x130] sm:$0xf]
      %v2305 = vld [vmem:[%s1 + $0x134] sm:$0xf]
      %v2306 = vld [vmem:[%s1 + $0x138] sm:$0xf]
      %v2307 = vld [vmem:[%s1 + $0x13c] sm:$0xf]
      %v2308 = vld [vmem:[%s1 + $0x140] sm:$0xf]
      %v2309 = vld [vmem:[%s1 + $0x144] sm:$0xf]
      %v2310 = vld [vmem:[%s1 + $0x148] sm:$0xf]
      %v2311 = vld [vmem:[%s1 + $0x14c] sm:$0xf]
      %v2312 = vld [vmem:[%s1 + $0x150] sm:$0xf]
      %v2313 = vld [vmem:[%s1 + $0x154] sm:$0xf]
      %v2314 = vld [vmem:[%s1 + $0x158] sm:$0xf]
      %v2315 = vld [vmem:[%s1 + $0x15c] sm:$0xf]
      %v2316 = vld [vmem:[%s1 + $0x160] sm:$0xf]
      %v2317 = vld [vmem:[%s1 + $0x164] sm:$0xf]
      %v2318 = vld [vmem:[%s1 + $0x168] sm:$0xf]
      %v2319 = vld [vmem:[%s1 + $0x16c] sm:$0xf]
      %v2320 = vld [vmem:[%s1 + $0x170] sm:$0xf]
      %v2321 = vld [vmem:[%s1 + $0x174] sm:$0xf]
      %v2322 = vld [vmem:[%s1 + $0x178] sm:$0xf]
      %v2323 = vld [vmem:[%s1 + $0x17c] sm:$0xf]
      %v2324 = vld [vmem:[%s1 + $0x180] sm:$0xf]
      %v2325 = vld [vmem:[%s1 + $0x184] sm:$0xf]
      %v2326 = vld [vmem:[%s1 + $0x188] sm:$0xf]
      %v2327 = vld [vmem:[%s1 + $0x18c] sm:$0xf]
      %v2328 = vld [vmem:[%s1 + $0x190] sm:$0xf]
      %v2329 = vld [vmem:[%s1 + $0x194] sm:$0xf]
      %v2330 = vld [vmem:[%s1 + $0x198] sm:$0xf]
      %v2331 = vld [vmem:[%s1 + $0x19c] sm:$0xf]
      %v2332 = vld [vmem:[%s1 + $0x1a0] sm:$0xf]
      %v2333 = vld [vmem:[%s1 + $0x1a4] sm:$0xf]
      %v2334 = vld [vmem:[%s1 + $0x1a8] sm:$0xf]
      %v2335 = vld [vmem:[%s1 + $0x1ac] sm:$0xf]
      %v2336 = vld [vmem:[%s1 + $0x1b0] sm:$0xf]
      %v2337 = vld [vmem:[%s1 + $0x1b4] sm:$0xf]
      %v2338 = vld [vmem:[%s1 + $0x1b8] sm:$0xf]
      %v2339 = vld [vmem:[%s1 + $0x1bc] sm:$0xf]
      %v2340 = vld [vmem:[%s1 + $0x1c0] sm:$0xf]
      %v2341 = vld [vmem:[%s1 + $0x1c4] sm:$0xf]
      %v2342 = vld [vmem:[%s1 + $0x1c8] sm:$0xf]
      %v2343 = vld [vmem:[%s1 + $0x1cc] sm:$0xf]
      %v2344 = vld [vmem:[%s1 + $0x1d0] sm:$0xf]
      %v2345 = vld [vmem:[%s1 + $0x1d4] sm:$0xf]
      %v2346 = vld [vmem:[%s1 + $0x1d8] sm:$0xf]
      %v2347 = vld [vmem:[%s1 + $0x1dc] sm:$0xf]
      %v2348 = vld [vmem:[%s1 + $0x1e0] sm:$0xf]
      %v2349 = vld [vmem:[%s1 + $0x1e4] sm:$0xf]
      %v2350 = vld [vmem:[%s1 + $0x1e8] sm:$0xf]
      %v2351 = vld [vmem:[%s1 + $0x1ec] sm:$0xf]
      %v2352 = vld [vmem:[%s1 + $0x1f0] sm:$0xf]
      %v2353 = vld [vmem:[%s1 + $0x1f4] sm:$0xf]
      %v2354 = vld [vmem:[%s1 + $0x1f8] sm:$0xf]
      %v2355 = vld [vmem:[%s1 + $0x1fc] sm:$0xf]
      %v2356 = vld [vmem:[%s1 + $0x200] sm:$0xf]
      %v2357 = vld [vmem:[%s1 + $0x204] sm:$0xf]
      %v2358 = vld [vmem:[%s1 + $0x208] sm:$0xf]
      %v2359 = vld [vmem:[%s1 + $0x20c] sm:$0xf]
      %v2360 = vld [vmem:[%s1 + $0x210] sm:$0xf]
      %v2361 = vld [vmem:[%s1 + $0x214] sm:$0xf]
      %v2362 = vld [vmem:[%s1 + $0x218] sm:$0xf]
      %v2363 = vld [vmem:[%s1 + $0x21c] sm:$0xf]
      %v2364 = vld [vmem:[%s1 + $0x220] sm:$0xf]
      %v2365 = vld [vmem:[%s1 + $0x224] sm:$0xf]
      %v2366 = vld [vmem:[%s1 + $0x228] sm:$0xf]
      %v2367 = vld [vmem:[%s1 + $0x22c] sm:$0xf]
      %v2368 = vld [vmem:[%s1 + $0x230] sm:$0xf]
      %v2369 = vld [vmem:[%s1 + $0x234] sm:$0xf]
      %v2370 = vld [vmem:[%s1 + $0x238] sm:$0xf]
      %v2371 = vld [vmem:[%s1 + $0x23c] sm:$0xf]
      %v2452 = vunpack.c.l.b16 %v2148
      %v2453 = vunpack.c.h.b16 %v2148
      %v2454 = vunpack.c.l.b16 %v2149
      %v2455 = vunpack.c.h.b16 %v2149
      %v2456 = vunpack.c.l.b16 %v2150
      %v2457 = vunpack.c.h.b16 %v2150
      %v2458 = vunpack.c.l.b16 %v2151
      %v2459 = vunpack.c.h.b16 %v2151
      %v2460 = vunpack.c.l.b16 %v2152
      %v2461 = vunpack.c.l.b16 %v2153
      %v2462 = vunpack.c.h.b16 %v2153
      %v2463 = vunpack.c.l.b16 %v2154
      %v2464 = vunpack.c.h.b16 %v2154
      %v2465 = vunpack.c.l.b16 %v2155
      %v2466 = vunpack.c.h.b16 %v2155
      %v2467 = vunpack.c.l.b16 %v2156
      %v2468 = vunpack.c.h.b16 %v2156
      %v2469 = vunpack.c.l.b16 %v2157
      %v2470 = vunpack.c.l.b16 %v2158
      %v2471 = vunpack.c.h.b16 %v2158
      %v2472 = vunpack.c.l.b16 %v2159
      %v2473 = vunpack.c.h.b16 %v2159
      %v2474 = vunpack.c.l.b16 %v2160
      %v2475 = vunpack.c.h.b16 %v2160
      %v2476 = vunpack.c.l.b16 %v2161
      %v2477 = vunpack.c.h.b16 %v2161
      %v2478 = vunpack.c.l.b16 %v2162
      %v2479 = vunpack.c.l.b16 %v2163
      %v2480 = vunpack.c.h.b16 %v2163
      %v2481 = vunpack.c.l.b16 %v2164
      %v2482 = vunpack.c.h.b16 %v2164
      %v2483 = vunpack.c.l.b16 %v2165
      %v2484 = vunpack.c.h.b16 %v2165
      %v2485 = vunpack.c.l.b16 %v2166
      %v2486 = vunpack.c.h.b16 %v2166
      %v2487 = vunpack.c.l.b16 %v2167
      %v2488 = vunpack.c.l.b16 %v2168
      %v2489 = vunpack.c.h.b16 %v2168
      %v2490 = vunpack.c.l.b16 %v2169
      %v2491 = vunpack.c.h.b16 %v2169
      %v2492 = vunpack.c.l.b16 %v2170
      %v2493 = vunpack.c.h.b16 %v2170
      %v2494 = vunpack.c.l.b16 %v2171
      %v2495 = vunpack.c.h.b16 %v2171
      %v2496 = vunpack.c.l.b16 %v2172
      %v2497 = vunpack.c.l.b16 %v2173
      %v2498 = vunpack.c.h.b16 %v2173
      %v2499 = vunpack.c.l.b16 %v2174
      %v2500 = vunpack.c.h.b16 %v2174
      %v2501 = vunpack.c.l.b16 %v2175
      %v2502 = vunpack.c.h.b16 %v2175
      %v2503 = vunpack.c.l.b16 %v2176
      %v2504 = vunpack.c.h.b16 %v2176
      %v2505 = vunpack.c.l.b16 %v2177
      %v2506 = vunpack.c.l.b16 %v2178
      %v2507 = vunpack.c.h.b16 %v2178
      %v2508 = vunpack.c.l.b16 %v2179
      %v2509 = vunpack.c.h.b16 %v2179
      %v2510 = vunpack.c.l.b16 %v2180
      %v2511 = vunpack.c.h.b16 %v2180
      %v2512 = vunpack.c.l.b16 %v2181
      %v2513 = vunpack.c.h.b16 %v2181
      %v2514 = vunpack.c.l.b16 %v2182
      %v2515 = vunpack.c.l.b16 %v2183
      %v2516 = vunpack.c.h.b16 %v2183
      %v2517 = vunpack.c.l.b16 %v2184
      %v2518 = vunpack.c.h.b16 %v2184
      %v2519 = vunpack.c.l.b16 %v2185
      %v2520 = vunpack.c.h.b16 %v2185
      %v2521 = vunpack.c.l.b16 %v2186
      %v2522 = vunpack.c.h.b16 %v2186
      %v2523 = vunpack.c.l.b16 %v2187
      %v2524 = vunpack.c.l.b16 %v2188
      %v2525 = vunpack.c.h.b16 %v2188
      %v2526 = vunpack.c.l.b16 %v2189
      %v2527 = vunpack.c.h.b16 %v2189
      %v2528 = vunpack.c.l.b16 %v2190
      %v2529 = vunpack.c.h.b16 %v2190
      %v2530 = vunpack.c.l.b16 %v2191
      %v2531 = vunpack.c.h.b16 %v2191
      %v2532 = vunpack.c.l.b16 %v2192
      %v2533 = vunpack.c.l.b16 %v2193
      %v2534 = vunpack.c.h.b16 %v2193
      %v2535 = vunpack.c.l.b16 %v2194
      %v2536 = vunpack.c.h.b16 %v2194
      %v2537 = vunpack.c.l.b16 %v2195
      %v2538 = vunpack.c.h.b16 %v2195
      %v2539 = vunpack.c.l.b16 %v2196
      %v2540 = vunpack.c.h.b16 %v2196
      %v2541 = vunpack.c.l.b16 %v2197
      %v2542 = vunpack.c.l.b16 %v2198
      %v2543 = vunpack.c.h.b16 %v2198
      %v2544 = vunpack.c.l.b16 %v2199
      %v2545 = vunpack.c.h.b16 %v2199
      %v2546 = vunpack.c.l.b16 %v2200
      %v2547 = vunpack.c.h.b16 %v2200
      %v2548 = vunpack.c.l.b16 %v2201
      %v2549 = vunpack.c.h.b16 %v2201
      %v2550 = vunpack.c.l.b16 %v2202
      %v2551 = vunpack.c.l.b16 %v2203
      %v2552 = vunpack.c.h.b16 %v2203
      %v2553 = vunpack.c.l.b16 %v2204
      %v2554 = vunpack.c.h.b16 %v2204
      %v2555 = vunpack.c.l.b16 %v2205
      %v2556 = vunpack.c.h.b16 %v2205
      %v2557 = vunpack.c.l.b16 %v2206
      %v2558 = vunpack.c.h.b16 %v2206
      %v2559 = vunpack.c.l.b16 %v2207
      %v2560 = vunpack.c.l.b16 %v2208
      %v2561 = vunpack.c.h.b16 %v2208
      %v2562 = vunpack.c.l.b16 %v2209
      %v2563 = vunpack.c.h.b16 %v2209
      %v2564 = vunpack.c.l.b16 %v2210
      %v2565 = vunpack.c.h.b16 %v2210
      %v2566 = vunpack.c.l.b16 %v2211
      %v2567 = vunpack.c.h.b16 %v2211
      %v2568 = vunpack.c.l.b16 %v2212
      %v2569 = vunpack.c.l.b16 %v2213
      %v2570 = vunpack.c.h.b16 %v2213
      %v2571 = vunpack.c.l.b16 %v2214
      %v2572 = vunpack.c.h.b16 %v2214
      %v2573 = vunpack.c.l.b16 %v2215
      %v2574 = vunpack.c.h.b16 %v2215
      %v2575 = vunpack.c.l.b16 %v2216
      %v2576 = vunpack.c.h.b16 %v2216
      %v2577 = vunpack.c.l.b16 %v2217
      %v2578 = vunpack.c.l.b16 %v2218
      %v2579 = vunpack.c.h.b16 %v2218
      %v2580 = vunpack.c.l.b16 %v2219
      %v2581 = vunpack.c.h.b16 %v2219
      %v2582 = vunpack.c.l.b16 %v2220
      %v2583 = vunpack.c.h.b16 %v2220
      %v2584 = vunpack.c.l.b16 %v2221
      %v2585 = vunpack.c.h.b16 %v2221
      %v2586 = vunpack.c.l.b16 %v2222
      %v2587 = vunpack.c.l.b16 %v2223
      %v2588 = vunpack.c.h.b16 %v2223
      %v2589 = vunpack.c.l.b16 %v2224
      %v2590 = vunpack.c.h.b16 %v2224
      %v2591 = vunpack.c.l.b16 %v2225
      %v2592 = vunpack.c.h.b16 %v2225
      %v2593 = vunpack.c.l.b16 %v2226
      %v2594 = vunpack.c.h.b16 %v2226
      %v2595 = vunpack.c.l.b16 %v2227
      %v2596 = vpack.c.b16 %v2461, %v2452
      %v2597 = vpack.c.b16 %v2462, %v2453
      %v2598 = vpack.c.b16 %v2463, %v2454
      %v2599 = vpack.c.b16 %v2464, %v2455
      %v2600 = vpack.c.b16 %v2465, %v2456
      %v2601 = vpack.c.b16 %v2466, %v2457
      %v2602 = vpack.c.b16 %v2467, %v2458
      %v2603 = vpack.c.b16 %v2468, %v2459
      %v2604 = vpack.c.b16 %v2469, %v2460
      %v2605 = vpack.c.b16 %v2479, %v2470
      %v2606 = vpack.c.b16 %v2480, %v2471
      %v2607 = vpack.c.b16 %v2481, %v2472
      %v2608 = vpack.c.b16 %v2482, %v2473
      %v2609 = vpack.c.b16 %v2483, %v2474
      %v2610 = vpack.c.b16 %v2484, %v2475
      %v2611 = vpack.c.b16 %v2485, %v2476
      %v2612 = vpack.c.b16 %v2486, %v2477
      %v2613 = vpack.c.b16 %v2487, %v2478
      %v2614 = vpack.c.b16 %v2497, %v2488
      %v2615 = vpack.c.b16 %v2498, %v2489
      %v2616 = vpack.c.b16 %v2499, %v2490
      %v2617 = vpack.c.b16 %v2500, %v2491
      %v2618 = vpack.c.b16 %v2501, %v2492
      %v2619 = vpack.c.b16 %v2502, %v2493
      %v2620 = vpack.c.b16 %v2503, %v2494
      %v2621 = vpack.c.b16 %v2504, %v2495
      %v2622 = vpack.c.b16 %v2505, %v2496
      %v2623 = vpack.c.b16 %v2515, %v2506
      %v2624 = vpack.c.b16 %v2516, %v2507
      %v2625 = vpack.c.b16 %v2517, %v2508
      %v2626 = vpack.c.b16 %v2518, %v2509
      %v2627 = vpack.c.b16 %v2519, %v2510
      %v2628 = vpack.c.b16 %v2520, %v2511
      %v2629 = vpack.c.b16 %v2521, %v2512
      %v2630 = vpack.c.b16 %v2522, %v2513
      %v2631 = vpack.c.b16 %v2523, %v2514
      %v2632 = vpack.c.b16 %v2533, %v2524
      %v2633 = vpack.c.b16 %v2534, %v2525
      %v2634 = vpack.c.b16 %v2535, %v2526
      %v2635 = vpack.c.b16 %v2536, %v2527
      %v2636 = vpack.c.b16 %v2537, %v2528
      %v2637 = vpack.c.b16 %v2538, %v2529
      %v2638 = vpack.c.b16 %v2539, %v2530
      %v2639 = vpack.c.b16 %v2540, %v2531
      %v2640 = vpack.c.b16 %v2541, %v2532
      %v2641 = vpack.c.b16 %v2551, %v2542
      %v2642 = vpack.c.b16 %v2552, %v2543
      %v2643 = vpack.c.b16 %v2553, %v2544
      %v2644 = vpack.c.b16 %v2554, %v2545
      %v2645 = vpack.c.b16 %v2555, %v2546
      %v2646 = vpack.c.b16 %v2556, %v2547
      %v2647 = vpack.c.b16 %v2557, %v2548
      %v2648 = vpack.c.b16 %v2558, %v2549
      %v2649 = vpack.c.b16 %v2559, %v2550
      %v2650 = vpack.c.b16 %v2569, %v2560
      %v2651 = vpack.c.b16 %v2570, %v2561
      %v2652 = vpack.c.b16 %v2571, %v2562
      %v2653 = vpack.c.b16 %v2572, %v2563
      %v2654 = vpack.c.b16 %v2573, %v2564
      %v2655 = vpack.c.b16 %v2574, %v2565
      %v2656 = vpack.c.b16 %v2575, %v2566
      %v2657 = vpack.c.b16 %v2576, %v2567
      %v2658 = vpack.c.b16 %v2577, %v2568
      %v2659 = vpack.c.b16 %v2587, %v2578
      %v2660 = vpack.c.b16 %v2588, %v2579
      %v2661 = vpack.c.b16 %v2589, %v2580
      %v2662 = vpack.c.b16 %v2590, %v2581
      %v2663 = vpack.c.b16 %v2591, %v2582
      %v2664 = vpack.c.b16 %v2592, %v2583
      %v2665 = vpack.c.b16 %v2593, %v2584
      %v2666 = vpack.c.b16 %v2594, %v2585
      %v2667 = vpack.c.b16 %v2595, %v2586
      %v2884 = vunpack.c.l.b16 %v2228
      %v2885 = vunpack.c.l.b16 %v2229
      %v2886 = vunpack.c.l.b16 %v2230
      %v2887 = vunpack.c.l.b16 %v2231
      %v2888 = vunpack.c.l.b16 %v2232
      %v2889 = vunpack.c.l.b16 %v2233
      %v2890 = vunpack.c.l.b16 %v2234
      %v2891 = vunpack.c.l.b16 %v2235
      %v2892 = vunpack.c.l.b16 %v2236
      %v2893 = vunpack.c.l.b16 %v2237
      %v2894 = vunpack.c.l.b16 %v2238
      %v2895 = vunpack.c.l.b16 %v2239
      %v2896 = vunpack.c.l.b16 %v2240
      %v2897 = vunpack.c.l.b16 %v2241
      %v2898 = vunpack.c.l.b16 %v2242
      %v2899 = vunpack.c.l.b16 %v2243
      %v2900 = vunpack.c.l.b16 %v2244
      %v2901 = vunpack.c.l.b16 %v2245
      %v2902 = vunpack.c.l.b16 %v2246
      %v2903 = vunpack.c.l.b16 %v2247
      %v2904 = vunpack.c.l.b16 %v2248
      %v2905 = vunpack.c.l.b16 %v2249
      %v2906 = vunpack.c.l.b16 %v2250
      %v2907 = vunpack.c.l.b16 %v2251
      %v2908 = vunpack.c.l.b16 %v2252
      %v2909 = vunpack.c.l.b16 %v2253
      %v2910 = vunpack.c.l.b16 %v2254
      %v2911 = vunpack.c.l.b16 %v2255
      %v2912 = vunpack.c.l.b16 %v2256
      %v2913 = vunpack.c.l.b16 %v2257
      %v2914 = vunpack.c.l.b16 %v2258
      %v2915 = vunpack.c.l.b16 %v2259
      %v2916 = vunpack.c.l.b16 %v2260
      %v2917 = vunpack.c.l.b16 %v2261
      %v2918 = vunpack.c.l.b16 %v2262
      %v2919 = vunpack.c.l.b16 %v2263
      %v2920 = vunpack.c.l.b16 %v2264
      %v2921 = vunpack.c.l.b16 %v2265
      %v2922 = vunpack.c.l.b16 %v2266
      %v2923 = vunpack.c.l.b16 %v2267
      %v2924 = vunpack.c.l.b16 %v2268
      %v2925 = vunpack.c.l.b16 %v2269
      %v2926 = vunpack.c.l.b16 %v2270
      %v2927 = vunpack.c.l.b16 %v2271
      %v2928 = vunpack.c.l.b16 %v2272
      %v2929 = vunpack.c.l.b16 %v2273
      %v2930 = vunpack.c.l.b16 %v2274
      %v2931 = vunpack.c.l.b16 %v2275
      %v2932 = vunpack.c.l.b16 %v2276
      %v2933 = vunpack.c.l.b16 %v2277
      %v2934 = vunpack.c.l.b16 %v2278
      %v2935 = vunpack.c.l.b16 %v2279
      %v2936 = vunpack.c.l.b16 %v2280
      %v2937 = vunpack.c.l.b16 %v2281
      %v2938 = vunpack.c.l.b16 %v2282
      %v2939 = vunpack.c.l.b16 %v2283
      %v2940 = vunpack.c.l.b16 %v2284
      %v2941 = vunpack.c.l.b16 %v2285
      %v2942 = vunpack.c.l.b16 %v2286
      %v2943 = vunpack.c.l.b16 %v2287
      %v2944 = vunpack.c.l.b16 %v2288
      %v2945 = vunpack.c.l.b16 %v2289
      %v2946 = vunpack.c.l.b16 %v2290
      %v2947 = vunpack.c.l.b16 %v2291
      %v2948 = vunpack.c.l.b16 %v2292
      %v2949 = vunpack.c.l.b16 %v2293
      %v2950 = vunpack.c.l.b16 %v2294
      %v2951 = vunpack.c.l.b16 %v2295
      %v2952 = vunpack.c.l.b16 %v2296
      %v2953 = vunpack.c.l.b16 %v2297
      %v2954 = vunpack.c.l.b16 %v2298
      %v2955 = vunpack.c.l.b16 %v2299
      %v2956 = vunpack.c.l.b16 %v2300
      %v2957 = vunpack.c.l.b16 %v2301
      %v2958 = vunpack.c.l.b16 %v2302
      %v2959 = vunpack.c.l.b16 %v2303
      %v2960 = vunpack.c.l.b16 %v2304
      %v2961 = vunpack.c.l.b16 %v2305
      %v2962 = vunpack.c.l.b16 %v2306
      %v2963 = vunpack.c.l.b16 %v2307
      %v2964 = vunpack.c.l.b16 %v2308
      %v2965 = vunpack.c.l.b16 %v2309
      %v2966 = vunpack.c.l.b16 %v2310
      %v2967 = vunpack.c.l.b16 %v2311
      %v2968 = vunpack.c.l.b16 %v2312
      %v2969 = vunpack.c.l.b16 %v2313
      %v2970 = vunpack.c.l.b16 %v2314
      %v2971 = vunpack.c.l.b16 %v2315
      %v2972 = vunpack.c.l.b16 %v2316
      %v2973 = vunpack.c.l.b16 %v2317
      %v2974 = vunpack.c.l.b16 %v2318
      %v2975 = vunpack.c.l.b16 %v2319
      %v2976 = vunpack.c.l.b16 %v2320
      %v2977 = vunpack.c.l.b16 %v2321
      %v2978 = vunpack.c.l.b16 %v2322
      %v2979 = vunpack.c.l.b16 %v2323
      %v2980 = vunpack.c.l.b16 %v2324
      %v2981 = vunpack.c.l.b16 %v2325
      %v2982 = vunpack.c.l.b16 %v2326
      %v2983 = vunpack.c.l.b16 %v2327
      %v2984 = vunpack.c.l.b16 %v2328
      %v2985 = vunpack.c.l.b16 %v2329
      %v2986 = vunpack.c.l.b16 %v2330
      %v2987 = vunpack.c.l.b16 %v2331
      %v2988 = vunpack.c.l.b16 %v2332
      %v2989 = vunpack.c.l.b16 %v2333
      %v2990 = vunpack.c.l.b16 %v2334
      %v2991 = vunpack.c.l.b16 %v2335
      %v2992 = vunpack.c.l.b16 %v2336
      %v2993 = vunpack.c.l.b16 %v2337
      %v2994 = vunpack.c.l.b16 %v2338
      %v2995 = vunpack.c.l.b16 %v2339
      %v2996 = vunpack.c.l.b16 %v2340
      %v2997 = vunpack.c.l.b16 %v2341
      %v2998 = vunpack.c.l.b16 %v2342
      %v2999 = vunpack.c.l.b16 %v2343
      %v3000 = vunpack.c.l.b16 %v2344
      %v3001 = vunpack.c.l.b16 %v2345
      %v3002 = vunpack.c.l.b16 %v2346
      %v3003 = vunpack.c.l.b16 %v2347
      %v3004 = vunpack.c.l.b16 %v2348
      %v3005 = vunpack.c.l.b16 %v2349
      %v3006 = vunpack.c.l.b16 %v2350
      %v3007 = vunpack.c.l.b16 %v2351
      %v3008 = vunpack.c.l.b16 %v2352
      %v3009 = vunpack.c.l.b16 %v2353
      %v3010 = vunpack.c.l.b16 %v2354
      %v3011 = vunpack.c.l.b16 %v2355
      %v3012 = vunpack.c.l.b16 %v2356
      %v3013 = vunpack.c.l.b16 %v2357
      %v3014 = vunpack.c.l.b16 %v2358
      %v3015 = vunpack.c.l.b16 %v2359
      %v3016 = vunpack.c.l.b16 %v2360
      %v3017 = vunpack.c.l.b16 %v2361
      %v3018 = vunpack.c.l.b16 %v2362
      %v3019 = vunpack.c.l.b16 %v2363
      %v3020 = vunpack.c.l.b16 %v2364
      %v3021 = vunpack.c.l.b16 %v2365
      %v3022 = vunpack.c.l.b16 %v2366
      %v3023 = vunpack.c.l.b16 %v2367
      %v3024 = vunpack.c.l.b16 %v2368
      %v3025 = vunpack.c.l.b16 %v2369
      %v3026 = vunpack.c.l.b16 %v2370
      %v3027 = vunpack.c.l.b16 %v2371
      %v3028 = vpack.c.b16 %v2885, %v2884
      %v3029 = vpack.c.b16 %v2887, %v2886
      %v3030 = vpack.c.b16 %v2889, %v2888
      %v3031 = vpack.c.b16 %v2891, %v2890
      %v3032 = vpack.c.b16 %v2893, %v2892
      %v3033 = vpack.c.b16 %v2895, %v2894
      %v3034 = vpack.c.b16 %v2897, %v2896
      %v3035 = vpack.c.b16 %v2899, %v2898
      %v3036 = vpack.c.b16 %v2901, %v2900
      %v3037 = vpack.c.b16 %v2903, %v2902
      %v3038 = vpack.c.b16 %v2905, %v2904
      %v3039 = vpack.c.b16 %v2907, %v2906
      %v3040 = vpack.c.b16 %v2909, %v2908
      %v3041 = vpack.c.b16 %v2911, %v2910
      %v3042 = vpack.c.b16 %v2913, %v2912
      %v3043 = vpack.c.b16 %v2915, %v2914
      %v3044 = vpack.c.b16 %v2917, %v2916
      %v3045 = vpack.c.b16 %v2919, %v2918
      %v3046 = vpack.c.b16 %v2921, %v2920
      %v3047 = vpack.c.b16 %v2923, %v2922
      %v3048 = vpack.c.b16 %v2925, %v2924
      %v3049 = vpack.c.b16 %v2927, %v2926
      %v3050 = vpack.c.b16 %v2929, %v2928
      %v3051 = vpack.c.b16 %v2931, %v2930
      %v3052 = vpack.c.b16 %v2933, %v2932
      %v3053 = vpack.c.b16 %v2935, %v2934
      %v3054 = vpack.c.b16 %v2937, %v2936
      %v3055 = vpack.c.b16 %v2939, %v2938
      %v3056 = vpack.c.b16 %v2941, %v2940
      %v3057 = vpack.c.b16 %v2943, %v2942
      %v3058 = vpack.c.b16 %v2945, %v2944
      %v3059 = vpack.c.b16 %v2947, %v2946
      %v3060 = vpack.c.b16 %v2949, %v2948
      %v3061 = vpack.c.b16 %v2951, %v2950
      %v3062 = vpack.c.b16 %v2953, %v2952
      %v3063 = vpack.c.b16 %v2955, %v2954
      %v3064 = vpack.c.b16 %v2957, %v2956
      %v3065 = vpack.c.b16 %v2959, %v2958
      %v3066 = vpack.c.b16 %v2961, %v2960
      %v3067 = vpack.c.b16 %v2963, %v2962
      %v3068 = vpack.c.b16 %v2965, %v2964
      %v3069 = vpack.c.b16 %v2967, %v2966
      %v3070 = vpack.c.b16 %v2969, %v2968
      %v3071 = vpack.c.b16 %v2971, %v2970
      %v3072 = vpack.c.b16 %v2973, %v2972
      %v3073 = vpack.c.b16 %v2975, %v2974
      %v3074 = vpack.c.b16 %v2977, %v2976
      %v3075 = vpack.c.b16 %v2979, %v2978
      %v3076 = vpack.c.b16 %v2981, %v2980
      %v3077 = vpack.c.b16 %v2983, %v2982
      %v3078 = vpack.c.b16 %v2985, %v2984
      %v3079 = vpack.c.b16 %v2987, %v2986
      %v3080 = vpack.c.b16 %v2989, %v2988
      %v3081 = vpack.c.b16 %v2991, %v2990
      %v3082 = vpack.c.b16 %v2993, %v2992
      %v3083 = vpack.c.b16 %v2995, %v2994
      %v3084 = vpack.c.b16 %v2997, %v2996
      %v3085 = vpack.c.b16 %v2999, %v2998
      %v3086 = vpack.c.b16 %v3001, %v3000
      %v3087 = vpack.c.b16 %v3003, %v3002
      %v3088 = vpack.c.b16 %v3005, %v3004
      %v3089 = vpack.c.b16 %v3007, %v3006
      %v3090 = vpack.c.b16 %v3009, %v3008
      %v3091 = vpack.c.b16 %v3011, %v3010
      %v3092 = vpack.c.b16 %v3013, %v3012
      %v3093 = vpack.c.b16 %v3015, %v3014
      %v3094 = vpack.c.b16 %v3017, %v3016
      %v3095 = vpack.c.b16 %v3019, %v3018
      %v3096 = vpack.c.b16 %v3021, %v3020
      %v3097 = vpack.c.b16 %v3023, %v3022
      %v3098 = vpack.c.b16 %v3025, %v3024
      %v3099 = vpack.c.b16 %v3027, %v3026
      %3172 = vmatprep.subr.bf16.mxu0 0
      %3173 = vmatpush1.bf16.msra.mxu0 %v3035
      %3174 = vmatprep.subr.bf16.mxu0 0
      %3175 = vmatpush1.bf16.msra.mxu0 %v3034
      %3176 = vmatprep.subr.bf16.mxu0 0
      %3177 = vmatpush1.bf16.msra.mxu0 %v3033
      %3178 = vmatprep.subr.bf16.mxu0 0
      %3179 = vmatpush1.bf16.msra.mxu0 %v3032
      %3180 = vmatprep.subr.bf16.mxu0 0
      %3181 = vmatpush1.bf16.msra.mxu0 %v3031
      %3182 = vmatprep.subr.bf16.mxu0 0
      %3183 = vmatpush1.bf16.msra.mxu0 %v3030
      %3184 = vmatprep.subr.bf16.mxu0 0
      %3185 = vmatpush1.bf16.msra.mxu0 %v3029
      %3186 = vmatprep.subr.bf16.mxu0 0
      %3187 = vmatpush1.bf16.msra.mxu0 %v3028
      %3188 = vmatprep.subr.bf16.mxu0 0
      %3189 = vmatpush2.bf16.msra.mxu0 %v3043
      %3190 = vmatprep.subr.bf16.mxu0 0
      %3191 = vmatpush2.bf16.msra.mxu0 %v3042
      %3192 = vmatprep.subr.bf16.mxu0 0
      %3193 = vmatpush2.bf16.msra.mxu0 %v3041
      %3194 = vmatprep.subr.bf16.mxu0 0
      %3195 = vmatpush2.bf16.msra.mxu0 %v3040
      %3196 = vmatprep.subr.bf16.mxu0 0
      %3197 = vmatpush2.bf16.msra.mxu0 %v3039
      %3198 = vmatprep.subr.bf16.mxu0 0
      %3199 = vmatpush2.bf16.msra.mxu0 %v3038
      %3200 = vmatprep.subr.bf16.mxu0 0
      %3201 = vmatpush2.bf16.msra.mxu0 %v3037
      %3202 = vmatprep.subr.bf16.mxu0 0
      %3203 = vmatpush2.bf16.msra.mxu0 %v3036
      %3204 = vmatprep.mubr.bf16.mxu0 %v2597
      %3205 = vmatmul.mubr.bf16.gmra.mxu0 %v2596
      %v3206 = vpop.f32.mrf.mxu0
      %v3207 = vadd.f32 0.0, %v3206
      %v3208 = vpop.f32.mrf.mxu0
      %v3209 = vpop.f32.mrf.mxu0
      %v3210 = vadd.f32 0.0, %v3209
      %v3211 = vpop.f32.mrf.mxu0
      %3212 = vmatprep.mubr.bf16.mxu0 %v2606
      %3213 = vmatmul.mubr.bf16.gmra.mxu0 %v2605
      %v3214 = vpop.f32.mrf.mxu0
      %v3215 = vadd.f32 0.0, %v3214
      %v3216 = vpop.f32.mrf.mxu0
      %v3217 = vpop.f32.mrf.mxu0
      %v3218 = vadd.f32 0.0, %v3217
      %v3219 = vpop.f32.mrf.mxu0
      %3220 = vmatprep.mubr.bf16.mxu0 %v2615
      %3221 = vmatmul.mubr.bf16.gmra.mxu0 %v2614
      %v3222 = vpop.f32.mrf.mxu0
      %v3223 = vadd.f32 0.0, %v3222
      %v3224 = vpop.f32.mrf.mxu0
      %v3225 = vpop.f32.mrf.mxu0
      %v3226 = vadd.f32 0.0, %v3225
      %v3227 = vpop.f32.mrf.mxu0
      %3228 = vmatprep.mubr.bf16.mxu0 %v2624
      %3229 = vmatmul.mubr.bf16.gmra.mxu0 %v2623
      %v3230 = vpop.f32.mrf.mxu0
      %v3231 = vadd.f32 0.0, %v3230
      %v3232 = vpop.f32.mrf.mxu0
      %v3233 = vpop.f32.mrf.mxu0
      %v3234 = vadd.f32 0.0, %v3233
      %v3235 = vpop.f32.mrf.mxu0
      %3236 = vmatprep.mubr.bf16.mxu0 %v2633
      %3237 = vmatmul.mubr.bf16.gmra.mxu0 %v2632
      %v3238 = vpop.f32.mrf.mxu0
      %v3239 = vadd.f32 0.0, %v3238
      %v3240 = vpop.f32.mrf.mxu0
      %v3241 = vpop.f32.mrf.mxu0
      %v3242 = vadd.f32 0.0, %v3241
      %v3243 = vpop.f32.mrf.mxu0
      %3244 = vmatprep.mubr.bf16.mxu0 %v2642
      %3245 = vmatmul.mubr.bf16.gmra.mxu0 %v2641
      %v3246 = vpop.f32.mrf.mxu0
      %v3247 = vadd.f32 0.0, %v3246
      %v3248 = vpop.f32.mrf.mxu0
      %v3249 = vpop.f32.mrf.mxu0
      %v3250 = vadd.f32 0.0, %v3249
      %v3251 = vpop.f32.mrf.mxu0
      %3252 = vmatprep.mubr.bf16.mxu0 %v2651
      %3253 = vmatmul.mubr.bf16.gmra.mxu0 %v2650
      %v3254 = vpop.f32.mrf.mxu0
      %v3255 = vadd.f32 0.0, %v3254
      %v3256 = vpop.f32.mrf.mxu0
      %v3257 = vpop.f32.mrf.mxu0
      %v3258 = vadd.f32 0.0, %v3257
      %v3259 = vpop.f32.mrf.mxu0
      %3260 = vmatprep.mubr.bf16.mxu0 %v2660
      %3261 = vmatmul.mubr.bf16.gmra.mxu0 %v2659
      %v3262 = vpop.f32.mrf.mxu0
      %v3263 = vadd.f32 0.0, %v3262
      %v3264 = vpop.f32.mrf.mxu0
      %v3265 = vpop.f32.mrf.mxu0
      %v3266 = vadd.f32 0.0, %v3265
      %v3267 = vpop.f32.mrf.mxu0
      %3268 = vdwg.mxu0
      %3269 = vmatprep.subr.bf16.mxu0 0
      %3270 = vmatpush1.bf16.msra.mxu0 %v3051
      %3271 = vmatprep.subr.bf16.mxu0 0
      %3272 = vmatpush1.bf16.msra.mxu0 %v3050
      %3273 = vmatprep.subr.bf16.mxu0 0
      %3274 = vmatpush1.bf16.msra.mxu0 %v3049
      %3275 = vmatprep.subr.bf16.mxu0 0
      %3276 = vmatpush1.bf16.msra.mxu0 %v3048
      %3277 = vmatprep.subr.bf16.mxu0 0
      %3278 = vmatpush1.bf16.msra.mxu0 %v3047
      %3279 = vmatprep.subr.bf16.mxu0 0
      %3280 = vmatpush1.bf16.msra.mxu0 %v3046
      %3281 = vmatprep.subr.bf16.mxu0 0
      %3282 = vmatpush1.bf16.msra.mxu0 %v3045
      %3283 = vmatprep.subr.bf16.mxu0 0
      %3284 = vmatpush1.bf16.msra.mxu0 %v3044
      %3285 = vmatprep.subr.bf16.mxu0 0
      %3286 = vmatpush2.bf16.msra.mxu0 %v3059
      %3287 = vmatprep.subr.bf16.mxu0 0
      %3288 = vmatpush2.bf16.msra.mxu0 %v3058
      %3289 = vmatprep.subr.bf16.mxu0 0
      %3290 = vmatpush2.bf16.msra.mxu0 %v3057
      %3291 = vmatprep.subr.bf16.mxu0 0
      %3292 = vmatpush2.bf16.msra.mxu0 %v3056
      %3293 = vmatprep.subr.bf16.mxu0 0
      %3294 = vmatpush2.bf16.msra.mxu0 %v3055
      %3295 = vmatprep.subr.bf16.mxu0 0
      %3296 = vmatpush2.bf16.msra.mxu0 %v3054
      %3297 = vmatprep.subr.bf16.mxu0 0
      %3298 = vmatpush2.bf16.msra.mxu0 %v3053
      %3299 = vmatprep.subr.bf16.mxu0 0
      %3300 = vmatpush2.bf16.msra.mxu0 %v3052
      %3301 = vmatprep.mubr.bf16.mxu0 %v2599
      %3302 = vmatmul.mubr.bf16.gmra.mxu0 %v2598
      %v3303 = vpop.f32.mrf.mxu0
      %v3304 = vadd.f32 %v3207, %v3303
      %v3305 = vpop.f32.mrf.mxu0
      %v3306 = vpop.f32.mrf.mxu0
      %v3307 = vadd.f32 %v3210, %v3306
      %v3308 = vpop.f32.mrf.mxu0
      %3309 = vmatprep.mubr.bf16.mxu0 %v2608
      %3310 = vmatmul.mubr.bf16.gmra.mxu0 %v2607
      %v3311 = vpop.f32.mrf.mxu0
      %v3312 = vadd.f32 %v3215, %v3311
      %v3313 = vpop.f32.mrf.mxu0
      %v3314 = vpop.f32.mrf.mxu0
      %v3315 = vadd.f32 %v3218, %v3314
      %v3316 = vpop.f32.mrf.mxu0
      %3317 = vmatprep.mubr.bf16.mxu0 %v2617
      %3318 = vmatmul.mubr.bf16.gmra.mxu0 %v2616
      %v3319 = vpop.f32.mrf.mxu0
      %v3320 = vadd.f32 %v3223, %v3319
      %v3321 = vpop.f32.mrf.mxu0
      %v3322 = vpop.f32.mrf.mxu0
      %v3323 = vadd.f32 %v3226, %v3322
      %v3324 = vpop.f32.mrf.mxu0
      %3325 = vmatprep.mubr.bf16.mxu0 %v2626
      %3326 = vmatmul.mubr.bf16.gmra.mxu0 %v2625
      %v3327 = vpop.f32.mrf.mxu0
      %v3328 = vadd.f32 %v3231, %v3327
      %v3329 = vpop.f32.mrf.mxu0
      %v3330 = vpop.f32.mrf.mxu0
      %v3331 = vadd.f32 %v3234, %v3330
      %v3332 = vpop.f32.mrf.mxu0
      %3333 = vmatprep.mubr.bf16.mxu0 %v2635
      %3334 = vmatmul.mubr.bf16.gmra.mxu0 %v2634
      %v3335 = vpop.f32.mrf.mxu0
      %v3336 = vadd.f32 %v3239, %v3335
      %v3337 = vpop.f32.mrf.mxu0
      %v3338 = vpop.f32.mrf.mxu0
      %v3339 = vadd.f32 %v3242, %v3338
      %v3340 = vpop.f32.mrf.mxu0
      %3341 = vmatprep.mubr.bf16.mxu0 %v2644
      %3342 = vmatmul.mubr.bf16.gmra.mxu0 %v2643
      %v3343 = vpop.f32.mrf.mxu0
      %v3344 = vadd.f32 %v3247, %v3343
      %v3345 = vpop.f32.mrf.mxu0
      %v3346 = vpop.f32.mrf.mxu0
      %v3347 = vadd.f32 %v3250, %v3346
      %v3348 = vpop.f32.mrf.mxu0
      %3349 = vmatprep.mubr.bf16.mxu0 %v2653
      %3350 = vmatmul.mubr.bf16.gmra.mxu0 %v2652
      %v3351 = vpop.f32.mrf.mxu0
      %v3352 = vadd.f32 %v3255, %v3351
      %v3353 = vpop.f32.mrf.mxu0
      %v3354 = vpop.f32.mrf.mxu0
      %v3355 = vadd.f32 %v3258, %v3354
      %v3356 = vpop.f32.mrf.mxu0
      %3357 = vmatprep.mubr.bf16.mxu0 %v2662
      %3358 = vmatmul.mubr.bf16.gmra.mxu0 %v2661
      %v3359 = vpop.f32.mrf.mxu0
      %v3360 = vadd.f32 %v3263, %v3359
      %v3361 = vpop.f32.mrf.mxu0
      %v3362 = vpop.f32.mrf.mxu0
      %v3363 = vadd.f32 %v3266, %v3362
      %v3364 = vpop.f32.mrf.mxu0
      %3365 = vdwg.mxu0
      %3366 = vmatprep.subr.bf16.mxu0 0
      %3367 = vmatpush1.bf16.msra.mxu0 %v3067
      %3368 = vmatprep.subr.bf16.mxu0 0
      %3369 = vmatpush1.bf16.msra.mxu0 %v3066
      %3370 = vmatprep.subr.bf16.mxu0 0
      %3371 = vmatpush1.bf16.msra.mxu0 %v3065
      %3372 = vmatprep.subr.bf16.mxu0 0
      %3373 = vmatpush1.bf16.msra.mxu0 %v3064
      %3374 = vmatprep.subr.bf16.mxu0 0
      %3375 = vmatpush1.bf16.msra.mxu0 %v3063
      %3376 = vmatprep.subr.bf16.mxu0 0
      %3377 = vmatpush1.bf16.msra.mxu0 %v3062
      %3378 = vmatprep.subr.bf16.mxu0 0
      %3379 = vmatpush1.bf16.msra.mxu0 %v3061
      %3380 = vmatprep.subr.bf16.mxu0 0
      %3381 = vmatpush1.bf16.msra.mxu0 %v3060
      %3382 = vmatprep.subr.bf16.mxu0 0
      %3383 = vmatpush2.bf16.msra.mxu0 %v3075
      %3384 = vmatprep.subr.bf16.mxu0 0
      %3385 = vmatpush2.bf16.msra.mxu0 %v3074
      %3386 = vmatprep.subr.bf16.mxu0 0
      %3387 = vmatpush2.bf16.msra.mxu0 %v3073
      %3388 = vmatprep.subr.bf16.mxu0 0
      %3389 = vmatpush2.bf16.msra.mxu0 %v3072
      %3390 = vmatprep.subr.bf16.mxu0 0
      %3391 = vmatpush2.bf16.msra.mxu0 %v3071
      %3392 = vmatprep.subr.bf16.mxu0 0
      %3393 = vmatpush2.bf16.msra.mxu0 %v3070
      %3394 = vmatprep.subr.bf16.mxu0 0
      %3395 = vmatpush2.bf16.msra.mxu0 %v3069
      %3396 = vmatprep.subr.bf16.mxu0 0
      %3397 = vmatpush2.bf16.msra.mxu0 %v3068
      %3398 = vmatprep.mubr.bf16.mxu0 %v2601
      %3399 = vmatmul.mubr.bf16.gmra.mxu0 %v2600
      %v3400 = vpop.f32.mrf.mxu0
      %v3401 = vadd.f32 %v3304, %v3400
      %v3402 = vpop.f32.mrf.mxu0
      %v3403 = vpop.f32.mrf.mxu0
      %v3404 = vadd.f32 %v3307, %v3403
      %v3405 = vpop.f32.mrf.mxu0
      %3406 = vmatprep.mubr.bf16.mxu0 %v2610
      %3407 = vmatmul.mubr.bf16.gmra.mxu0 %v2609
      %v3408 = vpop.f32.mrf.mxu0
      %v3409 = vadd.f32 %v3312, %v3408
      %v3410 = vpop.f32.mrf.mxu0
      %v3411 = vpop.f32.mrf.mxu0
      %v3412 = vadd.f32 %v3315, %v3411
      %v3413 = vpop.f32.mrf.mxu0
      %3414 = vmatprep.mubr.bf16.mxu0 %v2619
      %3415 = vmatmul.mubr.bf16.gmra.mxu0 %v2618
      %v3416 = vpop.f32.mrf.mxu0
      %v3417 = vadd.f32 %v3320, %v3416
      %v3418 = vpop.f32.mrf.mxu0
      %v3419 = vpop.f32.mrf.mxu0
      %v3420 = vadd.f32 %v3323, %v3419
      %v3421 = vpop.f32.mrf.mxu0
      %3422 = vmatprep.mubr.bf16.mxu0 %v2628
      %3423 = vmatmul.mubr.bf16.gmra.mxu0 %v2627
      %v3424 = vpop.f32.mrf.mxu0
      %v3425 = vadd.f32 %v3328, %v3424
      %v3426 = vpop.f32.mrf.mxu0
      %v3427 = vpop.f32.mrf.mxu0
      %v3428 = vadd.f32 %v3331, %v3427
      %v3429 = vpop.f32.mrf.mxu0
      %3430 = vmatprep.mubr.bf16.mxu0 %v2637
      %3431 = vmatmul.mubr.bf16.gmra.mxu0 %v2636
      %v3432 = vpop.f32.mrf.mxu0
      %v3433 = vadd.f32 %v3336, %v3432
      %v3434 = vpop.f32.mrf.mxu0
      %v3435 = vpop.f32.mrf.mxu0
      %v3436 = vadd.f32 %v3339, %v3435
      %v3437 = vpop.f32.mrf.mxu0
      %3438 = vmatprep.mubr.bf16.mxu0 %v2646
      %3439 = vmatmul.mubr.bf16.gmra.mxu0 %v2645
      %v3440 = vpop.f32.mrf.mxu0
      %v3441 = vadd.f32 %v3344, %v3440
      %v3442 = vpop.f32.mrf.mxu0
      %v3443 = vpop.f32.mrf.mxu0
      %v3444 = vadd.f32 %v3347, %v3443
      %v3445 = vpop.f32.mrf.mxu0
      %3446 = vmatprep.mubr.bf16.mxu0 %v2655
      %3447 = vmatmul.mubr.bf16.gmra.mxu0 %v2654
      %v3448 = vpop.f32.mrf.mxu0
      %v3449 = vadd.f32 %v3352, %v3448
      %v3450 = vpop.f32.mrf.mxu0
      %v3451 = vpop.f32.mrf.mxu0
      %v3452 = vadd.f32 %v3355, %v3451
      %v3453 = vpop.f32.mrf.mxu0
      %3454 = vmatprep.mubr.bf16.mxu0 %v2664
      %3455 = vmatmul.mubr.bf16.gmra.mxu0 %v2663
      %v3456 = vpop.f32.mrf.mxu0
      %v3457 = vadd.f32 %v3360, %v3456
      %v3458 = vpop.f32.mrf.mxu0
      %v3459 = vpop.f32.mrf.mxu0
      %v3460 = vadd.f32 %v3363, %v3459
      %v3461 = vpop.f32.mrf.mxu0
      %3462 = vdwg.mxu0
      %3463 = vmatprep.subr.bf16.mxu0 0
      %3464 = vmatpush1.bf16.msra.mxu0 %v3083
      %3465 = vmatprep.subr.bf16.mxu0 0
      %3466 = vmatpush1.bf16.msra.mxu0 %v3082
      %3467 = vmatprep.subr.bf16.mxu0 0
      %3468 = vmatpush1.bf16.msra.mxu0 %v3081
      %3469 = vmatprep.subr.bf16.mxu0 0
      %3470 = vmatpush1.bf16.msra.mxu0 %v3080
      %3471 = vmatprep.subr.bf16.mxu0 0
      %3472 = vmatpush1.bf16.msra.mxu0 %v3079
      %3473 = vmatprep.subr.bf16.mxu0 0
      %3474 = vmatpush1.bf16.msra.mxu0 %v3078
      %3475 = vmatprep.subr.bf16.mxu0 0
      %3476 = vmatpush1.bf16.msra.mxu0 %v3077
      %3477 = vmatprep.subr.bf16.mxu0 0
      %3478 = vmatpush1.bf16.msra.mxu0 %v3076
      %3479 = vmatprep.subr.bf16.mxu0 0
      %3480 = vmatpush2.bf16.msra.mxu0 %v3091
      %3481 = vmatprep.subr.bf16.mxu0 0
      %3482 = vmatpush2.bf16.msra.mxu0 %v3090
      %3483 = vmatprep.subr.bf16.mxu0 0
      %3484 = vmatpush2.bf16.msra.mxu0 %v3089
      %3485 = vmatprep.subr.bf16.mxu0 0
      %3486 = vmatpush2.bf16.msra.mxu0 %v3088
      %3487 = vmatprep.subr.bf16.mxu0 0
      %3488 = vmatpush2.bf16.msra.mxu0 %v3087
      %3489 = vmatprep.subr.bf16.mxu0 0
      %3490 = vmatpush2.bf16.msra.mxu0 %v3086
      %3491 = vmatprep.subr.bf16.mxu0 0
      %3492 = vmatpush2.bf16.msra.mxu0 %v3085
      %3493 = vmatprep.subr.bf16.mxu0 0
      %3494 = vmatpush2.bf16.msra.mxu0 %v3084
      %3495 = vmatprep.mubr.bf16.mxu0 %v2603
      %3496 = vmatmul.mubr.bf16.gmra.mxu0 %v2602
      %v3497 = vpop.f32.mrf.mxu0
      %v3498 = vadd.f32 %v3401, %v3497
      %v3499 = vpop.f32.mrf.mxu0
      %v3500 = vpop.f32.mrf.mxu0
      %v3501 = vadd.f32 %v3404, %v3500
      %v3502 = vpop.f32.mrf.mxu0
      %3503 = vmatprep.mubr.bf16.mxu0 %v2612
      %3504 = vmatmul.mubr.bf16.gmra.mxu0 %v2611
      %v3505 = vpop.f32.mrf.mxu0
      %v3506 = vadd.f32 %v3409, %v3505
      %v3507 = vpop.f32.mrf.mxu0
      %v3508 = vpop.f32.mrf.mxu0
      %v3509 = vadd.f32 %v3412, %v3508
      %v3510 = vpop.f32.mrf.mxu0
      %3511 = vmatprep.mubr.bf16.mxu0 %v2621
      %3512 = vmatmul.mubr.bf16.gmra.mxu0 %v2620
      %v3513 = vpop.f32.mrf.mxu0
      %v3514 = vadd.f32 %v3417, %v3513
      %v3515 = vpop.f32.mrf.mxu0
      %v3516 = vpop.f32.mrf.mxu0
      %v3517 = vadd.f32 %v3420, %v3516
      %v3518 = vpop.f32.mrf.mxu0
      %3519 = vmatprep.mubr.bf16.mxu0 %v2630
      %3520 = vmatmul.mubr.bf16.gmra.mxu0 %v2629
      %v3521 = vpop.f32.mrf.mxu0
      %v3522 = vadd.f32 %v3425, %v3521
      %v3523 = vpop.f32.mrf.mxu0
      %v3524 = vpop.f32.mrf.mxu0
      %v3525 = vadd.f32 %v3428, %v3524
      %v3526 = vpop.f32.mrf.mxu0
      %3527 = vmatprep.mubr.bf16.mxu0 %v2639
      %3528 = vmatmul.mubr.bf16.gmra.mxu0 %v2638
      %v3529 = vpop.f32.mrf.mxu0
      %v3530 = vadd.f32 %v3433, %v3529
      %v3531 = vpop.f32.mrf.mxu0
      %v3532 = vpop.f32.mrf.mxu0
      %v3533 = vadd.f32 %v3436, %v3532
      %v3534 = vpop.f32.mrf.mxu0
      %3535 = vmatprep.mubr.bf16.mxu0 %v2648
      %3536 = vmatmul.mubr.bf16.gmra.mxu0 %v2647
      %v3537 = vpop.f32.mrf.mxu0
      %v3538 = vadd.f32 %v3441, %v3537
      %v3539 = vpop.f32.mrf.mxu0
      %v3540 = vpop.f32.mrf.mxu0
      %v3541 = vadd.f32 %v3444, %v3540
      %v3542 = vpop.f32.mrf.mxu0
      %3543 = vmatprep.mubr.bf16.mxu0 %v2657
      %3544 = vmatmul.mubr.bf16.gmra.mxu0 %v2656
      %v3545 = vpop.f32.mrf.mxu0
      %v3546 = vadd.f32 %v3449, %v3545
      %v3547 = vpop.f32.mrf.mxu0
      %v3548 = vpop.f32.mrf.mxu0
      %v3549 = vadd.f32 %v3452, %v3548
      %v3550 = vpop.f32.mrf.mxu0
      %3551 = vmatprep.mubr.bf16.mxu0 %v2666
      %3552 = vmatmul.mubr.bf16.gmra.mxu0 %v2665
      %v3553 = vpop.f32.mrf.mxu0
      %v3554 = vadd.f32 %v3457, %v3553
      %v3555 = vpop.f32.mrf.mxu0
      %v3556 = vpop.f32.mrf.mxu0
      %v3557 = vadd.f32 %v3460, %v3556
      %v3558 = vpop.f32.mrf.mxu0
      %3559 = vdwg.mxu0
      %3560 = vmatprep.subr.bf16.mxu0 0
      %3561 = vmatpush1.bf16.msra.mxu0 %v3099
      %3562 = vmatprep.subr.bf16.mxu0 0
      %3563 = vmatpush1.bf16.msra.mxu0 %v3098
      %3564 = vmatprep.subr.bf16.mxu0 0
      %3565 = vmatpush1.bf16.msra.mxu0 %v3097
      %3566 = vmatprep.subr.bf16.mxu0 0
      %3567 = vmatpush1.bf16.msra.mxu0 %v3096
      %3568 = vmatprep.subr.bf16.mxu0 0
      %3569 = vmatpush1.bf16.msra.mxu0 %v3095
      %3570 = vmatprep.subr.bf16.mxu0 0
      %3571 = vmatpush1.bf16.msra.mxu0 %v3094
      %3572 = vmatprep.subr.bf16.mxu0 0
      %3573 = vmatpush1.bf16.msra.mxu0 %v3093
      %3574 = vmatprep.subr.bf16.mxu0 0
      %3575 = vmatpush1.bf16.msra.mxu0 %v3092
      %3576 = vmatprep.subr.bf16.mxu0 0
      %3577 = vmatpush2.bf16.msra.mxu0 0
      %3578 = vmatprep.subr.bf16.mxu0 0
      %3579 = vmatpush2.bf16.msra.mxu0 0
      %3580 = vmatprep.subr.bf16.mxu0 0
      %3581 = vmatpush2.bf16.msra.mxu0 0
      %3582 = vmatprep.subr.bf16.mxu0 0
      %3583 = vmatpush2.bf16.msra.mxu0 0
      %3584 = vmatprep.subr.bf16.mxu0 0
      %3585 = vmatpush2.bf16.msra.mxu0 0
      %3586 = vmatprep.subr.bf16.mxu0 0
      %3587 = vmatpush2.bf16.msra.mxu0 0
      %3588 = vmatprep.subr.bf16.mxu0 0
      %3589 = vmatpush2.bf16.msra.mxu0 0
      %3590 = vmatprep.subr.bf16.mxu0 0
      %3591 = vmatpush2.bf16.msra.mxu0 0
      %3592 = vmatprep.mubr.bf16.mxu0 0
      %3593 = vmatmul.mubr.bf16.gmra.mxu0 %v2604
      %v3594 = vpop.f32.mrf.mxu0
      %v3595 = vadd.f32 %v3498, %v3594
      %v3596 = vpop.f32.mrf.mxu0
      %v3597 = vpop.f32.mrf.mxu0
      %v3598 = vadd.f32 %v3501, %v3597
      %v3599 = vpop.f32.mrf.mxu0
      %3600 = vmatprep.mubr.bf16.mxu0 0
      %3601 = vmatmul.mubr.bf16.gmra.mxu0 %v2613
      %v3602 = vpop.f32.mrf.mxu0
      %v3603 = vadd.f32 %v3506, %v3602
      %v3604 = vpop.f32.mrf.mxu0
      %v3605 = vpop.f32.mrf.mxu0
      %v3606 = vadd.f32 %v3509, %v3605
      %v3607 = vpop.f32.mrf.mxu0
      %3608 = vmatprep.mubr.bf16.mxu0 0
      %3609 = vmatmul.mubr.bf16.gmra.mxu0 %v2622
      %v3610 = vpop.f32.mrf.mxu0
      %v3611 = vadd.f32 %v3514, %v3610
      %v3612 = vpop.f32.mrf.mxu0
      %v3613 = vpop.f32.mrf.mxu0
      %v3614 = vadd.f32 %v3517, %v3613
      %v3615 = vpop.f32.mrf.mxu0
      %3616 = vmatprep.mubr.bf16.mxu0 0
      %3617 = vmatmul.mubr.bf16.gmra.mxu0 %v2631
      %v3618 = vpop.f32.mrf.mxu0
      %v3619 = vadd.f32 %v3522, %v3618
      %v3620 = vpop.f32.mrf.mxu0
      %v3621 = vpop.f32.mrf.mxu0
      %v3622 = vadd.f32 %v3525, %v3621
      %v3623 = vpop.f32.mrf.mxu0
      %3624 = vmatprep.mubr.bf16.mxu0 0
      %3625 = vmatmul.mubr.bf16.gmra.mxu0 %v2640
      %v3626 = vpop.f32.mrf.mxu0
      %v3627 = vadd.f32 %v3530, %v3626
      %v3628 = vpop.f32.mrf.mxu0
      %v3629 = vpop.f32.mrf.mxu0
      %v3630 = vadd.f32 %v3533, %v3629
      %v3631 = vpop.f32.mrf.mxu0
      %3632 = vmatprep.mubr.bf16.mxu0 0
      %3633 = vmatmul.mubr.bf16.gmra.mxu0 %v2649
      %v3634 = vpop.f32.mrf.mxu0
      %v3635 = vadd.f32 %v3538, %v3634
      %v3636 = vpop.f32.mrf.mxu0
      %v3637 = vpop.f32.mrf.mxu0
      %v3638 = vadd.f32 %v3541, %v3637
      %v3639 = vpop.f32.mrf.mxu0
      %3640 = vmatprep.mubr.bf16.mxu0 0
      %3641 = vmatmul.mubr.bf16.gmra.mxu0 %v2658
      %v3642 = vpop.f32.mrf.mxu0
      %v3643 = vadd.f32 %v3546, %v3642
      %v3644 = vpop.f32.mrf.mxu0
      %v3645 = vpop.f32.mrf.mxu0
      %v3646 = vadd.f32 %v3549, %v3645
      %v3647 = vpop.f32.mrf.mxu0
      %3648 = vmatprep.mubr.bf16.mxu0 0
      %3649 = vmatmul.mubr.bf16.gmra.mxu0 %v2667
      %v3650 = vpop.f32.mrf.mxu0
      %v3651 = vadd.f32 %v3554, %v3650
      %v3652 = vpop.f32.mrf.mxu0
      %v3653 = vpop.f32.mrf.mxu0
      %v3654 = vadd.f32 %v3557, %v3653
      %v3655 = vpop.f32.mrf.mxu0
      %3656 = vdwg.mxu0
      %v3657 = vpack.c.bf16 %v3598, %v3595
      %v3658 = vpack.c.bf16 %v3606, %v3603
      %v3659 = vpack.c.bf16 %v3614, %v3611
      %v3660 = vpack.c.bf16 %v3622, %v3619
      %v3661 = vpack.c.bf16 %v3630, %v3627
      %v3662 = vpack.c.bf16 %v3638, %v3635
      %v3663 = vpack.c.bf16 %v3646, %v3643
      %v3664 = vpack.c.bf16 %v3654, %v3651
      %v3673 = vunpack.c.l.b16 %v3657
      %v3674 = vunpack.c.h.b16 %v3657
      %v3675 = vunpack.c.l.b16 %v3658
      %v3676 = vunpack.c.h.b16 %v3658
      %v3677 = vunpack.c.l.b16 %v3659
      %v3678 = vunpack.c.h.b16 %v3659
      %v3679 = vunpack.c.l.b16 %v3660
      %v3680 = vunpack.c.h.b16 %v3660
      %v3681 = vunpack.c.l.b16 %v3661
      %v3682 = vunpack.c.h.b16 %v3661
      %v3683 = vunpack.c.l.b16 %v3662
      %v3684 = vunpack.c.h.b16 %v3662
      %v3685 = vunpack.c.l.b16 %v3663
      %v3686 = vunpack.c.h.b16 %v3663
      %v3687 = vunpack.c.l.b16 %v3664
      %v3688 = vunpack.c.h.b16 %v3664
      %v3689 = vpack.c.b16 %v3673, %v3673
      %v3690 = vpack.c.b16 %v3674, %v3674
      %v3691 = vpack.c.b16 %v3675, %v3675
      %v3692 = vpack.c.b16 %v3676, %v3676
      %v3693 = vpack.c.b16 %v3677, %v3677
      %v3694 = vpack.c.b16 %v3678, %v3678
      %v3695 = vpack.c.b16 %v3679, %v3679
      %v3696 = vpack.c.b16 %v3680, %v3680
      %v3697 = vpack.c.b16 %v3681, %v3681
      %v3698 = vpack.c.b16 %v3682, %v3682
      %v3699 = vpack.c.b16 %v3683, %v3683
      %v3700 = vpack.c.b16 %v3684, %v3684
      %v3701 = vpack.c.b16 %v3685, %v3685
      %v3702 = vpack.c.b16 %v3686, %v3686
      %v3703 = vpack.c.b16 %v3687, %v3687
      %v3704 = vpack.c.b16 %v3688, %v3688
      %3721 = vst [vmem:[%s252] sm:$0xf] %v3689
      %3722 = vst [vmem:[%s252 + $0x4] sm:$0xf] %v3690
      %3723 = vst [vmem:[%s252 + $0x8] sm:$0xf] %v3691
      %3724 = vst [vmem:[%s252 + $0xc] sm:$0xf] %v3692
      %3725 = vst [vmem:[%s252 + $0x10] sm:$0xf] %v3693
      %3726 = vst [vmem:[%s252 + $0x14] sm:$0xf] %v3694
      %3727 = vst [vmem:[%s252 + $0x18] sm:$0xf] %v3695
      %3728 = vst [vmem:[%s252 + $0x1c] sm:$0xf] %v3696
      %3729 = vst [vmem:[%s252 + $0x20] sm:$0xf] %v3697
      %3730 = vst [vmem:[%s252 + $0x24] sm:$0xf] %v3698
      %3731 = vst [vmem:[%s252 + $0x28] sm:$0xf] %v3699
      %3732 = vst [vmem:[%s252 + $0x2c] sm:$0xf] %v3700
      %3733 = vst [vmem:[%s252 + $0x30] sm:$0xf] %v3701
      %3734 = vst [vmem:[%s252 + $0x34] sm:$0xf] %v3702
      %3735 = vst [vmem:[%s252 + $0x38] sm:$0xf] %v3703
      %3736 = vst [vmem:[%s252 + $0x3c] sm:$0xf] %v3704
      %v3737 = vadd.f32 %v3595, %v3598
      %v3738 = vadd.f32 %v3737, %v3603
      %v3739 = vadd.f32 %v3738, %v3606
      %v3740 = vadd.f32 %v3739, %v3611
      %v3741 = vadd.f32 %v3740, %v3614
      %v3742 = vadd.f32 %v3741, %v3619
      %v3743 = vadd.f32 %v3742, %v3622
      %v3744 = vadd.f32 %v3743, %v3627
      %v3745 = vadd.f32 %v3744, %v3630
      %v3746 = vadd.f32 %v3745, %v3635
      %v3747 = vadd.f32 %v3746, %v3638
      %v3748 = vadd.f32 %v3747, %v3643
      %v3749 = vadd.f32 %v3748, %v3646
      %v3750 = vadd.f32 %v3749, %v3651
      %v3751 = vadd.f32 %v3750, %v3654
      %v3752 = vrot.slane %v3751, 4
      %v3753 = vadd.f32 %v3751, %v3752
      %v3754 = vrot.slane %v3753, 2
      %v3755 = vadd.f32 %v3753, %v3754
      %v3756 = vrot.slane %v3755, 1
      %v3757 = vadd.f32 %v3755, %v3756
      %v3758 = vmul.f32 %v3757, 0.0078125
      %v3759 = vsub.f32 %v3595, %v3758
      %v3760 = vsub.f32 %v3598, %v3758
      %v3761 = vsub.f32 %v3603, %v3758
      %v3762 = vsub.f32 %v3606, %v3758
      %v3763 = vsub.f32 %v3611, %v3758
      %v3764 = vsub.f32 %v3614, %v3758
      %v3765 = vsub.f32 %v3619, %v3758
      %v3766 = vsub.f32 %v3622, %v3758
      %v3767 = vsub.f32 %v3627, %v3758
      %v3768 = vsub.f32 %v3630, %v3758
      %v3769 = vsub.f32 %v3635, %v3758
      %v3770 = vsub.f32 %v3638, %v3758
      %v3771 = vsub.f32 %v3643, %v3758
      %v3772 = vsub.f32 %v3646, %v3758
      %v3773 = vsub.f32 %v3651, %v3758
      %v3774 = vsub.f32 %v3654, %v3758
      %v3775 = vmul.f32 %v3759, %v3759
      %v3776 = vmul.f32 %v3760, %v3760
      %v3777 = vmul.f32 %v3761, %v3761
      %v3778 = vmul.f32 %v3762, %v3762
      %v3779 = vmul.f32 %v3763, %v3763
      %v3780 = vmul.f32 %v3764, %v3764
      %v3781 = vmul.f32 %v3765, %v3765
      %v3782 = vmul.f32 %v3766, %v3766
      %v3783 = vmul.f32 %v3767, %v3767
      %v3784 = vmul.f32 %v3768, %v3768
      %v3785 = vmul.f32 %v3769, %v3769
      %v3786 = vmul.f32 %v3770, %v3770
      %v3787 = vmul.f32 %v3771, %v3771
      %v3788 = vmul.f32 %v3772, %v3772
      %v3789 = vmul.f32 %v3773, %v3773
      %v3790 = vmul.f32 %v3774, %v3774
      %v3791 = vadd.f32 %v3775, %v3776
      %v3792 = vadd.f32 %v3791, %v3777
      %v3793 = vadd.f32 %v3792, %v3778
      %v3794 = vadd.f32 %v3793, %v3779
      %v3795 = vadd.f32 %v3794, %v3780
      %v3796 = vadd.f32 %v3795, %v3781
      %v3797 = vadd.f32 %v3796, %v3782
      %v3798 = vadd.f32 %v3797, %v3783
      %v3799 = vadd.f32 %v3798, %v3784
      %v3800 = vadd.f32 %v3799, %v3785
      %v3801 = vadd.f32 %v3800, %v3786
      %v3802 = vadd.f32 %v3801, %v3787
      %v3803 = vadd.f32 %v3802, %v3788
      %v3804 = vadd.f32 %v3803, %v3789
      %v3805 = vadd.f32 %v3804, %v3790
      %v3806 = vrot.slane %v3805, 4
      %v3807 = vadd.f32 %v3805, %v3806
      %v3808 = vrot.slane %v3807, 2
      %v3809 = vadd.f32 %v3807, %v3808
      %v3810 = vrot.slane %v3809, 1
      %v3811 = vadd.f32 %v3809, %v3810
      %3812 = vst [vmem:[%s260] sm:$0x1] %v3757
      %3813 = vst [vmem:[%s267] sm:$0x1] %v3811
      %s3814 = smul.u32 8, %s23
      %p3815 = scmp.lt.s32.totalorder %s22, 1
      %s3816 = scalar_select %p3815, %s22, 1
      %p3817 = scmp.lt.s32.totalorder %s3814, 15
      %s3818 = scalar_select %p3817, %s3814, 15
      %s3819 = smul.addr %s3818, 2
      %s3820 = smul.addr %s3816, 32
      %s3821 = sadd.s32 %s3819, %s3820
      %s3822 = smul.addr %s3821, 4
      %s3823 = scalar_lea.vmem %s4, %s3822
      %p3824 = scmp.lt.s32.totalorder %s22, 1
      %s3825 = scalar_select %p3824, %s22, 1
      %p3826 = scmp.lt.s32.totalorder %s23, 1
      %s3827 = scalar_select %p3826, %s23, 1
      %s3828 = smul.addr %s3825, 2
      %s3829 = sadd.s32 %s3827, %s3828
      %s3830 = scalar_lea.vmem %s5, %s3829
      %p3831 = scmp.lt.s32.totalorder %s22, 1
      %s3832 = scalar_select %p3831, %s22, 1
      %p3833 = scmp.lt.s32.totalorder %s23, 1
      %s3834 = scalar_select %p3833, %s23, 1
      %s3835 = smul.addr %s3832, 2
      %s3836 = sadd.s32 %s3834, %s3835
      %s3837 = scalar_lea.vmem %s6, %s3836
      // Predicated region
      $region157: #{double_conv_forward.4} parent=31 // pred_check
        %p3838 = pneg %p113
      $region158: #{double_conv_forward.4} parent=31 // pred_check_branch
        %3840 = sbr.rel (%p3838) target = $region160
      $region159: #{double_conv_forward.4} parent=31 // pred_region
        %s3841 = smul.u32 8, %s23
      $region160: #{double_conv_forward.4} parent=31 // pred_fallthru
        _
      // Predicated region
      $region161: #{double_conv_forward.4} parent=31 // pred_check
        %p3842 = pneg %p141
      $region162: #{double_conv_forward.4} parent=31 // pred_check_branch
        %3844 = sbr.rel (%p3842) target = $region164
      $region163: #{double_conv_forward.4} parent=31 // pred_region
        _
      $region164: #{double_conv_forward.4} parent=31 // pred_fallthru
        _
      // Predicated region
      $region165: #{double_conv_forward.4} parent=31 // pred_check
        %p3845 = pneg %p169
      $region166: #{double_conv_forward.4} parent=31 // pred_check_branch
        %3847 = sbr.rel (%p3845) target = $region168
      $region167: #{double_conv_forward.4} parent=31 // pred_region
        _
      $region168: #{double_conv_forward.4} parent=31 // pred_fallthru
        _
    $region32: #{double_conv_forward.4} parent=5 // pred_fallthru
      _
    %p3848 = scmp.le.s32.totalorder 2, %s13
    // Predicated region
    $region169: #{double_conv_forward.4} parent=5 // pred_check
      %p3849 = pneg %p3848
    $region170: #{double_conv_forward.4} parent=5 // pred_check_branch
      %3851 = sbr.rel (%p3849) target = $region172
    $region171: #{double_conv_forward.4} parent=5 // pred_region
      %s3852 = ssub.s32 %s13, 2
      // Predicated region
      $region173: #{double_conv_forward.4} parent=171 // pred_check
        %p3853 = pneg %p119
      $region174: #{double_conv_forward.4} parent=171 // pred_check_branch
        %3855 = sbr.rel (%p3853) target = $region176
      $region175: #{double_conv_forward.4} parent=171 // pred_region
        %s3856 = smul.u32 8, %s25
        %p3857 = scmp.lt.s32.totalorder %s24, 1
        %s3858 = scalar_select %p3857, %s24, 1
        %p3859 = scmp.lt.s32.totalorder %s3856, 15
        %s3860 = scalar_select %p3859, %s3856, 15
        %s3861 = smul.addr %s3860, 2
        %s3862 = smul.addr %s3858, 32
        %s3863 = sadd.s32 %s3861, %s3862
        %s3864 = smul.addr %s3863, 4
        %s3865 = scalar_lea.vmem %s4, %s3864
      $region176: #{double_conv_forward.4} parent=171 // pred_fallthru
        _
      // Predicated region
      $region177: #{double_conv_forward.4} parent=171 // pred_check
        %p3866 = pneg %p147
      $region178: #{double_conv_forward.4} parent=171 // pred_check_branch
        %3868 = sbr.rel (%p3866) target = $region180
      $region179: #{double_conv_forward.4} parent=171 // pred_region
        %p3869 = scmp.lt.s32.totalorder %s24, 1
        %s3870 = scalar_select %p3869, %s24, 1
        %p3871 = scmp.lt.s32.totalorder %s25, 1
        %s3872 = scalar_select %p3871, %s25, 1
        %s3873 = smul.addr %s3870, 2
        %s3874 = sadd.s32 %s3872, %s3873
        %s3875 = scalar_lea.vmem %s5, %s3874
      $region180: #{double_conv_forward.4} parent=171 // pred_fallthru
        _
      // Predicated region
      $region181: #{double_conv_forward.4} parent=171 // pred_check
        %p3876 = pneg %p175
      $region182: #{double_conv_forward.4} parent=171 // pred_check_branch
        %3878 = sbr.rel (%p3876) target = $region184
      $region183: #{double_conv_forward.4} parent=171 // pred_region
        %p3879 = scmp.lt.s32.totalorder %s24, 1
        %s3880 = scalar_select %p3879, %s24, 1
        %p3881 = scmp.lt.s32.totalorder %s25, 1
        %s3882 = scalar_select %p3881, %s25, 1
        %s3883 = smul.addr %s3880, 2
        %s3884 = sadd.s32 %s3882, %s3883
        %s3885 = scalar_lea.vmem %s6, %s3884
      $region184: #{double_conv_forward.4} parent=171 // pred_fallthru
        _
    $region172: #{double_conv_forward.4} parent=5 // pred_fallthru
      _
  $region6: #{double_conv_forward.4} parent=0 // loop_footer
    %s17 = sadd.s32 1, %s13
  $region7: #{double_conv_forward.4} parent=0 // loop_footer_branch
    %12 = sbr.rel target = $region3
  $region8: #{double_conv_forward.4} parent=0 // loop_exit
    _
  %3886 = vsyncmov [#allocation4]
  %s3887 = vpop.sfrf %3886
  %p3888 = scmp.eq.s32.totalorder %s3887, 0
  %p3889 = pneg %p3888
  %3891 = shalt.err (%p3889)
  %s3892 = scalar_lea.sflag [#allocation4], 1
  %3893 = vsyncmov %s3892
  %s3894 = vpop.sfrf %3893
  %p3895 = scmp.eq.s32.totalorder %s3894, 0
  %p3896 = pneg %p3895
  %3898 = shalt.err (%p3896)
  %s3899 = scalar_lea.sflag [#allocation4], 2
  %3900 = vsyncmov %s3899
  %s3901 = vpop.sfrf %3900
  %p3902 = scmp.eq.s32.totalorder %s3901, 0
  %p3903 = pneg %p3902
  %3905 = shalt.err (%p3903)

</llo_original>
